<compile_context>
chip_gen: v7x
topology: tpu7x:2x2x1
jax: 0.10.0
libtpu: 0.0.40
codegen_flags: <defaults>
</compile_context>

<pallas_src>
import jax
import jax.numpy as jnp
from jax.experimental import pallas as pl
from jax.experimental.pallas import tpu as pltpu


def _round_up(x, m):
    return (x + m - 1) // m * m


def _pick_batch_block(B, Hp, Wp, Cin_p, Cout_p, itemsize=4,
                      target_rows=512, vmem_budget=6 * 1024 * 1024):
    """Largest divisor of B whose block keeps M rows and VMEM footprint bounded."""
    Hs, Ws = Hp + 2, Wp + 2
    best = 1
    for bb in range(1, B + 1):
        if B % bb:
            continue
        m = bb * Hp * Wp
        in_bytes = 2 * bb * Hs * 2 * Ws * 2 * Cin_p * itemsize   # double-buffered input
        patch_bytes = m * 9 * Cin_p * itemsize                   # im2col scratch
        out_bytes = 2 * m * Cout_p * itemsize                    # double-buffered output
        if m <= max(target_rows, Hp * Wp) and (in_bytes + patch_bytes + out_bytes) <= vmem_budget:
            best = bb
    return best


def _conv_down_kernel(x_ref, w_ref, b_ref, o_ref):
    """Fused MaxPool2d(2) -> Conv2d(3x3, pad=1) -> ReLU for a block of Bb batch elems.

    x_ref: (Bb, Hp+2, 2, Wp+2, 2, Cin_p)  zero-padded NHWC input, 2x2 pool window
                                          split onto the interior size-2 axes
    w_ref: (9*Cin_p, Cout_p)              im2col weights, row = (ky*3+kx)*Cin_p + ci
    b_ref: (1, Cout_p)                    bias (zero-padded)
    o_ref: (Bb, Hp*Wp, Cout_p)            lane-dense output block (Cout_p % 128 == 0)
    """
    Bb, Hs, _, Ws, _, Cin_p = x_ref.shape          # Hs = Hp + 2, Ws = Wp + 2
    _, M_per_b, Cout_p = o_ref.shape
    Hp, Wp = Hs - 2, Ws - 2
    M = Bb * M_per_b

    # --- 2x2 max pool: max over the two interior pool-offset axes. ---
    # The +1 zero ring around the pooled map (== Conv2d padding=1) comes for
    # free from the window-aligned +2 pre-pool zero pad done on the host.
    pooled = jnp.maximum(
        jnp.maximum(x_ref[:, :, 0, :, 0, :], x_ref[:, :, 0, :, 1, :]),
        jnp.maximum(x_ref[:, :, 1, :, 0, :], x_ref[:, :, 1, :, 1, :]),
    )  # (Bb, Hs, Ws, Cin_p) = pooled maps, each padded by 1

    # --- im2col: 9 statically shifted windows concatenated along channels. ---
    cols = []
    for ky in range(3):
        for kx in range(3):
            cols.append(pooled[:, ky:ky + Hp, kx:kx + Wp, :])   # (Bb, Hp, Wp, Cin_p)
    patches = jnp.concatenate(cols, axis=-1)                    # (Bb, Hp, Wp, 9*Cin_p)
    patches = patches.reshape(M, 9 * Cin_p)                     # (Bb*Hp*Wp, 9*Cin_p)

    # --- single MXU matmul + bias + ReLU, one lane-dense block store. ---
    acc = jnp.dot(patches, w_ref[...],
                  preferred_element_type=jnp.float32,
                  precision=jax.lax.Precision.HIGHEST)
    out = jnp.maximum(acc + b_ref[...], 0.0)
    o_ref[...] = out.reshape(Bb, M_per_b, Cout_p).astype(o_ref.dtype)


@jax.jit
def conv_down(x_nchw, w_oihw, bias):
    """ConvDown.forward: MaxPool2d(2) -> Conv2d(in,out,3,padding=1) -> ReLU (NCHW API)."""
    B, Cin, H, W = x_nchw.shape
    Cout = w_oihw.shape[0]
    # The +2 pre-pool zero pad below only equals Conv2d(padding=1) on the pooled
    # map because pad width (2) == pool window/stride (2): pad regions form
    # whole zero pool windows.  Guard that assumption.
    assert H % 2 == 0 and W % 2 == 0, "MaxPool2d(2) requires even spatial dims"
    Hp, Wp = H // 2, W // 2
    Hs, Ws = Hp + 2, Wp + 2

    LANES = 128
    Cin_p = _round_up(Cin, LANES)
    Cout_p = _round_up(Cout, LANES)
    Bb = _pick_batch_block(B, Hp, Wp, Cin_p, Cout_p, jnp.dtype(x_nchw.dtype).itemsize)

    # Host glue (single data pass): NCHW -> NHWC, pad channels to a lane
    # multiple and spatial by 2 (window-aligned pre-pool pad), then a FREE
    # reshape splitting the 2x2 pool window onto its own axes for the BlockSpec.
    x_nhwc = jnp.transpose(x_nchw, (0, 2, 3, 1))                     # (B, H, W, Cin)
    x_pad = jnp.pad(x_nhwc, ((0, 0), (2, 2), (2, 2), (0, Cin_p - Cin)))
    x_blk = x_pad.reshape(B, Hs, 2, Ws, 2, Cin_p)

    # Weights: OIHW -> (ky, kx, ci, co), zero-pad channels, flatten to the
    # (9*Cin_p, Cout_p) im2col matrix used by the single in-kernel dot.
    w_hwio = jnp.transpose(w_oihw, (2, 3, 1, 0))                     # (3, 3, Cin, Cout)
    w_pad = jnp.pad(w_hwio, ((0, 0), (0, 0), (0, Cin_p - Cin), (0, Cout_p - Cout)))
    w_mat = w_pad.reshape(9 * Cin_p, Cout_p)
    b_mat = jnp.pad(bias, (0, Cout_p - Cout)).reshape(1, Cout_p)

    out_flat = pl.pallas_call(
        _conv_down_kernel,
        out_shape=jax.ShapeDtypeStruct((B, Hp * Wp, Cout_p), x_nchw.dtype),
        grid_spec=pltpu.PrefetchScalarGridSpec(
            num_scalar_prefetch=0,
            grid=(B // Bb,),
            in_specs=[
                pl.BlockSpec((Bb, Hs, 2, Ws, 2, Cin_p),
                             lambda b: (b, 0, 0, 0, 0, 0)),
                # Constant index_map: weights/bias stay resident in VMEM, no
                # per-grid-step re-DMA.
                pl.BlockSpec((9 * Cin_p, Cout_p), lambda b: (0, 0)),
                pl.BlockSpec((1, Cout_p), lambda b: (0, 0)),
            ],
            out_specs=pl.BlockSpec((Bb, Hp * Wp, Cout_p), lambda b: (b, 0, 0)),
        ),
        compiler_params=pltpu.CompilerParams(dimension_semantics=("parallel",)),
    )(x_blk, w_mat, b_mat)

    # Drop channel padding, restore PyTorch NCHW convention.
    out = out_flat[:, :, :Cout].reshape(B, Hp, Wp, Cout)
    return jnp.transpose(out, (0, 3, 1, 2))


if __name__ == "__main__":
    key = jax.random.PRNGKey(0)
    k_x, k_w, k_b = jax.random.split(key, 3)

    B, Cin, Cout, H, W = 2, 4, 8, 16, 16
    x = jax.random.normal(k_x, (B, Cin, H, W), jnp.float32)
    # Deterministic synthetic parameters (PyTorch Conv2d layouts: OIHW weight, (O,) bias).
    w = jax.random.normal(k_w, (Cout, Cin, 3, 3), jnp.float32) * 0.1
    b = jax.random.normal(k_b, (Cout,), jnp.float32) * 0.1

    out = jax.block_until_ready(conv_down(x, w, b))

    # Pure-JAX reference of the PyTorch forward (maxpool -> conv(pad=1) -> relu).
    pooled = jax.lax.reduce_window(x, -jnp.inf, jax.lax.max,
                                   (1, 1, 2, 2), (1, 1, 2, 2), "VALID")
    ref = jax.lax.conv_general_dilated(
        pooled, w, (1, 1), ((1, 1), (1, 1)),
        dimension_numbers=("NCHW", "OIHW", "NCHW"),
        precision=jax.lax.Precision.HIGHEST)
    ref = jnp.maximum(ref + b[None, :, None, None], 0.0)

    assert out.shape == ref.shape == (B, Cout, H // 2, W // 2), (out.shape, ref.shape)
    max_err = float(jnp.max(jnp.abs(out - ref)))
    assert jnp.allclose(out, ref, atol=1e-4, rtol=1e-4), f"max_err={max_err}"
    print("KERNEL_OK")
</pallas_src>

<mosaic_0001>
module attributes {stable_mosaic.version = 11 : i64} {
  func.func @_conv_down_kernel(%arg0: i32, %arg1: memref<2x10x2x10x2x128xf32, #tpu.memory_space<vmem>>, %arg2: memref<1152x128xf32, #tpu.memory_space<vmem>>, %arg3: memref<1x128xf32, #tpu.memory_space<vmem>>, %arg4: memref<2x64x128xf32, #tpu.memory_space<vmem>>) attributes {dimension_semantics = [#tpu.dimension_semantics<parallel>], iteration_bounds = array<i64: 1>, scalar_prefetch = 0 : i64, scratch_operands = 0 : i64, tpu.core_type = #tpu.core_type<tc>, window_params = [{transform_indices = @transform_0, window_bounds = array<i64: 2, 10, 2, 10, 2, 128>}, {pipeline_mode = #tpu.pipeline_mode<synchronous>, transform_indices = @transform_1, window_bounds = array<i64: 1152, 128>}, {pipeline_mode = #tpu.pipeline_mode<synchronous>, transform_indices = @transform_2, window_bounds = array<i64: 1, 128>}, {transform_indices = @transform_3, window_bounds = array<i64: 2, 64, 128>}]} {
    %c0 = arith.constant 0 : index
    %c0_0 = arith.constant 0 : index
    %c0_1 = arith.constant 0 : index
    %c0_2 = arith.constant 0 : index
    %c0_3 = arith.constant 0 : index
    %c0_4 = arith.constant 0 : index
    %0 = vector.load %arg1[%c0, %c0_0, %c0_1, %c0_2, %c0_3, %c0_4] : memref<2x10x2x10x2x128xf32, #tpu.memory_space<vmem>>, vector<2x10x1x10x1x128xf32>
    %1 = vector.shape_cast %0 : vector<2x10x1x10x1x128xf32> to vector<2x10x10x128xf32>
    %c0_5 = arith.constant 0 : index
    %c0_6 = arith.constant 0 : index
    %c0_7 = arith.constant 0 : index
    %c0_8 = arith.constant 0 : index
    %c1 = arith.constant 1 : index
    %c0_9 = arith.constant 0 : index
    %2 = vector.load %arg1[%c0_5, %c0_6, %c0_7, %c0_8, %c1, %c0_9] : memref<2x10x2x10x2x128xf32, #tpu.memory_space<vmem>>, vector<2x10x1x10x1x128xf32>
    %3 = vector.shape_cast %2 : vector<2x10x1x10x1x128xf32> to vector<2x10x10x128xf32>
    %4 = arith.maximumf %1, %3 : vector<2x10x10x128xf32>
    %c0_10 = arith.constant 0 : index
    %c0_11 = arith.constant 0 : index
    %c1_12 = arith.constant 1 : index
    %c0_13 = arith.constant 0 : index
    %c0_14 = arith.constant 0 : index
    %c0_15 = arith.constant 0 : index
    %5 = vector.load %arg1[%c0_10, %c0_11, %c1_12, %c0_13, %c0_14, %c0_15] : memref<2x10x2x10x2x128xf32, #tpu.memory_space<vmem>>, vector<2x10x1x10x1x128xf32>
    %6 = vector.shape_cast %5 : vector<2x10x1x10x1x128xf32> to vector<2x10x10x128xf32>
    %c0_16 = arith.constant 0 : index
    %c0_17 = arith.constant 0 : index
    %c1_18 = arith.constant 1 : index
    %c0_19 = arith.constant 0 : index
    %c1_20 = arith.constant 1 : index
    %c0_21 = arith.constant 0 : index
    %7 = vector.load %arg1[%c0_16, %c0_17, %c1_18, %c0_19, %c1_20, %c0_21] : memref<2x10x2x10x2x128xf32, #tpu.memory_space<vmem>>, vector<2x10x1x10x1x128xf32>
    %8 = vector.shape_cast %7 : vector<2x10x1x10x1x128xf32> to vector<2x10x10x128xf32>
    %9 = arith.maximumf %6, %8 : vector<2x10x10x128xf32>
    %10 = arith.maximumf %4, %9 : vector<2x10x10x128xf32>
    %11 = vector.extract_strided_slice %10 {offsets = [0, 0, 0, 0], sizes = [2, 8, 8, 128], strides = [1, 1, 1, 1]} : vector<2x10x10x128xf32> to vector<2x8x8x128xf32>
    %12 = vector.extract_strided_slice %10 {offsets = [0, 0, 1, 0], sizes = [2, 8, 8, 128], strides = [1, 1, 1, 1]} : vector<2x10x10x128xf32> to vector<2x8x8x128xf32>
    %13 = vector.extract_strided_slice %10 {offsets = [0, 0, 2, 0], sizes = [2, 8, 8, 128], strides = [1, 1, 1, 1]} : vector<2x10x10x128xf32> to vector<2x8x8x128xf32>
    %14 = vector.extract_strided_slice %10 {offsets = [0, 1, 0, 0], sizes = [2, 8, 8, 128], strides = [1, 1, 1, 1]} : vector<2x10x10x128xf32> to vector<2x8x8x128xf32>
    %15 = vector.extract_strided_slice %10 {offsets = [0, 1, 1, 0], sizes = [2, 8, 8, 128], strides = [1, 1, 1, 1]} : vector<2x10x10x128xf32> to vector<2x8x8x128xf32>
    %16 = vector.extract_strided_slice %10 {offsets = [0, 1, 2, 0], sizes = [2, 8, 8, 128], strides = [1, 1, 1, 1]} : vector<2x10x10x128xf32> to vector<2x8x8x128xf32>
    %17 = vector.extract_strided_slice %10 {offsets = [0, 2, 0, 0], sizes = [2, 8, 8, 128], strides = [1, 1, 1, 1]} : vector<2x10x10x128xf32> to vector<2x8x8x128xf32>
    %18 = vector.extract_strided_slice %10 {offsets = [0, 2, 1, 0], sizes = [2, 8, 8, 128], strides = [1, 1, 1, 1]} : vector<2x10x10x128xf32> to vector<2x8x8x128xf32>
    %19 = vector.extract_strided_slice %10 {offsets = [0, 2, 2, 0], sizes = [2, 8, 8, 128], strides = [1, 1, 1, 1]} : vector<2x10x10x128xf32> to vector<2x8x8x128xf32>
    %20 = tpu.concatenate %11, %12, %13, %14, %15, %16, %17, %18, %19 in 3 : vector<2x8x8x128xf32>, vector<2x8x8x128xf32>, vector<2x8x8x128xf32>, vector<2x8x8x128xf32>, vector<2x8x8x128xf32>, vector<2x8x8x128xf32>, vector<2x8x8x128xf32>, vector<2x8x8x128xf32>, vector<2x8x8x128xf32> -> vector<2x8x8x1152xf32>
    %21 = vector.shape_cast %20 : vector<2x8x8x1152xf32> to vector<128x1152xf32>
    %c0_22 = arith.constant 0 : index
    %c0_23 = arith.constant 0 : index
    %22 = vector.load %arg2[%c0_22, %c0_23] : memref<1152x128xf32, #tpu.memory_space<vmem>>, vector<1152x128xf32>
    %cst = arith.constant dense<0.000000e+00> : vector<128x128xf32>
    %23 = tpu.matmul %21, %22, %cst {dimension_numbers = #tpu.dot_dimension_numbers<[1], [0], [0], [1], [0, 0, 1, 1], [], []>, precision = #tpu.contract_precision<fp32>} : vector<128x1152xf32>, vector<1152x128xf32>, vector<128x128xf32> -> vector<128x128xf32>
    %c0_24 = arith.constant 0 : index
    %c0_25 = arith.constant 0 : index
    %24 = vector.load %arg3[%c0_24, %c0_25] : memref<1x128xf32, #tpu.memory_space<vmem>>, vector<1x128xf32>
    %25 = vector.broadcast %24 : vector<1x128xf32> to vector<128x128xf32>
    %26 = arith.addf %23, %25 : vector<128x128xf32>
    %cst_26 = arith.constant 0.000000e+00 : f32
    %27 = vector.broadcast %cst_26 : f32 to vector<128x128xf32>
    %28 = arith.maximumf %26, %27 : vector<128x128xf32>
    %29 = vector.shape_cast %28 : vector<128x128xf32> to vector<2x64x128xf32>
    %c0_27 = arith.constant 0 : index
    %c0_28 = arith.constant 0 : index
    %c0_29 = arith.constant 0 : index
    %30 = vector.load %arg4[%c0_27, %c0_28, %c0_29] : memref<2x64x128xf32, #tpu.memory_space<vmem>>, vector<2x64x128xf32>
    tpu.vector_store %arg4[%c0_27, %c0_28, %c0_29], %29 {strides = array<i32>} : memref<2x64x128xf32, #tpu.memory_space<vmem>>, vector<2x64x128xf32>,
    return
  }
  func.func @transform_0(%arg0: i32) -> (i32, i32, i32, i32, i32, i32) {
    %c0_i32 = arith.constant 0 : i32
    %c0_i32_0 = arith.constant 0 : i32
    %c0_i32_1 = arith.constant 0 : i32
    %c0_i32_2 = arith.constant 0 : i32
    %c0_i32_3 = arith.constant 0 : i32
    %c0_i32_4 = arith.constant 0 : i32
    return %arg0, %c0_i32, %c0_i32_0, %c0_i32_1, %c0_i32_2, %c0_i32_3 : i32, i32, i32, i32, i32, i32
  }
  func.func @transform_1(%arg0: i32) -> (i32, i32) {
    %c0_i32 = arith.constant 0 : i32
    %c0_i32_0 = arith.constant 0 : i32
    %c0_i32_1 = arith.constant 0 : i32
    return %c0_i32, %c0_i32_0 : i32, i32
  }
  func.func @transform_2(%arg0: i32) -> (i32, i32) {
    %c0_i32 = arith.constant 0 : i32
    %c0_i32_0 = arith.constant 0 : i32
    %c0_i32_1 = arith.constant 0 : i32
    return %c0_i32, %c0_i32_0 : i32, i32
  }
  func.func @transform_3(%arg0: i32) -> (i32, i32, i32) {
    %c0_i32 = arith.constant 0 : i32
    %c0_i32_0 = arith.constant 0 : i32
    %c0_i32_1 = arith.constant 0 : i32
    return %arg0, %c0_i32, %c0_i32_0 : i32, i32, i32
  }
}

</mosaic_0001>

<llo_original>
// kernel: conv_down.1
$region0: #{conv_down.1}
  #allocation0 [shape = 'u32[]', space=smem, size = 0x4, offset = 0x4, fixed_abs, tag = 'smem constant byte address 0x4 - core index']
  #allocation1 [shape = 'u32[144,128]{1,0:T(1,128)}', space=vmem, size = 0x12000, scoped, tag = 'internal scratch']
  %s0 = inlined_call_operand.vmem [shape: f32[2,10,2,10,2,128], index: 0, kind: input, shape index: {}]
  %s1 = inlined_call_operand.vmem [shape: f32[1152,128], index: 1, kind: input, shape index: {}]
  %s2 = inlined_call_operand.vmem [shape: f32[1,128], index: 2, kind: input, shape index: {}]
  %s3 = inlined_call_operand.vmem [shape: f32[2,64,128], index: 3, kind: output, shape index: {}]
  %s4 = sld [smem:[#allocation0]]
  $region22: #{conv_down.1} parent=0
    _
  %s6 = ssub.s32 1, %s4
  %s7 = scalar_select 0, %s6, %s4
  // Predicated region
  $region2: #{conv_down.1} parent=0 // pred_check
    _
  $region3: #{conv_down.1} parent=0 // pred_check_branch
    %9 = sbr.rel (0) target = $region5
  $region4: #{conv_down.1} parent=0 // pred_region
    _
  $region5: #{conv_down.1} parent=0 // pred_fallthru
    _
  // Predicated region
  $region6: #{conv_down.1} parent=0 // pred_check
    _
  $region7: #{conv_down.1} parent=0 // pred_check_branch
    %11 = sbr.rel (0) target = $region9
  $region8: #{conv_down.1} parent=0 // pred_region
    _
  $region9: #{conv_down.1} parent=0 // pred_fallthru
    _
  // Predicated region
  $region10: #{conv_down.1} parent=0 // pred_check
    _
  $region11: #{conv_down.1} parent=0 // pred_check_branch
    %13 = sbr.rel (0) target = $region13
  $region12: #{conv_down.1} parent=0 // pred_region
    _
  $region13: #{conv_down.1} parent=0 // pred_fallthru
    _
  %v14 = vld [vmem:[%s0] sm:$0x1]
  %v15 = vld [vmem:[%s0 + $0x2] sm:$0x1]
  %v16 = vld [vmem:[%s0 + $0x4] sm:$0x1]
  %v17 = vld [vmem:[%s0 + $0x6] sm:$0x1]
  %v18 = vld [vmem:[%s0 + $0x8] sm:$0x1]
  %v19 = vld [vmem:[%s0 + $0xa] sm:$0x1]
  %v20 = vld [vmem:[%s0 + $0xc] sm:$0x1]
  %v21 = vld [vmem:[%s0 + $0xe] sm:$0x1]
  %v22 = vld [vmem:[%s0 + $0x10] sm:$0x1]
  %v23 = vld [vmem:[%s0 + $0x12] sm:$0x1]
  %v24 = vld [vmem:[%s0 + $0x28] sm:$0x1]
  %v25 = vld [vmem:[%s0 + $0x2a] sm:$0x1]
  %v26 = vld [vmem:[%s0 + $0x2c] sm:$0x1]
  %v27 = vld [vmem:[%s0 + $0x2e] sm:$0x1]
  %v28 = vld [vmem:[%s0 + $0x30] sm:$0x1]
  %v29 = vld [vmem:[%s0 + $0x32] sm:$0x1]
  %v30 = vld [vmem:[%s0 + $0x34] sm:$0x1]
  %v31 = vld [vmem:[%s0 + $0x36] sm:$0x1]
  %v32 = vld [vmem:[%s0 + $0x38] sm:$0x1]
  %v33 = vld [vmem:[%s0 + $0x3a] sm:$0x1]
  %v34 = vld [vmem:[%s0 + $0x50] sm:$0x1]
  %v35 = vld [vmem:[%s0 + $0x52] sm:$0x1]
  %v36 = vld [vmem:[%s0 + $0x54] sm:$0x1]
  %v37 = vld [vmem:[%s0 + $0x56] sm:$0x1]
  %v38 = vld [vmem:[%s0 + $0x58] sm:$0x1]
  %v39 = vld [vmem:[%s0 + $0x5a] sm:$0x1]
  %v40 = vld [vmem:[%s0 + $0x5c] sm:$0x1]
  %v41 = vld [vmem:[%s0 + $0x5e] sm:$0x1]
  %v42 = vld [vmem:[%s0 + $0x60] sm:$0x1]
  %v43 = vld [vmem:[%s0 + $0x62] sm:$0x1]
  %v44 = vld [vmem:[%s0 + $0x78] sm:$0x1]
  %v45 = vld [vmem:[%s0 + $0x7a] sm:$0x1]
  %v46 = vld [vmem:[%s0 + $0x7c] sm:$0x1]
  %v47 = vld [vmem:[%s0 + $0x7e] sm:$0x1]
  %v48 = vld [vmem:[%s0 + $0x80] sm:$0x1]
  %v49 = vld [vmem:[%s0 + $0x82] sm:$0x1]
  %v50 = vld [vmem:[%s0 + $0x84] sm:$0x1]
  %v51 = vld [vmem:[%s0 + $0x86] sm:$0x1]
  %v52 = vld [vmem:[%s0 + $0x88] sm:$0x1]
  %v53 = vld [vmem:[%s0 + $0x8a] sm:$0x1]
  %v54 = vld [vmem:[%s0 + $0xa0] sm:$0x1]
  %v55 = vld [vmem:[%s0 + $0xa2] sm:$0x1]
  %v56 = vld [vmem:[%s0 + $0xa4] sm:$0x1]
  %v57 = vld [vmem:[%s0 + $0xa6] sm:$0x1]
  %v58 = vld [vmem:[%s0 + $0xa8] sm:$0x1]
  %v59 = vld [vmem:[%s0 + $0xaa] sm:$0x1]
  %v60 = vld [vmem:[%s0 + $0xac] sm:$0x1]
  %v61 = vld [vmem:[%s0 + $0xae] sm:$0x1]
  %v62 = vld [vmem:[%s0 + $0xb0] sm:$0x1]
  %v63 = vld [vmem:[%s0 + $0xb2] sm:$0x1]
  %v64 = vld [vmem:[%s0 + $0xc8] sm:$0x1]
  %v65 = vld [vmem:[%s0 + $0xca] sm:$0x1]
  %v66 = vld [vmem:[%s0 + $0xcc] sm:$0x1]
  %v67 = vld [vmem:[%s0 + $0xce] sm:$0x1]
  %v68 = vld [vmem:[%s0 + $0xd0] sm:$0x1]
  %v69 = vld [vmem:[%s0 + $0xd2] sm:$0x1]
  %v70 = vld [vmem:[%s0 + $0xd4] sm:$0x1]
  %v71 = vld [vmem:[%s0 + $0xd6] sm:$0x1]
  %v72 = vld [vmem:[%s0 + $0xd8] sm:$0x1]
  %v73 = vld [vmem:[%s0 + $0xda] sm:$0x1]
  %v74 = vld [vmem:[%s0 + $0xf0] sm:$0x1]
  %v75 = vld [vmem:[%s0 + $0xf2] sm:$0x1]
  %v76 = vld [vmem:[%s0 + $0xf4] sm:$0x1]
  %v77 = vld [vmem:[%s0 + $0xf6] sm:$0x1]
  %v78 = vld [vmem:[%s0 + $0xf8] sm:$0x1]
  %v79 = vld [vmem:[%s0 + $0xfa] sm:$0x1]
  %v80 = vld [vmem:[%s0 + $0xfc] sm:$0x1]
  %v81 = vld [vmem:[%s0 + $0xfe] sm:$0x1]
  %v82 = vld [vmem:[%s0 + $0x100] sm:$0x1]
  %v83 = vld [vmem:[%s0 + $0x102] sm:$0x1]
  %v84 = vld [vmem:[%s0 + $0x118] sm:$0x1]
  %v85 = vld [vmem:[%s0 + $0x11a] sm:$0x1]
  %v86 = vld [vmem:[%s0 + $0x11c] sm:$0x1]
  %v87 = vld [vmem:[%s0 + $0x11e] sm:$0x1]
  %v88 = vld [vmem:[%s0 + $0x120] sm:$0x1]
  %v89 = vld [vmem:[%s0 + $0x122] sm:$0x1]
  %v90 = vld [vmem:[%s0 + $0x124] sm:$0x1]
  %v91 = vld [vmem:[%s0 + $0x126] sm:$0x1]
  %v92 = vld [vmem:[%s0 + $0x128] sm:$0x1]
  %v93 = vld [vmem:[%s0 + $0x12a] sm:$0x1]
  %v94 = vld [vmem:[%s0 + $0x140] sm:$0x1]
  %v95 = vld [vmem:[%s0 + $0x142] sm:$0x1]
  %v96 = vld [vmem:[%s0 + $0x144] sm:$0x1]
  %v97 = vld [vmem:[%s0 + $0x146] sm:$0x1]
  %v98 = vld [vmem:[%s0 + $0x148] sm:$0x1]
  %v99 = vld [vmem:[%s0 + $0x14a] sm:$0x1]
  %v100 = vld [vmem:[%s0 + $0x14c] sm:$0x1]
  %v101 = vld [vmem:[%s0 + $0x14e] sm:$0x1]
  %v102 = vld [vmem:[%s0 + $0x150] sm:$0x1]
  %v103 = vld [vmem:[%s0 + $0x152] sm:$0x1]
  %v104 = vld [vmem:[%s0 + $0x168] sm:$0x1]
  %v105 = vld [vmem:[%s0 + $0x16a] sm:$0x1]
  %v106 = vld [vmem:[%s0 + $0x16c] sm:$0x1]
  %v107 = vld [vmem:[%s0 + $0x16e] sm:$0x1]
  %v108 = vld [vmem:[%s0 + $0x170] sm:$0x1]
  %v109 = vld [vmem:[%s0 + $0x172] sm:$0x1]
  %v110 = vld [vmem:[%s0 + $0x174] sm:$0x1]
  %v111 = vld [vmem:[%s0 + $0x176] sm:$0x1]
  %v112 = vld [vmem:[%s0 + $0x178] sm:$0x1]
  %v113 = vld [vmem:[%s0 + $0x17a] sm:$0x1]
  %v114 = vld [vmem:[%s0 + $0x190] sm:$0x1]
  %v115 = vld [vmem:[%s0 + $0x192] sm:$0x1]
  %v116 = vld [vmem:[%s0 + $0x194] sm:$0x1]
  %v117 = vld [vmem:[%s0 + $0x196] sm:$0x1]
  %v118 = vld [vmem:[%s0 + $0x198] sm:$0x1]
  %v119 = vld [vmem:[%s0 + $0x19a] sm:$0x1]
  %v120 = vld [vmem:[%s0 + $0x19c] sm:$0x1]
  %v121 = vld [vmem:[%s0 + $0x19e] sm:$0x1]
  %v122 = vld [vmem:[%s0 + $0x1a0] sm:$0x1]
  %v123 = vld [vmem:[%s0 + $0x1a2] sm:$0x1]
  %v124 = vld [vmem:[%s0 + $0x1b8] sm:$0x1]
  %v125 = vld [vmem:[%s0 + $0x1ba] sm:$0x1]
  %v126 = vld [vmem:[%s0 + $0x1bc] sm:$0x1]
  %v127 = vld [vmem:[%s0 + $0x1be] sm:$0x1]
  %v128 = vld [vmem:[%s0 + $0x1c0] sm:$0x1]
  %v129 = vld [vmem:[%s0 + $0x1c2] sm:$0x1]
  %v130 = vld [vmem:[%s0 + $0x1c4] sm:$0x1]
  %v131 = vld [vmem:[%s0 + $0x1c6] sm:$0x1]
  %v132 = vld [vmem:[%s0 + $0x1c8] sm:$0x1]
  %v133 = vld [vmem:[%s0 + $0x1ca] sm:$0x1]
  %v134 = vld [vmem:[%s0 + $0x1e0] sm:$0x1]
  %v135 = vld [vmem:[%s0 + $0x1e2] sm:$0x1]
  %v136 = vld [vmem:[%s0 + $0x1e4] sm:$0x1]
  %v137 = vld [vmem:[%s0 + $0x1e6] sm:$0x1]
  %v138 = vld [vmem:[%s0 + $0x1e8] sm:$0x1]
  %v139 = vld [vmem:[%s0 + $0x1ea] sm:$0x1]
  %v140 = vld [vmem:[%s0 + $0x1ec] sm:$0x1]
  %v141 = vld [vmem:[%s0 + $0x1ee] sm:$0x1]
  %v142 = vld [vmem:[%s0 + $0x1f0] sm:$0x1]
  %v143 = vld [vmem:[%s0 + $0x1f2] sm:$0x1]
  %v144 = vld [vmem:[%s0 + $0x208] sm:$0x1]
  %v145 = vld [vmem:[%s0 + $0x20a] sm:$0x1]
  %v146 = vld [vmem:[%s0 + $0x20c] sm:$0x1]
  %v147 = vld [vmem:[%s0 + $0x20e] sm:$0x1]
  %v148 = vld [vmem:[%s0 + $0x210] sm:$0x1]
  %v149 = vld [vmem:[%s0 + $0x212] sm:$0x1]
  %v150 = vld [vmem:[%s0 + $0x214] sm:$0x1]
  %v151 = vld [vmem:[%s0 + $0x216] sm:$0x1]
  %v152 = vld [vmem:[%s0 + $0x218] sm:$0x1]
  %v153 = vld [vmem:[%s0 + $0x21a] sm:$0x1]
  %v154 = vld [vmem:[%s0 + $0x230] sm:$0x1]
  %v155 = vld [vmem:[%s0 + $0x232] sm:$0x1]
  %v156 = vld [vmem:[%s0 + $0x234] sm:$0x1]
  %v157 = vld [vmem:[%s0 + $0x236] sm:$0x1]
  %v158 = vld [vmem:[%s0 + $0x238] sm:$0x1]
  %v159 = vld [vmem:[%s0 + $0x23a] sm:$0x1]
  %v160 = vld [vmem:[%s0 + $0x23c] sm:$0x1]
  %v161 = vld [vmem:[%s0 + $0x23e] sm:$0x1]
  %v162 = vld [vmem:[%s0 + $0x240] sm:$0x1]
  %v163 = vld [vmem:[%s0 + $0x242] sm:$0x1]
  %v164 = vld [vmem:[%s0 + $0x258] sm:$0x1]
  %v165 = vld [vmem:[%s0 + $0x25a] sm:$0x1]
  %v166 = vld [vmem:[%s0 + $0x25c] sm:$0x1]
  %v167 = vld [vmem:[%s0 + $0x25e] sm:$0x1]
  %v168 = vld [vmem:[%s0 + $0x260] sm:$0x1]
  %v169 = vld [vmem:[%s0 + $0x262] sm:$0x1]
  %v170 = vld [vmem:[%s0 + $0x264] sm:$0x1]
  %v171 = vld [vmem:[%s0 + $0x266] sm:$0x1]
  %v172 = vld [vmem:[%s0 + $0x268] sm:$0x1]
  %v173 = vld [vmem:[%s0 + $0x26a] sm:$0x1]
  %v174 = vld [vmem:[%s0 + $0x280] sm:$0x1]
  %v175 = vld [vmem:[%s0 + $0x282] sm:$0x1]
  %v176 = vld [vmem:[%s0 + $0x284] sm:$0x1]
  %v177 = vld [vmem:[%s0 + $0x286] sm:$0x1]
  %v178 = vld [vmem:[%s0 + $0x288] sm:$0x1]
  %v179 = vld [vmem:[%s0 + $0x28a] sm:$0x1]
  %v180 = vld [vmem:[%s0 + $0x28c] sm:$0x1]
  %v181 = vld [vmem:[%s0 + $0x28e] sm:$0x1]
  %v182 = vld [vmem:[%s0 + $0x290] sm:$0x1]
  %v183 = vld [vmem:[%s0 + $0x292] sm:$0x1]
  %v184 = vld [vmem:[%s0 + $0x2a8] sm:$0x1]
  %v185 = vld [vmem:[%s0 + $0x2aa] sm:$0x1]
  %v186 = vld [vmem:[%s0 + $0x2ac] sm:$0x1]
  %v187 = vld [vmem:[%s0 + $0x2ae] sm:$0x1]
  %v188 = vld [vmem:[%s0 + $0x2b0] sm:$0x1]
  %v189 = vld [vmem:[%s0 + $0x2b2] sm:$0x1]
  %v190 = vld [vmem:[%s0 + $0x2b4] sm:$0x1]
  %v191 = vld [vmem:[%s0 + $0x2b6] sm:$0x1]
  %v192 = vld [vmem:[%s0 + $0x2b8] sm:$0x1]
  %v193 = vld [vmem:[%s0 + $0x2ba] sm:$0x1]
  %v194 = vld [vmem:[%s0 + $0x2d0] sm:$0x1]
  %v195 = vld [vmem:[%s0 + $0x2d2] sm:$0x1]
  %v196 = vld [vmem:[%s0 + $0x2d4] sm:$0x1]
  %v197 = vld [vmem:[%s0 + $0x2d6] sm:$0x1]
  %v198 = vld [vmem:[%s0 + $0x2d8] sm:$0x1]
  %v199 = vld [vmem:[%s0 + $0x2da] sm:$0x1]
  %v200 = vld [vmem:[%s0 + $0x2dc] sm:$0x1]
  %v201 = vld [vmem:[%s0 + $0x2de] sm:$0x1]
  %v202 = vld [vmem:[%s0 + $0x2e0] sm:$0x1]
  %v203 = vld [vmem:[%s0 + $0x2e2] sm:$0x1]
  %v204 = vld [vmem:[%s0 + $0x2f8] sm:$0x1]
  %v205 = vld [vmem:[%s0 + $0x2fa] sm:$0x1]
  %v206 = vld [vmem:[%s0 + $0x2fc] sm:$0x1]
  %v207 = vld [vmem:[%s0 + $0x2fe] sm:$0x1]
  %v208 = vld [vmem:[%s0 + $0x300] sm:$0x1]
  %v209 = vld [vmem:[%s0 + $0x302] sm:$0x1]
  %v210 = vld [vmem:[%s0 + $0x304] sm:$0x1]
  %v211 = vld [vmem:[%s0 + $0x306] sm:$0x1]
  %v212 = vld [vmem:[%s0 + $0x308] sm:$0x1]
  %v213 = vld [vmem:[%s0 + $0x30a] sm:$0x1]
  %v214 = vld [vmem:[%s0 + $0x1] sm:$0x1]
  %v215 = vld [vmem:[%s0 + $0x3] sm:$0x1]
  %v216 = vld [vmem:[%s0 + $0x5] sm:$0x1]
  %v217 = vld [vmem:[%s0 + $0x7] sm:$0x1]
  %v218 = vld [vmem:[%s0 + $0x9] sm:$0x1]
  %v219 = vld [vmem:[%s0 + $0xb] sm:$0x1]
  %v220 = vld [vmem:[%s0 + $0xd] sm:$0x1]
  %v221 = vld [vmem:[%s0 + $0xf] sm:$0x1]
  %v222 = vld [vmem:[%s0 + $0x11] sm:$0x1]
  %v223 = vld [vmem:[%s0 + $0x13] sm:$0x1]
  %v224 = vld [vmem:[%s0 + $0x29] sm:$0x1]
  %v225 = vld [vmem:[%s0 + $0x2b] sm:$0x1]
  %v226 = vld [vmem:[%s0 + $0x2d] sm:$0x1]
  %v227 = vld [vmem:[%s0 + $0x2f] sm:$0x1]
  %v228 = vld [vmem:[%s0 + $0x31] sm:$0x1]
  %v229 = vld [vmem:[%s0 + $0x33] sm:$0x1]
  %v230 = vld [vmem:[%s0 + $0x35] sm:$0x1]
  %v231 = vld [vmem:[%s0 + $0x37] sm:$0x1]
  %v232 = vld [vmem:[%s0 + $0x39] sm:$0x1]
  %v233 = vld [vmem:[%s0 + $0x3b] sm:$0x1]
  %v234 = vld [vmem:[%s0 + $0x51] sm:$0x1]
  %v235 = vld [vmem:[%s0 + $0x53] sm:$0x1]
  %v236 = vld [vmem:[%s0 + $0x55] sm:$0x1]
  %v237 = vld [vmem:[%s0 + $0x57] sm:$0x1]
  %v238 = vld [vmem:[%s0 + $0x59] sm:$0x1]
  %v239 = vld [vmem:[%s0 + $0x5b] sm:$0x1]
  %v240 = vld [vmem:[%s0 + $0x5d] sm:$0x1]
  %v241 = vld [vmem:[%s0 + $0x5f] sm:$0x1]
  %v242 = vld [vmem:[%s0 + $0x61] sm:$0x1]
  %v243 = vld [vmem:[%s0 + $0x63] sm:$0x1]
  %v244 = vld [vmem:[%s0 + $0x79] sm:$0x1]
  %v245 = vld [vmem:[%s0 + $0x7b] sm:$0x1]
  %v246 = vld [vmem:[%s0 + $0x7d] sm:$0x1]
  %v247 = vld [vmem:[%s0 + $0x7f] sm:$0x1]
  %v248 = vld [vmem:[%s0 + $0x81] sm:$0x1]
  %v249 = vld [vmem:[%s0 + $0x83] sm:$0x1]
  %v250 = vld [vmem:[%s0 + $0x85] sm:$0x1]
  %v251 = vld [vmem:[%s0 + $0x87] sm:$0x1]
  %v252 = vld [vmem:[%s0 + $0x89] sm:$0x1]
  %v253 = vld [vmem:[%s0 + $0x8b] sm:$0x1]
  %v254 = vld [vmem:[%s0 + $0xa1] sm:$0x1]
  %v255 = vld [vmem:[%s0 + $0xa3] sm:$0x1]
  %v256 = vld [vmem:[%s0 + $0xa5] sm:$0x1]
  %v257 = vld [vmem:[%s0 + $0xa7] sm:$0x1]
  %v258 = vld [vmem:[%s0 + $0xa9] sm:$0x1]
  %v259 = vld [vmem:[%s0 + $0xab] sm:$0x1]
  %v260 = vld [vmem:[%s0 + $0xad] sm:$0x1]
  %v261 = vld [vmem:[%s0 + $0xaf] sm:$0x1]
  %v262 = vld [vmem:[%s0 + $0xb1] sm:$0x1]
  %v263 = vld [vmem:[%s0 + $0xb3] sm:$0x1]
  %v264 = vld [vmem:[%s0 + $0xc9] sm:$0x1]
  %v265 = vld [vmem:[%s0 + $0xcb] sm:$0x1]
  %v266 = vld [vmem:[%s0 + $0xcd] sm:$0x1]
  %v267 = vld [vmem:[%s0 + $0xcf] sm:$0x1]
  %v268 = vld [vmem:[%s0 + $0xd1] sm:$0x1]
  %v269 = vld [vmem:[%s0 + $0xd3] sm:$0x1]
  %v270 = vld [vmem:[%s0 + $0xd5] sm:$0x1]
  %v271 = vld [vmem:[%s0 + $0xd7] sm:$0x1]
  %v272 = vld [vmem:[%s0 + $0xd9] sm:$0x1]
  %v273 = vld [vmem:[%s0 + $0xdb] sm:$0x1]
  %v274 = vld [vmem:[%s0 + $0xf1] sm:$0x1]
  %v275 = vld [vmem:[%s0 + $0xf3] sm:$0x1]
  %v276 = vld [vmem:[%s0 + $0xf5] sm:$0x1]
  %v277 = vld [vmem:[%s0 + $0xf7] sm:$0x1]
  %v278 = vld [vmem:[%s0 + $0xf9] sm:$0x1]
  %v279 = vld [vmem:[%s0 + $0xfb] sm:$0x1]
  %v280 = vld [vmem:[%s0 + $0xfd] sm:$0x1]
  %v281 = vld [vmem:[%s0 + $0xff] sm:$0x1]
  %v282 = vld [vmem:[%s0 + $0x101] sm:$0x1]
  %v283 = vld [vmem:[%s0 + $0x103] sm:$0x1]
  %v284 = vld [vmem:[%s0 + $0x119] sm:$0x1]
  %v285 = vld [vmem:[%s0 + $0x11b] sm:$0x1]
  %v286 = vld [vmem:[%s0 + $0x11d] sm:$0x1]
  %v287 = vld [vmem:[%s0 + $0x11f] sm:$0x1]
  %v288 = vld [vmem:[%s0 + $0x121] sm:$0x1]
  %v289 = vld [vmem:[%s0 + $0x123] sm:$0x1]
  %v290 = vld [vmem:[%s0 + $0x125] sm:$0x1]
  %v291 = vld [vmem:[%s0 + $0x127] sm:$0x1]
  %v292 = vld [vmem:[%s0 + $0x129] sm:$0x1]
  %v293 = vld [vmem:[%s0 + $0x12b] sm:$0x1]
  %v294 = vld [vmem:[%s0 + $0x141] sm:$0x1]
  %v295 = vld [vmem:[%s0 + $0x143] sm:$0x1]
  %v296 = vld [vmem:[%s0 + $0x145] sm:$0x1]
  %v297 = vld [vmem:[%s0 + $0x147] sm:$0x1]
  %v298 = vld [vmem:[%s0 + $0x149] sm:$0x1]
  %v299 = vld [vmem:[%s0 + $0x14b] sm:$0x1]
  %v300 = vld [vmem:[%s0 + $0x14d] sm:$0x1]
  %v301 = vld [vmem:[%s0 + $0x14f] sm:$0x1]
  %v302 = vld [vmem:[%s0 + $0x151] sm:$0x1]
  %v303 = vld [vmem:[%s0 + $0x153] sm:$0x1]
  %v304 = vld [vmem:[%s0 + $0x169] sm:$0x1]
  %v305 = vld [vmem:[%s0 + $0x16b] sm:$0x1]
  %v306 = vld [vmem:[%s0 + $0x16d] sm:$0x1]
  %v307 = vld [vmem:[%s0 + $0x16f] sm:$0x1]
  %v308 = vld [vmem:[%s0 + $0x171] sm:$0x1]
  %v309 = vld [vmem:[%s0 + $0x173] sm:$0x1]
  %v310 = vld [vmem:[%s0 + $0x175] sm:$0x1]
  %v311 = vld [vmem:[%s0 + $0x177] sm:$0x1]
  %v312 = vld [vmem:[%s0 + $0x179] sm:$0x1]
  %v313 = vld [vmem:[%s0 + $0x17b] sm:$0x1]
  %v314 = vld [vmem:[%s0 + $0x191] sm:$0x1]
  %v315 = vld [vmem:[%s0 + $0x193] sm:$0x1]
  %v316 = vld [vmem:[%s0 + $0x195] sm:$0x1]
  %v317 = vld [vmem:[%s0 + $0x197] sm:$0x1]
  %v318 = vld [vmem:[%s0 + $0x199] sm:$0x1]
  %v319 = vld [vmem:[%s0 + $0x19b] sm:$0x1]
  %v320 = vld [vmem:[%s0 + $0x19d] sm:$0x1]
  %v321 = vld [vmem:[%s0 + $0x19f] sm:$0x1]
  %v322 = vld [vmem:[%s0 + $0x1a1] sm:$0x1]
  %v323 = vld [vmem:[%s0 + $0x1a3] sm:$0x1]
  %v324 = vld [vmem:[%s0 + $0x1b9] sm:$0x1]
  %v325 = vld [vmem:[%s0 + $0x1bb] sm:$0x1]
  %v326 = vld [vmem:[%s0 + $0x1bd] sm:$0x1]
  %v327 = vld [vmem:[%s0 + $0x1bf] sm:$0x1]
  %v328 = vld [vmem:[%s0 + $0x1c1] sm:$0x1]
  %v329 = vld [vmem:[%s0 + $0x1c3] sm:$0x1]
  %v330 = vld [vmem:[%s0 + $0x1c5] sm:$0x1]
  %v331 = vld [vmem:[%s0 + $0x1c7] sm:$0x1]
  %v332 = vld [vmem:[%s0 + $0x1c9] sm:$0x1]
  %v333 = vld [vmem:[%s0 + $0x1cb] sm:$0x1]
  %v334 = vld [vmem:[%s0 + $0x1e1] sm:$0x1]
  %v335 = vld [vmem:[%s0 + $0x1e3] sm:$0x1]
  %v336 = vld [vmem:[%s0 + $0x1e5] sm:$0x1]
  %v337 = vld [vmem:[%s0 + $0x1e7] sm:$0x1]
  %v338 = vld [vmem:[%s0 + $0x1e9] sm:$0x1]
  %v339 = vld [vmem:[%s0 + $0x1eb] sm:$0x1]
  %v340 = vld [vmem:[%s0 + $0x1ed] sm:$0x1]
  %v341 = vld [vmem:[%s0 + $0x1ef] sm:$0x1]
  %v342 = vld [vmem:[%s0 + $0x1f1] sm:$0x1]
  %v343 = vld [vmem:[%s0 + $0x1f3] sm:$0x1]
  %v344 = vld [vmem:[%s0 + $0x209] sm:$0x1]
  %v345 = vld [vmem:[%s0 + $0x20b] sm:$0x1]
  %v346 = vld [vmem:[%s0 + $0x20d] sm:$0x1]
  %v347 = vld [vmem:[%s0 + $0x20f] sm:$0x1]
  %v348 = vld [vmem:[%s0 + $0x211] sm:$0x1]
  %v349 = vld [vmem:[%s0 + $0x213] sm:$0x1]
  %v350 = vld [vmem:[%s0 + $0x215] sm:$0x1]
  %v351 = vld [vmem:[%s0 + $0x217] sm:$0x1]
  %v352 = vld [vmem:[%s0 + $0x219] sm:$0x1]
  %v353 = vld [vmem:[%s0 + $0x21b] sm:$0x1]
  %v354 = vld [vmem:[%s0 + $0x231] sm:$0x1]
  %v355 = vld [vmem:[%s0 + $0x233] sm:$0x1]
  %v356 = vld [vmem:[%s0 + $0x235] sm:$0x1]
  %v357 = vld [vmem:[%s0 + $0x237] sm:$0x1]
  %v358 = vld [vmem:[%s0 + $0x239] sm:$0x1]
  %v359 = vld [vmem:[%s0 + $0x23b] sm:$0x1]
  %v360 = vld [vmem:[%s0 + $0x23d] sm:$0x1]
  %v361 = vld [vmem:[%s0 + $0x23f] sm:$0x1]
  %v362 = vld [vmem:[%s0 + $0x241] sm:$0x1]
  %v363 = vld [vmem:[%s0 + $0x243] sm:$0x1]
  %v364 = vld [vmem:[%s0 + $0x259] sm:$0x1]
  %v365 = vld [vmem:[%s0 + $0x25b] sm:$0x1]
  %v366 = vld [vmem:[%s0 + $0x25d] sm:$0x1]
  %v367 = vld [vmem:[%s0 + $0x25f] sm:$0x1]
  %v368 = vld [vmem:[%s0 + $0x261] sm:$0x1]
  %v369 = vld [vmem:[%s0 + $0x263] sm:$0x1]
  %v370 = vld [vmem:[%s0 + $0x265] sm:$0x1]
  %v371 = vld [vmem:[%s0 + $0x267] sm:$0x1]
  %v372 = vld [vmem:[%s0 + $0x269] sm:$0x1]
  %v373 = vld [vmem:[%s0 + $0x26b] sm:$0x1]
  %v374 = vld [vmem:[%s0 + $0x281] sm:$0x1]
  %v375 = vld [vmem:[%s0 + $0x283] sm:$0x1]
  %v376 = vld [vmem:[%s0 + $0x285] sm:$0x1]
  %v377 = vld [vmem:[%s0 + $0x287] sm:$0x1]
  %v378 = vld [vmem:[%s0 + $0x289] sm:$0x1]
  %v379 = vld [vmem:[%s0 + $0x28b] sm:$0x1]
  %v380 = vld [vmem:[%s0 + $0x28d] sm:$0x1]
  %v381 = vld [vmem:[%s0 + $0x28f] sm:$0x1]
  %v382 = vld [vmem:[%s0 + $0x291] sm:$0x1]
  %v383 = vld [vmem:[%s0 + $0x293] sm:$0x1]
  %v384 = vld [vmem:[%s0 + $0x2a9] sm:$0x1]
  %v385 = vld [vmem:[%s0 + $0x2ab] sm:$0x1]
  %v386 = vld [vmem:[%s0 + $0x2ad] sm:$0x1]
  %v387 = vld [vmem:[%s0 + $0x2af] sm:$0x1]
  %v388 = vld [vmem:[%s0 + $0x2b1] sm:$0x1]
  %v389 = vld [vmem:[%s0 + $0x2b3] sm:$0x1]
  %v390 = vld [vmem:[%s0 + $0x2b5] sm:$0x1]
  %v391 = vld [vmem:[%s0 + $0x2b7] sm:$0x1]
  %v392 = vld [vmem:[%s0 + $0x2b9] sm:$0x1]
  %v393 = vld [vmem:[%s0 + $0x2bb] sm:$0x1]
  %v394 = vld [vmem:[%s0 + $0x2d1] sm:$0x1]
  %v395 = vld [vmem:[%s0 + $0x2d3] sm:$0x1]
  %v396 = vld [vmem:[%s0 + $0x2d5] sm:$0x1]
  %v397 = vld [vmem:[%s0 + $0x2d7] sm:$0x1]
  %v398 = vld [vmem:[%s0 + $0x2d9] sm:$0x1]
  %v399 = vld [vmem:[%s0 + $0x2db] sm:$0x1]
  %v400 = vld [vmem:[%s0 + $0x2dd] sm:$0x1]
  %v401 = vld [vmem:[%s0 + $0x2df] sm:$0x1]
  %v402 = vld [vmem:[%s0 + $0x2e1] sm:$0x1]
  %v403 = vld [vmem:[%s0 + $0x2e3] sm:$0x1]
  %v404 = vld [vmem:[%s0 + $0x2f9] sm:$0x1]
  %v405 = vld [vmem:[%s0 + $0x2fb] sm:$0x1]
  %v406 = vld [vmem:[%s0 + $0x2fd] sm:$0x1]
  %v407 = vld [vmem:[%s0 + $0x2ff] sm:$0x1]
  %v408 = vld [vmem:[%s0 + $0x301] sm:$0x1]
  %v409 = vld [vmem:[%s0 + $0x303] sm:$0x1]
  %v410 = vld [vmem:[%s0 + $0x305] sm:$0x1]
  %v411 = vld [vmem:[%s0 + $0x307] sm:$0x1]
  %v412 = vld [vmem:[%s0 + $0x309] sm:$0x1]
  %v413 = vld [vmem:[%s0 + $0x30b] sm:$0x1]
  %v414 = vmax.f32 %v14, %v214
  %v415 = vmax.f32 %v15, %v215
  %v416 = vmax.f32 %v16, %v216
  %v417 = vmax.f32 %v17, %v217
  %v418 = vmax.f32 %v18, %v218
  %v419 = vmax.f32 %v19, %v219
  %v420 = vmax.f32 %v20, %v220
  %v421 = vmax.f32 %v21, %v221
  %v422 = vmax.f32 %v22, %v222
  %v423 = vmax.f32 %v23, %v223
  %v424 = vmax.f32 %v24, %v224
  %v425 = vmax.f32 %v25, %v225
  %v426 = vmax.f32 %v26, %v226
  %v427 = vmax.f32 %v27, %v227
  %v428 = vmax.f32 %v28, %v228
  %v429 = vmax.f32 %v29, %v229
  %v430 = vmax.f32 %v30, %v230
  %v431 = vmax.f32 %v31, %v231
  %v432 = vmax.f32 %v32, %v232
  %v433 = vmax.f32 %v33, %v233
  %v434 = vmax.f32 %v34, %v234
  %v435 = vmax.f32 %v35, %v235
  %v436 = vmax.f32 %v36, %v236
  %v437 = vmax.f32 %v37, %v237
  %v438 = vmax.f32 %v38, %v238
  %v439 = vmax.f32 %v39, %v239
  %v440 = vmax.f32 %v40, %v240
  %v441 = vmax.f32 %v41, %v241
  %v442 = vmax.f32 %v42, %v242
  %v443 = vmax.f32 %v43, %v243
  %v444 = vmax.f32 %v44, %v244
  %v445 = vmax.f32 %v45, %v245
  %v446 = vmax.f32 %v46, %v246
  %v447 = vmax.f32 %v47, %v247
  %v448 = vmax.f32 %v48, %v248
  %v449 = vmax.f32 %v49, %v249
  %v450 = vmax.f32 %v50, %v250
  %v451 = vmax.f32 %v51, %v251
  %v452 = vmax.f32 %v52, %v252
  %v453 = vmax.f32 %v53, %v253
  %v454 = vmax.f32 %v54, %v254
  %v455 = vmax.f32 %v55, %v255
  %v456 = vmax.f32 %v56, %v256
  %v457 = vmax.f32 %v57, %v257
  %v458 = vmax.f32 %v58, %v258
  %v459 = vmax.f32 %v59, %v259
  %v460 = vmax.f32 %v60, %v260
  %v461 = vmax.f32 %v61, %v261
  %v462 = vmax.f32 %v62, %v262
  %v463 = vmax.f32 %v63, %v263
  %v464 = vmax.f32 %v64, %v264
  %v465 = vmax.f32 %v65, %v265
  %v466 = vmax.f32 %v66, %v266
  %v467 = vmax.f32 %v67, %v267
  %v468 = vmax.f32 %v68, %v268
  %v469 = vmax.f32 %v69, %v269
  %v470 = vmax.f32 %v70, %v270
  %v471 = vmax.f32 %v71, %v271
  %v472 = vmax.f32 %v72, %v272
  %v473 = vmax.f32 %v73, %v273
  %v474 = vmax.f32 %v74, %v274
  %v475 = vmax.f32 %v75, %v275
  %v476 = vmax.f32 %v76, %v276
  %v477 = vmax.f32 %v77, %v277
  %v478 = vmax.f32 %v78, %v278
  %v479 = vmax.f32 %v79, %v279
  %v480 = vmax.f32 %v80, %v280
  %v481 = vmax.f32 %v81, %v281
  %v482 = vmax.f32 %v82, %v282
  %v483 = vmax.f32 %v83, %v283
  %v484 = vmax.f32 %v84, %v284
  %v485 = vmax.f32 %v85, %v285
  %v486 = vmax.f32 %v86, %v286
  %v487 = vmax.f32 %v87, %v287
  %v488 = vmax.f32 %v88, %v288
  %v489 = vmax.f32 %v89, %v289
  %v490 = vmax.f32 %v90, %v290
  %v491 = vmax.f32 %v91, %v291
  %v492 = vmax.f32 %v92, %v292
  %v493 = vmax.f32 %v93, %v293
  %v494 = vmax.f32 %v94, %v294
  %v495 = vmax.f32 %v95, %v295
  %v496 = vmax.f32 %v96, %v296
  %v497 = vmax.f32 %v97, %v297
  %v498 = vmax.f32 %v98, %v298
  %v499 = vmax.f32 %v99, %v299
  %v500 = vmax.f32 %v100, %v300
  %v501 = vmax.f32 %v101, %v301
  %v502 = vmax.f32 %v102, %v302
  %v503 = vmax.f32 %v103, %v303
  %v504 = vmax.f32 %v104, %v304
  %v505 = vmax.f32 %v105, %v305
  %v506 = vmax.f32 %v106, %v306
  %v507 = vmax.f32 %v107, %v307
  %v508 = vmax.f32 %v108, %v308
  %v509 = vmax.f32 %v109, %v309
  %v510 = vmax.f32 %v110, %v310
  %v511 = vmax.f32 %v111, %v311
  %v512 = vmax.f32 %v112, %v312
  %v513 = vmax.f32 %v113, %v313
  %v514 = vmax.f32 %v114, %v314
  %v515 = vmax.f32 %v115, %v315
  %v516 = vmax.f32 %v116, %v316
  %v517 = vmax.f32 %v117, %v317
  %v518 = vmax.f32 %v118, %v318
  %v519 = vmax.f32 %v119, %v319
  %v520 = vmax.f32 %v120, %v320
  %v521 = vmax.f32 %v121, %v321
  %v522 = vmax.f32 %v122, %v322
  %v523 = vmax.f32 %v123, %v323
  %v524 = vmax.f32 %v124, %v324
  %v525 = vmax.f32 %v125, %v325
  %v526 = vmax.f32 %v126, %v326
  %v527 = vmax.f32 %v127, %v327
  %v528 = vmax.f32 %v128, %v328
  %v529 = vmax.f32 %v129, %v329
  %v530 = vmax.f32 %v130, %v330
  %v531 = vmax.f32 %v131, %v331
  %v532 = vmax.f32 %v132, %v332
  %v533 = vmax.f32 %v133, %v333
  %v534 = vmax.f32 %v134, %v334
  %v535 = vmax.f32 %v135, %v335
  %v536 = vmax.f32 %v136, %v336
  %v537 = vmax.f32 %v137, %v337
  %v538 = vmax.f32 %v138, %v338
  %v539 = vmax.f32 %v139, %v339
  %v540 = vmax.f32 %v140, %v340
  %v541 = vmax.f32 %v141, %v341
  %v542 = vmax.f32 %v142, %v342
  %v543 = vmax.f32 %v143, %v343
  %v544 = vmax.f32 %v144, %v344
  %v545 = vmax.f32 %v145, %v345
  %v546 = vmax.f32 %v146, %v346
  %v547 = vmax.f32 %v147, %v347
  %v548 = vmax.f32 %v148, %v348
  %v549 = vmax.f32 %v149, %v349
  %v550 = vmax.f32 %v150, %v350
  %v551 = vmax.f32 %v151, %v351
  %v552 = vmax.f32 %v152, %v352
  %v553 = vmax.f32 %v153, %v353
  %v554 = vmax.f32 %v154, %v354
  %v555 = vmax.f32 %v155, %v355
  %v556 = vmax.f32 %v156, %v356
  %v557 = vmax.f32 %v157, %v357
  %v558 = vmax.f32 %v158, %v358
  %v559 = vmax.f32 %v159, %v359
  %v560 = vmax.f32 %v160, %v360
  %v561 = vmax.f32 %v161, %v361
  %v562 = vmax.f32 %v162, %v362
  %v563 = vmax.f32 %v163, %v363
  %v564 = vmax.f32 %v164, %v364
  %v565 = vmax.f32 %v165, %v365
  %v566 = vmax.f32 %v166, %v366
  %v567 = vmax.f32 %v167, %v367
  %v568 = vmax.f32 %v168, %v368
  %v569 = vmax.f32 %v169, %v369
  %v570 = vmax.f32 %v170, %v370
  %v571 = vmax.f32 %v171, %v371
  %v572 = vmax.f32 %v172, %v372
  %v573 = vmax.f32 %v173, %v373
  %v574 = vmax.f32 %v174, %v374
  %v575 = vmax.f32 %v175, %v375
  %v576 = vmax.f32 %v176, %v376
  %v577 = vmax.f32 %v177, %v377
  %v578 = vmax.f32 %v178, %v378
  %v579 = vmax.f32 %v179, %v379
  %v580 = vmax.f32 %v180, %v380
  %v581 = vmax.f32 %v181, %v381
  %v582 = vmax.f32 %v182, %v382
  %v583 = vmax.f32 %v183, %v383
  %v584 = vmax.f32 %v184, %v384
  %v585 = vmax.f32 %v185, %v385
  %v586 = vmax.f32 %v186, %v386
  %v587 = vmax.f32 %v187, %v387
  %v588 = vmax.f32 %v188, %v388
  %v589 = vmax.f32 %v189, %v389
  %v590 = vmax.f32 %v190, %v390
  %v591 = vmax.f32 %v191, %v391
  %v592 = vmax.f32 %v192, %v392
  %v593 = vmax.f32 %v193, %v393
  %v594 = vmax.f32 %v194, %v394
  %v595 = vmax.f32 %v195, %v395
  %v596 = vmax.f32 %v196, %v396
  %v597 = vmax.f32 %v197, %v397
  %v598 = vmax.f32 %v198, %v398
  %v599 = vmax.f32 %v199, %v399
  %v600 = vmax.f32 %v200, %v400
  %v601 = vmax.f32 %v201, %v401
  %v602 = vmax.f32 %v202, %v402
  %v603 = vmax.f32 %v203, %v403
  %v604 = vmax.f32 %v204, %v404
  %v605 = vmax.f32 %v205, %v405
  %v606 = vmax.f32 %v206, %v406
  %v607 = vmax.f32 %v207, %v407
  %v608 = vmax.f32 %v208, %v408
  %v609 = vmax.f32 %v209, %v409
  %v610 = vmax.f32 %v210, %v410
  %v611 = vmax.f32 %v211, %v411
  %v612 = vmax.f32 %v212, %v412
  %v613 = vmax.f32 %v213, %v413
  %s614 = scalar_lea.vmem %s0, 20
  %v615 = vld [vmem:[%s614] sm:$0x1]
  %v616 = vld [vmem:[%s614 + $0x2] sm:$0x1]
  %v617 = vld [vmem:[%s614 + $0x4] sm:$0x1]
  %v618 = vld [vmem:[%s614 + $0x6] sm:$0x1]
  %v619 = vld [vmem:[%s614 + $0x8] sm:$0x1]
  %v620 = vld [vmem:[%s614 + $0xa] sm:$0x1]
  %v621 = vld [vmem:[%s614 + $0xc] sm:$0x1]
  %v622 = vld [vmem:[%s614 + $0xe] sm:$0x1]
  %v623 = vld [vmem:[%s614 + $0x10] sm:$0x1]
  %v624 = vld [vmem:[%s614 + $0x12] sm:$0x1]
  %v625 = vld [vmem:[%s614 + $0x28] sm:$0x1]
  %v626 = vld [vmem:[%s614 + $0x2a] sm:$0x1]
  %v627 = vld [vmem:[%s614 + $0x2c] sm:$0x1]
  %v628 = vld [vmem:[%s614 + $0x2e] sm:$0x1]
  %v629 = vld [vmem:[%s614 + $0x30] sm:$0x1]
  %v630 = vld [vmem:[%s614 + $0x32] sm:$0x1]
  %v631 = vld [vmem:[%s614 + $0x34] sm:$0x1]
  %v632 = vld [vmem:[%s614 + $0x36] sm:$0x1]
  %v633 = vld [vmem:[%s614 + $0x38] sm:$0x1]
  %v634 = vld [vmem:[%s614 + $0x3a] sm:$0x1]
  %v635 = vld [vmem:[%s614 + $0x50] sm:$0x1]
  %v636 = vld [vmem:[%s614 + $0x52] sm:$0x1]
  %v637 = vld [vmem:[%s614 + $0x54] sm:$0x1]
  %v638 = vld [vmem:[%s614 + $0x56] sm:$0x1]
  %v639 = vld [vmem:[%s614 + $0x58] sm:$0x1]
  %v640 = vld [vmem:[%s614 + $0x5a] sm:$0x1]
  %v641 = vld [vmem:[%s614 + $0x5c] sm:$0x1]
  %v642 = vld [vmem:[%s614 + $0x5e] sm:$0x1]
  %v643 = vld [vmem:[%s614 + $0x60] sm:$0x1]
  %v644 = vld [vmem:[%s614 + $0x62] sm:$0x1]
  %v645 = vld [vmem:[%s614 + $0x78] sm:$0x1]
  %v646 = vld [vmem:[%s614 + $0x7a] sm:$0x1]
  %v647 = vld [vmem:[%s614 + $0x7c] sm:$0x1]
  %v648 = vld [vmem:[%s614 + $0x7e] sm:$0x1]
  %v649 = vld [vmem:[%s614 + $0x80] sm:$0x1]
  %v650 = vld [vmem:[%s614 + $0x82] sm:$0x1]
  %v651 = vld [vmem:[%s614 + $0x84] sm:$0x1]
  %v652 = vld [vmem:[%s614 + $0x86] sm:$0x1]
  %v653 = vld [vmem:[%s614 + $0x88] sm:$0x1]
  %v654 = vld [vmem:[%s614 + $0x8a] sm:$0x1]
  %v655 = vld [vmem:[%s614 + $0xa0] sm:$0x1]
  %v656 = vld [vmem:[%s614 + $0xa2] sm:$0x1]
  %v657 = vld [vmem:[%s614 + $0xa4] sm:$0x1]
  %v658 = vld [vmem:[%s614 + $0xa6] sm:$0x1]
  %v659 = vld [vmem:[%s614 + $0xa8] sm:$0x1]
  %v660 = vld [vmem:[%s614 + $0xaa] sm:$0x1]
  %v661 = vld [vmem:[%s614 + $0xac] sm:$0x1]
  %v662 = vld [vmem:[%s614 + $0xae] sm:$0x1]
  %v663 = vld [vmem:[%s614 + $0xb0] sm:$0x1]
  %v664 = vld [vmem:[%s614 + $0xb2] sm:$0x1]
  %v665 = vld [vmem:[%s614 + $0xc8] sm:$0x1]
  %v666 = vld [vmem:[%s614 + $0xca] sm:$0x1]
  %v667 = vld [vmem:[%s614 + $0xcc] sm:$0x1]
  %v668 = vld [vmem:[%s614 + $0xce] sm:$0x1]
  %v669 = vld [vmem:[%s614 + $0xd0] sm:$0x1]
  %v670 = vld [vmem:[%s614 + $0xd2] sm:$0x1]
  %v671 = vld [vmem:[%s614 + $0xd4] sm:$0x1]
  %v672 = vld [vmem:[%s614 + $0xd6] sm:$0x1]
  %v673 = vld [vmem:[%s614 + $0xd8] sm:$0x1]
  %v674 = vld [vmem:[%s614 + $0xda] sm:$0x1]
  %v675 = vld [vmem:[%s614 + $0xf0] sm:$0x1]
  %v676 = vld [vmem:[%s614 + $0xf2] sm:$0x1]
  %v677 = vld [vmem:[%s614 + $0xf4] sm:$0x1]
  %v678 = vld [vmem:[%s614 + $0xf6] sm:$0x1]
  %v679 = vld [vmem:[%s614 + $0xf8] sm:$0x1]
  %v680 = vld [vmem:[%s614 + $0xfa] sm:$0x1]
  %v681 = vld [vmem:[%s614 + $0xfc] sm:$0x1]
  %v682 = vld [vmem:[%s614 + $0xfe] sm:$0x1]
  %v683 = vld [vmem:[%s614 + $0x100] sm:$0x1]
  %v684 = vld [vmem:[%s614 + $0x102] sm:$0x1]
  %v685 = vld [vmem:[%s614 + $0x118] sm:$0x1]
  %v686 = vld [vmem:[%s614 + $0x11a] sm:$0x1]
  %v687 = vld [vmem:[%s614 + $0x11c] sm:$0x1]
  %v688 = vld [vmem:[%s614 + $0x11e] sm:$0x1]
  %v689 = vld [vmem:[%s614 + $0x120] sm:$0x1]
  %v690 = vld [vmem:[%s614 + $0x122] sm:$0x1]
  %v691 = vld [vmem:[%s614 + $0x124] sm:$0x1]
  %v692 = vld [vmem:[%s614 + $0x126] sm:$0x1]
  %v693 = vld [vmem:[%s614 + $0x128] sm:$0x1]
  %v694 = vld [vmem:[%s614 + $0x12a] sm:$0x1]
  %v695 = vld [vmem:[%s614 + $0x140] sm:$0x1]
  %v696 = vld [vmem:[%s614 + $0x142] sm:$0x1]
  %v697 = vld [vmem:[%s614 + $0x144] sm:$0x1]
  %v698 = vld [vmem:[%s614 + $0x146] sm:$0x1]
  %v699 = vld [vmem:[%s614 + $0x148] sm:$0x1]
  %v700 = vld [vmem:[%s614 + $0x14a] sm:$0x1]
  %v701 = vld [vmem:[%s614 + $0x14c] sm:$0x1]
  %v702 = vld [vmem:[%s614 + $0x14e] sm:$0x1]
  %v703 = vld [vmem:[%s614 + $0x150] sm:$0x1]
  %v704 = vld [vmem:[%s614 + $0x152] sm:$0x1]
  %v705 = vld [vmem:[%s614 + $0x168] sm:$0x1]
  %v706 = vld [vmem:[%s614 + $0x16a] sm:$0x1]
  %v707 = vld [vmem:[%s614 + $0x16c] sm:$0x1]
  %v708 = vld [vmem:[%s614 + $0x16e] sm:$0x1]
  %v709 = vld [vmem:[%s614 + $0x170] sm:$0x1]
  %v710 = vld [vmem:[%s614 + $0x172] sm:$0x1]
  %v711 = vld [vmem:[%s614 + $0x174] sm:$0x1]
  %v712 = vld [vmem:[%s614 + $0x176] sm:$0x1]
  %v713 = vld [vmem:[%s614 + $0x178] sm:$0x1]
  %v714 = vld [vmem:[%s614 + $0x17a] sm:$0x1]
  %v715 = vld [vmem:[%s614 + $0x190] sm:$0x1]
  %v716 = vld [vmem:[%s614 + $0x192] sm:$0x1]
  %v717 = vld [vmem:[%s614 + $0x194] sm:$0x1]
  %v718 = vld [vmem:[%s614 + $0x196] sm:$0x1]
  %v719 = vld [vmem:[%s614 + $0x198] sm:$0x1]
  %v720 = vld [vmem:[%s614 + $0x19a] sm:$0x1]
  %v721 = vld [vmem:[%s614 + $0x19c] sm:$0x1]
  %v722 = vld [vmem:[%s614 + $0x19e] sm:$0x1]
  %v723 = vld [vmem:[%s614 + $0x1a0] sm:$0x1]
  %v724 = vld [vmem:[%s614 + $0x1a2] sm:$0x1]
  %v725 = vld [vmem:[%s614 + $0x1b8] sm:$0x1]
  %v726 = vld [vmem:[%s614 + $0x1ba] sm:$0x1]
  %v727 = vld [vmem:[%s614 + $0x1bc] sm:$0x1]
  %v728 = vld [vmem:[%s614 + $0x1be] sm:$0x1]
  %v729 = vld [vmem:[%s614 + $0x1c0] sm:$0x1]
  %v730 = vld [vmem:[%s614 + $0x1c2] sm:$0x1]
  %v731 = vld [vmem:[%s614 + $0x1c4] sm:$0x1]
  %v732 = vld [vmem:[%s614 + $0x1c6] sm:$0x1]
  %v733 = vld [vmem:[%s614 + $0x1c8] sm:$0x1]
  %v734 = vld [vmem:[%s614 + $0x1ca] sm:$0x1]
  %v735 = vld [vmem:[%s614 + $0x1e0] sm:$0x1]
  %v736 = vld [vmem:[%s614 + $0x1e2] sm:$0x1]
  %v737 = vld [vmem:[%s614 + $0x1e4] sm:$0x1]
  %v738 = vld [vmem:[%s614 + $0x1e6] sm:$0x1]
  %v739 = vld [vmem:[%s614 + $0x1e8] sm:$0x1]
  %v740 = vld [vmem:[%s614 + $0x1ea] sm:$0x1]
  %v741 = vld [vmem:[%s614 + $0x1ec] sm:$0x1]
  %v742 = vld [vmem:[%s614 + $0x1ee] sm:$0x1]
  %v743 = vld [vmem:[%s614 + $0x1f0] sm:$0x1]
  %v744 = vld [vmem:[%s614 + $0x1f2] sm:$0x1]
  %v745 = vld [vmem:[%s614 + $0x208] sm:$0x1]
  %v746 = vld [vmem:[%s614 + $0x20a] sm:$0x1]
  %v747 = vld [vmem:[%s614 + $0x20c] sm:$0x1]
  %v748 = vld [vmem:[%s614 + $0x20e] sm:$0x1]
  %v749 = vld [vmem:[%s614 + $0x210] sm:$0x1]
  %v750 = vld [vmem:[%s614 + $0x212] sm:$0x1]
  %v751 = vld [vmem:[%s614 + $0x214] sm:$0x1]
  %v752 = vld [vmem:[%s614 + $0x216] sm:$0x1]
  %v753 = vld [vmem:[%s614 + $0x218] sm:$0x1]
  %v754 = vld [vmem:[%s614 + $0x21a] sm:$0x1]
  %v755 = vld [vmem:[%s614 + $0x230] sm:$0x1]
  %v756 = vld [vmem:[%s614 + $0x232] sm:$0x1]
  %v757 = vld [vmem:[%s614 + $0x234] sm:$0x1]
  %v758 = vld [vmem:[%s614 + $0x236] sm:$0x1]
  %v759 = vld [vmem:[%s614 + $0x238] sm:$0x1]
  %v760 = vld [vmem:[%s614 + $0x23a] sm:$0x1]
  %v761 = vld [vmem:[%s614 + $0x23c] sm:$0x1]
  %v762 = vld [vmem:[%s614 + $0x23e] sm:$0x1]
  %v763 = vld [vmem:[%s614 + $0x240] sm:$0x1]
  %v764 = vld [vmem:[%s614 + $0x242] sm:$0x1]
  %v765 = vld [vmem:[%s614 + $0x258] sm:$0x1]
  %v766 = vld [vmem:[%s614 + $0x25a] sm:$0x1]
  %v767 = vld [vmem:[%s614 + $0x25c] sm:$0x1]
  %v768 = vld [vmem:[%s614 + $0x25e] sm:$0x1]
  %v769 = vld [vmem:[%s614 + $0x260] sm:$0x1]
  %v770 = vld [vmem:[%s614 + $0x262] sm:$0x1]
  %v771 = vld [vmem:[%s614 + $0x264] sm:$0x1]
  %v772 = vld [vmem:[%s614 + $0x266] sm:$0x1]
  %v773 = vld [vmem:[%s614 + $0x268] sm:$0x1]
  %v774 = vld [vmem:[%s614 + $0x26a] sm:$0x1]
  %v775 = vld [vmem:[%s614 + $0x280] sm:$0x1]
  %v776 = vld [vmem:[%s614 + $0x282] sm:$0x1]
  %v777 = vld [vmem:[%s614 + $0x284] sm:$0x1]
  %v778 = vld [vmem:[%s614 + $0x286] sm:$0x1]
  %v779 = vld [vmem:[%s614 + $0x288] sm:$0x1]
  %v780 = vld [vmem:[%s614 + $0x28a] sm:$0x1]
  %v781 = vld [vmem:[%s614 + $0x28c] sm:$0x1]
  %v782 = vld [vmem:[%s614 + $0x28e] sm:$0x1]
  %v783 = vld [vmem:[%s614 + $0x290] sm:$0x1]
  %v784 = vld [vmem:[%s614 + $0x292] sm:$0x1]
  %v785 = vld [vmem:[%s614 + $0x2a8] sm:$0x1]
  %v786 = vld [vmem:[%s614 + $0x2aa] sm:$0x1]
  %v787 = vld [vmem:[%s614 + $0x2ac] sm:$0x1]
  %v788 = vld [vmem:[%s614 + $0x2ae] sm:$0x1]
  %v789 = vld [vmem:[%s614 + $0x2b0] sm:$0x1]
  %v790 = vld [vmem:[%s614 + $0x2b2] sm:$0x1]
  %v791 = vld [vmem:[%s614 + $0x2b4] sm:$0x1]
  %v792 = vld [vmem:[%s614 + $0x2b6] sm:$0x1]
  %v793 = vld [vmem:[%s614 + $0x2b8] sm:$0x1]
  %v794 = vld [vmem:[%s614 + $0x2ba] sm:$0x1]
  %v795 = vld [vmem:[%s614 + $0x2d0] sm:$0x1]
  %v796 = vld [vmem:[%s614 + $0x2d2] sm:$0x1]
  %v797 = vld [vmem:[%s614 + $0x2d4] sm:$0x1]
  %v798 = vld [vmem:[%s614 + $0x2d6] sm:$0x1]
  %v799 = vld [vmem:[%s614 + $0x2d8] sm:$0x1]
  %v800 = vld [vmem:[%s614 + $0x2da] sm:$0x1]
  %v801 = vld [vmem:[%s614 + $0x2dc] sm:$0x1]
  %v802 = vld [vmem:[%s614 + $0x2de] sm:$0x1]
  %v803 = vld [vmem:[%s614 + $0x2e0] sm:$0x1]
  %v804 = vld [vmem:[%s614 + $0x2e2] sm:$0x1]
  %v805 = vld [vmem:[%s614 + $0x2f8] sm:$0x1]
  %v806 = vld [vmem:[%s614 + $0x2fa] sm:$0x1]
  %v807 = vld [vmem:[%s614 + $0x2fc] sm:$0x1]
  %v808 = vld [vmem:[%s614 + $0x2fe] sm:$0x1]
  %v809 = vld [vmem:[%s614 + $0x300] sm:$0x1]
  %v810 = vld [vmem:[%s614 + $0x302] sm:$0x1]
  %v811 = vld [vmem:[%s614 + $0x304] sm:$0x1]
  %v812 = vld [vmem:[%s614 + $0x306] sm:$0x1]
  %v813 = vld [vmem:[%s614 + $0x308] sm:$0x1]
  %v814 = vld [vmem:[%s614 + $0x30a] sm:$0x1]
  %v815 = vld [vmem:[%s614 + $0x1] sm:$0x1]
  %v816 = vld [vmem:[%s614 + $0x3] sm:$0x1]
  %v817 = vld [vmem:[%s614 + $0x5] sm:$0x1]
  %v818 = vld [vmem:[%s614 + $0x7] sm:$0x1]
  %v819 = vld [vmem:[%s614 + $0x9] sm:$0x1]
  %v820 = vld [vmem:[%s614 + $0xb] sm:$0x1]
  %v821 = vld [vmem:[%s614 + $0xd] sm:$0x1]
  %v822 = vld [vmem:[%s614 + $0xf] sm:$0x1]
  %v823 = vld [vmem:[%s614 + $0x11] sm:$0x1]
  %v824 = vld [vmem:[%s614 + $0x13] sm:$0x1]
  %v825 = vld [vmem:[%s614 + $0x29] sm:$0x1]
  %v826 = vld [vmem:[%s614 + $0x2b] sm:$0x1]
  %v827 = vld [vmem:[%s614 + $0x2d] sm:$0x1]
  %v828 = vld [vmem:[%s614 + $0x2f] sm:$0x1]
  %v829 = vld [vmem:[%s614 + $0x31] sm:$0x1]
  %v830 = vld [vmem:[%s614 + $0x33] sm:$0x1]
  %v831 = vld [vmem:[%s614 + $0x35] sm:$0x1]
  %v832 = vld [vmem:[%s614 + $0x37] sm:$0x1]
  %v833 = vld [vmem:[%s614 + $0x39] sm:$0x1]
  %v834 = vld [vmem:[%s614 + $0x3b] sm:$0x1]
  %v835 = vld [vmem:[%s614 + $0x51] sm:$0x1]
  %v836 = vld [vmem:[%s614 + $0x53] sm:$0x1]
  %v837 = vld [vmem:[%s614 + $0x55] sm:$0x1]
  %v838 = vld [vmem:[%s614 + $0x57] sm:$0x1]
  %v839 = vld [vmem:[%s614 + $0x59] sm:$0x1]
  %v840 = vld [vmem:[%s614 + $0x5b] sm:$0x1]
  %v841 = vld [vmem:[%s614 + $0x5d] sm:$0x1]
  %v842 = vld [vmem:[%s614 + $0x5f] sm:$0x1]
  %v843 = vld [vmem:[%s614 + $0x61] sm:$0x1]
  %v844 = vld [vmem:[%s614 + $0x63] sm:$0x1]
  %v845 = vld [vmem:[%s614 + $0x79] sm:$0x1]
  %v846 = vld [vmem:[%s614 + $0x7b] sm:$0x1]
  %v847 = vld [vmem:[%s614 + $0x7d] sm:$0x1]
  %v848 = vld [vmem:[%s614 + $0x7f] sm:$0x1]
  %v849 = vld [vmem:[%s614 + $0x81] sm:$0x1]
  %v850 = vld [vmem:[%s614 + $0x83] sm:$0x1]
  %v851 = vld [vmem:[%s614 + $0x85] sm:$0x1]
  %v852 = vld [vmem:[%s614 + $0x87] sm:$0x1]
  %v853 = vld [vmem:[%s614 + $0x89] sm:$0x1]
  %v854 = vld [vmem:[%s614 + $0x8b] sm:$0x1]
  %v855 = vld [vmem:[%s614 + $0xa1] sm:$0x1]
  %v856 = vld [vmem:[%s614 + $0xa3] sm:$0x1]
  %v857 = vld [vmem:[%s614 + $0xa5] sm:$0x1]
  %v858 = vld [vmem:[%s614 + $0xa7] sm:$0x1]
  %v859 = vld [vmem:[%s614 + $0xa9] sm:$0x1]
  %v860 = vld [vmem:[%s614 + $0xab] sm:$0x1]
  %v861 = vld [vmem:[%s614 + $0xad] sm:$0x1]
  %v862 = vld [vmem:[%s614 + $0xaf] sm:$0x1]
  %v863 = vld [vmem:[%s614 + $0xb1] sm:$0x1]
  %v864 = vld [vmem:[%s614 + $0xb3] sm:$0x1]
  %v865 = vld [vmem:[%s614 + $0xc9] sm:$0x1]
  %v866 = vld [vmem:[%s614 + $0xcb] sm:$0x1]
  %v867 = vld [vmem:[%s614 + $0xcd] sm:$0x1]
  %v868 = vld [vmem:[%s614 + $0xcf] sm:$0x1]
  %v869 = vld [vmem:[%s614 + $0xd1] sm:$0x1]
  %v870 = vld [vmem:[%s614 + $0xd3] sm:$0x1]
  %v871 = vld [vmem:[%s614 + $0xd5] sm:$0x1]
  %v872 = vld [vmem:[%s614 + $0xd7] sm:$0x1]
  %v873 = vld [vmem:[%s614 + $0xd9] sm:$0x1]
  %v874 = vld [vmem:[%s614 + $0xdb] sm:$0x1]
  %v875 = vld [vmem:[%s614 + $0xf1] sm:$0x1]
  %v876 = vld [vmem:[%s614 + $0xf3] sm:$0x1]
  %v877 = vld [vmem:[%s614 + $0xf5] sm:$0x1]
  %v878 = vld [vmem:[%s614 + $0xf7] sm:$0x1]
  %v879 = vld [vmem:[%s614 + $0xf9] sm:$0x1]
  %v880 = vld [vmem:[%s614 + $0xfb] sm:$0x1]
  %v881 = vld [vmem:[%s614 + $0xfd] sm:$0x1]
  %v882 = vld [vmem:[%s614 + $0xff] sm:$0x1]
  %v883 = vld [vmem:[%s614 + $0x101] sm:$0x1]
  %v884 = vld [vmem:[%s614 + $0x103] sm:$0x1]
  %v885 = vld [vmem:[%s614 + $0x119] sm:$0x1]
  %v886 = vld [vmem:[%s614 + $0x11b] sm:$0x1]
  %v887 = vld [vmem:[%s614 + $0x11d] sm:$0x1]
  %v888 = vld [vmem:[%s614 + $0x11f] sm:$0x1]
  %v889 = vld [vmem:[%s614 + $0x121] sm:$0x1]
  %v890 = vld [vmem:[%s614 + $0x123] sm:$0x1]
  %v891 = vld [vmem:[%s614 + $0x125] sm:$0x1]
  %v892 = vld [vmem:[%s614 + $0x127] sm:$0x1]
  %v893 = vld [vmem:[%s614 + $0x129] sm:$0x1]
  %v894 = vld [vmem:[%s614 + $0x12b] sm:$0x1]
  %v895 = vld [vmem:[%s614 + $0x141] sm:$0x1]
  %v896 = vld [vmem:[%s614 + $0x143] sm:$0x1]
  %v897 = vld [vmem:[%s614 + $0x145] sm:$0x1]
  %v898 = vld [vmem:[%s614 + $0x147] sm:$0x1]
  %v899 = vld [vmem:[%s614 + $0x149] sm:$0x1]
  %v900 = vld [vmem:[%s614 + $0x14b] sm:$0x1]
  %v901 = vld [vmem:[%s614 + $0x14d] sm:$0x1]
  %v902 = vld [vmem:[%s614 + $0x14f] sm:$0x1]
  %v903 = vld [vmem:[%s614 + $0x151] sm:$0x1]
  %v904 = vld [vmem:[%s614 + $0x153] sm:$0x1]
  %v905 = vld [vmem:[%s614 + $0x169] sm:$0x1]
  %v906 = vld [vmem:[%s614 + $0x16b] sm:$0x1]
  %v907 = vld [vmem:[%s614 + $0x16d] sm:$0x1]
  %v908 = vld [vmem:[%s614 + $0x16f] sm:$0x1]
  %v909 = vld [vmem:[%s614 + $0x171] sm:$0x1]
  %v910 = vld [vmem:[%s614 + $0x173] sm:$0x1]
  %v911 = vld [vmem:[%s614 + $0x175] sm:$0x1]
  %v912 = vld [vmem:[%s614 + $0x177] sm:$0x1]
  %v913 = vld [vmem:[%s614 + $0x179] sm:$0x1]
  %v914 = vld [vmem:[%s614 + $0x17b] sm:$0x1]
  %v915 = vld [vmem:[%s614 + $0x191] sm:$0x1]
  %v916 = vld [vmem:[%s614 + $0x193] sm:$0x1]
  %v917 = vld [vmem:[%s614 + $0x195] sm:$0x1]
  %v918 = vld [vmem:[%s614 + $0x197] sm:$0x1]
  %v919 = vld [vmem:[%s614 + $0x199] sm:$0x1]
  %v920 = vld [vmem:[%s614 + $0x19b] sm:$0x1]
  %v921 = vld [vmem:[%s614 + $0x19d] sm:$0x1]
  %v922 = vld [vmem:[%s614 + $0x19f] sm:$0x1]
  %v923 = vld [vmem:[%s614 + $0x1a1] sm:$0x1]
  %v924 = vld [vmem:[%s614 + $0x1a3] sm:$0x1]
  %v925 = vld [vmem:[%s614 + $0x1b9] sm:$0x1]
  %v926 = vld [vmem:[%s614 + $0x1bb] sm:$0x1]
  %v927 = vld [vmem:[%s614 + $0x1bd] sm:$0x1]
  %v928 = vld [vmem:[%s614 + $0x1bf] sm:$0x1]
  %v929 = vld [vmem:[%s614 + $0x1c1] sm:$0x1]
  %v930 = vld [vmem:[%s614 + $0x1c3] sm:$0x1]
  %v931 = vld [vmem:[%s614 + $0x1c5] sm:$0x1]
  %v932 = vld [vmem:[%s614 + $0x1c7] sm:$0x1]
  %v933 = vld [vmem:[%s614 + $0x1c9] sm:$0x1]
  %v934 = vld [vmem:[%s614 + $0x1cb] sm:$0x1]
  %v935 = vld [vmem:[%s614 + $0x1e1] sm:$0x1]
  %v936 = vld [vmem:[%s614 + $0x1e3] sm:$0x1]
  %v937 = vld [vmem:[%s614 + $0x1e5] sm:$0x1]
  %v938 = vld [vmem:[%s614 + $0x1e7] sm:$0x1]
  %v939 = vld [vmem:[%s614 + $0x1e9] sm:$0x1]
  %v940 = vld [vmem:[%s614 + $0x1eb] sm:$0x1]
  %v941 = vld [vmem:[%s614 + $0x1ed] sm:$0x1]
  %v942 = vld [vmem:[%s614 + $0x1ef] sm:$0x1]
  %v943 = vld [vmem:[%s614 + $0x1f1] sm:$0x1]
  %v944 = vld [vmem:[%s614 + $0x1f3] sm:$0x1]
  %v945 = vld [vmem:[%s614 + $0x209] sm:$0x1]
  %v946 = vld [vmem:[%s614 + $0x20b] sm:$0x1]
  %v947 = vld [vmem:[%s614 + $0x20d] sm:$0x1]
  %v948 = vld [vmem:[%s614 + $0x20f] sm:$0x1]
  %v949 = vld [vmem:[%s614 + $0x211] sm:$0x1]
  %v950 = vld [vmem:[%s614 + $0x213] sm:$0x1]
  %v951 = vld [vmem:[%s614 + $0x215] sm:$0x1]
  %v952 = vld [vmem:[%s614 + $0x217] sm:$0x1]
  %v953 = vld [vmem:[%s614 + $0x219] sm:$0x1]
  %v954 = vld [vmem:[%s614 + $0x21b] sm:$0x1]
  %v955 = vld [vmem:[%s614 + $0x231] sm:$0x1]
  %v956 = vld [vmem:[%s614 + $0x233] sm:$0x1]
  %v957 = vld [vmem:[%s614 + $0x235] sm:$0x1]
  %v958 = vld [vmem:[%s614 + $0x237] sm:$0x1]
  %v959 = vld [vmem:[%s614 + $0x239] sm:$0x1]
  %v960 = vld [vmem:[%s614 + $0x23b] sm:$0x1]
  %v961 = vld [vmem:[%s614 + $0x23d] sm:$0x1]
  %v962 = vld [vmem:[%s614 + $0x23f] sm:$0x1]
  %v963 = vld [vmem:[%s614 + $0x241] sm:$0x1]
  %v964 = vld [vmem:[%s614 + $0x243] sm:$0x1]
  %v965 = vld [vmem:[%s614 + $0x259] sm:$0x1]
  %v966 = vld [vmem:[%s614 + $0x25b] sm:$0x1]
  %v967 = vld [vmem:[%s614 + $0x25d] sm:$0x1]
  %v968 = vld [vmem:[%s614 + $0x25f] sm:$0x1]
  %v969 = vld [vmem:[%s614 + $0x261] sm:$0x1]
  %v970 = vld [vmem:[%s614 + $0x263] sm:$0x1]
  %v971 = vld [vmem:[%s614 + $0x265] sm:$0x1]
  %v972 = vld [vmem:[%s614 + $0x267] sm:$0x1]
  %v973 = vld [vmem:[%s614 + $0x269] sm:$0x1]
  %v974 = vld [vmem:[%s614 + $0x26b] sm:$0x1]
  %v975 = vld [vmem:[%s614 + $0x281] sm:$0x1]
  %v976 = vld [vmem:[%s614 + $0x283] sm:$0x1]
  %v977 = vld [vmem:[%s614 + $0x285] sm:$0x1]
  %v978 = vld [vmem:[%s614 + $0x287] sm:$0x1]
  %v979 = vld [vmem:[%s614 + $0x289] sm:$0x1]
  %v980 = vld [vmem:[%s614 + $0x28b] sm:$0x1]
  %v981 = vld [vmem:[%s614 + $0x28d] sm:$0x1]
  %v982 = vld [vmem:[%s614 + $0x28f] sm:$0x1]
  %v983 = vld [vmem:[%s614 + $0x291] sm:$0x1]
  %v984 = vld [vmem:[%s614 + $0x293] sm:$0x1]
  %v985 = vld [vmem:[%s614 + $0x2a9] sm:$0x1]
  %v986 = vld [vmem:[%s614 + $0x2ab] sm:$0x1]
  %v987 = vld [vmem:[%s614 + $0x2ad] sm:$0x1]
  %v988 = vld [vmem:[%s614 + $0x2af] sm:$0x1]
  %v989 = vld [vmem:[%s614 + $0x2b1] sm:$0x1]
  %v990 = vld [vmem:[%s614 + $0x2b3] sm:$0x1]
  %v991 = vld [vmem:[%s614 + $0x2b5] sm:$0x1]
  %v992 = vld [vmem:[%s614 + $0x2b7] sm:$0x1]
  %v993 = vld [vmem:[%s614 + $0x2b9] sm:$0x1]
  %v994 = vld [vmem:[%s614 + $0x2bb] sm:$0x1]
  %v995 = vld [vmem:[%s614 + $0x2d1] sm:$0x1]
  %v996 = vld [vmem:[%s614 + $0x2d3] sm:$0x1]
  %v997 = vld [vmem:[%s614 + $0x2d5] sm:$0x1]
  %v998 = vld [vmem:[%s614 + $0x2d7] sm:$0x1]
  %v999 = vld [vmem:[%s614 + $0x2d9] sm:$0x1]
  %v1000 = vld [vmem:[%s614 + $0x2db] sm:$0x1]
  %v1001 = vld [vmem:[%s614 + $0x2dd] sm:$0x1]
  %v1002 = vld [vmem:[%s614 + $0x2df] sm:$0x1]
  %v1003 = vld [vmem:[%s614 + $0x2e1] sm:$0x1]
  %v1004 = vld [vmem:[%s614 + $0x2e3] sm:$0x1]
  %v1005 = vld [vmem:[%s614 + $0x2f9] sm:$0x1]
  %v1006 = vld [vmem:[%s614 + $0x2fb] sm:$0x1]
  %v1007 = vld [vmem:[%s614 + $0x2fd] sm:$0x1]
  %v1008 = vld [vmem:[%s614 + $0x2ff] sm:$0x1]
  %v1009 = vld [vmem:[%s614 + $0x301] sm:$0x1]
  %v1010 = vld [vmem:[%s614 + $0x303] sm:$0x1]
  %v1011 = vld [vmem:[%s614 + $0x305] sm:$0x1]
  %v1012 = vld [vmem:[%s614 + $0x307] sm:$0x1]
  %v1013 = vld [vmem:[%s614 + $0x309] sm:$0x1]
  %v1014 = vld [vmem:[%s614 + $0x30b] sm:$0x1]
  %v1015 = vmax.f32 %v615, %v815
  %v1016 = vmax.f32 %v616, %v816
  %v1017 = vmax.f32 %v617, %v817
  %v1018 = vmax.f32 %v618, %v818
  %v1019 = vmax.f32 %v619, %v819
  %v1020 = vmax.f32 %v620, %v820
  %v1021 = vmax.f32 %v621, %v821
  %v1022 = vmax.f32 %v622, %v822
  %v1023 = vmax.f32 %v623, %v823
  %v1024 = vmax.f32 %v624, %v824
  %v1025 = vmax.f32 %v625, %v825
  %v1026 = vmax.f32 %v626, %v826
  %v1027 = vmax.f32 %v627, %v827
  %v1028 = vmax.f32 %v628, %v828
  %v1029 = vmax.f32 %v629, %v829
  %v1030 = vmax.f32 %v630, %v830
  %v1031 = vmax.f32 %v631, %v831
  %v1032 = vmax.f32 %v632, %v832
  %v1033 = vmax.f32 %v633, %v833
  %v1034 = vmax.f32 %v634, %v834
  %v1035 = vmax.f32 %v635, %v835
  %v1036 = vmax.f32 %v636, %v836
  %v1037 = vmax.f32 %v637, %v837
  %v1038 = vmax.f32 %v638, %v838
  %v1039 = vmax.f32 %v639, %v839
  %v1040 = vmax.f32 %v640, %v840
  %v1041 = vmax.f32 %v641, %v841
  %v1042 = vmax.f32 %v642, %v842
  %v1043 = vmax.f32 %v643, %v843
  %v1044 = vmax.f32 %v644, %v844
  %v1045 = vmax.f32 %v645, %v845
  %v1046 = vmax.f32 %v646, %v846
  %v1047 = vmax.f32 %v647, %v847
  %v1048 = vmax.f32 %v648, %v848
  %v1049 = vmax.f32 %v649, %v849
  %v1050 = vmax.f32 %v650, %v850
  %v1051 = vmax.f32 %v651, %v851
  %v1052 = vmax.f32 %v652, %v852
  %v1053 = vmax.f32 %v653, %v853
  %v1054 = vmax.f32 %v654, %v854
  %v1055 = vmax.f32 %v655, %v855
  %v1056 = vmax.f32 %v656, %v856
  %v1057 = vmax.f32 %v657, %v857
  %v1058 = vmax.f32 %v658, %v858
  %v1059 = vmax.f32 %v659, %v859
  %v1060 = vmax.f32 %v660, %v860
  %v1061 = vmax.f32 %v661, %v861
  %v1062 = vmax.f32 %v662, %v862
  %v1063 = vmax.f32 %v663, %v863
  %v1064 = vmax.f32 %v664, %v864
  %v1065 = vmax.f32 %v665, %v865
  %v1066 = vmax.f32 %v666, %v866
  %v1067 = vmax.f32 %v667, %v867
  %v1068 = vmax.f32 %v668, %v868
  %v1069 = vmax.f32 %v669, %v869
  %v1070 = vmax.f32 %v670, %v870
  %v1071 = vmax.f32 %v671, %v871
  %v1072 = vmax.f32 %v672, %v872
  %v1073 = vmax.f32 %v673, %v873
  %v1074 = vmax.f32 %v674, %v874
  %v1075 = vmax.f32 %v675, %v875
  %v1076 = vmax.f32 %v676, %v876
  %v1077 = vmax.f32 %v677, %v877
  %v1078 = vmax.f32 %v678, %v878
  %v1079 = vmax.f32 %v679, %v879
  %v1080 = vmax.f32 %v680, %v880
  %v1081 = vmax.f32 %v681, %v881
  %v1082 = vmax.f32 %v682, %v882
  %v1083 = vmax.f32 %v683, %v883
  %v1084 = vmax.f32 %v684, %v884
  %v1085 = vmax.f32 %v685, %v885
  %v1086 = vmax.f32 %v686, %v886
  %v1087 = vmax.f32 %v687, %v887
  %v1088 = vmax.f32 %v688, %v888
  %v1089 = vmax.f32 %v689, %v889
  %v1090 = vmax.f32 %v690, %v890
  %v1091 = vmax.f32 %v691, %v891
  %v1092 = vmax.f32 %v692, %v892
  %v1093 = vmax.f32 %v693, %v893
  %v1094 = vmax.f32 %v694, %v894
  %v1095 = vmax.f32 %v695, %v895
  %v1096 = vmax.f32 %v696, %v896
  %v1097 = vmax.f32 %v697, %v897
  %v1098 = vmax.f32 %v698, %v898
  %v1099 = vmax.f32 %v699, %v899
  %v1100 = vmax.f32 %v700, %v900
  %v1101 = vmax.f32 %v701, %v901
  %v1102 = vmax.f32 %v702, %v902
  %v1103 = vmax.f32 %v703, %v903
  %v1104 = vmax.f32 %v704, %v904
  %v1105 = vmax.f32 %v705, %v905
  %v1106 = vmax.f32 %v706, %v906
  %v1107 = vmax.f32 %v707, %v907
  %v1108 = vmax.f32 %v708, %v908
  %v1109 = vmax.f32 %v709, %v909
  %v1110 = vmax.f32 %v710, %v910
  %v1111 = vmax.f32 %v711, %v911
  %v1112 = vmax.f32 %v712, %v912
  %v1113 = vmax.f32 %v713, %v913
  %v1114 = vmax.f32 %v714, %v914
  %v1115 = vmax.f32 %v715, %v915
  %v1116 = vmax.f32 %v716, %v916
  %v1117 = vmax.f32 %v717, %v917
  %v1118 = vmax.f32 %v718, %v918
  %v1119 = vmax.f32 %v719, %v919
  %v1120 = vmax.f32 %v720, %v920
  %v1121 = vmax.f32 %v721, %v921
  %v1122 = vmax.f32 %v722, %v922
  %v1123 = vmax.f32 %v723, %v923
  %v1124 = vmax.f32 %v724, %v924
  %v1125 = vmax.f32 %v725, %v925
  %v1126 = vmax.f32 %v726, %v926
  %v1127 = vmax.f32 %v727, %v927
  %v1128 = vmax.f32 %v728, %v928
  %v1129 = vmax.f32 %v729, %v929
  %v1130 = vmax.f32 %v730, %v930
  %v1131 = vmax.f32 %v731, %v931
  %v1132 = vmax.f32 %v732, %v932
  %v1133 = vmax.f32 %v733, %v933
  %v1134 = vmax.f32 %v734, %v934
  %v1135 = vmax.f32 %v735, %v935
  %v1136 = vmax.f32 %v736, %v936
  %v1137 = vmax.f32 %v737, %v937
  %v1138 = vmax.f32 %v738, %v938
  %v1139 = vmax.f32 %v739, %v939
  %v1140 = vmax.f32 %v740, %v940
  %v1141 = vmax.f32 %v741, %v941
  %v1142 = vmax.f32 %v742, %v942
  %v1143 = vmax.f32 %v743, %v943
  %v1144 = vmax.f32 %v744, %v944
  %v1145 = vmax.f32 %v745, %v945
  %v1146 = vmax.f32 %v746, %v946
  %v1147 = vmax.f32 %v747, %v947
  %v1148 = vmax.f32 %v748, %v948
  %v1149 = vmax.f32 %v749, %v949
  %v1150 = vmax.f32 %v750, %v950
  %v1151 = vmax.f32 %v751, %v951
  %v1152 = vmax.f32 %v752, %v952
  %v1153 = vmax.f32 %v753, %v953
  %v1154 = vmax.f32 %v754, %v954
  %v1155 = vmax.f32 %v755, %v955
  %v1156 = vmax.f32 %v756, %v956
  %v1157 = vmax.f32 %v757, %v957
  %v1158 = vmax.f32 %v758, %v958
  %v1159 = vmax.f32 %v759, %v959
  %v1160 = vmax.f32 %v760, %v960
  %v1161 = vmax.f32 %v761, %v961
  %v1162 = vmax.f32 %v762, %v962
  %v1163 = vmax.f32 %v763, %v963
  %v1164 = vmax.f32 %v764, %v964
  %v1165 = vmax.f32 %v765, %v965
  %v1166 = vmax.f32 %v766, %v966
  %v1167 = vmax.f32 %v767, %v967
  %v1168 = vmax.f32 %v768, %v968
  %v1169 = vmax.f32 %v769, %v969
  %v1170 = vmax.f32 %v770, %v970
  %v1171 = vmax.f32 %v771, %v971
  %v1172 = vmax.f32 %v772, %v972
  %v1173 = vmax.f32 %v773, %v973
  %v1174 = vmax.f32 %v774, %v974
  %v1175 = vmax.f32 %v775, %v975
  %v1176 = vmax.f32 %v776, %v976
  %v1177 = vmax.f32 %v777, %v977
  %v1178 = vmax.f32 %v778, %v978
  %v1179 = vmax.f32 %v779, %v979
  %v1180 = vmax.f32 %v780, %v980
  %v1181 = vmax.f32 %v781, %v981
  %v1182 = vmax.f32 %v782, %v982
  %v1183 = vmax.f32 %v783, %v983
  %v1184 = vmax.f32 %v784, %v984
  %v1185 = vmax.f32 %v785, %v985
  %v1186 = vmax.f32 %v786, %v986
  %v1187 = vmax.f32 %v787, %v987
  %v1188 = vmax.f32 %v788, %v988
  %v1189 = vmax.f32 %v789, %v989
  %v1190 = vmax.f32 %v790, %v990
  %v1191 = vmax.f32 %v791, %v991
  %v1192 = vmax.f32 %v792, %v992
  %v1193 = vmax.f32 %v793, %v993
  %v1194 = vmax.f32 %v794, %v994
  %v1195 = vmax.f32 %v795, %v995
  %v1196 = vmax.f32 %v796, %v996
  %v1197 = vmax.f32 %v797, %v997
  %v1198 = vmax.f32 %v798, %v998
  %v1199 = vmax.f32 %v799, %v999
  %v1200 = vmax.f32 %v800, %v1000
  %v1201 = vmax.f32 %v801, %v1001
  %v1202 = vmax.f32 %v802, %v1002
  %v1203 = vmax.f32 %v803, %v1003
  %v1204 = vmax.f32 %v804, %v1004
  %v1205 = vmax.f32 %v805, %v1005
  %v1206 = vmax.f32 %v806, %v1006
  %v1207 = vmax.f32 %v807, %v1007
  %v1208 = vmax.f32 %v808, %v1008
  %v1209 = vmax.f32 %v809, %v1009
  %v1210 = vmax.f32 %v810, %v1010
  %v1211 = vmax.f32 %v811, %v1011
  %v1212 = vmax.f32 %v812, %v1012
  %v1213 = vmax.f32 %v813, %v1013
  %v1214 = vmax.f32 %v814, %v1014
  %v1215 = vmax.f32 %v414, %v1015
  %v1216 = vmax.f32 %v415, %v1016
  %v1217 = vmax.f32 %v416, %v1017
  %v1218 = vmax.f32 %v417, %v1018
  %v1219 = vmax.f32 %v418, %v1019
  %v1220 = vmax.f32 %v419, %v1020
  %v1221 = vmax.f32 %v420, %v1021
  %v1222 = vmax.f32 %v421, %v1022
  %v1223 = vmax.f32 %v422, %v1023
  %v1224 = vmax.f32 %v423, %v1024
  %v1225 = vmax.f32 %v424, %v1025
  %v1226 = vmax.f32 %v425, %v1026
  %v1227 = vmax.f32 %v426, %v1027
  %v1228 = vmax.f32 %v427, %v1028
  %v1229 = vmax.f32 %v428, %v1029
  %v1230 = vmax.f32 %v429, %v1030
  %v1231 = vmax.f32 %v430, %v1031
  %v1232 = vmax.f32 %v431, %v1032
  %v1233 = vmax.f32 %v432, %v1033
  %v1234 = vmax.f32 %v433, %v1034
  %v1235 = vmax.f32 %v434, %v1035
  %v1236 = vmax.f32 %v435, %v1036
  %v1237 = vmax.f32 %v436, %v1037
  %v1238 = vmax.f32 %v437, %v1038
  %v1239 = vmax.f32 %v438, %v1039
  %v1240 = vmax.f32 %v439, %v1040
  %v1241 = vmax.f32 %v440, %v1041
  %v1242 = vmax.f32 %v441, %v1042
  %v1243 = vmax.f32 %v442, %v1043
  %v1244 = vmax.f32 %v443, %v1044
  %v1245 = vmax.f32 %v444, %v1045
  %v1246 = vmax.f32 %v445, %v1046
  %v1247 = vmax.f32 %v446, %v1047
  %v1248 = vmax.f32 %v447, %v1048
  %v1249 = vmax.f32 %v448, %v1049
  %v1250 = vmax.f32 %v449, %v1050
  %v1251 = vmax.f32 %v450, %v1051
  %v1252 = vmax.f32 %v451, %v1052
  %v1253 = vmax.f32 %v452, %v1053
  %v1254 = vmax.f32 %v453, %v1054
  %v1255 = vmax.f32 %v454, %v1055
  %v1256 = vmax.f32 %v455, %v1056
  %v1257 = vmax.f32 %v456, %v1057
  %v1258 = vmax.f32 %v457, %v1058
  %v1259 = vmax.f32 %v458, %v1059
  %v1260 = vmax.f32 %v459, %v1060
  %v1261 = vmax.f32 %v460, %v1061
  %v1262 = vmax.f32 %v461, %v1062
  %v1263 = vmax.f32 %v462, %v1063
  %v1264 = vmax.f32 %v463, %v1064
  %v1265 = vmax.f32 %v464, %v1065
  %v1266 = vmax.f32 %v465, %v1066
  %v1267 = vmax.f32 %v466, %v1067
  %v1268 = vmax.f32 %v467, %v1068
  %v1269 = vmax.f32 %v468, %v1069
  %v1270 = vmax.f32 %v469, %v1070
  %v1271 = vmax.f32 %v470, %v1071
  %v1272 = vmax.f32 %v471, %v1072
  %v1273 = vmax.f32 %v472, %v1073
  %v1274 = vmax.f32 %v473, %v1074
  %v1275 = vmax.f32 %v474, %v1075
  %v1276 = vmax.f32 %v475, %v1076
  %v1277 = vmax.f32 %v476, %v1077
  %v1278 = vmax.f32 %v477, %v1078
  %v1279 = vmax.f32 %v478, %v1079
  %v1280 = vmax.f32 %v479, %v1080
  %v1281 = vmax.f32 %v480, %v1081
  %v1282 = vmax.f32 %v481, %v1082
  %v1283 = vmax.f32 %v482, %v1083
  %v1284 = vmax.f32 %v483, %v1084
  %v1285 = vmax.f32 %v484, %v1085
  %v1286 = vmax.f32 %v485, %v1086
  %v1287 = vmax.f32 %v486, %v1087
  %v1288 = vmax.f32 %v487, %v1088
  %v1289 = vmax.f32 %v488, %v1089
  %v1290 = vmax.f32 %v489, %v1090
  %v1291 = vmax.f32 %v490, %v1091
  %v1292 = vmax.f32 %v491, %v1092
  %v1293 = vmax.f32 %v492, %v1093
  %v1294 = vmax.f32 %v493, %v1094
  %v1295 = vmax.f32 %v494, %v1095
  %v1296 = vmax.f32 %v495, %v1096
  %v1297 = vmax.f32 %v496, %v1097
  %v1298 = vmax.f32 %v497, %v1098
  %v1299 = vmax.f32 %v498, %v1099
  %v1300 = vmax.f32 %v499, %v1100
  %v1301 = vmax.f32 %v500, %v1101
  %v1302 = vmax.f32 %v501, %v1102
  %v1303 = vmax.f32 %v502, %v1103
  %v1304 = vmax.f32 %v503, %v1104
  %v1305 = vmax.f32 %v504, %v1105
  %v1306 = vmax.f32 %v505, %v1106
  %v1307 = vmax.f32 %v506, %v1107
  %v1308 = vmax.f32 %v507, %v1108
  %v1309 = vmax.f32 %v508, %v1109
  %v1310 = vmax.f32 %v509, %v1110
  %v1311 = vmax.f32 %v510, %v1111
  %v1312 = vmax.f32 %v511, %v1112
  %v1313 = vmax.f32 %v512, %v1113
  %v1314 = vmax.f32 %v513, %v1114
  %v1315 = vmax.f32 %v514, %v1115
  %v1316 = vmax.f32 %v515, %v1116
  %v1317 = vmax.f32 %v516, %v1117
  %v1318 = vmax.f32 %v517, %v1118
  %v1319 = vmax.f32 %v518, %v1119
  %v1320 = vmax.f32 %v519, %v1120
  %v1321 = vmax.f32 %v520, %v1121
  %v1322 = vmax.f32 %v521, %v1122
  %v1323 = vmax.f32 %v522, %v1123
  %v1324 = vmax.f32 %v523, %v1124
  %v1325 = vmax.f32 %v524, %v1125
  %v1326 = vmax.f32 %v525, %v1126
  %v1327 = vmax.f32 %v526, %v1127
  %v1328 = vmax.f32 %v527, %v1128
  %v1329 = vmax.f32 %v528, %v1129
  %v1330 = vmax.f32 %v529, %v1130
  %v1331 = vmax.f32 %v530, %v1131
  %v1332 = vmax.f32 %v531, %v1132
  %v1333 = vmax.f32 %v532, %v1133
  %v1334 = vmax.f32 %v533, %v1134
  %v1335 = vmax.f32 %v534, %v1135
  %v1336 = vmax.f32 %v535, %v1136
  %v1337 = vmax.f32 %v536, %v1137
  %v1338 = vmax.f32 %v537, %v1138
  %v1339 = vmax.f32 %v538, %v1139
  %v1340 = vmax.f32 %v539, %v1140
  %v1341 = vmax.f32 %v540, %v1141
  %v1342 = vmax.f32 %v541, %v1142
  %v1343 = vmax.f32 %v542, %v1143
  %v1344 = vmax.f32 %v543, %v1144
  %v1345 = vmax.f32 %v544, %v1145
  %v1346 = vmax.f32 %v545, %v1146
  %v1347 = vmax.f32 %v546, %v1147
  %v1348 = vmax.f32 %v547, %v1148
  %v1349 = vmax.f32 %v548, %v1149
  %v1350 = vmax.f32 %v549, %v1150
  %v1351 = vmax.f32 %v550, %v1151
  %v1352 = vmax.f32 %v551, %v1152
  %v1353 = vmax.f32 %v552, %v1153
  %v1354 = vmax.f32 %v553, %v1154
  %v1355 = vmax.f32 %v554, %v1155
  %v1356 = vmax.f32 %v555, %v1156
  %v1357 = vmax.f32 %v556, %v1157
  %v1358 = vmax.f32 %v557, %v1158
  %v1359 = vmax.f32 %v558, %v1159
  %v1360 = vmax.f32 %v559, %v1160
  %v1361 = vmax.f32 %v560, %v1161
  %v1362 = vmax.f32 %v561, %v1162
  %v1363 = vmax.f32 %v562, %v1163
  %v1364 = vmax.f32 %v563, %v1164
  %v1365 = vmax.f32 %v564, %v1165
  %v1366 = vmax.f32 %v565, %v1166
  %v1367 = vmax.f32 %v566, %v1167
  %v1368 = vmax.f32 %v567, %v1168
  %v1369 = vmax.f32 %v568, %v1169
  %v1370 = vmax.f32 %v569, %v1170
  %v1371 = vmax.f32 %v570, %v1171
  %v1372 = vmax.f32 %v571, %v1172
  %v1373 = vmax.f32 %v572, %v1173
  %v1374 = vmax.f32 %v573, %v1174
  %v1375 = vmax.f32 %v574, %v1175
  %v1376 = vmax.f32 %v575, %v1176
  %v1377 = vmax.f32 %v576, %v1177
  %v1378 = vmax.f32 %v577, %v1178
  %v1379 = vmax.f32 %v578, %v1179
  %v1380 = vmax.f32 %v579, %v1180
  %v1381 = vmax.f32 %v580, %v1181
  %v1382 = vmax.f32 %v581, %v1182
  %v1383 = vmax.f32 %v582, %v1183
  %v1384 = vmax.f32 %v583, %v1184
  %v1385 = vmax.f32 %v584, %v1185
  %v1386 = vmax.f32 %v585, %v1186
  %v1387 = vmax.f32 %v586, %v1187
  %v1388 = vmax.f32 %v587, %v1188
  %v1389 = vmax.f32 %v588, %v1189
  %v1390 = vmax.f32 %v589, %v1190
  %v1391 = vmax.f32 %v590, %v1191
  %v1392 = vmax.f32 %v591, %v1192
  %v1393 = vmax.f32 %v592, %v1193
  %v1394 = vmax.f32 %v593, %v1194
  %v1395 = vmax.f32 %v594, %v1195
  %v1396 = vmax.f32 %v595, %v1196
  %v1397 = vmax.f32 %v596, %v1197
  %v1398 = vmax.f32 %v597, %v1198
  %v1399 = vmax.f32 %v598, %v1199
  %v1400 = vmax.f32 %v599, %v1200
  %v1401 = vmax.f32 %v600, %v1201
  %v1402 = vmax.f32 %v601, %v1202
  %v1403 = vmax.f32 %v602, %v1203
  %v1404 = vmax.f32 %v603, %v1204
  %v1405 = vmax.f32 %v604, %v1205
  %v1406 = vmax.f32 %v605, %v1206
  %v1407 = vmax.f32 %v606, %v1207
  %v1408 = vmax.f32 %v607, %v1208
  %v1409 = vmax.f32 %v608, %v1209
  %v1410 = vmax.f32 %v609, %v1210
  %v1411 = vmax.f32 %v610, %v1211
  %v1412 = vmax.f32 %v611, %v1212
  %v1413 = vmax.f32 %v612, %v1213
  %v1414 = vmax.f32 %v613, %v1214
  %v1543 = vrot.slane %v1216, 7
  %vm1544 = vcmask 1041409
  %v1545 = vsel %vm1544, %v1543, %v1215
  %v1546 = vrot.slane %v1217, 6
  %vm1547 = vcmask 1042434
  %v1548 = vsel %vm1547, %v1546, %v1545
  %v1549 = vrot.slane %v1218, 5
  %vm1550 = vcmask 1043459
  %v1551 = vsel %vm1550, %v1549, %v1548
  %v1552 = vrot.slane %v1219, 4
  %vm1553 = vcmask 1044484
  %v1554 = vsel %vm1553, %v1552, %v1551
  %v1555 = vrot.slane %v1220, 3
  %vm1556 = vcmask 1045509
  %v1557 = vsel %vm1556, %v1555, %v1554
  %v1558 = vrot.slane %v1221, 2
  %vm1559 = vcmask 1046534
  %v1560 = vsel %vm1559, %v1558, %v1557
  %v1561 = vrot.slane %v1222, 1
  %vm1562 = vcmask 1047559
  %v1563 = vsel %vm1562, %v1561, %v1560
  %v1564 = vrot.slane %v1226, 7
  %v1565 = vsel %vm1544, %v1564, %v1225
  %v1566 = vrot.slane %v1227, 6
  %v1567 = vsel %vm1547, %v1566, %v1565
  %v1568 = vrot.slane %v1228, 5
  %v1569 = vsel %vm1550, %v1568, %v1567
  %v1570 = vrot.slane %v1229, 4
  %v1571 = vsel %vm1553, %v1570, %v1569
  %v1572 = vrot.slane %v1230, 3
  %v1573 = vsel %vm1556, %v1572, %v1571
  %v1574 = vrot.slane %v1231, 2
  %v1575 = vsel %vm1559, %v1574, %v1573
  %v1576 = vrot.slane %v1232, 1
  %v1577 = vsel %vm1562, %v1576, %v1575
  %v1578 = vrot.slane %v1236, 7
  %v1579 = vsel %vm1544, %v1578, %v1235
  %v1580 = vrot.slane %v1237, 6
  %v1581 = vsel %vm1547, %v1580, %v1579
  %v1582 = vrot.slane %v1238, 5
  %v1583 = vsel %vm1550, %v1582, %v1581
  %v1584 = vrot.slane %v1239, 4
  %v1585 = vsel %vm1553, %v1584, %v1583
  %v1586 = vrot.slane %v1240, 3
  %v1587 = vsel %vm1556, %v1586, %v1585
  %v1588 = vrot.slane %v1241, 2
  %v1589 = vsel %vm1559, %v1588, %v1587
  %v1590 = vrot.slane %v1242, 1
  %v1591 = vsel %vm1562, %v1590, %v1589
  %v1592 = vrot.slane %v1246, 7
  %v1593 = vsel %vm1544, %v1592, %v1245
  %v1594 = vrot.slane %v1247, 6
  %v1595 = vsel %vm1547, %v1594, %v1593
  %v1596 = vrot.slane %v1248, 5
  %v1597 = vsel %vm1550, %v1596, %v1595
  %v1598 = vrot.slane %v1249, 4
  %v1599 = vsel %vm1553, %v1598, %v1597
  %v1600 = vrot.slane %v1250, 3
  %v1601 = vsel %vm1556, %v1600, %v1599
  %v1602 = vrot.slane %v1251, 2
  %v1603 = vsel %vm1559, %v1602, %v1601
  %v1604 = vrot.slane %v1252, 1
  %v1605 = vsel %vm1562, %v1604, %v1603
  %v1606 = vrot.slane %v1256, 7
  %v1607 = vsel %vm1544, %v1606, %v1255
  %v1608 = vrot.slane %v1257, 6
  %v1609 = vsel %vm1547, %v1608, %v1607
  %v1610 = vrot.slane %v1258, 5
  %v1611 = vsel %vm1550, %v1610, %v1609
  %v1612 = vrot.slane %v1259, 4
  %v1613 = vsel %vm1553, %v1612, %v1611
  %v1614 = vrot.slane %v1260, 3
  %v1615 = vsel %vm1556, %v1614, %v1613
  %v1616 = vrot.slane %v1261, 2
  %v1617 = vsel %vm1559, %v1616, %v1615
  %v1618 = vrot.slane %v1262, 1
  %v1619 = vsel %vm1562, %v1618, %v1617
  %v1620 = vrot.slane %v1266, 7
  %v1621 = vsel %vm1544, %v1620, %v1265
  %v1622 = vrot.slane %v1267, 6
  %v1623 = vsel %vm1547, %v1622, %v1621
  %v1624 = vrot.slane %v1268, 5
  %v1625 = vsel %vm1550, %v1624, %v1623
  %v1626 = vrot.slane %v1269, 4
  %v1627 = vsel %vm1553, %v1626, %v1625
  %v1628 = vrot.slane %v1270, 3
  %v1629 = vsel %vm1556, %v1628, %v1627
  %v1630 = vrot.slane %v1271, 2
  %v1631 = vsel %vm1559, %v1630, %v1629
  %v1632 = vrot.slane %v1272, 1
  %v1633 = vsel %vm1562, %v1632, %v1631
  %v1634 = vrot.slane %v1276, 7
  %v1635 = vsel %vm1544, %v1634, %v1275
  %v1636 = vrot.slane %v1277, 6
  %v1637 = vsel %vm1547, %v1636, %v1635
  %v1638 = vrot.slane %v1278, 5
  %v1639 = vsel %vm1550, %v1638, %v1637
  %v1640 = vrot.slane %v1279, 4
  %v1641 = vsel %vm1553, %v1640, %v1639
  %v1642 = vrot.slane %v1280, 3
  %v1643 = vsel %vm1556, %v1642, %v1641
  %v1644 = vrot.slane %v1281, 2
  %v1645 = vsel %vm1559, %v1644, %v1643
  %v1646 = vrot.slane %v1282, 1
  %v1647 = vsel %vm1562, %v1646, %v1645
  %v1648 = vrot.slane %v1286, 7
  %v1649 = vsel %vm1544, %v1648, %v1285
  %v1650 = vrot.slane %v1287, 6
  %v1651 = vsel %vm1547, %v1650, %v1649
  %v1652 = vrot.slane %v1288, 5
  %v1653 = vsel %vm1550, %v1652, %v1651
  %v1654 = vrot.slane %v1289, 4
  %v1655 = vsel %vm1553, %v1654, %v1653
  %v1656 = vrot.slane %v1290, 3
  %v1657 = vsel %vm1556, %v1656, %v1655
  %v1658 = vrot.slane %v1291, 2
  %v1659 = vsel %vm1559, %v1658, %v1657
  %v1660 = vrot.slane %v1292, 1
  %v1661 = vsel %vm1562, %v1660, %v1659
  %v1662 = vrot.slane %v1316, 7
  %v1663 = vsel %vm1544, %v1662, %v1315
  %v1664 = vrot.slane %v1317, 6
  %v1665 = vsel %vm1547, %v1664, %v1663
  %v1666 = vrot.slane %v1318, 5
  %v1667 = vsel %vm1550, %v1666, %v1665
  %v1668 = vrot.slane %v1319, 4
  %v1669 = vsel %vm1553, %v1668, %v1667
  %v1670 = vrot.slane %v1320, 3
  %v1671 = vsel %vm1556, %v1670, %v1669
  %v1672 = vrot.slane %v1321, 2
  %v1673 = vsel %vm1559, %v1672, %v1671
  %v1674 = vrot.slane %v1322, 1
  %v1675 = vsel %vm1562, %v1674, %v1673
  %v1676 = vrot.slane %v1326, 7
  %v1677 = vsel %vm1544, %v1676, %v1325
  %v1678 = vrot.slane %v1327, 6
  %v1679 = vsel %vm1547, %v1678, %v1677
  %v1680 = vrot.slane %v1328, 5
  %v1681 = vsel %vm1550, %v1680, %v1679
  %v1682 = vrot.slane %v1329, 4
  %v1683 = vsel %vm1553, %v1682, %v1681
  %v1684 = vrot.slane %v1330, 3
  %v1685 = vsel %vm1556, %v1684, %v1683
  %v1686 = vrot.slane %v1331, 2
  %v1687 = vsel %vm1559, %v1686, %v1685
  %v1688 = vrot.slane %v1332, 1
  %v1689 = vsel %vm1562, %v1688, %v1687
  %v1690 = vrot.slane %v1336, 7
  %v1691 = vsel %vm1544, %v1690, %v1335
  %v1692 = vrot.slane %v1337, 6
  %v1693 = vsel %vm1547, %v1692, %v1691
  %v1694 = vrot.slane %v1338, 5
  %v1695 = vsel %vm1550, %v1694, %v1693
  %v1696 = vrot.slane %v1339, 4
  %v1697 = vsel %vm1553, %v1696, %v1695
  %v1698 = vrot.slane %v1340, 3
  %v1699 = vsel %vm1556, %v1698, %v1697
  %v1700 = vrot.slane %v1341, 2
  %v1701 = vsel %vm1559, %v1700, %v1699
  %v1702 = vrot.slane %v1342, 1
  %v1703 = vsel %vm1562, %v1702, %v1701
  %v1704 = vrot.slane %v1346, 7
  %v1705 = vsel %vm1544, %v1704, %v1345
  %v1706 = vrot.slane %v1347, 6
  %v1707 = vsel %vm1547, %v1706, %v1705
  %v1708 = vrot.slane %v1348, 5
  %v1709 = vsel %vm1550, %v1708, %v1707
  %v1710 = vrot.slane %v1349, 4
  %v1711 = vsel %vm1553, %v1710, %v1709
  %v1712 = vrot.slane %v1350, 3
  %v1713 = vsel %vm1556, %v1712, %v1711
  %v1714 = vrot.slane %v1351, 2
  %v1715 = vsel %vm1559, %v1714, %v1713
  %v1716 = vrot.slane %v1352, 1
  %v1717 = vsel %vm1562, %v1716, %v1715
  %v1718 = vrot.slane %v1356, 7
  %v1719 = vsel %vm1544, %v1718, %v1355
  %v1720 = vrot.slane %v1357, 6
  %v1721 = vsel %vm1547, %v1720, %v1719
  %v1722 = vrot.slane %v1358, 5
  %v1723 = vsel %vm1550, %v1722, %v1721
  %v1724 = vrot.slane %v1359, 4
  %v1725 = vsel %vm1553, %v1724, %v1723
  %v1726 = vrot.slane %v1360, 3
  %v1727 = vsel %vm1556, %v1726, %v1725
  %v1728 = vrot.slane %v1361, 2
  %v1729 = vsel %vm1559, %v1728, %v1727
  %v1730 = vrot.slane %v1362, 1
  %v1731 = vsel %vm1562, %v1730, %v1729
  %v1732 = vrot.slane %v1366, 7
  %v1733 = vsel %vm1544, %v1732, %v1365
  %v1734 = vrot.slane %v1367, 6
  %v1735 = vsel %vm1547, %v1734, %v1733
  %v1736 = vrot.slane %v1368, 5
  %v1737 = vsel %vm1550, %v1736, %v1735
  %v1738 = vrot.slane %v1369, 4
  %v1739 = vsel %vm1553, %v1738, %v1737
  %v1740 = vrot.slane %v1370, 3
  %v1741 = vsel %vm1556, %v1740, %v1739
  %v1742 = vrot.slane %v1371, 2
  %v1743 = vsel %vm1559, %v1742, %v1741
  %v1744 = vrot.slane %v1372, 1
  %v1745 = vsel %vm1562, %v1744, %v1743
  %v1746 = vrot.slane %v1376, 7
  %v1747 = vsel %vm1544, %v1746, %v1375
  %v1748 = vrot.slane %v1377, 6
  %v1749 = vsel %vm1547, %v1748, %v1747
  %v1750 = vrot.slane %v1378, 5
  %v1751 = vsel %vm1550, %v1750, %v1749
  %v1752 = vrot.slane %v1379, 4
  %v1753 = vsel %vm1553, %v1752, %v1751
  %v1754 = vrot.slane %v1380, 3
  %v1755 = vsel %vm1556, %v1754, %v1753
  %v1756 = vrot.slane %v1381, 2
  %v1757 = vsel %vm1559, %v1756, %v1755
  %v1758 = vrot.slane %v1382, 1
  %v1759 = vsel %vm1562, %v1758, %v1757
  %v1760 = vrot.slane %v1386, 7
  %v1761 = vsel %vm1544, %v1760, %v1385
  %v1762 = vrot.slane %v1387, 6
  %v1763 = vsel %vm1547, %v1762, %v1761
  %v1764 = vrot.slane %v1388, 5
  %v1765 = vsel %vm1550, %v1764, %v1763
  %v1766 = vrot.slane %v1389, 4
  %v1767 = vsel %vm1553, %v1766, %v1765
  %v1768 = vrot.slane %v1390, 3
  %v1769 = vsel %vm1556, %v1768, %v1767
  %v1770 = vrot.slane %v1391, 2
  %v1771 = vsel %vm1559, %v1770, %v1769
  %v1772 = vrot.slane %v1392, 1
  %v1773 = vsel %vm1562, %v1772, %v1771
  %v1806 = vrot.slane %v1217, 7
  %v1807 = vsel %vm1544, %v1806, %v1216
  %v1808 = vrot.slane %v1218, 6
  %v1809 = vsel %vm1547, %v1808, %v1807
  %v1810 = vrot.slane %v1219, 5
  %v1811 = vsel %vm1550, %v1810, %v1809
  %v1812 = vrot.slane %v1220, 4
  %v1813 = vsel %vm1553, %v1812, %v1811
  %v1814 = vrot.slane %v1221, 3
  %v1815 = vsel %vm1556, %v1814, %v1813
  %v1816 = vrot.slane %v1222, 2
  %v1817 = vsel %vm1559, %v1816, %v1815
  %v1818 = vrot.slane %v1223, 1
  %v1819 = vsel %vm1562, %v1818, %v1817
  %v1820 = vrot.slane %v1227, 7
  %v1821 = vsel %vm1544, %v1820, %v1226
  %v1822 = vrot.slane %v1228, 6
  %v1823 = vsel %vm1547, %v1822, %v1821
  %v1824 = vrot.slane %v1229, 5
  %v1825 = vsel %vm1550, %v1824, %v1823
  %v1826 = vrot.slane %v1230, 4
  %v1827 = vsel %vm1553, %v1826, %v1825
  %v1828 = vrot.slane %v1231, 3
  %v1829 = vsel %vm1556, %v1828, %v1827
  %v1830 = vrot.slane %v1232, 2
  %v1831 = vsel %vm1559, %v1830, %v1829
  %v1832 = vrot.slane %v1233, 1
  %v1833 = vsel %vm1562, %v1832, %v1831
  %v1834 = vrot.slane %v1237, 7
  %v1835 = vsel %vm1544, %v1834, %v1236
  %v1836 = vrot.slane %v1238, 6
  %v1837 = vsel %vm1547, %v1836, %v1835
  %v1838 = vrot.slane %v1239, 5
  %v1839 = vsel %vm1550, %v1838, %v1837
  %v1840 = vrot.slane %v1240, 4
  %v1841 = vsel %vm1553, %v1840, %v1839
  %v1842 = vrot.slane %v1241, 3
  %v1843 = vsel %vm1556, %v1842, %v1841
  %v1844 = vrot.slane %v1242, 2
  %v1845 = vsel %vm1559, %v1844, %v1843
  %v1846 = vrot.slane %v1243, 1
  %v1847 = vsel %vm1562, %v1846, %v1845
  %v1848 = vrot.slane %v1247, 7
  %v1849 = vsel %vm1544, %v1848, %v1246
  %v1850 = vrot.slane %v1248, 6
  %v1851 = vsel %vm1547, %v1850, %v1849
  %v1852 = vrot.slane %v1249, 5
  %v1853 = vsel %vm1550, %v1852, %v1851
  %v1854 = vrot.slane %v1250, 4
  %v1855 = vsel %vm1553, %v1854, %v1853
  %v1856 = vrot.slane %v1251, 3
  %v1857 = vsel %vm1556, %v1856, %v1855
  %v1858 = vrot.slane %v1252, 2
  %v1859 = vsel %vm1559, %v1858, %v1857
  %v1860 = vrot.slane %v1253, 1
  %v1861 = vsel %vm1562, %v1860, %v1859
  %v1862 = vrot.slane %v1257, 7
  %v1863 = vsel %vm1544, %v1862, %v1256
  %v1864 = vrot.slane %v1258, 6
  %v1865 = vsel %vm1547, %v1864, %v1863
  %v1866 = vrot.slane %v1259, 5
  %v1867 = vsel %vm1550, %v1866, %v1865
  %v1868 = vrot.slane %v1260, 4
  %v1869 = vsel %vm1553, %v1868, %v1867
  %v1870 = vrot.slane %v1261, 3
  %v1871 = vsel %vm1556, %v1870, %v1869
  %v1872 = vrot.slane %v1262, 2
  %v1873 = vsel %vm1559, %v1872, %v1871
  %v1874 = vrot.slane %v1263, 1
  %v1875 = vsel %vm1562, %v1874, %v1873
  %v1876 = vrot.slane %v1267, 7
  %v1877 = vsel %vm1544, %v1876, %v1266
  %v1878 = vrot.slane %v1268, 6
  %v1879 = vsel %vm1547, %v1878, %v1877
  %v1880 = vrot.slane %v1269, 5
  %v1881 = vsel %vm1550, %v1880, %v1879
  %v1882 = vrot.slane %v1270, 4
  %v1883 = vsel %vm1553, %v1882, %v1881
  %v1884 = vrot.slane %v1271, 3
  %v1885 = vsel %vm1556, %v1884, %v1883
  %v1886 = vrot.slane %v1272, 2
  %v1887 = vsel %vm1559, %v1886, %v1885
  %v1888 = vrot.slane %v1273, 1
  %v1889 = vsel %vm1562, %v1888, %v1887
  %v1890 = vrot.slane %v1277, 7
  %v1891 = vsel %vm1544, %v1890, %v1276
  %v1892 = vrot.slane %v1278, 6
  %v1893 = vsel %vm1547, %v1892, %v1891
  %v1894 = vrot.slane %v1279, 5
  %v1895 = vsel %vm1550, %v1894, %v1893
  %v1896 = vrot.slane %v1280, 4
  %v1897 = vsel %vm1553, %v1896, %v1895
  %v1898 = vrot.slane %v1281, 3
  %v1899 = vsel %vm1556, %v1898, %v1897
  %v1900 = vrot.slane %v1282, 2
  %v1901 = vsel %vm1559, %v1900, %v1899
  %v1902 = vrot.slane %v1283, 1
  %v1903 = vsel %vm1562, %v1902, %v1901
  %v1904 = vrot.slane %v1287, 7
  %v1905 = vsel %vm1544, %v1904, %v1286
  %v1906 = vrot.slane %v1288, 6
  %v1907 = vsel %vm1547, %v1906, %v1905
  %v1908 = vrot.slane %v1289, 5
  %v1909 = vsel %vm1550, %v1908, %v1907
  %v1910 = vrot.slane %v1290, 4
  %v1911 = vsel %vm1553, %v1910, %v1909
  %v1912 = vrot.slane %v1291, 3
  %v1913 = vsel %vm1556, %v1912, %v1911
  %v1914 = vrot.slane %v1292, 2
  %v1915 = vsel %vm1559, %v1914, %v1913
  %v1916 = vrot.slane %v1293, 1
  %v1917 = vsel %vm1562, %v1916, %v1915
  %v1918 = vrot.slane %v1317, 7
  %v1919 = vsel %vm1544, %v1918, %v1316
  %v1920 = vrot.slane %v1318, 6
  %v1921 = vsel %vm1547, %v1920, %v1919
  %v1922 = vrot.slane %v1319, 5
  %v1923 = vsel %vm1550, %v1922, %v1921
  %v1924 = vrot.slane %v1320, 4
  %v1925 = vsel %vm1553, %v1924, %v1923
  %v1926 = vrot.slane %v1321, 3
  %v1927 = vsel %vm1556, %v1926, %v1925
  %v1928 = vrot.slane %v1322, 2
  %v1929 = vsel %vm1559, %v1928, %v1927
  %v1930 = vrot.slane %v1323, 1
  %v1931 = vsel %vm1562, %v1930, %v1929
  %v1932 = vrot.slane %v1327, 7
  %v1933 = vsel %vm1544, %v1932, %v1326
  %v1934 = vrot.slane %v1328, 6
  %v1935 = vsel %vm1547, %v1934, %v1933
  %v1936 = vrot.slane %v1329, 5
  %v1937 = vsel %vm1550, %v1936, %v1935
  %v1938 = vrot.slane %v1330, 4
  %v1939 = vsel %vm1553, %v1938, %v1937
  %v1940 = vrot.slane %v1331, 3
  %v1941 = vsel %vm1556, %v1940, %v1939
  %v1942 = vrot.slane %v1332, 2
  %v1943 = vsel %vm1559, %v1942, %v1941
  %v1944 = vrot.slane %v1333, 1
  %v1945 = vsel %vm1562, %v1944, %v1943
  %v1946 = vrot.slane %v1337, 7
  %v1947 = vsel %vm1544, %v1946, %v1336
  %v1948 = vrot.slane %v1338, 6
  %v1949 = vsel %vm1547, %v1948, %v1947
  %v1950 = vrot.slane %v1339, 5
  %v1951 = vsel %vm1550, %v1950, %v1949
  %v1952 = vrot.slane %v1340, 4
  %v1953 = vsel %vm1553, %v1952, %v1951
  %v1954 = vrot.slane %v1341, 3
  %v1955 = vsel %vm1556, %v1954, %v1953
  %v1956 = vrot.slane %v1342, 2
  %v1957 = vsel %vm1559, %v1956, %v1955
  %v1958 = vrot.slane %v1343, 1
  %v1959 = vsel %vm1562, %v1958, %v1957
  %v1960 = vrot.slane %v1347, 7
  %v1961 = vsel %vm1544, %v1960, %v1346
  %v1962 = vrot.slane %v1348, 6
  %v1963 = vsel %vm1547, %v1962, %v1961
  %v1964 = vrot.slane %v1349, 5
  %v1965 = vsel %vm1550, %v1964, %v1963
  %v1966 = vrot.slane %v1350, 4
  %v1967 = vsel %vm1553, %v1966, %v1965
  %v1968 = vrot.slane %v1351, 3
  %v1969 = vsel %vm1556, %v1968, %v1967
  %v1970 = vrot.slane %v1352, 2
  %v1971 = vsel %vm1559, %v1970, %v1969
  %v1972 = vrot.slane %v1353, 1
  %v1973 = vsel %vm1562, %v1972, %v1971
  %v1974 = vrot.slane %v1357, 7
  %v1975 = vsel %vm1544, %v1974, %v1356
  %v1976 = vrot.slane %v1358, 6
  %v1977 = vsel %vm1547, %v1976, %v1975
  %v1978 = vrot.slane %v1359, 5
  %v1979 = vsel %vm1550, %v1978, %v1977
  %v1980 = vrot.slane %v1360, 4
  %v1981 = vsel %vm1553, %v1980, %v1979
  %v1982 = vrot.slane %v1361, 3
  %v1983 = vsel %vm1556, %v1982, %v1981
  %v1984 = vrot.slane %v1362, 2
  %v1985 = vsel %vm1559, %v1984, %v1983
  %v1986 = vrot.slane %v1363, 1
  %v1987 = vsel %vm1562, %v1986, %v1985
  %v1988 = vrot.slane %v1367, 7
  %v1989 = vsel %vm1544, %v1988, %v1366
  %v1990 = vrot.slane %v1368, 6
  %v1991 = vsel %vm1547, %v1990, %v1989
  %v1992 = vrot.slane %v1369, 5
  %v1993 = vsel %vm1550, %v1992, %v1991
  %v1994 = vrot.slane %v1370, 4
  %v1995 = vsel %vm1553, %v1994, %v1993
  %v1996 = vrot.slane %v1371, 3
  %v1997 = vsel %vm1556, %v1996, %v1995
  %v1998 = vrot.slane %v1372, 2
  %v1999 = vsel %vm1559, %v1998, %v1997
  %v2000 = vrot.slane %v1373, 1
  %v2001 = vsel %vm1562, %v2000, %v1999
  %v2002 = vrot.slane %v1377, 7
  %v2003 = vsel %vm1544, %v2002, %v1376
  %v2004 = vrot.slane %v1378, 6
  %v2005 = vsel %vm1547, %v2004, %v2003
  %v2006 = vrot.slane %v1379, 5
  %v2007 = vsel %vm1550, %v2006, %v2005
  %v2008 = vrot.slane %v1380, 4
  %v2009 = vsel %vm1553, %v2008, %v2007
  %v2010 = vrot.slane %v1381, 3
  %v2011 = vsel %vm1556, %v2010, %v2009
  %v2012 = vrot.slane %v1382, 2
  %v2013 = vsel %vm1559, %v2012, %v2011
  %v2014 = vrot.slane %v1383, 1
  %v2015 = vsel %vm1562, %v2014, %v2013
  %v2016 = vrot.slane %v1387, 7
  %v2017 = vsel %vm1544, %v2016, %v1386
  %v2018 = vrot.slane %v1388, 6
  %v2019 = vsel %vm1547, %v2018, %v2017
  %v2020 = vrot.slane %v1389, 5
  %v2021 = vsel %vm1550, %v2020, %v2019
  %v2022 = vrot.slane %v1390, 4
  %v2023 = vsel %vm1553, %v2022, %v2021
  %v2024 = vrot.slane %v1391, 3
  %v2025 = vsel %vm1556, %v2024, %v2023
  %v2026 = vrot.slane %v1392, 2
  %v2027 = vsel %vm1559, %v2026, %v2025
  %v2028 = vrot.slane %v1393, 1
  %v2029 = vsel %vm1562, %v2028, %v2027
  %v2062 = vrot.slane %v1218, 7
  %v2063 = vsel %vm1544, %v2062, %v1217
  %v2064 = vrot.slane %v1219, 6
  %v2065 = vsel %vm1547, %v2064, %v2063
  %v2066 = vrot.slane %v1220, 5
  %v2067 = vsel %vm1550, %v2066, %v2065
  %v2068 = vrot.slane %v1221, 4
  %v2069 = vsel %vm1553, %v2068, %v2067
  %v2070 = vrot.slane %v1222, 3
  %v2071 = vsel %vm1556, %v2070, %v2069
  %v2072 = vrot.slane %v1223, 2
  %v2073 = vsel %vm1559, %v2072, %v2071
  %v2074 = vrot.slane %v1224, 1
  %v2075 = vsel %vm1562, %v2074, %v2073
  %v2076 = vrot.slane %v1228, 7
  %v2077 = vsel %vm1544, %v2076, %v1227
  %v2078 = vrot.slane %v1229, 6
  %v2079 = vsel %vm1547, %v2078, %v2077
  %v2080 = vrot.slane %v1230, 5
  %v2081 = vsel %vm1550, %v2080, %v2079
  %v2082 = vrot.slane %v1231, 4
  %v2083 = vsel %vm1553, %v2082, %v2081
  %v2084 = vrot.slane %v1232, 3
  %v2085 = vsel %vm1556, %v2084, %v2083
  %v2086 = vrot.slane %v1233, 2
  %v2087 = vsel %vm1559, %v2086, %v2085
  %v2088 = vrot.slane %v1234, 1
  %v2089 = vsel %vm1562, %v2088, %v2087
  %v2090 = vrot.slane %v1238, 7
  %v2091 = vsel %vm1544, %v2090, %v1237
  %v2092 = vrot.slane %v1239, 6
  %v2093 = vsel %vm1547, %v2092, %v2091
  %v2094 = vrot.slane %v1240, 5
  %v2095 = vsel %vm1550, %v2094, %v2093
  %v2096 = vrot.slane %v1241, 4
  %v2097 = vsel %vm1553, %v2096, %v2095
  %v2098 = vrot.slane %v1242, 3
  %v2099 = vsel %vm1556, %v2098, %v2097
  %v2100 = vrot.slane %v1243, 2
  %v2101 = vsel %vm1559, %v2100, %v2099
  %v2102 = vrot.slane %v1244, 1
  %v2103 = vsel %vm1562, %v2102, %v2101
  %v2104 = vrot.slane %v1248, 7
  %v2105 = vsel %vm1544, %v2104, %v1247
  %v2106 = vrot.slane %v1249, 6
  %v2107 = vsel %vm1547, %v2106, %v2105
  %v2108 = vrot.slane %v1250, 5
  %v2109 = vsel %vm1550, %v2108, %v2107
  %v2110 = vrot.slane %v1251, 4
  %v2111 = vsel %vm1553, %v2110, %v2109
  %v2112 = vrot.slane %v1252, 3
  %v2113 = vsel %vm1556, %v2112, %v2111
  %v2114 = vrot.slane %v1253, 2
  %v2115 = vsel %vm1559, %v2114, %v2113
  %v2116 = vrot.slane %v1254, 1
  %v2117 = vsel %vm1562, %v2116, %v2115
  %v2118 = vrot.slane %v1258, 7
  %v2119 = vsel %vm1544, %v2118, %v1257
  %v2120 = vrot.slane %v1259, 6
  %v2121 = vsel %vm1547, %v2120, %v2119
  %v2122 = vrot.slane %v1260, 5
  %v2123 = vsel %vm1550, %v2122, %v2121
  %v2124 = vrot.slane %v1261, 4
  %v2125 = vsel %vm1553, %v2124, %v2123
  %v2126 = vrot.slane %v1262, 3
  %v2127 = vsel %vm1556, %v2126, %v2125
  %v2128 = vrot.slane %v1263, 2
  %v2129 = vsel %vm1559, %v2128, %v2127
  %v2130 = vrot.slane %v1264, 1
  %v2131 = vsel %vm1562, %v2130, %v2129
  %v2132 = vrot.slane %v1268, 7
  %v2133 = vsel %vm1544, %v2132, %v1267
  %v2134 = vrot.slane %v1269, 6
  %v2135 = vsel %vm1547, %v2134, %v2133
  %v2136 = vrot.slane %v1270, 5
  %v2137 = vsel %vm1550, %v2136, %v2135
  %v2138 = vrot.slane %v1271, 4
  %v2139 = vsel %vm1553, %v2138, %v2137
  %v2140 = vrot.slane %v1272, 3
  %v2141 = vsel %vm1556, %v2140, %v2139
  %v2142 = vrot.slane %v1273, 2
  %v2143 = vsel %vm1559, %v2142, %v2141
  %v2144 = vrot.slane %v1274, 1
  %v2145 = vsel %vm1562, %v2144, %v2143
  %v2146 = vrot.slane %v1278, 7
  %v2147 = vsel %vm1544, %v2146, %v1277
  %v2148 = vrot.slane %v1279, 6
  %v2149 = vsel %vm1547, %v2148, %v2147
  %v2150 = vrot.slane %v1280, 5
  %v2151 = vsel %vm1550, %v2150, %v2149
  %v2152 = vrot.slane %v1281, 4
  %v2153 = vsel %vm1553, %v2152, %v2151
  %v2154 = vrot.slane %v1282, 3
  %v2155 = vsel %vm1556, %v2154, %v2153
  %v2156 = vrot.slane %v1283, 2
  %v2157 = vsel %vm1559, %v2156, %v2155
  %v2158 = vrot.slane %v1284, 1
  %v2159 = vsel %vm1562, %v2158, %v2157
  %v2160 = vrot.slane %v1288, 7
  %v2161 = vsel %vm1544, %v2160, %v1287
  %v2162 = vrot.slane %v1289, 6
  %v2163 = vsel %vm1547, %v2162, %v2161
  %v2164 = vrot.slane %v1290, 5
  %v2165 = vsel %vm1550, %v2164, %v2163
  %v2166 = vrot.slane %v1291, 4
  %v2167 = vsel %vm1553, %v2166, %v2165
  %v2168 = vrot.slane %v1292, 3
  %v2169 = vsel %vm1556, %v2168, %v2167
  %v2170 = vrot.slane %v1293, 2
  %v2171 = vsel %vm1559, %v2170, %v2169
  %v2172 = vrot.slane %v1294, 1
  %v2173 = vsel %vm1562, %v2172, %v2171
  %v2174 = vrot.slane %v1318, 7
  %v2175 = vsel %vm1544, %v2174, %v1317
  %v2176 = vrot.slane %v1319, 6
  %v2177 = vsel %vm1547, %v2176, %v2175
  %v2178 = vrot.slane %v1320, 5
  %v2179 = vsel %vm1550, %v2178, %v2177
  %v2180 = vrot.slane %v1321, 4
  %v2181 = vsel %vm1553, %v2180, %v2179
  %v2182 = vrot.slane %v1322, 3
  %v2183 = vsel %vm1556, %v2182, %v2181
  %v2184 = vrot.slane %v1323, 2
  %v2185 = vsel %vm1559, %v2184, %v2183
  %v2186 = vrot.slane %v1324, 1
  %v2187 = vsel %vm1562, %v2186, %v2185
  %v2188 = vrot.slane %v1328, 7
  %v2189 = vsel %vm1544, %v2188, %v1327
  %v2190 = vrot.slane %v1329, 6
  %v2191 = vsel %vm1547, %v2190, %v2189
  %v2192 = vrot.slane %v1330, 5
  %v2193 = vsel %vm1550, %v2192, %v2191
  %v2194 = vrot.slane %v1331, 4
  %v2195 = vsel %vm1553, %v2194, %v2193
  %v2196 = vrot.slane %v1332, 3
  %v2197 = vsel %vm1556, %v2196, %v2195
  %v2198 = vrot.slane %v1333, 2
  %v2199 = vsel %vm1559, %v2198, %v2197
  %v2200 = vrot.slane %v1334, 1
  %v2201 = vsel %vm1562, %v2200, %v2199
  %v2202 = vrot.slane %v1338, 7
  %v2203 = vsel %vm1544, %v2202, %v1337
  %v2204 = vrot.slane %v1339, 6
  %v2205 = vsel %vm1547, %v2204, %v2203
  %v2206 = vrot.slane %v1340, 5
  %v2207 = vsel %vm1550, %v2206, %v2205
  %v2208 = vrot.slane %v1341, 4
  %v2209 = vsel %vm1553, %v2208, %v2207
  %v2210 = vrot.slane %v1342, 3
  %v2211 = vsel %vm1556, %v2210, %v2209
  %v2212 = vrot.slane %v1343, 2
  %v2213 = vsel %vm1559, %v2212, %v2211
  %v2214 = vrot.slane %v1344, 1
  %v2215 = vsel %vm1562, %v2214, %v2213
  %v2216 = vrot.slane %v1348, 7
  %v2217 = vsel %vm1544, %v2216, %v1347
  %v2218 = vrot.slane %v1349, 6
  %v2219 = vsel %vm1547, %v2218, %v2217
  %v2220 = vrot.slane %v1350, 5
  %v2221 = vsel %vm1550, %v2220, %v2219
  %v2222 = vrot.slane %v1351, 4
  %v2223 = vsel %vm1553, %v2222, %v2221
  %v2224 = vrot.slane %v1352, 3
  %v2225 = vsel %vm1556, %v2224, %v2223
  %v2226 = vrot.slane %v1353, 2
  %v2227 = vsel %vm1559, %v2226, %v2225
  %v2228 = vrot.slane %v1354, 1
  %v2229 = vsel %vm1562, %v2228, %v2227
  %v2230 = vrot.slane %v1358, 7
  %v2231 = vsel %vm1544, %v2230, %v1357
  %v2232 = vrot.slane %v1359, 6
  %v2233 = vsel %vm1547, %v2232, %v2231
  %v2234 = vrot.slane %v1360, 5
  %v2235 = vsel %vm1550, %v2234, %v2233
  %v2236 = vrot.slane %v1361, 4
  %v2237 = vsel %vm1553, %v2236, %v2235
  %v2238 = vrot.slane %v1362, 3
  %v2239 = vsel %vm1556, %v2238, %v2237
  %v2240 = vrot.slane %v1363, 2
  %v2241 = vsel %vm1559, %v2240, %v2239
  %v2242 = vrot.slane %v1364, 1
  %v2243 = vsel %vm1562, %v2242, %v2241
  %v2244 = vrot.slane %v1368, 7
  %v2245 = vsel %vm1544, %v2244, %v1367
  %v2246 = vrot.slane %v1369, 6
  %v2247 = vsel %vm1547, %v2246, %v2245
  %v2248 = vrot.slane %v1370, 5
  %v2249 = vsel %vm1550, %v2248, %v2247
  %v2250 = vrot.slane %v1371, 4
  %v2251 = vsel %vm1553, %v2250, %v2249
  %v2252 = vrot.slane %v1372, 3
  %v2253 = vsel %vm1556, %v2252, %v2251
  %v2254 = vrot.slane %v1373, 2
  %v2255 = vsel %vm1559, %v2254, %v2253
  %v2256 = vrot.slane %v1374, 1
  %v2257 = vsel %vm1562, %v2256, %v2255
  %v2258 = vrot.slane %v1378, 7
  %v2259 = vsel %vm1544, %v2258, %v1377
  %v2260 = vrot.slane %v1379, 6
  %v2261 = vsel %vm1547, %v2260, %v2259
  %v2262 = vrot.slane %v1380, 5
  %v2263 = vsel %vm1550, %v2262, %v2261
  %v2264 = vrot.slane %v1381, 4
  %v2265 = vsel %vm1553, %v2264, %v2263
  %v2266 = vrot.slane %v1382, 3
  %v2267 = vsel %vm1556, %v2266, %v2265
  %v2268 = vrot.slane %v1383, 2
  %v2269 = vsel %vm1559, %v2268, %v2267
  %v2270 = vrot.slane %v1384, 1
  %v2271 = vsel %vm1562, %v2270, %v2269
  %v2272 = vrot.slane %v1388, 7
  %v2273 = vsel %vm1544, %v2272, %v1387
  %v2274 = vrot.slane %v1389, 6
  %v2275 = vsel %vm1547, %v2274, %v2273
  %v2276 = vrot.slane %v1390, 5
  %v2277 = vsel %vm1550, %v2276, %v2275
  %v2278 = vrot.slane %v1391, 4
  %v2279 = vsel %vm1553, %v2278, %v2277
  %v2280 = vrot.slane %v1392, 3
  %v2281 = vsel %vm1556, %v2280, %v2279
  %v2282 = vrot.slane %v1393, 2
  %v2283 = vsel %vm1559, %v2282, %v2281
  %v2284 = vrot.slane %v1394, 1
  %v2285 = vsel %vm1562, %v2284, %v2283
  %v2318 = vrot.slane %v1296, 7
  %v2319 = vsel %vm1544, %v2318, %v1295
  %v2320 = vrot.slane %v1297, 6
  %v2321 = vsel %vm1547, %v2320, %v2319
  %v2322 = vrot.slane %v1298, 5
  %v2323 = vsel %vm1550, %v2322, %v2321
  %v2324 = vrot.slane %v1299, 4
  %v2325 = vsel %vm1553, %v2324, %v2323
  %v2326 = vrot.slane %v1300, 3
  %v2327 = vsel %vm1556, %v2326, %v2325
  %v2328 = vrot.slane %v1301, 2
  %v2329 = vsel %vm1559, %v2328, %v2327
  %v2330 = vrot.slane %v1302, 1
  %v2331 = vsel %vm1562, %v2330, %v2329
  %v2332 = vrot.slane %v1396, 7
  %v2333 = vsel %vm1544, %v2332, %v1395
  %v2334 = vrot.slane %v1397, 6
  %v2335 = vsel %vm1547, %v2334, %v2333
  %v2336 = vrot.slane %v1398, 5
  %v2337 = vsel %vm1550, %v2336, %v2335
  %v2338 = vrot.slane %v1399, 4
  %v2339 = vsel %vm1553, %v2338, %v2337
  %v2340 = vrot.slane %v1400, 3
  %v2341 = vsel %vm1556, %v2340, %v2339
  %v2342 = vrot.slane %v1401, 2
  %v2343 = vsel %vm1559, %v2342, %v2341
  %v2344 = vrot.slane %v1402, 1
  %v2345 = vsel %vm1562, %v2344, %v2343
  %v2350 = vrot.slane %v1297, 7
  %v2351 = vsel %vm1544, %v2350, %v1296
  %v2352 = vrot.slane %v1298, 6
  %v2353 = vsel %vm1547, %v2352, %v2351
  %v2354 = vrot.slane %v1299, 5
  %v2355 = vsel %vm1550, %v2354, %v2353
  %v2356 = vrot.slane %v1300, 4
  %v2357 = vsel %vm1553, %v2356, %v2355
  %v2358 = vrot.slane %v1301, 3
  %v2359 = vsel %vm1556, %v2358, %v2357
  %v2360 = vrot.slane %v1302, 2
  %v2361 = vsel %vm1559, %v2360, %v2359
  %v2362 = vrot.slane %v1303, 1
  %v2363 = vsel %vm1562, %v2362, %v2361
  %v2364 = vrot.slane %v1397, 7
  %v2365 = vsel %vm1544, %v2364, %v1396
  %v2366 = vrot.slane %v1398, 6
  %v2367 = vsel %vm1547, %v2366, %v2365
  %v2368 = vrot.slane %v1399, 5
  %v2369 = vsel %vm1550, %v2368, %v2367
  %v2370 = vrot.slane %v1400, 4
  %v2371 = vsel %vm1553, %v2370, %v2369
  %v2372 = vrot.slane %v1401, 3
  %v2373 = vsel %vm1556, %v2372, %v2371
  %v2374 = vrot.slane %v1402, 2
  %v2375 = vsel %vm1559, %v2374, %v2373
  %v2376 = vrot.slane %v1403, 1
  %v2377 = vsel %vm1562, %v2376, %v2375
  %v2382 = vrot.slane %v1298, 7
  %v2383 = vsel %vm1544, %v2382, %v1297
  %v2384 = vrot.slane %v1299, 6
  %v2385 = vsel %vm1547, %v2384, %v2383
  %v2386 = vrot.slane %v1300, 5
  %v2387 = vsel %vm1550, %v2386, %v2385
  %v2388 = vrot.slane %v1301, 4
  %v2389 = vsel %vm1553, %v2388, %v2387
  %v2390 = vrot.slane %v1302, 3
  %v2391 = vsel %vm1556, %v2390, %v2389
  %v2392 = vrot.slane %v1303, 2
  %v2393 = vsel %vm1559, %v2392, %v2391
  %v2394 = vrot.slane %v1304, 1
  %v2395 = vsel %vm1562, %v2394, %v2393
  %v2396 = vrot.slane %v1398, 7
  %v2397 = vsel %vm1544, %v2396, %v1397
  %v2398 = vrot.slane %v1399, 6
  %v2399 = vsel %vm1547, %v2398, %v2397
  %v2400 = vrot.slane %v1400, 5
  %v2401 = vsel %vm1550, %v2400, %v2399
  %v2402 = vrot.slane %v1401, 4
  %v2403 = vsel %vm1553, %v2402, %v2401
  %v2404 = vrot.slane %v1402, 3
  %v2405 = vsel %vm1556, %v2404, %v2403
  %v2406 = vrot.slane %v1403, 2
  %v2407 = vsel %vm1559, %v2406, %v2405
  %v2408 = vrot.slane %v1404, 1
  %v2409 = vsel %vm1562, %v2408, %v2407
  %v2428 = vrot.slane %v1306, 7
  %v2429 = vsel %vm1544, %v2428, %v1305
  %v2430 = vrot.slane %v1307, 6
  %v2431 = vsel %vm1547, %v2430, %v2429
  %v2432 = vrot.slane %v1308, 5
  %v2433 = vsel %vm1550, %v2432, %v2431
  %v2434 = vrot.slane %v1309, 4
  %v2435 = vsel %vm1553, %v2434, %v2433
  %v2436 = vrot.slane %v1310, 3
  %v2437 = vsel %vm1556, %v2436, %v2435
  %v2438 = vrot.slane %v1311, 2
  %v2439 = vsel %vm1559, %v2438, %v2437
  %v2440 = vrot.slane %v1312, 1
  %v2441 = vsel %vm1562, %v2440, %v2439
  %v2442 = vrot.slane %v1406, 7
  %v2443 = vsel %vm1544, %v2442, %v1405
  %v2444 = vrot.slane %v1407, 6
  %v2445 = vsel %vm1547, %v2444, %v2443
  %v2446 = vrot.slane %v1408, 5
  %v2447 = vsel %vm1550, %v2446, %v2445
  %v2448 = vrot.slane %v1409, 4
  %v2449 = vsel %vm1553, %v2448, %v2447
  %v2450 = vrot.slane %v1410, 3
  %v2451 = vsel %vm1556, %v2450, %v2449
  %v2452 = vrot.slane %v1411, 2
  %v2453 = vsel %vm1559, %v2452, %v2451
  %v2454 = vrot.slane %v1412, 1
  %v2455 = vsel %vm1562, %v2454, %v2453
  %v2460 = vrot.slane %v1307, 7
  %v2461 = vsel %vm1544, %v2460, %v1306
  %v2462 = vrot.slane %v1308, 6
  %v2463 = vsel %vm1547, %v2462, %v2461
  %v2464 = vrot.slane %v1309, 5
  %v2465 = vsel %vm1550, %v2464, %v2463
  %v2466 = vrot.slane %v1310, 4
  %v2467 = vsel %vm1553, %v2466, %v2465
  %v2468 = vrot.slane %v1311, 3
  %v2469 = vsel %vm1556, %v2468, %v2467
  %v2470 = vrot.slane %v1312, 2
  %v2471 = vsel %vm1559, %v2470, %v2469
  %v2472 = vrot.slane %v1313, 1
  %v2473 = vsel %vm1562, %v2472, %v2471
  %v2474 = vrot.slane %v1407, 7
  %v2475 = vsel %vm1544, %v2474, %v1406
  %v2476 = vrot.slane %v1408, 6
  %v2477 = vsel %vm1547, %v2476, %v2475
  %v2478 = vrot.slane %v1409, 5
  %v2479 = vsel %vm1550, %v2478, %v2477
  %v2480 = vrot.slane %v1410, 4
  %v2481 = vsel %vm1553, %v2480, %v2479
  %v2482 = vrot.slane %v1411, 3
  %v2483 = vsel %vm1556, %v2482, %v2481
  %v2484 = vrot.slane %v1412, 2
  %v2485 = vsel %vm1559, %v2484, %v2483
  %v2486 = vrot.slane %v1413, 1
  %v2487 = vsel %vm1562, %v2486, %v2485
  %v2492 = vrot.slane %v1308, 7
  %v2493 = vsel %vm1544, %v2492, %v1307
  %v2494 = vrot.slane %v1309, 6
  %v2495 = vsel %vm1547, %v2494, %v2493
  %v2496 = vrot.slane %v1310, 5
  %v2497 = vsel %vm1550, %v2496, %v2495
  %v2498 = vrot.slane %v1311, 4
  %v2499 = vsel %vm1553, %v2498, %v2497
  %v2500 = vrot.slane %v1312, 3
  %v2501 = vsel %vm1556, %v2500, %v2499
  %v2502 = vrot.slane %v1313, 2
  %v2503 = vsel %vm1559, %v2502, %v2501
  %v2504 = vrot.slane %v1314, 1
  %v2505 = vsel %vm1562, %v2504, %v2503
  %v2506 = vrot.slane %v1408, 7
  %v2507 = vsel %vm1544, %v2506, %v1407
  %v2508 = vrot.slane %v1409, 6
  %v2509 = vsel %vm1547, %v2508, %v2507
  %v2510 = vrot.slane %v1410, 5
  %v2511 = vsel %vm1550, %v2510, %v2509
  %v2512 = vrot.slane %v1411, 4
  %v2513 = vsel %vm1553, %v2512, %v2511
  %v2514 = vrot.slane %v1412, 3
  %v2515 = vsel %vm1556, %v2514, %v2513
  %v2516 = vrot.slane %v1413, 2
  %v2517 = vsel %vm1559, %v2516, %v2515
  %v2518 = vrot.slane %v1414, 1
  %v2519 = vsel %vm1562, %v2518, %v2517
  %v2522 = vld [vmem:[%s1] sm:$0xff]
  %v2523 = vld [vmem:[%s1 + $0x8] sm:$0xff]
  %v2524 = vld [vmem:[%s1 + $0x10] sm:$0xff]
  %v2525 = vld [vmem:[%s1 + $0x18] sm:$0xff]
  %v2526 = vld [vmem:[%s1 + $0x20] sm:$0xff]
  %v2527 = vld [vmem:[%s1 + $0x28] sm:$0xff]
  %v2528 = vld [vmem:[%s1 + $0x30] sm:$0xff]
  %v2529 = vld [vmem:[%s1 + $0x38] sm:$0xff]
  %v2530 = vld [vmem:[%s1 + $0x40] sm:$0xff]
  %v2531 = vld [vmem:[%s1 + $0x48] sm:$0xff]
  %v2532 = vld [vmem:[%s1 + $0x50] sm:$0xff]
  %v2533 = vld [vmem:[%s1 + $0x58] sm:$0xff]
  %v2534 = vld [vmem:[%s1 + $0x60] sm:$0xff]
  %v2535 = vld [vmem:[%s1 + $0x68] sm:$0xff]
  %v2536 = vld [vmem:[%s1 + $0x70] sm:$0xff]
  %v2537 = vld [vmem:[%s1 + $0x78] sm:$0xff]
  %v2538 = vld [vmem:[%s1 + $0x80] sm:$0xff]
  %v2539 = vld [vmem:[%s1 + $0x88] sm:$0xff]
  %v2540 = vld [vmem:[%s1 + $0x90] sm:$0xff]
  %v2541 = vld [vmem:[%s1 + $0x98] sm:$0xff]
  %v2542 = vld [vmem:[%s1 + $0xa0] sm:$0xff]
  %v2543 = vld [vmem:[%s1 + $0xa8] sm:$0xff]
  %v2544 = vld [vmem:[%s1 + $0xb0] sm:$0xff]
  %v2545 = vld [vmem:[%s1 + $0xb8] sm:$0xff]
  %v2546 = vld [vmem:[%s1 + $0xc0] sm:$0xff]
  %v2547 = vld [vmem:[%s1 + $0xc8] sm:$0xff]
  %v2548 = vld [vmem:[%s1 + $0xd0] sm:$0xff]
  %v2549 = vld [vmem:[%s1 + $0xd8] sm:$0xff]
  %v2550 = vld [vmem:[%s1 + $0xe0] sm:$0xff]
  %v2551 = vld [vmem:[%s1 + $0xe8] sm:$0xff]
  %v2552 = vld [vmem:[%s1 + $0xf0] sm:$0xff]
  %v2553 = vld [vmem:[%s1 + $0xf8] sm:$0xff]
  %v2554 = vld [vmem:[%s1 + $0x100] sm:$0xff]
  %v2555 = vld [vmem:[%s1 + $0x108] sm:$0xff]
  %v2556 = vld [vmem:[%s1 + $0x110] sm:$0xff]
  %v2557 = vld [vmem:[%s1 + $0x118] sm:$0xff]
  %v2558 = vld [vmem:[%s1 + $0x120] sm:$0xff]
  %v2559 = vld [vmem:[%s1 + $0x128] sm:$0xff]
  %v2560 = vld [vmem:[%s1 + $0x130] sm:$0xff]
  %v2561 = vld [vmem:[%s1 + $0x138] sm:$0xff]
  %v2562 = vld [vmem:[%s1 + $0x140] sm:$0xff]
  %v2563 = vld [vmem:[%s1 + $0x148] sm:$0xff]
  %v2564 = vld [vmem:[%s1 + $0x150] sm:$0xff]
  %v2565 = vld [vmem:[%s1 + $0x158] sm:$0xff]
  %v2566 = vld [vmem:[%s1 + $0x160] sm:$0xff]
  %v2567 = vld [vmem:[%s1 + $0x168] sm:$0xff]
  %v2568 = vld [vmem:[%s1 + $0x170] sm:$0xff]
  %v2569 = vld [vmem:[%s1 + $0x178] sm:$0xff]
  %v2570 = vld [vmem:[%s1 + $0x180] sm:$0xff]
  %v2571 = vld [vmem:[%s1 + $0x188] sm:$0xff]
  %v2572 = vld [vmem:[%s1 + $0x190] sm:$0xff]
  %v2573 = vld [vmem:[%s1 + $0x198] sm:$0xff]
  %v2574 = vld [vmem:[%s1 + $0x1a0] sm:$0xff]
  %v2575 = vld [vmem:[%s1 + $0x1a8] sm:$0xff]
  %v2576 = vld [vmem:[%s1 + $0x1b0] sm:$0xff]
  %v2577 = vld [vmem:[%s1 + $0x1b8] sm:$0xff]
  %v2578 = vld [vmem:[%s1 + $0x1c0] sm:$0xff]
  %v2579 = vld [vmem:[%s1 + $0x1c8] sm:$0xff]
  %v2580 = vld [vmem:[%s1 + $0x1d0] sm:$0xff]
  %v2581 = vld [vmem:[%s1 + $0x1d8] sm:$0xff]
  %v2582 = vld [vmem:[%s1 + $0x1e0] sm:$0xff]
  %v2583 = vld [vmem:[%s1 + $0x1e8] sm:$0xff]
  %v2584 = vld [vmem:[%s1 + $0x1f0] sm:$0xff]
  %v2585 = vld [vmem:[%s1 + $0x1f8] sm:$0xff]
  %v2586 = vld [vmem:[%s1 + $0x200] sm:$0xff]
  %v2587 = vld [vmem:[%s1 + $0x208] sm:$0xff]
  %v2588 = vld [vmem:[%s1 + $0x210] sm:$0xff]
  %v2589 = vld [vmem:[%s1 + $0x218] sm:$0xff]
  %v2590 = vld [vmem:[%s1 + $0x220] sm:$0xff]
  %v2591 = vld [vmem:[%s1 + $0x228] sm:$0xff]
  %v2592 = vld [vmem:[%s1 + $0x230] sm:$0xff]
  %v2593 = vld [vmem:[%s1 + $0x238] sm:$0xff]
  %v2594 = vld [vmem:[%s1 + $0x240] sm:$0xff]
  %v2595 = vld [vmem:[%s1 + $0x248] sm:$0xff]
  %v2596 = vld [vmem:[%s1 + $0x250] sm:$0xff]
  %v2597 = vld [vmem:[%s1 + $0x258] sm:$0xff]
  %v2598 = vld [vmem:[%s1 + $0x260] sm:$0xff]
  %v2599 = vld [vmem:[%s1 + $0x268] sm:$0xff]
  %v2600 = vld [vmem:[%s1 + $0x270] sm:$0xff]
  %v2601 = vld [vmem:[%s1 + $0x278] sm:$0xff]
  %v2602 = vld [vmem:[%s1 + $0x280] sm:$0xff]
  %v2603 = vld [vmem:[%s1 + $0x288] sm:$0xff]
  %v2604 = vld [vmem:[%s1 + $0x290] sm:$0xff]
  %v2605 = vld [vmem:[%s1 + $0x298] sm:$0xff]
  %v2606 = vld [vmem:[%s1 + $0x2a0] sm:$0xff]
  %v2607 = vld [vmem:[%s1 + $0x2a8] sm:$0xff]
  %v2608 = vld [vmem:[%s1 + $0x2b0] sm:$0xff]
  %v2609 = vld [vmem:[%s1 + $0x2b8] sm:$0xff]
  %v2610 = vld [vmem:[%s1 + $0x2c0] sm:$0xff]
  %v2611 = vld [vmem:[%s1 + $0x2c8] sm:$0xff]
  %v2612 = vld [vmem:[%s1 + $0x2d0] sm:$0xff]
  %v2613 = vld [vmem:[%s1 + $0x2d8] sm:$0xff]
  %v2614 = vld [vmem:[%s1 + $0x2e0] sm:$0xff]
  %v2615 = vld [vmem:[%s1 + $0x2e8] sm:$0xff]
  %v2616 = vld [vmem:[%s1 + $0x2f0] sm:$0xff]
  %v2617 = vld [vmem:[%s1 + $0x2f8] sm:$0xff]
  %v2618 = vld [vmem:[%s1 + $0x300] sm:$0xff]
  %v2619 = vld [vmem:[%s1 + $0x308] sm:$0xff]
  %v2620 = vld [vmem:[%s1 + $0x310] sm:$0xff]
  %v2621 = vld [vmem:[%s1 + $0x318] sm:$0xff]
  %v2622 = vld [vmem:[%s1 + $0x320] sm:$0xff]
  %v2623 = vld [vmem:[%s1 + $0x328] sm:$0xff]
  %v2624 = vld [vmem:[%s1 + $0x330] sm:$0xff]
  %v2625 = vld [vmem:[%s1 + $0x338] sm:$0xff]
  %v2626 = vld [vmem:[%s1 + $0x340] sm:$0xff]
  %v2627 = vld [vmem:[%s1 + $0x348] sm:$0xff]
  %v2628 = vld [vmem:[%s1 + $0x350] sm:$0xff]
  %v2629 = vld [vmem:[%s1 + $0x358] sm:$0xff]
  %v2630 = vld [vmem:[%s1 + $0x360] sm:$0xff]
  %v2631 = vld [vmem:[%s1 + $0x368] sm:$0xff]
  %v2632 = vld [vmem:[%s1 + $0x370] sm:$0xff]
  %v2633 = vld [vmem:[%s1 + $0x378] sm:$0xff]
  %v2634 = vld [vmem:[%s1 + $0x380] sm:$0xff]
  %v2635 = vld [vmem:[%s1 + $0x388] sm:$0xff]
  %v2636 = vld [vmem:[%s1 + $0x390] sm:$0xff]
  %v2637 = vld [vmem:[%s1 + $0x398] sm:$0xff]
  %v2638 = vld [vmem:[%s1 + $0x3a0] sm:$0xff]
  %v2639 = vld [vmem:[%s1 + $0x3a8] sm:$0xff]
  %v2640 = vld [vmem:[%s1 + $0x3b0] sm:$0xff]
  %v2641 = vld [vmem:[%s1 + $0x3b8] sm:$0xff]
  %v2642 = vld [vmem:[%s1 + $0x3c0] sm:$0xff]
  %v2643 = vld [vmem:[%s1 + $0x3c8] sm:$0xff]
  %v2644 = vld [vmem:[%s1 + $0x3d0] sm:$0xff]
  %v2645 = vld [vmem:[%s1 + $0x3d8] sm:$0xff]
  %v2646 = vld [vmem:[%s1 + $0x3e0] sm:$0xff]
  %v2647 = vld [vmem:[%s1 + $0x3e8] sm:$0xff]
  %v2648 = vld [vmem:[%s1 + $0x3f0] sm:$0xff]
  %v2649 = vld [vmem:[%s1 + $0x3f8] sm:$0xff]
  %v2650 = vld [vmem:[%s1 + $0x400] sm:$0xff]
  %v2651 = vld [vmem:[%s1 + $0x408] sm:$0xff]
  %v2652 = vld [vmem:[%s1 + $0x410] sm:$0xff]
  %v2653 = vld [vmem:[%s1 + $0x418] sm:$0xff]
  %v2654 = vld [vmem:[%s1 + $0x420] sm:$0xff]
  %v2655 = vld [vmem:[%s1 + $0x428] sm:$0xff]
  %v2656 = vld [vmem:[%s1 + $0x430] sm:$0xff]
  %v2657 = vld [vmem:[%s1 + $0x438] sm:$0xff]
  %v2658 = vld [vmem:[%s1 + $0x440] sm:$0xff]
  %v2659 = vld [vmem:[%s1 + $0x448] sm:$0xff]
  %v2660 = vld [vmem:[%s1 + $0x450] sm:$0xff]
  %v2661 = vld [vmem:[%s1 + $0x458] sm:$0xff]
  %v2662 = vld [vmem:[%s1 + $0x460] sm:$0xff]
  %v2663 = vld [vmem:[%s1 + $0x468] sm:$0xff]
  %v2664 = vld [vmem:[%s1 + $0x470] sm:$0xff]
  %v2665 = vld [vmem:[%s1 + $0x478] sm:$0xff]
  %v2666 = vld [vmem:[%s2] sm:$0x1]
  %v2668 = vlaneseq
  %v2669 = vshrl.u32 %v2668, 7
  %v2670 = vsub.s32 0, %v2669
  %v2671 = vrot.slane %v2666, %v2670
  %2673 = vmatprep.subr.mxu0 0.0
  %v2674 = vand.u32 %v2522, 4294901760
  %2675 = vmatpush1.msra.mxu0 %v2674
  %2676 = vmatprep.subr.mxu0 0.0
  %v2677 = vand.u32 %v2523, 4294901760
  %2678 = vmatpush1.msra.mxu0 %v2677
  %2679 = vmatprep.subr.mxu0 0.0
  %v2680 = vand.u32 %v2524, 4294901760
  %2681 = vmatpush1.msra.mxu0 %v2680
  %2682 = vmatprep.subr.mxu0 0.0
  %v2683 = vand.u32 %v2525, 4294901760
  %2684 = vmatpush1.msra.mxu0 %v2683
  %2685 = vmatprep.subr.mxu0 0.0
  %v2686 = vand.u32 %v2526, 4294901760
  %2687 = vmatpush1.msra.mxu0 %v2686
  %2688 = vmatprep.subr.mxu0 0.0
  %v2689 = vand.u32 %v2527, 4294901760
  %2690 = vmatpush1.msra.mxu0 %v2689
  %2691 = vmatprep.subr.mxu0 0.0
  %v2692 = vand.u32 %v2528, 4294901760
  %2693 = vmatpush1.msra.mxu0 %v2692
  %2694 = vmatprep.subr.mxu0 0.0
  %v2695 = vand.u32 %v2529, 4294901760
  %2696 = vmatpush1.msra.mxu0 %v2695
  %2697 = vmatprep.subr.mxu0 0.0
  %v2698 = vand.u32 %v2530, 4294901760
  %2699 = vmatpush1.msra.mxu0 %v2698
  %2700 = vmatprep.subr.mxu0 0.0
  %v2701 = vand.u32 %v2531, 4294901760
  %2702 = vmatpush1.msra.mxu0 %v2701
  %2703 = vmatprep.subr.mxu0 0.0
  %v2704 = vand.u32 %v2532, 4294901760
  %2705 = vmatpush1.msra.mxu0 %v2704
  %2706 = vmatprep.subr.mxu0 0.0
  %v2707 = vand.u32 %v2533, 4294901760
  %2708 = vmatpush1.msra.mxu0 %v2707
  %2709 = vmatprep.subr.mxu0 0.0
  %v2710 = vand.u32 %v2534, 4294901760
  %2711 = vmatpush1.msra.mxu0 %v2710
  %2712 = vmatprep.subr.mxu0 0.0
  %v2713 = vand.u32 %v2535, 4294901760
  %2714 = vmatpush1.msra.mxu0 %v2713
  %2715 = vmatprep.subr.mxu0 0.0
  %v2716 = vand.u32 %v2536, 4294901760
  %2717 = vmatpush1.msra.mxu0 %v2716
  %2718 = vmatprep.subr.mxu0 0.0
  %v2719 = vand.u32 %v2537, 4294901760
  %2720 = vmatpush1.msra.mxu0 %v2719
  %2721 = vmatprep.subr.mxu0 0.0
  %v2722 = vand.u32 %v2538, 4294901760
  %2723 = vmatpush1.msra.mxu0 %v2722
  %2724 = vmatprep.subr.mxu0 0.0
  %v2725 = vand.u32 %v2539, 4294901760
  %2726 = vmatpush1.msra.mxu0 %v2725
  %2727 = vmatprep.subr.mxu0 0.0
  %v2728 = vand.u32 %v2540, 4294901760
  %2729 = vmatpush1.msra.mxu0 %v2728
  %2730 = vmatprep.subr.mxu0 0.0
  %v2731 = vand.u32 %v2541, 4294901760
  %2732 = vmatpush1.msra.mxu0 %v2731
  %2733 = vmatprep.subr.mxu0 0.0
  %v2734 = vand.u32 %v2542, 4294901760
  %2735 = vmatpush1.msra.mxu0 %v2734
  %2736 = vmatprep.subr.mxu0 0.0
  %v2737 = vand.u32 %v2543, 4294901760
  %2738 = vmatpush1.msra.mxu0 %v2737
  %2739 = vmatprep.subr.mxu0 0.0
  %v2740 = vand.u32 %v2544, 4294901760
  %2741 = vmatpush1.msra.mxu0 %v2740
  %2742 = vmatprep.subr.mxu0 0.0
  %v2743 = vand.u32 %v2545, 4294901760
  %2744 = vmatpush1.msra.mxu0 %v2743
  %2745 = vmatprep.subr.mxu0 0.0
  %v2746 = vand.u32 %v2546, 4294901760
  %2747 = vmatpush1.msra.mxu0 %v2746
  %2748 = vmatprep.subr.mxu0 0.0
  %v2749 = vand.u32 %v2547, 4294901760
  %2750 = vmatpush1.msra.mxu0 %v2749
  %2751 = vmatprep.subr.mxu0 0.0
  %v2752 = vand.u32 %v2548, 4294901760
  %2753 = vmatpush1.msra.mxu0 %v2752
  %2754 = vmatprep.subr.mxu0 0.0
  %v2755 = vand.u32 %v2549, 4294901760
  %2756 = vmatpush1.msra.mxu0 %v2755
  %2757 = vmatprep.subr.mxu0 0.0
  %v2758 = vand.u32 %v2550, 4294901760
  %2759 = vmatpush1.msra.mxu0 %v2758
  %2760 = vmatprep.subr.mxu0 0.0
  %v2761 = vand.u32 %v2551, 4294901760
  %2762 = vmatpush1.msra.mxu0 %v2761
  %2763 = vmatprep.subr.mxu0 0.0
  %v2764 = vand.u32 %v2552, 4294901760
  %2765 = vmatpush1.msra.mxu0 %v2764
  %2766 = vmatprep.subr.mxu0 0.0
  %v2767 = vand.u32 %v2553, 4294901760
  %2768 = vmatpush1.msra.mxu0 %v2767
  %v2769 = vand.u32 %v1819, 4294901760
  %v2770 = vsub.f32 %v1819, %v2769
  %v2771 = vand.u32 %v2770, 4294901760
  %v2772 = vsub.f32 %v2770, %v2771
  %v2773 = vand.u32 %v2772, 4294901760
  %2774 = vmatprep.mubr.f32.mxu0 %v2773
  %v2775 = vand.u32 %v1563, 4294901760
  %v2776 = vsub.f32 %v1563, %v2775
  %v2777 = vand.u32 %v2776, 4294901760
  %v2778 = vsub.f32 %v2776, %v2777
  %v2779 = vand.u32 %v2778, 4294901760
  %2780 = vmatmul.mubr.f32.gmra.mrb[0].mxu0 %v2779
  %v2781 = vpop.f32.mrb[0].mxu0
  %v2782 = vadd.f32 %v2671, %v2781
  %v2783 = vpop.f32.mrb[0].mxu0
  %v2784 = vand.u32 %v1833, 4294901760
  %v2785 = vsub.f32 %v1833, %v2784
  %v2786 = vand.u32 %v2785, 4294901760
  %v2787 = vsub.f32 %v2785, %v2786
  %v2788 = vand.u32 %v2787, 4294901760
  %2789 = vmatprep.mubr.f32.mxu0 %v2788
  %v2790 = vand.u32 %v1577, 4294901760
  %v2791 = vsub.f32 %v1577, %v2790
  %v2792 = vand.u32 %v2791, 4294901760
  %v2793 = vsub.f32 %v2791, %v2792
  %v2794 = vand.u32 %v2793, 4294901760
  %2795 = vmatmul.mubr.f32.gmra.mrb[0].mxu0 %v2794
  %v2796 = vpop.f32.mrb[0].mxu0
  %v2797 = vadd.f32 %v2671, %v2796
  %v2798 = vpop.f32.mrb[0].mxu0
  %v2799 = vand.u32 %v1847, 4294901760
  %v2800 = vsub.f32 %v1847, %v2799
  %v2801 = vand.u32 %v2800, 4294901760
  %v2802 = vsub.f32 %v2800, %v2801
  %v2803 = vand.u32 %v2802, 4294901760
  %2804 = vmatprep.mubr.f32.mxu0 %v2803
  %v2805 = vand.u32 %v1591, 4294901760
  %v2806 = vsub.f32 %v1591, %v2805
  %v2807 = vand.u32 %v2806, 4294901760
  %v2808 = vsub.f32 %v2806, %v2807
  %v2809 = vand.u32 %v2808, 4294901760
  %2810 = vmatmul.mubr.f32.gmra.mrb[0].mxu0 %v2809
  %v2811 = vpop.f32.mrb[0].mxu0
  %v2812 = vadd.f32 %v2671, %v2811
  %v2813 = vpop.f32.mrb[0].mxu0
  %v2814 = vand.u32 %v1861, 4294901760
  %v2815 = vsub.f32 %v1861, %v2814
  %v2816 = vand.u32 %v2815, 4294901760
  %v2817 = vsub.f32 %v2815, %v2816
  %v2818 = vand.u32 %v2817, 4294901760
  %2819 = vmatprep.mubr.f32.mxu0 %v2818
  %v2820 = vand.u32 %v1605, 4294901760
  %v2821 = vsub.f32 %v1605, %v2820
  %v2822 = vand.u32 %v2821, 4294901760
  %v2823 = vsub.f32 %v2821, %v2822
  %v2824 = vand.u32 %v2823, 4294901760
  %2825 = vmatmul.mubr.f32.gmra.mrb[0].mxu0 %v2824
  %v2826 = vpop.f32.mrb[0].mxu0
  %v2827 = vadd.f32 %v2671, %v2826
  %v2828 = vpop.f32.mrb[0].mxu0
  %v2829 = vand.u32 %v1875, 4294901760
  %v2830 = vsub.f32 %v1875, %v2829
  %v2831 = vand.u32 %v2830, 4294901760
  %v2832 = vsub.f32 %v2830, %v2831
  %v2833 = vand.u32 %v2832, 4294901760
  %2834 = vmatprep.mubr.f32.mxu0 %v2833
  %v2835 = vand.u32 %v1619, 4294901760
  %v2836 = vsub.f32 %v1619, %v2835
  %v2837 = vand.u32 %v2836, 4294901760
  %v2838 = vsub.f32 %v2836, %v2837
  %v2839 = vand.u32 %v2838, 4294901760
  %2840 = vmatmul.mubr.f32.gmra.mrb[0].mxu0 %v2839
  %v2841 = vpop.f32.mrb[0].mxu0
  %v2842 = vadd.f32 %v2671, %v2841
  %v2843 = vpop.f32.mrb[0].mxu0
  %v2844 = vand.u32 %v1889, 4294901760
  %v2845 = vsub.f32 %v1889, %v2844
  %v2846 = vand.u32 %v2845, 4294901760
  %v2847 = vsub.f32 %v2845, %v2846
  %v2848 = vand.u32 %v2847, 4294901760
  %2849 = vmatprep.mubr.f32.mxu0 %v2848
  %v2850 = vand.u32 %v1633, 4294901760
  %v2851 = vsub.f32 %v1633, %v2850
  %v2852 = vand.u32 %v2851, 4294901760
  %v2853 = vsub.f32 %v2851, %v2852
  %v2854 = vand.u32 %v2853, 4294901760
  %2855 = vmatmul.mubr.f32.gmra.mrb[0].mxu0 %v2854
  %v2856 = vpop.f32.mrb[0].mxu0
  %v2857 = vadd.f32 %v2671, %v2856
  %v2858 = vpop.f32.mrb[0].mxu0
  %v2859 = vand.u32 %v1903, 4294901760
  %v2860 = vsub.f32 %v1903, %v2859
  %v2861 = vand.u32 %v2860, 4294901760
  %v2862 = vsub.f32 %v2860, %v2861
  %v2863 = vand.u32 %v2862, 4294901760
  %2864 = vmatprep.mubr.f32.mxu0 %v2863
  %v2865 = vand.u32 %v1647, 4294901760
  %v2866 = vsub.f32 %v1647, %v2865
  %v2867 = vand.u32 %v2866, 4294901760
  %v2868 = vsub.f32 %v2866, %v2867
  %v2869 = vand.u32 %v2868, 4294901760
  %2870 = vmatmul.mubr.f32.gmra.mrb[0].mxu0 %v2869
  %v2871 = vpop.f32.mrb[0].mxu0
  %v2872 = vadd.f32 %v2671, %v2871
  %v2873 = vpop.f32.mrb[0].mxu0
  %v2874 = vand.u32 %v1917, 4294901760
  %v2875 = vsub.f32 %v1917, %v2874
  %v2876 = vand.u32 %v2875, 4294901760
  %v2877 = vsub.f32 %v2875, %v2876
  %v2878 = vand.u32 %v2877, 4294901760
  %2879 = vmatprep.mubr.f32.mxu0 %v2878
  %v2880 = vand.u32 %v1661, 4294901760
  %v2881 = vsub.f32 %v1661, %v2880
  %v2882 = vand.u32 %v2881, 4294901760
  %v2883 = vsub.f32 %v2881, %v2882
  %v2884 = vand.u32 %v2883, 4294901760
  %2885 = vmatmul.mubr.f32.gmra.mrb[0].mxu0 %v2884
  %v2886 = vpop.f32.mrb[0].mxu0
  %v2887 = vadd.f32 %v2671, %v2886
  %v2888 = vpop.f32.mrb[0].mxu0
  %v2889 = vand.u32 %v1931, 4294901760
  %v2890 = vsub.f32 %v1931, %v2889
  %v2891 = vand.u32 %v2890, 4294901760
  %v2892 = vsub.f32 %v2890, %v2891
  %v2893 = vand.u32 %v2892, 4294901760
  %2894 = vmatprep.mubr.f32.mxu0 %v2893
  %v2895 = vand.u32 %v1675, 4294901760
  %v2896 = vsub.f32 %v1675, %v2895
  %v2897 = vand.u32 %v2896, 4294901760
  %v2898 = vsub.f32 %v2896, %v2897
  %v2899 = vand.u32 %v2898, 4294901760
  %2900 = vmatmul.mubr.f32.gmra.mrb[0].mxu0 %v2899
  %v2901 = vpop.f32.mrb[0].mxu0
  %v2902 = vadd.f32 %v2671, %v2901
  %v2903 = vpop.f32.mrb[0].mxu0
  %v2904 = vand.u32 %v1945, 4294901760
  %v2905 = vsub.f32 %v1945, %v2904
  %v2906 = vand.u32 %v2905, 4294901760
  %v2907 = vsub.f32 %v2905, %v2906
  %v2908 = vand.u32 %v2907, 4294901760
  %2909 = vmatprep.mubr.f32.mxu0 %v2908
  %v2910 = vand.u32 %v1689, 4294901760
  %v2911 = vsub.f32 %v1689, %v2910
  %v2912 = vand.u32 %v2911, 4294901760
  %v2913 = vsub.f32 %v2911, %v2912
  %v2914 = vand.u32 %v2913, 4294901760
  %2915 = vmatmul.mubr.f32.gmra.mrb[0].mxu0 %v2914
  %v2916 = vpop.f32.mrb[0].mxu0
  %v2917 = vadd.f32 %v2671, %v2916
  %v2918 = vpop.f32.mrb[0].mxu0
  %v2919 = vand.u32 %v1959, 4294901760
  %v2920 = vsub.f32 %v1959, %v2919
  %v2921 = vand.u32 %v2920, 4294901760
  %v2922 = vsub.f32 %v2920, %v2921
  %v2923 = vand.u32 %v2922, 4294901760
  %2924 = vmatprep.mubr.f32.mxu0 %v2923
  %v2925 = vand.u32 %v1703, 4294901760
  %v2926 = vsub.f32 %v1703, %v2925
  %v2927 = vand.u32 %v2926, 4294901760
  %v2928 = vsub.f32 %v2926, %v2927
  %v2929 = vand.u32 %v2928, 4294901760
  %2930 = vmatmul.mubr.f32.gmra.mrb[0].mxu0 %v2929
  %v2931 = vpop.f32.mrb[0].mxu0
  %v2932 = vadd.f32 %v2671, %v2931
  %v2933 = vpop.f32.mrb[0].mxu0
  %v2934 = vand.u32 %v1973, 4294901760
  %v2935 = vsub.f32 %v1973, %v2934
  %v2936 = vand.u32 %v2935, 4294901760
  %v2937 = vsub.f32 %v2935, %v2936
  %v2938 = vand.u32 %v2937, 4294901760
  %2939 = vmatprep.mubr.f32.mxu0 %v2938
  %v2940 = vand.u32 %v1717, 4294901760
  %v2941 = vsub.f32 %v1717, %v2940
  %v2942 = vand.u32 %v2941, 4294901760
  %v2943 = vsub.f32 %v2941, %v2942
  %v2944 = vand.u32 %v2943, 4294901760
  %2945 = vmatmul.mubr.f32.gmra.mrb[0].mxu0 %v2944
  %v2946 = vpop.f32.mrb[0].mxu0
  %v2947 = vadd.f32 %v2671, %v2946
  %v2948 = vpop.f32.mrb[0].mxu0
  %v2949 = vand.u32 %v1987, 4294901760
  %v2950 = vsub.f32 %v1987, %v2949
  %v2951 = vand.u32 %v2950, 4294901760
  %v2952 = vsub.f32 %v2950, %v2951
  %v2953 = vand.u32 %v2952, 4294901760
  %2954 = vmatprep.mubr.f32.mxu0 %v2953
  %v2955 = vand.u32 %v1731, 4294901760
  %v2956 = vsub.f32 %v1731, %v2955
  %v2957 = vand.u32 %v2956, 4294901760
  %v2958 = vsub.f32 %v2956, %v2957
  %v2959 = vand.u32 %v2958, 4294901760
  %2960 = vmatmul.mubr.f32.gmra.mrb[0].mxu0 %v2959
  %v2961 = vpop.f32.mrb[0].mxu0
  %v2962 = vadd.f32 %v2671, %v2961
  %v2963 = vpop.f32.mrb[0].mxu0
  %v2964 = vand.u32 %v2001, 4294901760
  %v2965 = vsub.f32 %v2001, %v2964
  %v2966 = vand.u32 %v2965, 4294901760
  %v2967 = vsub.f32 %v2965, %v2966
  %v2968 = vand.u32 %v2967, 4294901760
  %2969 = vmatprep.mubr.f32.mxu0 %v2968
  %v2970 = vand.u32 %v1745, 4294901760
  %v2971 = vsub.f32 %v1745, %v2970
  %v2972 = vand.u32 %v2971, 4294901760
  %v2973 = vsub.f32 %v2971, %v2972
  %v2974 = vand.u32 %v2973, 4294901760
  %2975 = vmatmul.mubr.f32.gmra.mrb[0].mxu0 %v2974
  %v2976 = vpop.f32.mrb[0].mxu0
  %v2977 = vadd.f32 %v2671, %v2976
  %v2978 = vpop.f32.mrb[0].mxu0
  %v2979 = vand.u32 %v2015, 4294901760
  %v2980 = vsub.f32 %v2015, %v2979
  %v2981 = vand.u32 %v2980, 4294901760
  %v2982 = vsub.f32 %v2980, %v2981
  %v2983 = vand.u32 %v2982, 4294901760
  %2984 = vmatprep.mubr.f32.mxu0 %v2983
  %v2985 = vand.u32 %v1759, 4294901760
  %v2986 = vsub.f32 %v1759, %v2985
  %v2987 = vand.u32 %v2986, 4294901760
  %v2988 = vsub.f32 %v2986, %v2987
  %v2989 = vand.u32 %v2988, 4294901760
  %2990 = vmatmul.mubr.f32.gmra.mrb[0].mxu0 %v2989
  %v2991 = vpop.f32.mrb[0].mxu0
  %v2992 = vadd.f32 %v2671, %v2991
  %v2993 = vpop.f32.mrb[0].mxu0
  %v2994 = vand.u32 %v2029, 4294901760
  %v2995 = vsub.f32 %v2029, %v2994
  %v2996 = vand.u32 %v2995, 4294901760
  %v2997 = vsub.f32 %v2995, %v2996
  %v2998 = vand.u32 %v2997, 4294901760
  %2999 = vmatprep.mubr.f32.mxu0 %v2998
  %v3000 = vand.u32 %v1773, 4294901760
  %v3001 = vsub.f32 %v1773, %v3000
  %v3002 = vand.u32 %v3001, 4294901760
  %v3003 = vsub.f32 %v3001, %v3002
  %v3004 = vand.u32 %v3003, 4294901760
  %3005 = vmatmul.mubr.f32.gmra.mrb[0].mxu0 %v3004
  %v3006 = vpop.f32.mrb[0].mxu0
  %v3007 = vadd.f32 %v2671, %v3006
  %v3008 = vpop.f32.mrb[0].mxu0
  %3009 = vdwg.mxu0
  %3010 = vmatprep.subr.mxu0 0.0
  %v3011 = vand.u32 %v2522, 4294901760
  %v3012 = vsub.f32 %v2522, %v3011
  %v3013 = vand.u32 %v3012, 4294901760
  %v3014 = vsub.f32 %v3012, %v3013
  %v3015 = vand.u32 %v3014, 4294901760
  %3016 = vmatpush1.msra.mxu0 %v3015
  %3017 = vmatprep.subr.mxu0 0.0
  %v3018 = vand.u32 %v2523, 4294901760
  %v3019 = vsub.f32 %v2523, %v3018
  %v3020 = vand.u32 %v3019, 4294901760
  %v3021 = vsub.f32 %v3019, %v3020
  %v3022 = vand.u32 %v3021, 4294901760
  %3023 = vmatpush1.msra.mxu0 %v3022
  %3024 = vmatprep.subr.mxu0 0.0
  %v3025 = vand.u32 %v2524, 4294901760
  %v3026 = vsub.f32 %v2524, %v3025
  %v3027 = vand.u32 %v3026, 4294901760
  %v3028 = vsub.f32 %v3026, %v3027
  %v3029 = vand.u32 %v3028, 4294901760
  %3030 = vmatpush1.msra.mxu0 %v3029
  %3031 = vmatprep.subr.mxu0 0.0
  %v3032 = vand.u32 %v2525, 4294901760
  %v3033 = vsub.f32 %v2525, %v3032
  %v3034 = vand.u32 %v3033, 4294901760
  %v3035 = vsub.f32 %v3033, %v3034
  %v3036 = vand.u32 %v3035, 4294901760
  %3037 = vmatpush1.msra.mxu0 %v3036
  %3038 = vmatprep.subr.mxu0 0.0
  %v3039 = vand.u32 %v2526, 4294901760
  %v3040 = vsub.f32 %v2526, %v3039
  %v3041 = vand.u32 %v3040, 4294901760
  %v3042 = vsub.f32 %v3040, %v3041
  %v3043 = vand.u32 %v3042, 4294901760
  %3044 = vmatpush1.msra.mxu0 %v3043
  %3045 = vmatprep.subr.mxu0 0.0
  %v3046 = vand.u32 %v2527, 4294901760
  %v3047 = vsub.f32 %v2527, %v3046
  %v3048 = vand.u32 %v3047, 4294901760
  %v3049 = vsub.f32 %v3047, %v3048
  %v3050 = vand.u32 %v3049, 4294901760
  %3051 = vmatpush1.msra.mxu0 %v3050
  %3052 = vmatprep.subr.mxu0 0.0
  %v3053 = vand.u32 %v2528, 4294901760
  %v3054 = vsub.f32 %v2528, %v3053
  %v3055 = vand.u32 %v3054, 4294901760
  %v3056 = vsub.f32 %v3054, %v3055
  %v3057 = vand.u32 %v3056, 4294901760
  %3058 = vmatpush1.msra.mxu0 %v3057
  %3059 = vmatprep.subr.mxu0 0.0
  %v3060 = vand.u32 %v2529, 4294901760
  %v3061 = vsub.f32 %v2529, %v3060
  %v3062 = vand.u32 %v3061, 4294901760
  %v3063 = vsub.f32 %v3061, %v3062
  %v3064 = vand.u32 %v3063, 4294901760
  %3065 = vmatpush1.msra.mxu0 %v3064
  %3066 = vmatprep.subr.mxu0 0.0
  %v3067 = vand.u32 %v2530, 4294901760
  %v3068 = vsub.f32 %v2530, %v3067
  %v3069 = vand.u32 %v3068, 4294901760
  %v3070 = vsub.f32 %v3068, %v3069
  %v3071 = vand.u32 %v3070, 4294901760
  %3072 = vmatpush1.msra.mxu0 %v3071
  %3073 = vmatprep.subr.mxu0 0.0
  %v3074 = vand.u32 %v2531, 4294901760
  %v3075 = vsub.f32 %v2531, %v3074
  %v3076 = vand.u32 %v3075, 4294901760
  %v3077 = vsub.f32 %v3075, %v3076
  %v3078 = vand.u32 %v3077, 4294901760
  %3079 = vmatpush1.msra.mxu0 %v3078
  %3080 = vmatprep.subr.mxu0 0.0
  %v3081 = vand.u32 %v2532, 4294901760
  %v3082 = vsub.f32 %v2532, %v3081
  %v3083 = vand.u32 %v3082, 4294901760
  %v3084 = vsub.f32 %v3082, %v3083
  %v3085 = vand.u32 %v3084, 4294901760
  %3086 = vmatpush1.msra.mxu0 %v3085
  %3087 = vmatprep.subr.mxu0 0.0
  %v3088 = vand.u32 %v2533, 4294901760
  %v3089 = vsub.f32 %v2533, %v3088
  %v3090 = vand.u32 %v3089, 4294901760
  %v3091 = vsub.f32 %v3089, %v3090
  %v3092 = vand.u32 %v3091, 4294901760
  %3093 = vmatpush1.msra.mxu0 %v3092
  %3094 = vmatprep.subr.mxu0 0.0
  %v3095 = vand.u32 %v2534, 4294901760
  %v3096 = vsub.f32 %v2534, %v3095
  %v3097 = vand.u32 %v3096, 4294901760
  %v3098 = vsub.f32 %v3096, %v3097
  %v3099 = vand.u32 %v3098, 4294901760
  %3100 = vmatpush1.msra.mxu0 %v3099
  %3101 = vmatprep.subr.mxu0 0.0
  %v3102 = vand.u32 %v2535, 4294901760
  %v3103 = vsub.f32 %v2535, %v3102
  %v3104 = vand.u32 %v3103, 4294901760
  %v3105 = vsub.f32 %v3103, %v3104
  %v3106 = vand.u32 %v3105, 4294901760
  %3107 = vmatpush1.msra.mxu0 %v3106
  %3108 = vmatprep.subr.mxu0 0.0
  %v3109 = vand.u32 %v2536, 4294901760
  %v3110 = vsub.f32 %v2536, %v3109
  %v3111 = vand.u32 %v3110, 4294901760
  %v3112 = vsub.f32 %v3110, %v3111
  %v3113 = vand.u32 %v3112, 4294901760
  %3114 = vmatpush1.msra.mxu0 %v3113
  %3115 = vmatprep.subr.mxu0 0.0
  %v3116 = vand.u32 %v2537, 4294901760
  %v3117 = vsub.f32 %v2537, %v3116
  %v3118 = vand.u32 %v3117, 4294901760
  %v3119 = vsub.f32 %v3117, %v3118
  %v3120 = vand.u32 %v3119, 4294901760
  %3121 = vmatpush1.msra.mxu0 %v3120
  %3122 = vmatprep.subr.mxu0 0.0
  %v3123 = vand.u32 %v2538, 4294901760
  %v3124 = vsub.f32 %v2538, %v3123
  %v3125 = vand.u32 %v3124, 4294901760
  %v3126 = vsub.f32 %v3124, %v3125
  %v3127 = vand.u32 %v3126, 4294901760
  %3128 = vmatpush1.msra.mxu0 %v3127
  %3129 = vmatprep.subr.mxu0 0.0
  %v3130 = vand.u32 %v2539, 4294901760
  %v3131 = vsub.f32 %v2539, %v3130
  %v3132 = vand.u32 %v3131, 4294901760
  %v3133 = vsub.f32 %v3131, %v3132
  %v3134 = vand.u32 %v3133, 4294901760
  %3135 = vmatpush1.msra.mxu0 %v3134
  %3136 = vmatprep.subr.mxu0 0.0
  %v3137 = vand.u32 %v2540, 4294901760
  %v3138 = vsub.f32 %v2540, %v3137
  %v3139 = vand.u32 %v3138, 4294901760
  %v3140 = vsub.f32 %v3138, %v3139
  %v3141 = vand.u32 %v3140, 4294901760
  %3142 = vmatpush1.msra.mxu0 %v3141
  %3143 = vmatprep.subr.mxu0 0.0
  %v3144 = vand.u32 %v2541, 4294901760
  %v3145 = vsub.f32 %v2541, %v3144
  %v3146 = vand.u32 %v3145, 4294901760
  %v3147 = vsub.f32 %v3145, %v3146
  %v3148 = vand.u32 %v3147, 4294901760
  %3149 = vmatpush1.msra.mxu0 %v3148
  %3150 = vmatprep.subr.mxu0 0.0
  %v3151 = vand.u32 %v2542, 4294901760
  %v3152 = vsub.f32 %v2542, %v3151
  %v3153 = vand.u32 %v3152, 4294901760
  %v3154 = vsub.f32 %v3152, %v3153
  %v3155 = vand.u32 %v3154, 4294901760
  %3156 = vmatpush1.msra.mxu0 %v3155
  %3157 = vmatprep.subr.mxu0 0.0
  %v3158 = vand.u32 %v2543, 4294901760
  %v3159 = vsub.f32 %v2543, %v3158
  %v3160 = vand.u32 %v3159, 4294901760
  %v3161 = vsub.f32 %v3159, %v3160
  %v3162 = vand.u32 %v3161, 4294901760
  %3163 = vmatpush1.msra.mxu0 %v3162
  %3164 = vmatprep.subr.mxu0 0.0
  %v3165 = vand.u32 %v2544, 4294901760
  %v3166 = vsub.f32 %v2544, %v3165
  %v3167 = vand.u32 %v3166, 4294901760
  %v3168 = vsub.f32 %v3166, %v3167
  %v3169 = vand.u32 %v3168, 4294901760
  %3170 = vmatpush1.msra.mxu0 %v3169
  %3171 = vmatprep.subr.mxu0 0.0
  %v3172 = vand.u32 %v2545, 4294901760
  %v3173 = vsub.f32 %v2545, %v3172
  %v3174 = vand.u32 %v3173, 4294901760
  %v3175 = vsub.f32 %v3173, %v3174
  %v3176 = vand.u32 %v3175, 4294901760
  %3177 = vmatpush1.msra.mxu0 %v3176
  %3178 = vmatprep.subr.mxu0 0.0
  %v3179 = vand.u32 %v2546, 4294901760
  %v3180 = vsub.f32 %v2546, %v3179
  %v3181 = vand.u32 %v3180, 4294901760
  %v3182 = vsub.f32 %v3180, %v3181
  %v3183 = vand.u32 %v3182, 4294901760
  %3184 = vmatpush1.msra.mxu0 %v3183
  %3185 = vmatprep.subr.mxu0 0.0
  %v3186 = vand.u32 %v2547, 4294901760
  %v3187 = vsub.f32 %v2547, %v3186
  %v3188 = vand.u32 %v3187, 4294901760
  %v3189 = vsub.f32 %v3187, %v3188
  %v3190 = vand.u32 %v3189, 4294901760
  %3191 = vmatpush1.msra.mxu0 %v3190
  %3192 = vmatprep.subr.mxu0 0.0
  %v3193 = vand.u32 %v2548, 4294901760
  %v3194 = vsub.f32 %v2548, %v3193
  %v3195 = vand.u32 %v3194, 4294901760
  %v3196 = vsub.f32 %v3194, %v3195
  %v3197 = vand.u32 %v3196, 4294901760
  %3198 = vmatpush1.msra.mxu0 %v3197
  %3199 = vmatprep.subr.mxu0 0.0
  %v3200 = vand.u32 %v2549, 4294901760
  %v3201 = vsub.f32 %v2549, %v3200
  %v3202 = vand.u32 %v3201, 4294901760
  %v3203 = vsub.f32 %v3201, %v3202
  %v3204 = vand.u32 %v3203, 4294901760
  %3205 = vmatpush1.msra.mxu0 %v3204
  %3206 = vmatprep.subr.mxu0 0.0
  %v3207 = vand.u32 %v2550, 4294901760
  %v3208 = vsub.f32 %v2550, %v3207
  %v3209 = vand.u32 %v3208, 4294901760
  %v3210 = vsub.f32 %v3208, %v3209
  %v3211 = vand.u32 %v3210, 4294901760
  %3212 = vmatpush1.msra.mxu0 %v3211
  %3213 = vmatprep.subr.mxu0 0.0
  %v3214 = vand.u32 %v2551, 4294901760
  %v3215 = vsub.f32 %v2551, %v3214
  %v3216 = vand.u32 %v3215, 4294901760
  %v3217 = vsub.f32 %v3215, %v3216
  %v3218 = vand.u32 %v3217, 4294901760
  %3219 = vmatpush1.msra.mxu0 %v3218
  %3220 = vmatprep.subr.mxu0 0.0
  %v3221 = vand.u32 %v2552, 4294901760
  %v3222 = vsub.f32 %v2552, %v3221
  %v3223 = vand.u32 %v3222, 4294901760
  %v3224 = vsub.f32 %v3222, %v3223
  %v3225 = vand.u32 %v3224, 4294901760
  %3226 = vmatpush1.msra.mxu0 %v3225
  %3227 = vmatprep.subr.mxu0 0.0
  %v3228 = vand.u32 %v2553, 4294901760
  %v3229 = vsub.f32 %v2553, %v3228
  %v3230 = vand.u32 %v3229, 4294901760
  %v3231 = vsub.f32 %v3229, %v3230
  %v3232 = vand.u32 %v3231, 4294901760
  %3233 = vmatpush1.msra.mxu0 %v3232
  %v3234 = vand.u32 %v1819, 4294901760
  %3235 = vmatprep.mubr.f32.mxu0 %v3234
  %v3236 = vand.u32 %v1563, 4294901760
  %3237 = vmatmul.mubr.f32.gmra.mrb[0].mxu0 %v3236
  %v3238 = vpop.f32.mrb[0].mxu0
  %v3239 = vadd.f32 %v2782, %v3238
  %v3240 = vpop.f32.mrb[0].mxu0
  %v3241 = vand.u32 %v1833, 4294901760
  %3242 = vmatprep.mubr.f32.mxu0 %v3241
  %v3243 = vand.u32 %v1577, 4294901760
  %3244 = vmatmul.mubr.f32.gmra.mrb[0].mxu0 %v3243
  %v3245 = vpop.f32.mrb[0].mxu0
  %v3246 = vadd.f32 %v2797, %v3245
  %v3247 = vpop.f32.mrb[0].mxu0
  %v3248 = vand.u32 %v1847, 4294901760
  %3249 = vmatprep.mubr.f32.mxu0 %v3248
  %v3250 = vand.u32 %v1591, 4294901760
  %3251 = vmatmul.mubr.f32.gmra.mrb[0].mxu0 %v3250
  %v3252 = vpop.f32.mrb[0].mxu0
  %v3253 = vadd.f32 %v2812, %v3252
  %v3254 = vpop.f32.mrb[0].mxu0
  %v3255 = vand.u32 %v1861, 4294901760
  %3256 = vmatprep.mubr.f32.mxu0 %v3255
  %v3257 = vand.u32 %v1605, 4294901760
  %3258 = vmatmul.mubr.f32.gmra.mrb[0].mxu0 %v3257
  %v3259 = vpop.f32.mrb[0].mxu0
  %v3260 = vadd.f32 %v2827, %v3259
  %v3261 = vpop.f32.mrb[0].mxu0
  %v3262 = vand.u32 %v1875, 4294901760
  %3263 = vmatprep.mubr.f32.mxu0 %v3262
  %v3264 = vand.u32 %v1619, 4294901760
  %3265 = vmatmul.mubr.f32.gmra.mrb[0].mxu0 %v3264
  %v3266 = vpop.f32.mrb[0].mxu0
  %v3267 = vadd.f32 %v2842, %v3266
  %v3268 = vpop.f32.mrb[0].mxu0
  %v3269 = vand.u32 %v1889, 4294901760
  %3270 = vmatprep.mubr.f32.mxu0 %v3269
  %v3271 = vand.u32 %v1633, 4294901760
  %3272 = vmatmul.mubr.f32.gmra.mrb[0].mxu0 %v3271
  %v3273 = vpop.f32.mrb[0].mxu0
  %v3274 = vadd.f32 %v2857, %v3273
  %v3275 = vpop.f32.mrb[0].mxu0
  %v3276 = vand.u32 %v1903, 4294901760
  %3277 = vmatprep.mubr.f32.mxu0 %v3276
  %v3278 = vand.u32 %v1647, 4294901760
  %3279 = vmatmul.mubr.f32.gmra.mrb[0].mxu0 %v3278
  %v3280 = vpop.f32.mrb[0].mxu0
  %v3281 = vadd.f32 %v2872, %v3280
  %v3282 = vpop.f32.mrb[0].mxu0
  %v3283 = vand.u32 %v1917, 4294901760
  %3284 = vmatprep.mubr.f32.mxu0 %v3283
  %v3285 = vand.u32 %v1661, 4294901760
  %3286 = vmatmul.mubr.f32.gmra.mrb[0].mxu0 %v3285
  %v3287 = vpop.f32.mrb[0].mxu0
  %v3288 = vadd.f32 %v2887, %v3287
  %v3289 = vpop.f32.mrb[0].mxu0
  %v3290 = vand.u32 %v1931, 4294901760
  %3291 = vmatprep.mubr.f32.mxu0 %v3290
  %v3292 = vand.u32 %v1675, 4294901760
  %3293 = vmatmul.mubr.f32.gmra.mrb[0].mxu0 %v3292
  %v3294 = vpop.f32.mrb[0].mxu0
  %v3295 = vadd.f32 %v2902, %v3294
  %v3296 = vpop.f32.mrb[0].mxu0
  %v3297 = vand.u32 %v1945, 4294901760
  %3298 = vmatprep.mubr.f32.mxu0 %v3297
  %v3299 = vand.u32 %v1689, 4294901760
  %3300 = vmatmul.mubr.f32.gmra.mrb[0].mxu0 %v3299
  %v3301 = vpop.f32.mrb[0].mxu0
  %v3302 = vadd.f32 %v2917, %v3301
  %v3303 = vpop.f32.mrb[0].mxu0
  %v3304 = vand.u32 %v1959, 4294901760
  %3305 = vmatprep.mubr.f32.mxu0 %v3304
  %v3306 = vand.u32 %v1703, 4294901760
  %3307 = vmatmul.mubr.f32.gmra.mrb[0].mxu0 %v3306
  %v3308 = vpop.f32.mrb[0].mxu0
  %v3309 = vadd.f32 %v2932, %v3308
  %v3310 = vpop.f32.mrb[0].mxu0
  %v3311 = vand.u32 %v1973, 4294901760
  %3312 = vmatprep.mubr.f32.mxu0 %v3311
  %v3313 = vand.u32 %v1717, 4294901760
  %3314 = vmatmul.mubr.f32.gmra.mrb[0].mxu0 %v3313
  %v3315 = vpop.f32.mrb[0].mxu0
  %v3316 = vadd.f32 %v2947, %v3315
  %v3317 = vpop.f32.mrb[0].mxu0
  %v3318 = vand.u32 %v1987, 4294901760
  %3319 = vmatprep.mubr.f32.mxu0 %v3318
  %v3320 = vand.u32 %v1731, 4294901760
  %3321 = vmatmul.mubr.f32.gmra.mrb[0].mxu0 %v3320
  %v3322 = vpop.f32.mrb[0].mxu0
  %v3323 = vadd.f32 %v2962, %v3322
  %v3324 = vpop.f32.mrb[0].mxu0
  %v3325 = vand.u32 %v2001, 4294901760
  %3326 = vmatprep.mubr.f32.mxu0 %v3325
  %v3327 = vand.u32 %v1745, 4294901760
  %3328 = vmatmul.mubr.f32.gmra.mrb[0].mxu0 %v3327
  %v3329 = vpop.f32.mrb[0].mxu0
  %v3330 = vadd.f32 %v2977, %v3329
  %v3331 = vpop.f32.mrb[0].mxu0
  %v3332 = vand.u32 %v2015, 4294901760
  %3333 = vmatprep.mubr.f32.mxu0 %v3332
  %v3334 = vand.u32 %v1759, 4294901760
  %3335 = vmatmul.mubr.f32.gmra.mrb[0].mxu0 %v3334
  %v3336 = vpop.f32.mrb[0].mxu0
  %v3337 = vadd.f32 %v2992, %v3336
  %v3338 = vpop.f32.mrb[0].mxu0
  %v3339 = vand.u32 %v2029, 4294901760
  %3340 = vmatprep.mubr.f32.mxu0 %v3339
  %v3341 = vand.u32 %v1773, 4294901760
  %3342 = vmatmul.mubr.f32.gmra.mrb[0].mxu0 %v3341
  %v3343 = vpop.f32.mrb[0].mxu0
  %v3344 = vadd.f32 %v3007, %v3343
  %v3345 = vpop.f32.mrb[0].mxu0
  %3346 = vdwg.mxu0
  %3347 = vmatprep.subr.mxu0 0.0
  %v3348 = vand.u32 %v2522, 4294901760
  %v3349 = vsub.f32 %v2522, %v3348
  %3350 = vmatpush1.msra.mxu0 %v3349
  %3351 = vmatprep.subr.mxu0 0.0
  %v3352 = vand.u32 %v2523, 4294901760
  %v3353 = vsub.f32 %v2523, %v3352
  %3354 = vmatpush1.msra.mxu0 %v3353
  %3355 = vmatprep.subr.mxu0 0.0
  %v3356 = vand.u32 %v2524, 4294901760
  %v3357 = vsub.f32 %v2524, %v3356
  %3358 = vmatpush1.msra.mxu0 %v3357
  %3359 = vmatprep.subr.mxu0 0.0
  %v3360 = vand.u32 %v2525, 4294901760
  %v3361 = vsub.f32 %v2525, %v3360
  %3362 = vmatpush1.msra.mxu0 %v3361
  %3363 = vmatprep.subr.mxu0 0.0
  %v3364 = vand.u32 %v2526, 4294901760
  %v3365 = vsub.f32 %v2526, %v3364
  %3366 = vmatpush1.msra.mxu0 %v3365
  %3367 = vmatprep.subr.mxu0 0.0
  %v3368 = vand.u32 %v2527, 4294901760
  %v3369 = vsub.f32 %v2527, %v3368
  %3370 = vmatpush1.msra.mxu0 %v3369
  %3371 = vmatprep.subr.mxu0 0.0
  %v3372 = vand.u32 %v2528, 4294901760
  %v3373 = vsub.f32 %v2528, %v3372
  %3374 = vmatpush1.msra.mxu0 %v3373
  %3375 = vmatprep.subr.mxu0 0.0
  %v3376 = vand.u32 %v2529, 4294901760
  %v3377 = vsub.f32 %v2529, %v3376
  %3378 = vmatpush1.msra.mxu0 %v3377
  %3379 = vmatprep.subr.mxu0 0.0
  %v3380 = vand.u32 %v2530, 4294901760
  %v3381 = vsub.f32 %v2530, %v3380
  %3382 = vmatpush1.msra.mxu0 %v3381
  %3383 = vmatprep.subr.mxu0 0.0
  %v3384 = vand.u32 %v2531, 4294901760
  %v3385 = vsub.f32 %v2531, %v3384
  %3386 = vmatpush1.msra.mxu0 %v3385
  %3387 = vmatprep.subr.mxu0 0.0
  %v3388 = vand.u32 %v2532, 4294901760
  %v3389 = vsub.f32 %v2532, %v3388
  %3390 = vmatpush1.msra.mxu0 %v3389
  %3391 = vmatprep.subr.mxu0 0.0
  %v3392 = vand.u32 %v2533, 4294901760
  %v3393 = vsub.f32 %v2533, %v3392
  %3394 = vmatpush1.msra.mxu0 %v3393
  %3395 = vmatprep.subr.mxu0 0.0
  %v3396 = vand.u32 %v2534, 4294901760
  %v3397 = vsub.f32 %v2534, %v3396
  %3398 = vmatpush1.msra.mxu0 %v3397
  %3399 = vmatprep.subr.mxu0 0.0
  %v3400 = vand.u32 %v2535, 4294901760
  %v3401 = vsub.f32 %v2535, %v3400
  %3402 = vmatpush1.msra.mxu0 %v3401
  %3403 = vmatprep.subr.mxu0 0.0
  %v3404 = vand.u32 %v2536, 4294901760
  %v3405 = vsub.f32 %v2536, %v3404
  %3406 = vmatpush1.msra.mxu0 %v3405
  %3407 = vmatprep.subr.mxu0 0.0
  %v3408 = vand.u32 %v2537, 4294901760
  %v3409 = vsub.f32 %v2537, %v3408
  %3410 = vmatpush1.msra.mxu0 %v3409
  %3411 = vmatprep.subr.mxu0 0.0
  %v3412 = vand.u32 %v2538, 4294901760
  %v3413 = vsub.f32 %v2538, %v3412
  %3414 = vmatpush1.msra.mxu0 %v3413
  %3415 = vmatprep.subr.mxu0 0.0
  %v3416 = vand.u32 %v2539, 4294901760
  %v3417 = vsub.f32 %v2539, %v3416
  %3418 = vmatpush1.msra.mxu0 %v3417
  %3419 = vmatprep.subr.mxu0 0.0
  %v3420 = vand.u32 %v2540, 4294901760
  %v3421 = vsub.f32 %v2540, %v3420
  %3422 = vmatpush1.msra.mxu0 %v3421
  %3423 = vmatprep.subr.mxu0 0.0
  %v3424 = vand.u32 %v2541, 4294901760
  %v3425 = vsub.f32 %v2541, %v3424
  %3426 = vmatpush1.msra.mxu0 %v3425
  %3427 = vmatprep.subr.mxu0 0.0
  %v3428 = vand.u32 %v2542, 4294901760
  %v3429 = vsub.f32 %v2542, %v3428
  %3430 = vmatpush1.msra.mxu0 %v3429
  %3431 = vmatprep.subr.mxu0 0.0
  %v3432 = vand.u32 %v2543, 4294901760
  %v3433 = vsub.f32 %v2543, %v3432
  %3434 = vmatpush1.msra.mxu0 %v3433
  %3435 = vmatprep.subr.mxu0 0.0
  %v3436 = vand.u32 %v2544, 4294901760
  %v3437 = vsub.f32 %v2544, %v3436
  %3438 = vmatpush1.msra.mxu0 %v3437
  %3439 = vmatprep.subr.mxu0 0.0
  %v3440 = vand.u32 %v2545, 4294901760
  %v3441 = vsub.f32 %v2545, %v3440
  %3442 = vmatpush1.msra.mxu0 %v3441
  %3443 = vmatprep.subr.mxu0 0.0
  %v3444 = vand.u32 %v2546, 4294901760
  %v3445 = vsub.f32 %v2546, %v3444
  %3446 = vmatpush1.msra.mxu0 %v3445
  %3447 = vmatprep.subr.mxu0 0.0
  %v3448 = vand.u32 %v2547, 4294901760
  %v3449 = vsub.f32 %v2547, %v3448
  %3450 = vmatpush1.msra.mxu0 %v3449
  %3451 = vmatprep.subr.mxu0 0.0
  %v3452 = vand.u32 %v2548, 4294901760
  %v3453 = vsub.f32 %v2548, %v3452
  %3454 = vmatpush1.msra.mxu0 %v3453
  %3455 = vmatprep.subr.mxu0 0.0
  %v3456 = vand.u32 %v2549, 4294901760
  %v3457 = vsub.f32 %v2549, %v3456
  %3458 = vmatpush1.msra.mxu0 %v3457
  %3459 = vmatprep.subr.mxu0 0.0
  %v3460 = vand.u32 %v2550, 4294901760
  %v3461 = vsub.f32 %v2550, %v3460
  %3462 = vmatpush1.msra.mxu0 %v3461
  %3463 = vmatprep.subr.mxu0 0.0
  %v3464 = vand.u32 %v2551, 4294901760
  %v3465 = vsub.f32 %v2551, %v3464
  %3466 = vmatpush1.msra.mxu0 %v3465
  %3467 = vmatprep.subr.mxu0 0.0
  %v3468 = vand.u32 %v2552, 4294901760
  %v3469 = vsub.f32 %v2552, %v3468
  %3470 = vmatpush1.msra.mxu0 %v3469
  %3471 = vmatprep.subr.mxu0 0.0
  %v3472 = vand.u32 %v2553, 4294901760
  %v3473 = vsub.f32 %v2553, %v3472
  %3474 = vmatpush1.msra.mxu0 %v3473
  %v3475 = vand.u32 %v1819, 4294901760
  %v3476 = vsub.f32 %v1819, %v3475
  %3477 = vmatprep.mubr.f32.mxu0 %v3476
  %v3478 = vand.u32 %v1563, 4294901760
  %v3479 = vsub.f32 %v1563, %v3478
  %3480 = vmatmul.mubr.f32.gmra.mrb[0].mxu0 %v3479
  %v3481 = vpop.f32.mrb[0].mxu0
  %v3482 = vadd.f32 %v3239, %v3481
  %v3483 = vpop.f32.mrb[0].mxu0
  %v3484 = vand.u32 %v1833, 4294901760
  %v3485 = vsub.f32 %v1833, %v3484
  %3486 = vmatprep.mubr.f32.mxu0 %v3485
  %v3487 = vand.u32 %v1577, 4294901760
  %v3488 = vsub.f32 %v1577, %v3487
  %3489 = vmatmul.mubr.f32.gmra.mrb[0].mxu0 %v3488
  %v3490 = vpop.f32.mrb[0].mxu0
  %v3491 = vadd.f32 %v3246, %v3490
  %v3492 = vpop.f32.mrb[0].mxu0
  %v3493 = vand.u32 %v1847, 4294901760
  %v3494 = vsub.f32 %v1847, %v3493
  %3495 = vmatprep.mubr.f32.mxu0 %v3494
  %v3496 = vand.u32 %v1591, 4294901760
  %v3497 = vsub.f32 %v1591, %v3496
  %3498 = vmatmul.mubr.f32.gmra.mrb[0].mxu0 %v3497
  %v3499 = vpop.f32.mrb[0].mxu0
  %v3500 = vadd.f32 %v3253, %v3499
  %v3501 = vpop.f32.mrb[0].mxu0
  %v3502 = vand.u32 %v1861, 4294901760
  %v3503 = vsub.f32 %v1861, %v3502
  %3504 = vmatprep.mubr.f32.mxu0 %v3503
  %v3505 = vand.u32 %v1605, 4294901760
  %v3506 = vsub.f32 %v1605, %v3505
  %3507 = vmatmul.mubr.f32.gmra.mrb[0].mxu0 %v3506
  %v3508 = vpop.f32.mrb[0].mxu0
  %v3509 = vadd.f32 %v3260, %v3508
  %v3510 = vpop.f32.mrb[0].mxu0
  %v3511 = vand.u32 %v1875, 4294901760
  %v3512 = vsub.f32 %v1875, %v3511
  %3513 = vmatprep.mubr.f32.mxu0 %v3512
  %v3514 = vand.u32 %v1619, 4294901760
  %v3515 = vsub.f32 %v1619, %v3514
  %3516 = vmatmul.mubr.f32.gmra.mrb[0].mxu0 %v3515
  %v3517 = vpop.f32.mrb[0].mxu0
  %v3518 = vadd.f32 %v3267, %v3517
  %v3519 = vpop.f32.mrb[0].mxu0
  %v3520 = vand.u32 %v1889, 4294901760
  %v3521 = vsub.f32 %v1889, %v3520
  %3522 = vmatprep.mubr.f32.mxu0 %v3521
  %v3523 = vand.u32 %v1633, 4294901760
  %v3524 = vsub.f32 %v1633, %v3523
  %3525 = vmatmul.mubr.f32.gmra.mrb[0].mxu0 %v3524
  %v3526 = vpop.f32.mrb[0].mxu0
  %v3527 = vadd.f32 %v3274, %v3526
  %v3528 = vpop.f32.mrb[0].mxu0
  %v3529 = vand.u32 %v1903, 4294901760
  %v3530 = vsub.f32 %v1903, %v3529
  %3531 = vmatprep.mubr.f32.mxu0 %v3530
  %v3532 = vand.u32 %v1647, 4294901760
  %v3533 = vsub.f32 %v1647, %v3532
  %3534 = vmatmul.mubr.f32.gmra.mrb[0].mxu0 %v3533
  %v3535 = vpop.f32.mrb[0].mxu0
  %v3536 = vadd.f32 %v3281, %v3535
  %v3537 = vpop.f32.mrb[0].mxu0
  %v3538 = vand.u32 %v1917, 4294901760
  %v3539 = vsub.f32 %v1917, %v3538
  %3540 = vmatprep.mubr.f32.mxu0 %v3539
  %v3541 = vand.u32 %v1661, 4294901760
  %v3542 = vsub.f32 %v1661, %v3541
  %3543 = vmatmul.mubr.f32.gmra.mrb[0].mxu0 %v3542
  %v3544 = vpop.f32.mrb[0].mxu0
  %v3545 = vadd.f32 %v3288, %v3544
  %v3546 = vpop.f32.mrb[0].mxu0
  %v3547 = vand.u32 %v1931, 4294901760
  %v3548 = vsub.f32 %v1931, %v3547
  %3549 = vmatprep.mubr.f32.mxu0 %v3548
  %v3550 = vand.u32 %v1675, 4294901760
  %v3551 = vsub.f32 %v1675, %v3550
  %3552 = vmatmul.mubr.f32.gmra.mrb[0].mxu0 %v3551
  %v3553 = vpop.f32.mrb[0].mxu0
  %v3554 = vadd.f32 %v3295, %v3553
  %v3555 = vpop.f32.mrb[0].mxu0
  %v3556 = vand.u32 %v1945, 4294901760
  %v3557 = vsub.f32 %v1945, %v3556
  %3558 = vmatprep.mubr.f32.mxu0 %v3557
  %v3559 = vand.u32 %v1689, 4294901760
  %v3560 = vsub.f32 %v1689, %v3559
  %3561 = vmatmul.mubr.f32.gmra.mrb[0].mxu0 %v3560
  %v3562 = vpop.f32.mrb[0].mxu0
  %v3563 = vadd.f32 %v3302, %v3562
  %v3564 = vpop.f32.mrb[0].mxu0
  %v3565 = vand.u32 %v1959, 4294901760
  %v3566 = vsub.f32 %v1959, %v3565
  %3567 = vmatprep.mubr.f32.mxu0 %v3566
  %v3568 = vand.u32 %v1703, 4294901760
  %v3569 = vsub.f32 %v1703, %v3568
  %3570 = vmatmul.mubr.f32.gmra.mrb[0].mxu0 %v3569
  %v3571 = vpop.f32.mrb[0].mxu0
  %v3572 = vadd.f32 %v3309, %v3571
  %v3573 = vpop.f32.mrb[0].mxu0
  %v3574 = vand.u32 %v1973, 4294901760
  %v3575 = vsub.f32 %v1973, %v3574
  %3576 = vmatprep.mubr.f32.mxu0 %v3575
  %v3577 = vand.u32 %v1717, 4294901760
  %v3578 = vsub.f32 %v1717, %v3577
  %3579 = vmatmul.mubr.f32.gmra.mrb[0].mxu0 %v3578
  %v3580 = vpop.f32.mrb[0].mxu0
  %v3581 = vadd.f32 %v3316, %v3580
  %v3582 = vpop.f32.mrb[0].mxu0
  %v3583 = vand.u32 %v1987, 4294901760
  %v3584 = vsub.f32 %v1987, %v3583
  %3585 = vmatprep.mubr.f32.mxu0 %v3584
  %v3586 = vand.u32 %v1731, 4294901760
  %v3587 = vsub.f32 %v1731, %v3586
  %3588 = vmatmul.mubr.f32.gmra.mrb[0].mxu0 %v3587
  %v3589 = vpop.f32.mrb[0].mxu0
  %v3590 = vadd.f32 %v3323, %v3589
  %v3591 = vpop.f32.mrb[0].mxu0
  %v3592 = vand.u32 %v2001, 4294901760
  %v3593 = vsub.f32 %v2001, %v3592
  %3594 = vmatprep.mubr.f32.mxu0 %v3593
  %v3595 = vand.u32 %v1745, 4294901760
  %v3596 = vsub.f32 %v1745, %v3595
  %3597 = vmatmul.mubr.f32.gmra.mrb[0].mxu0 %v3596
  %v3598 = vpop.f32.mrb[0].mxu0
  %v3599 = vadd.f32 %v3330, %v3598
  %v3600 = vpop.f32.mrb[0].mxu0
  %v3601 = vand.u32 %v2015, 4294901760
  %v3602 = vsub.f32 %v2015, %v3601
  %3603 = vmatprep.mubr.f32.mxu0 %v3602
  %v3604 = vand.u32 %v1759, 4294901760
  %v3605 = vsub.f32 %v1759, %v3604
  %3606 = vmatmul.mubr.f32.gmra.mrb[0].mxu0 %v3605
  %v3607 = vpop.f32.mrb[0].mxu0
  %v3608 = vadd.f32 %v3337, %v3607
  %v3609 = vpop.f32.mrb[0].mxu0
  %v3610 = vand.u32 %v2029, 4294901760
  %v3611 = vsub.f32 %v2029, %v3610
  %3612 = vmatprep.mubr.f32.mxu0 %v3611
  %v3613 = vand.u32 %v1773, 4294901760
  %v3614 = vsub.f32 %v1773, %v3613
  %3615 = vmatmul.mubr.f32.gmra.mrb[0].mxu0 %v3614
  %v3616 = vpop.f32.mrb[0].mxu0
  %v3617 = vadd.f32 %v3344, %v3616
  %v3618 = vpop.f32.mrb[0].mxu0
  %3619 = vdwg.mxu0
  %3620 = vmatprep.subr.mxu0 0.0
  %v3621 = vand.u32 %v2522, 4294901760
  %3622 = vmatpush1.msra.mxu0 %v3621
  %3623 = vmatprep.subr.mxu0 0.0
  %v3624 = vand.u32 %v2523, 4294901760
  %3625 = vmatpush1.msra.mxu0 %v3624
  %3626 = vmatprep.subr.mxu0 0.0
  %v3627 = vand.u32 %v2524, 4294901760
  %3628 = vmatpush1.msra.mxu0 %v3627
  %3629 = vmatprep.subr.mxu0 0.0
  %v3630 = vand.u32 %v2525, 4294901760
  %3631 = vmatpush1.msra.mxu0 %v3630
  %3632 = vmatprep.subr.mxu0 0.0
  %v3633 = vand.u32 %v2526, 4294901760
  %3634 = vmatpush1.msra.mxu0 %v3633
  %3635 = vmatprep.subr.mxu0 0.0
  %v3636 = vand.u32 %v2527, 4294901760
  %3637 = vmatpush1.msra.mxu0 %v3636
  %3638 = vmatprep.subr.mxu0 0.0
  %v3639 = vand.u32 %v2528, 4294901760
  %3640 = vmatpush1.msra.mxu0 %v3639
  %3641 = vmatprep.subr.mxu0 0.0
  %v3642 = vand.u32 %v2529, 4294901760
  %3643 = vmatpush1.msra.mxu0 %v3642
  %3644 = vmatprep.subr.mxu0 0.0
  %v3645 = vand.u32 %v2530, 4294901760
  %3646 = vmatpush1.msra.mxu0 %v3645
  %3647 = vmatprep.subr.mxu0 0.0
  %v3648 = vand.u32 %v2531, 4294901760
  %3649 = vmatpush1.msra.mxu0 %v3648
  %3650 = vmatprep.subr.mxu0 0.0
  %v3651 = vand.u32 %v2532, 4294901760
  %3652 = vmatpush1.msra.mxu0 %v3651
  %3653 = vmatprep.subr.mxu0 0.0
  %v3654 = vand.u32 %v2533, 4294901760
  %3655 = vmatpush1.msra.mxu0 %v3654
  %3656 = vmatprep.subr.mxu0 0.0
  %v3657 = vand.u32 %v2534, 4294901760
  %3658 = vmatpush1.msra.mxu0 %v3657
  %3659 = vmatprep.subr.mxu0 0.0
  %v3660 = vand.u32 %v2535, 4294901760
  %3661 = vmatpush1.msra.mxu0 %v3660
  %3662 = vmatprep.subr.mxu0 0.0
  %v3663 = vand.u32 %v2536, 4294901760
  %3664 = vmatpush1.msra.mxu0 %v3663
  %3665 = vmatprep.subr.mxu0 0.0
  %v3666 = vand.u32 %v2537, 4294901760
  %3667 = vmatpush1.msra.mxu0 %v3666
  %3668 = vmatprep.subr.mxu0 0.0
  %v3669 = vand.u32 %v2538, 4294901760
  %3670 = vmatpush1.msra.mxu0 %v3669
  %3671 = vmatprep.subr.mxu0 0.0
  %v3672 = vand.u32 %v2539, 4294901760
  %3673 = vmatpush1.msra.mxu0 %v3672
  %3674 = vmatprep.subr.mxu0 0.0
  %v3675 = vand.u32 %v2540, 4294901760
  %3676 = vmatpush1.msra.mxu0 %v3675
  %3677 = vmatprep.subr.mxu0 0.0
  %v3678 = vand.u32 %v2541, 4294901760
  %3679 = vmatpush1.msra.mxu0 %v3678
  %3680 = vmatprep.subr.mxu0 0.0
  %v3681 = vand.u32 %v2542, 4294901760
  %3682 = vmatpush1.msra.mxu0 %v3681
  %3683 = vmatprep.subr.mxu0 0.0
  %v3684 = vand.u32 %v2543, 4294901760
  %3685 = vmatpush1.msra.mxu0 %v3684
  %3686 = vmatprep.subr.mxu0 0.0
  %v3687 = vand.u32 %v2544, 4294901760
  %3688 = vmatpush1.msra.mxu0 %v3687
  %3689 = vmatprep.subr.mxu0 0.0
  %v3690 = vand.u32 %v2545, 4294901760
  %3691 = vmatpush1.msra.mxu0 %v3690
  %3692 = vmatprep.subr.mxu0 0.0
  %v3693 = vand.u32 %v2546, 4294901760
  %3694 = vmatpush1.msra.mxu0 %v3693
  %3695 = vmatprep.subr.mxu0 0.0
  %v3696 = vand.u32 %v2547, 4294901760
  %3697 = vmatpush1.msra.mxu0 %v3696
  %3698 = vmatprep.subr.mxu0 0.0
  %v3699 = vand.u32 %v2548, 4294901760
  %3700 = vmatpush1.msra.mxu0 %v3699
  %3701 = vmatprep.subr.mxu0 0.0
  %v3702 = vand.u32 %v2549, 4294901760
  %3703 = vmatpush1.msra.mxu0 %v3702
  %3704 = vmatprep.subr.mxu0 0.0
  %v3705 = vand.u32 %v2550, 4294901760
  %3706 = vmatpush1.msra.mxu0 %v3705
  %3707 = vmatprep.subr.mxu0 0.0
  %v3708 = vand.u32 %v2551, 4294901760
  %3709 = vmatpush1.msra.mxu0 %v3708
  %3710 = vmatprep.subr.mxu0 0.0
  %v3711 = vand.u32 %v2552, 4294901760
  %3712 = vmatpush1.msra.mxu0 %v3711
  %3713 = vmatprep.subr.mxu0 0.0
  %v3714 = vand.u32 %v2553, 4294901760
  %3715 = vmatpush1.msra.mxu0 %v3714
  %v3716 = vand.u32 %v1819, 4294901760
  %v3717 = vsub.f32 %v1819, %v3716
  %v3718 = vand.u32 %v3717, 4294901760
  %3719 = vmatprep.mubr.f32.mxu0 %v3718
  %v3720 = vand.u32 %v1563, 4294901760
  %v3721 = vsub.f32 %v1563, %v3720
  %v3722 = vand.u32 %v3721, 4294901760
  %3723 = vmatmul.mubr.f32.gmra.mrb[0].mxu0 %v3722
  %v3724 = vpop.f32.mrb[0].mxu0
  %v3725 = vadd.f32 %v3482, %v3724
  %v3726 = vpop.f32.mrb[0].mxu0
  %v3727 = vand.u32 %v1833, 4294901760
  %v3728 = vsub.f32 %v1833, %v3727
  %v3729 = vand.u32 %v3728, 4294901760
  %3730 = vmatprep.mubr.f32.mxu0 %v3729
  %v3731 = vand.u32 %v1577, 4294901760
  %v3732 = vsub.f32 %v1577, %v3731
  %v3733 = vand.u32 %v3732, 4294901760
  %3734 = vmatmul.mubr.f32.gmra.mrb[0].mxu0 %v3733
  %v3735 = vpop.f32.mrb[0].mxu0
  %v3736 = vadd.f32 %v3491, %v3735
  %v3737 = vpop.f32.mrb[0].mxu0
  %v3738 = vand.u32 %v1847, 4294901760
  %v3739 = vsub.f32 %v1847, %v3738
  %v3740 = vand.u32 %v3739, 4294901760
  %3741 = vmatprep.mubr.f32.mxu0 %v3740
  %v3742 = vand.u32 %v1591, 4294901760
  %v3743 = vsub.f32 %v1591, %v3742
  %v3744 = vand.u32 %v3743, 4294901760
  %3745 = vmatmul.mubr.f32.gmra.mrb[0].mxu0 %v3744
  %v3746 = vpop.f32.mrb[0].mxu0
  %v3747 = vadd.f32 %v3500, %v3746
  %v3748 = vpop.f32.mrb[0].mxu0
  %v3749 = vand.u32 %v1861, 4294901760
  %v3750 = vsub.f32 %v1861, %v3749
  %v3751 = vand.u32 %v3750, 4294901760
  %3752 = vmatprep.mubr.f32.mxu0 %v3751
  %v3753 = vand.u32 %v1605, 4294901760
  %v3754 = vsub.f32 %v1605, %v3753
  %v3755 = vand.u32 %v3754, 4294901760
  %3756 = vmatmul.mubr.f32.gmra.mrb[0].mxu0 %v3755
  %v3757 = vpop.f32.mrb[0].mxu0
  %v3758 = vadd.f32 %v3509, %v3757
  %v3759 = vpop.f32.mrb[0].mxu0
  %v3760 = vand.u32 %v1875, 4294901760
  %v3761 = vsub.f32 %v1875, %v3760
  %v3762 = vand.u32 %v3761, 4294901760
  %3763 = vmatprep.mubr.f32.mxu0 %v3762
  %v3764 = vand.u32 %v1619, 4294901760
  %v3765 = vsub.f32 %v1619, %v3764
  %v3766 = vand.u32 %v3765, 4294901760
  %3767 = vmatmul.mubr.f32.gmra.mrb[0].mxu0 %v3766
  %v3768 = vpop.f32.mrb[0].mxu0
  %v3769 = vadd.f32 %v3518, %v3768
  %v3770 = vpop.f32.mrb[0].mxu0
  %v3771 = vand.u32 %v1889, 4294901760
  %v3772 = vsub.f32 %v1889, %v3771
  %v3773 = vand.u32 %v3772, 4294901760
  %3774 = vmatprep.mubr.f32.mxu0 %v3773
  %v3775 = vand.u32 %v1633, 4294901760
  %v3776 = vsub.f32 %v1633, %v3775
  %v3777 = vand.u32 %v3776, 4294901760
  %3778 = vmatmul.mubr.f32.gmra.mrb[0].mxu0 %v3777
  %v3779 = vpop.f32.mrb[0].mxu0
  %v3780 = vadd.f32 %v3527, %v3779
  %v3781 = vpop.f32.mrb[0].mxu0
  %v3782 = vand.u32 %v1903, 4294901760
  %v3783 = vsub.f32 %v1903, %v3782
  %v3784 = vand.u32 %v3783, 4294901760
  %3785 = vmatprep.mubr.f32.mxu0 %v3784
  %v3786 = vand.u32 %v1647, 4294901760
  %v3787 = vsub.f32 %v1647, %v3786
  %v3788 = vand.u32 %v3787, 4294901760
  %3789 = vmatmul.mubr.f32.gmra.mrb[0].mxu0 %v3788
  %v3790 = vpop.f32.mrb[0].mxu0
  %v3791 = vadd.f32 %v3536, %v3790
  %v3792 = vpop.f32.mrb[0].mxu0
  %v3793 = vand.u32 %v1917, 4294901760
  %v3794 = vsub.f32 %v1917, %v3793
  %v3795 = vand.u32 %v3794, 4294901760
  %3796 = vmatprep.mubr.f32.mxu0 %v3795
  %v3797 = vand.u32 %v1661, 4294901760
  %v3798 = vsub.f32 %v1661, %v3797
  %v3799 = vand.u32 %v3798, 4294901760
  %3800 = vmatmul.mubr.f32.gmra.mrb[0].mxu0 %v3799
  %v3801 = vpop.f32.mrb[0].mxu0
  %v3802 = vadd.f32 %v3545, %v3801
  %v3803 = vpop.f32.mrb[0].mxu0
  %v3804 = vand.u32 %v1931, 4294901760
  %v3805 = vsub.f32 %v1931, %v3804
  %v3806 = vand.u32 %v3805, 4294901760
  %3807 = vmatprep.mubr.f32.mxu0 %v3806
  %v3808 = vand.u32 %v1675, 4294901760
  %v3809 = vsub.f32 %v1675, %v3808
  %v3810 = vand.u32 %v3809, 4294901760
  %3811 = vmatmul.mubr.f32.gmra.mrb[0].mxu0 %v3810
  %v3812 = vpop.f32.mrb[0].mxu0
  %v3813 = vadd.f32 %v3554, %v3812
  %v3814 = vpop.f32.mrb[0].mxu0
  %v3815 = vand.u32 %v1945, 4294901760
  %v3816 = vsub.f32 %v1945, %v3815
  %v3817 = vand.u32 %v3816, 4294901760
  %3818 = vmatprep.mubr.f32.mxu0 %v3817
  %v3819 = vand.u32 %v1689, 4294901760
  %v3820 = vsub.f32 %v1689, %v3819
  %v3821 = vand.u32 %v3820, 4294901760
  %3822 = vmatmul.mubr.f32.gmra.mrb[0].mxu0 %v3821
  %v3823 = vpop.f32.mrb[0].mxu0
  %v3824 = vadd.f32 %v3563, %v3823
  %v3825 = vpop.f32.mrb[0].mxu0
  %v3826 = vand.u32 %v1959, 4294901760
  %v3827 = vsub.f32 %v1959, %v3826
  %v3828 = vand.u32 %v3827, 4294901760
  %3829 = vmatprep.mubr.f32.mxu0 %v3828
  %v3830 = vand.u32 %v1703, 4294901760
  %v3831 = vsub.f32 %v1703, %v3830
  %v3832 = vand.u32 %v3831, 4294901760
  %3833 = vmatmul.mubr.f32.gmra.mrb[0].mxu0 %v3832
  %v3834 = vpop.f32.mrb[0].mxu0
  %v3835 = vadd.f32 %v3572, %v3834
  %v3836 = vpop.f32.mrb[0].mxu0
  %v3837 = vand.u32 %v1973, 4294901760
  %v3838 = vsub.f32 %v1973, %v3837
  %v3839 = vand.u32 %v3838, 4294901760
  %3840 = vmatprep.mubr.f32.mxu0 %v3839
  %v3841 = vand.u32 %v1717, 4294901760
  %v3842 = vsub.f32 %v1717, %v3841
  %v3843 = vand.u32 %v3842, 4294901760
  %3844 = vmatmul.mubr.f32.gmra.mrb[0].mxu0 %v3843
  %v3845 = vpop.f32.mrb[0].mxu0
  %v3846 = vadd.f32 %v3581, %v3845
  %v3847 = vpop.f32.mrb[0].mxu0
  %v3848 = vand.u32 %v1987, 4294901760
  %v3849 = vsub.f32 %v1987, %v3848
  %v3850 = vand.u32 %v3849, 4294901760
  %3851 = vmatprep.mubr.f32.mxu0 %v3850
  %v3852 = vand.u32 %v1731, 4294901760
  %v3853 = vsub.f32 %v1731, %v3852
  %v3854 = vand.u32 %v3853, 4294901760
  %3855 = vmatmul.mubr.f32.gmra.mrb[0].mxu0 %v3854
  %v3856 = vpop.f32.mrb[0].mxu0
  %v3857 = vadd.f32 %v3590, %v3856
  %v3858 = vpop.f32.mrb[0].mxu0
  %v3859 = vand.u32 %v2001, 4294901760
  %v3860 = vsub.f32 %v2001, %v3859
  %v3861 = vand.u32 %v3860, 4294901760
  %3862 = vmatprep.mubr.f32.mxu0 %v3861
  %v3863 = vand.u32 %v1745, 4294901760
  %v3864 = vsub.f32 %v1745, %v3863
  %v3865 = vand.u32 %v3864, 4294901760
  %3866 = vmatmul.mubr.f32.gmra.mrb[0].mxu0 %v3865
  %v3867 = vpop.f32.mrb[0].mxu0
  %v3868 = vadd.f32 %v3599, %v3867
  %v3869 = vpop.f32.mrb[0].mxu0
  %v3870 = vand.u32 %v2015, 4294901760
  %v3871 = vsub.f32 %v2015, %v3870
  %v3872 = vand.u32 %v3871, 4294901760
  %3873 = vmatprep.mubr.f32.mxu0 %v3872
  %v3874 = vand.u32 %v1759, 4294901760
  %v3875 = vsub.f32 %v1759, %v3874
  %v3876 = vand.u32 %v3875, 4294901760
  %3877 = vmatmul.mubr.f32.gmra.mrb[0].mxu0 %v3876
  %v3878 = vpop.f32.mrb[0].mxu0
  %v3879 = vadd.f32 %v3608, %v3878
  %v3880 = vpop.f32.mrb[0].mxu0
  %v3881 = vand.u32 %v2029, 4294901760
  %v3882 = vsub.f32 %v2029, %v3881
  %v3883 = vand.u32 %v3882, 4294901760
  %3884 = vmatprep.mubr.f32.mxu0 %v3883
  %v3885 = vand.u32 %v1773, 4294901760
  %v3886 = vsub.f32 %v1773, %v3885
  %v3887 = vand.u32 %v3886, 4294901760
  %3888 = vmatmul.mubr.f32.gmra.mrb[0].mxu0 %v3887
  %v3889 = vpop.f32.mrb[0].mxu0
  %v3890 = vadd.f32 %v3617, %v3889
  %v3891 = vpop.f32.mrb[0].mxu0
  %3892 = vdwg.mxu0
  %3893 = vmatprep.subr.mxu0 0.0
  %v3894 = vand.u32 %v2522, 4294901760
  %v3895 = vsub.f32 %v2522, %v3894
  %v3896 = vand.u32 %v3895, 4294901760
  %3897 = vmatpush1.msra.mxu0 %v3896
  %3898 = vmatprep.subr.mxu0 0.0
  %v3899 = vand.u32 %v2523, 4294901760
  %v3900 = vsub.f32 %v2523, %v3899
  %v3901 = vand.u32 %v3900, 4294901760
  %3902 = vmatpush1.msra.mxu0 %v3901
  %3903 = vmatprep.subr.mxu0 0.0
  %v3904 = vand.u32 %v2524, 4294901760
  %v3905 = vsub.f32 %v2524, %v3904
  %v3906 = vand.u32 %v3905, 4294901760
  %3907 = vmatpush1.msra.mxu0 %v3906
  %3908 = vmatprep.subr.mxu0 0.0
  %v3909 = vand.u32 %v2525, 4294901760
  %v3910 = vsub.f32 %v2525, %v3909
  %v3911 = vand.u32 %v3910, 4294901760
  %3912 = vmatpush1.msra.mxu0 %v3911
  %3913 = vmatprep.subr.mxu0 0.0
  %v3914 = vand.u32 %v2526, 4294901760
  %v3915 = vsub.f32 %v2526, %v3914
  %v3916 = vand.u32 %v3915, 4294901760
  %3917 = vmatpush1.msra.mxu0 %v3916
  %3918 = vmatprep.subr.mxu0 0.0
  %v3919 = vand.u32 %v2527, 4294901760
  %v3920 = vsub.f32 %v2527, %v3919
  %v3921 = vand.u32 %v3920, 4294901760
  %3922 = vmatpush1.msra.mxu0 %v3921
  %3923 = vmatprep.subr.mxu0 0.0
  %v3924 = vand.u32 %v2528, 4294901760
  %v3925 = vsub.f32 %v2528, %v3924
  %v3926 = vand.u32 %v3925, 4294901760
  %3927 = vmatpush1.msra.mxu0 %v3926
  %3928 = vmatprep.subr.mxu0 0.0
  %v3929 = vand.u32 %v2529, 4294901760
  %v3930 = vsub.f32 %v2529, %v3929
  %v3931 = vand.u32 %v3930, 4294901760
  %3932 = vmatpush1.msra.mxu0 %v3931
  %3933 = vmatprep.subr.mxu0 0.0
  %v3934 = vand.u32 %v2530, 4294901760
  %v3935 = vsub.f32 %v2530, %v3934
  %v3936 = vand.u32 %v3935, 4294901760
  %3937 = vmatpush1.msra.mxu0 %v3936
  %3938 = vmatprep.subr.mxu0 0.0
  %v3939 = vand.u32 %v2531, 4294901760
  %v3940 = vsub.f32 %v2531, %v3939
  %v3941 = vand.u32 %v3940, 4294901760
  %3942 = vmatpush1.msra.mxu0 %v3941
  %3943 = vmatprep.subr.mxu0 0.0
  %v3944 = vand.u32 %v2532, 4294901760
  %v3945 = vsub.f32 %v2532, %v3944
  %v3946 = vand.u32 %v3945, 4294901760
  %3947 = vmatpush1.msra.mxu0 %v3946
  %3948 = vmatprep.subr.mxu0 0.0
  %v3949 = vand.u32 %v2533, 4294901760
  %v3950 = vsub.f32 %v2533, %v3949
  %v3951 = vand.u32 %v3950, 4294901760
  %3952 = vmatpush1.msra.mxu0 %v3951
  %3953 = vmatprep.subr.mxu0 0.0
  %v3954 = vand.u32 %v2534, 4294901760
  %v3955 = vsub.f32 %v2534, %v3954
  %v3956 = vand.u32 %v3955, 4294901760
  %3957 = vmatpush1.msra.mxu0 %v3956
  %3958 = vmatprep.subr.mxu0 0.0
  %v3959 = vand.u32 %v2535, 4294901760
  %v3960 = vsub.f32 %v2535, %v3959
  %v3961 = vand.u32 %v3960, 4294901760
  %3962 = vmatpush1.msra.mxu0 %v3961
  %3963 = vmatprep.subr.mxu0 0.0
  %v3964 = vand.u32 %v2536, 4294901760
  %v3965 = vsub.f32 %v2536, %v3964
  %v3966 = vand.u32 %v3965, 4294901760
  %3967 = vmatpush1.msra.mxu0 %v3966
  %3968 = vmatprep.subr.mxu0 0.0
  %v3969 = vand.u32 %v2537, 4294901760
  %v3970 = vsub.f32 %v2537, %v3969
  %v3971 = vand.u32 %v3970, 4294901760
  %3972 = vmatpush1.msra.mxu0 %v3971
  %3973 = vmatprep.subr.mxu0 0.0
  %v3974 = vand.u32 %v2538, 4294901760
  %v3975 = vsub.f32 %v2538, %v3974
  %v3976 = vand.u32 %v3975, 4294901760
  %3977 = vmatpush1.msra.mxu0 %v3976
  %3978 = vmatprep.subr.mxu0 0.0
  %v3979 = vand.u32 %v2539, 4294901760
  %v3980 = vsub.f32 %v2539, %v3979
  %v3981 = vand.u32 %v3980, 4294901760
  %3982 = vmatpush1.msra.mxu0 %v3981
  %3983 = vmatprep.subr.mxu0 0.0
  %v3984 = vand.u32 %v2540, 4294901760
  %v3985 = vsub.f32 %v2540, %v3984
  %v3986 = vand.u32 %v3985, 4294901760
  %3987 = vmatpush1.msra.mxu0 %v3986
  %3988 = vmatprep.subr.mxu0 0.0
  %v3989 = vand.u32 %v2541, 4294901760
  %v3990 = vsub.f32 %v2541, %v3989
  %v3991 = vand.u32 %v3990, 4294901760
  %3992 = vmatpush1.msra.mxu0 %v3991
  %3993 = vmatprep.subr.mxu0 0.0
  %v3994 = vand.u32 %v2542, 4294901760
  %v3995 = vsub.f32 %v2542, %v3994
  %v3996 = vand.u32 %v3995, 4294901760
  %3997 = vmatpush1.msra.mxu0 %v3996
  %3998 = vmatprep.subr.mxu0 0.0
  %v3999 = vand.u32 %v2543, 4294901760
  %v4000 = vsub.f32 %v2543, %v3999
  %v4001 = vand.u32 %v4000, 4294901760
  %4002 = vmatpush1.msra.mxu0 %v4001
  %4003 = vmatprep.subr.mxu0 0.0
  %v4004 = vand.u32 %v2544, 4294901760
  %v4005 = vsub.f32 %v2544, %v4004
  %v4006 = vand.u32 %v4005, 4294901760
  %4007 = vmatpush1.msra.mxu0 %v4006
  %4008 = vmatprep.subr.mxu0 0.0
  %v4009 = vand.u32 %v2545, 4294901760
  %v4010 = vsub.f32 %v2545, %v4009
  %v4011 = vand.u32 %v4010, 4294901760
  %4012 = vmatpush1.msra.mxu0 %v4011
  %4013 = vmatprep.subr.mxu0 0.0
  %v4014 = vand.u32 %v2546, 4294901760
  %v4015 = vsub.f32 %v2546, %v4014
  %v4016 = vand.u32 %v4015, 4294901760
  %4017 = vmatpush1.msra.mxu0 %v4016
  %4018 = vmatprep.subr.mxu0 0.0
  %v4019 = vand.u32 %v2547, 4294901760
  %v4020 = vsub.f32 %v2547, %v4019
  %v4021 = vand.u32 %v4020, 4294901760
  %4022 = vmatpush1.msra.mxu0 %v4021
  %4023 = vmatprep.subr.mxu0 0.0
  %v4024 = vand.u32 %v2548, 4294901760
  %v4025 = vsub.f32 %v2548, %v4024
  %v4026 = vand.u32 %v4025, 4294901760
  %4027 = vmatpush1.msra.mxu0 %v4026
  %4028 = vmatprep.subr.mxu0 0.0
  %v4029 = vand.u32 %v2549, 4294901760
  %v4030 = vsub.f32 %v2549, %v4029
  %v4031 = vand.u32 %v4030, 4294901760
  %4032 = vmatpush1.msra.mxu0 %v4031
  %4033 = vmatprep.subr.mxu0 0.0
  %v4034 = vand.u32 %v2550, 4294901760
  %v4035 = vsub.f32 %v2550, %v4034
  %v4036 = vand.u32 %v4035, 4294901760
  %4037 = vmatpush1.msra.mxu0 %v4036
  %4038 = vmatprep.subr.mxu0 0.0
  %v4039 = vand.u32 %v2551, 4294901760
  %v4040 = vsub.f32 %v2551, %v4039
  %v4041 = vand.u32 %v4040, 4294901760
  %4042 = vmatpush1.msra.mxu0 %v4041
  %4043 = vmatprep.subr.mxu0 0.0
  %v4044 = vand.u32 %v2552, 4294901760
  %v4045 = vsub.f32 %v2552, %v4044
  %v4046 = vand.u32 %v4045, 4294901760
  %4047 = vmatpush1.msra.mxu0 %v4046
  %4048 = vmatprep.subr.mxu0 0.0
  %v4049 = vand.u32 %v2553, 4294901760
  %v4050 = vsub.f32 %v2553, %v4049
  %v4051 = vand.u32 %v4050, 4294901760
  %4052 = vmatpush1.msra.mxu0 %v4051
  %v4053 = vand.u32 %v1819, 4294901760
  %4054 = vmatprep.mubr.f32.mxu0 %v4053
  %v4055 = vand.u32 %v1563, 4294901760
  %4056 = vmatmul.mubr.f32.gmra.mrb[0].mxu0 %v4055
  %v4057 = vpop.f32.mrb[0].mxu0
  %v4058 = vadd.f32 %v3725, %v4057
  %v4059 = vpop.f32.mrb[0].mxu0
  %v4060 = vand.u32 %v1833, 4294901760
  %4061 = vmatprep.mubr.f32.mxu0 %v4060
  %v4062 = vand.u32 %v1577, 4294901760
  %4063 = vmatmul.mubr.f32.gmra.mrb[0].mxu0 %v4062
  %v4064 = vpop.f32.mrb[0].mxu0
  %v4065 = vadd.f32 %v3736, %v4064
  %v4066 = vpop.f32.mrb[0].mxu0
  %v4067 = vand.u32 %v1847, 4294901760
  %4068 = vmatprep.mubr.f32.mxu0 %v4067
  %v4069 = vand.u32 %v1591, 4294901760
  %4070 = vmatmul.mubr.f32.gmra.mrb[0].mxu0 %v4069
  %v4071 = vpop.f32.mrb[0].mxu0
  %v4072 = vadd.f32 %v3747, %v4071
  %v4073 = vpop.f32.mrb[0].mxu0
  %v4074 = vand.u32 %v1861, 4294901760
  %4075 = vmatprep.mubr.f32.mxu0 %v4074
  %v4076 = vand.u32 %v1605, 4294901760
  %4077 = vmatmul.mubr.f32.gmra.mrb[0].mxu0 %v4076
  %v4078 = vpop.f32.mrb[0].mxu0
  %v4079 = vadd.f32 %v3758, %v4078
  %v4080 = vpop.f32.mrb[0].mxu0
  %v4081 = vand.u32 %v1875, 4294901760
  %4082 = vmatprep.mubr.f32.mxu0 %v4081
  %v4083 = vand.u32 %v1619, 4294901760
  %4084 = vmatmul.mubr.f32.gmra.mrb[0].mxu0 %v4083
  %v4085 = vpop.f32.mrb[0].mxu0
  %v4086 = vadd.f32 %v3769, %v4085
  %v4087 = vpop.f32.mrb[0].mxu0
  %v4088 = vand.u32 %v1889, 4294901760
  %4089 = vmatprep.mubr.f32.mxu0 %v4088
  %v4090 = vand.u32 %v1633, 4294901760
  %4091 = vmatmul.mubr.f32.gmra.mrb[0].mxu0 %v4090
  %v4092 = vpop.f32.mrb[0].mxu0
  %v4093 = vadd.f32 %v3780, %v4092
  %v4094 = vpop.f32.mrb[0].mxu0
  %v4095 = vand.u32 %v1903, 4294901760
  %4096 = vmatprep.mubr.f32.mxu0 %v4095
  %v4097 = vand.u32 %v1647, 4294901760
  %4098 = vmatmul.mubr.f32.gmra.mrb[0].mxu0 %v4097
  %v4099 = vpop.f32.mrb[0].mxu0
  %v4100 = vadd.f32 %v3791, %v4099
  %v4101 = vpop.f32.mrb[0].mxu0
  %v4102 = vand.u32 %v1917, 4294901760
  %4103 = vmatprep.mubr.f32.mxu0 %v4102
  %v4104 = vand.u32 %v1661, 4294901760
  %4105 = vmatmul.mubr.f32.gmra.mrb[0].mxu0 %v4104
  %v4106 = vpop.f32.mrb[0].mxu0
  %v4107 = vadd.f32 %v3802, %v4106
  %v4108 = vpop.f32.mrb[0].mxu0
  %v4109 = vand.u32 %v1931, 4294901760
  %4110 = vmatprep.mubr.f32.mxu0 %v4109
  %v4111 = vand.u32 %v1675, 4294901760
  %4112 = vmatmul.mubr.f32.gmra.mrb[0].mxu0 %v4111
  %v4113 = vpop.f32.mrb[0].mxu0
  %v4114 = vadd.f32 %v3813, %v4113
  %v4115 = vpop.f32.mrb[0].mxu0
  %v4116 = vand.u32 %v1945, 4294901760
  %4117 = vmatprep.mubr.f32.mxu0 %v4116
  %v4118 = vand.u32 %v1689, 4294901760
  %4119 = vmatmul.mubr.f32.gmra.mrb[0].mxu0 %v4118
  %v4120 = vpop.f32.mrb[0].mxu0
  %v4121 = vadd.f32 %v3824, %v4120
  %v4122 = vpop.f32.mrb[0].mxu0
  %v4123 = vand.u32 %v1959, 4294901760
  %4124 = vmatprep.mubr.f32.mxu0 %v4123
  %v4125 = vand.u32 %v1703, 4294901760
  %4126 = vmatmul.mubr.f32.gmra.mrb[0].mxu0 %v4125
  %v4127 = vpop.f32.mrb[0].mxu0
  %v4128 = vadd.f32 %v3835, %v4127
  %v4129 = vpop.f32.mrb[0].mxu0
  %v4130 = vand.u32 %v1973, 4294901760
  %4131 = vmatprep.mubr.f32.mxu0 %v4130
  %v4132 = vand.u32 %v1717, 4294901760
  %4133 = vmatmul.mubr.f32.gmra.mrb[0].mxu0 %v4132
  %v4134 = vpop.f32.mrb[0].mxu0
  %v4135 = vadd.f32 %v3846, %v4134
  %v4136 = vpop.f32.mrb[0].mxu0
  %v4137 = vand.u32 %v1987, 4294901760
  %4138 = vmatprep.mubr.f32.mxu0 %v4137
  %v4139 = vand.u32 %v1731, 4294901760
  %4140 = vmatmul.mubr.f32.gmra.mrb[0].mxu0 %v4139
  %v4141 = vpop.f32.mrb[0].mxu0
  %v4142 = vadd.f32 %v3857, %v4141
  %v4143 = vpop.f32.mrb[0].mxu0
  %v4144 = vand.u32 %v2001, 4294901760
  %4145 = vmatprep.mubr.f32.mxu0 %v4144
  %v4146 = vand.u32 %v1745, 4294901760
  %4147 = vmatmul.mubr.f32.gmra.mrb[0].mxu0 %v4146
  %v4148 = vpop.f32.mrb[0].mxu0
  %v4149 = vadd.f32 %v3868, %v4148
  %v4150 = vpop.f32.mrb[0].mxu0
  %v4151 = vand.u32 %v2015, 4294901760
  %4152 = vmatprep.mubr.f32.mxu0 %v4151
  %v4153 = vand.u32 %v1759, 4294901760
  %4154 = vmatmul.mubr.f32.gmra.mrb[0].mxu0 %v4153
  %v4155 = vpop.f32.mrb[0].mxu0
  %v4156 = vadd.f32 %v3879, %v4155
  %v4157 = vpop.f32.mrb[0].mxu0
  %v4158 = vand.u32 %v2029, 4294901760
  %4159 = vmatprep.mubr.f32.mxu0 %v4158
  %v4160 = vand.u32 %v1773, 4294901760
  %4161 = vmatmul.mubr.f32.gmra.mrb[0].mxu0 %v4160
  %v4162 = vpop.f32.mrb[0].mxu0
  %v4163 = vadd.f32 %v3890, %v4162
  %v4164 = vpop.f32.mrb[0].mxu0
  %4165 = vdwg.mxu0
  %4166 = vmatprep.subr.mxu0 0.0
  %v4167 = vand.u32 %v2522, 4294901760
  %4168 = vmatpush1.msra.mxu0 %v4167
  %4169 = vmatprep.subr.mxu0 0.0
  %v4170 = vand.u32 %v2523, 4294901760
  %4171 = vmatpush1.msra.mxu0 %v4170
  %4172 = vmatprep.subr.mxu0 0.0
  %v4173 = vand.u32 %v2524, 4294901760
  %4174 = vmatpush1.msra.mxu0 %v4173
  %4175 = vmatprep.subr.mxu0 0.0
  %v4176 = vand.u32 %v2525, 4294901760
  %4177 = vmatpush1.msra.mxu0 %v4176
  %4178 = vmatprep.subr.mxu0 0.0
  %v4179 = vand.u32 %v2526, 4294901760
  %4180 = vmatpush1.msra.mxu0 %v4179
  %4181 = vmatprep.subr.mxu0 0.0
  %v4182 = vand.u32 %v2527, 4294901760
  %4183 = vmatpush1.msra.mxu0 %v4182
  %4184 = vmatprep.subr.mxu0 0.0
  %v4185 = vand.u32 %v2528, 4294901760
  %4186 = vmatpush1.msra.mxu0 %v4185
  %4187 = vmatprep.subr.mxu0 0.0
  %v4188 = vand.u32 %v2529, 4294901760
  %4189 = vmatpush1.msra.mxu0 %v4188
  %4190 = vmatprep.subr.mxu0 0.0
  %v4191 = vand.u32 %v2530, 4294901760
  %4192 = vmatpush1.msra.mxu0 %v4191
  %4193 = vmatprep.subr.mxu0 0.0
  %v4194 = vand.u32 %v2531, 4294901760
  %4195 = vmatpush1.msra.mxu0 %v4194
  %4196 = vmatprep.subr.mxu0 0.0
  %v4197 = vand.u32 %v2532, 4294901760
  %4198 = vmatpush1.msra.mxu0 %v4197
  %4199 = vmatprep.subr.mxu0 0.0
  %v4200 = vand.u32 %v2533, 4294901760
  %4201 = vmatpush1.msra.mxu0 %v4200
  %4202 = vmatprep.subr.mxu0 0.0
  %v4203 = vand.u32 %v2534, 4294901760
  %4204 = vmatpush1.msra.mxu0 %v4203
  %4205 = vmatprep.subr.mxu0 0.0
  %v4206 = vand.u32 %v2535, 4294901760
  %4207 = vmatpush1.msra.mxu0 %v4206
  %4208 = vmatprep.subr.mxu0 0.0
  %v4209 = vand.u32 %v2536, 4294901760
  %4210 = vmatpush1.msra.mxu0 %v4209
  %4211 = vmatprep.subr.mxu0 0.0
  %v4212 = vand.u32 %v2537, 4294901760
  %4213 = vmatpush1.msra.mxu0 %v4212
  %4214 = vmatprep.subr.mxu0 0.0
  %v4215 = vand.u32 %v2538, 4294901760
  %4216 = vmatpush1.msra.mxu0 %v4215
  %4217 = vmatprep.subr.mxu0 0.0
  %v4218 = vand.u32 %v2539, 4294901760
  %4219 = vmatpush1.msra.mxu0 %v4218
  %4220 = vmatprep.subr.mxu0 0.0
  %v4221 = vand.u32 %v2540, 4294901760
  %4222 = vmatpush1.msra.mxu0 %v4221
  %4223 = vmatprep.subr.mxu0 0.0
  %v4224 = vand.u32 %v2541, 4294901760
  %4225 = vmatpush1.msra.mxu0 %v4224
  %4226 = vmatprep.subr.mxu0 0.0
  %v4227 = vand.u32 %v2542, 4294901760
  %4228 = vmatpush1.msra.mxu0 %v4227
  %4229 = vmatprep.subr.mxu0 0.0
  %v4230 = vand.u32 %v2543, 4294901760
  %4231 = vmatpush1.msra.mxu0 %v4230
  %4232 = vmatprep.subr.mxu0 0.0
  %v4233 = vand.u32 %v2544, 4294901760
  %4234 = vmatpush1.msra.mxu0 %v4233
  %4235 = vmatprep.subr.mxu0 0.0
  %v4236 = vand.u32 %v2545, 4294901760
  %4237 = vmatpush1.msra.mxu0 %v4236
  %4238 = vmatprep.subr.mxu0 0.0
  %v4239 = vand.u32 %v2546, 4294901760
  %4240 = vmatpush1.msra.mxu0 %v4239
  %4241 = vmatprep.subr.mxu0 0.0
  %v4242 = vand.u32 %v2547, 4294901760
  %4243 = vmatpush1.msra.mxu0 %v4242
  %4244 = vmatprep.subr.mxu0 0.0
  %v4245 = vand.u32 %v2548, 4294901760
  %4246 = vmatpush1.msra.mxu0 %v4245
  %4247 = vmatprep.subr.mxu0 0.0
  %v4248 = vand.u32 %v2549, 4294901760
  %4249 = vmatpush1.msra.mxu0 %v4248
  %4250 = vmatprep.subr.mxu0 0.0
  %v4251 = vand.u32 %v2550, 4294901760
  %4252 = vmatpush1.msra.mxu0 %v4251
  %4253 = vmatprep.subr.mxu0 0.0
  %v4254 = vand.u32 %v2551, 4294901760
  %4255 = vmatpush1.msra.mxu0 %v4254
  %4256 = vmatprep.subr.mxu0 0.0
  %v4257 = vand.u32 %v2552, 4294901760
  %4258 = vmatpush1.msra.mxu0 %v4257
  %4259 = vmatprep.subr.mxu0 0.0
  %v4260 = vand.u32 %v2553, 4294901760
  %4261 = vmatpush1.msra.mxu0 %v4260
  %v4262 = vand.u32 %v1819, 4294901760
  %4263 = vmatprep.mubr.f32.mxu0 %v4262
  %v4264 = vand.u32 %v1563, 4294901760
  %4265 = vmatmul.mubr.f32.gmra.mrb[0].mxu0 %v4264
  %v4266 = vpop.f32.mrb[0].mxu0
  %v4267 = vadd.f32 %v4058, %v4266
  %v4268 = vpop.f32.mrb[0].mxu0
  %v4269 = vand.u32 %v1833, 4294901760
  %4270 = vmatprep.mubr.f32.mxu0 %v4269
  %v4271 = vand.u32 %v1577, 4294901760
  %4272 = vmatmul.mubr.f32.gmra.mrb[0].mxu0 %v4271
  %v4273 = vpop.f32.mrb[0].mxu0
  %v4274 = vadd.f32 %v4065, %v4273
  %v4275 = vpop.f32.mrb[0].mxu0
  %v4276 = vand.u32 %v1847, 4294901760
  %4277 = vmatprep.mubr.f32.mxu0 %v4276
  %v4278 = vand.u32 %v1591, 4294901760
  %4279 = vmatmul.mubr.f32.gmra.mrb[0].mxu0 %v4278
  %v4280 = vpop.f32.mrb[0].mxu0
  %v4281 = vadd.f32 %v4072, %v4280
  %v4282 = vpop.f32.mrb[0].mxu0
  %v4283 = vand.u32 %v1861, 4294901760
  %4284 = vmatprep.mubr.f32.mxu0 %v4283
  %v4285 = vand.u32 %v1605, 4294901760
  %4286 = vmatmul.mubr.f32.gmra.mrb[0].mxu0 %v4285
  %v4287 = vpop.f32.mrb[0].mxu0
  %v4288 = vadd.f32 %v4079, %v4287
  %v4289 = vpop.f32.mrb[0].mxu0
  %v4290 = vand.u32 %v1875, 4294901760
  %4291 = vmatprep.mubr.f32.mxu0 %v4290
  %v4292 = vand.u32 %v1619, 4294901760
  %4293 = vmatmul.mubr.f32.gmra.mrb[0].mxu0 %v4292
  %v4294 = vpop.f32.mrb[0].mxu0
  %v4295 = vadd.f32 %v4086, %v4294
  %v4296 = vpop.f32.mrb[0].mxu0
  %v4297 = vand.u32 %v1889, 4294901760
  %4298 = vmatprep.mubr.f32.mxu0 %v4297
  %v4299 = vand.u32 %v1633, 4294901760
  %4300 = vmatmul.mubr.f32.gmra.mrb[0].mxu0 %v4299
  %v4301 = vpop.f32.mrb[0].mxu0
  %v4302 = vadd.f32 %v4093, %v4301
  %v4303 = vpop.f32.mrb[0].mxu0
  %v4304 = vand.u32 %v1903, 4294901760
  %4305 = vmatprep.mubr.f32.mxu0 %v4304
  %v4306 = vand.u32 %v1647, 4294901760
  %4307 = vmatmul.mubr.f32.gmra.mrb[0].mxu0 %v4306
  %v4308 = vpop.f32.mrb[0].mxu0
  %v4309 = vadd.f32 %v4100, %v4308
  %v4310 = vpop.f32.mrb[0].mxu0
  %v4311 = vand.u32 %v1917, 4294901760
  %4312 = vmatprep.mubr.f32.mxu0 %v4311
  %v4313 = vand.u32 %v1661, 4294901760
  %4314 = vmatmul.mubr.f32.gmra.mrb[0].mxu0 %v4313
  %v4315 = vpop.f32.mrb[0].mxu0
  %v4316 = vadd.f32 %v4107, %v4315
  %v4317 = vpop.f32.mrb[0].mxu0
  %v4318 = vand.u32 %v1931, 4294901760
  %4319 = vmatprep.mubr.f32.mxu0 %v4318
  %v4320 = vand.u32 %v1675, 4294901760
  %4321 = vmatmul.mubr.f32.gmra.mrb[0].mxu0 %v4320
  %v4322 = vpop.f32.mrb[0].mxu0
  %v4323 = vadd.f32 %v4114, %v4322
  %v4324 = vpop.f32.mrb[0].mxu0
  %v4325 = vand.u32 %v1945, 4294901760
  %4326 = vmatprep.mubr.f32.mxu0 %v4325
  %v4327 = vand.u32 %v1689, 4294901760
  %4328 = vmatmul.mubr.f32.gmra.mrb[0].mxu0 %v4327
  %v4329 = vpop.f32.mrb[0].mxu0
  %v4330 = vadd.f32 %v4121, %v4329
  %v4331 = vpop.f32.mrb[0].mxu0
  %v4332 = vand.u32 %v1959, 4294901760
  %4333 = vmatprep.mubr.f32.mxu0 %v4332
  %v4334 = vand.u32 %v1703, 4294901760
  %4335 = vmatmul.mubr.f32.gmra.mrb[0].mxu0 %v4334
  %v4336 = vpop.f32.mrb[0].mxu0
  %v4337 = vadd.f32 %v4128, %v4336
  %v4338 = vpop.f32.mrb[0].mxu0
  %v4339 = vand.u32 %v1973, 4294901760
  %4340 = vmatprep.mubr.f32.mxu0 %v4339
  %v4341 = vand.u32 %v1717, 4294901760
  %4342 = vmatmul.mubr.f32.gmra.mrb[0].mxu0 %v4341
  %v4343 = vpop.f32.mrb[0].mxu0
  %v4344 = vadd.f32 %v4135, %v4343
  %v4345 = vpop.f32.mrb[0].mxu0
  %v4346 = vand.u32 %v1987, 4294901760
  %4347 = vmatprep.mubr.f32.mxu0 %v4346
  %v4348 = vand.u32 %v1731, 4294901760
  %4349 = vmatmul.mubr.f32.gmra.mrb[0].mxu0 %v4348
  %v4350 = vpop.f32.mrb[0].mxu0
  %v4351 = vadd.f32 %v4142, %v4350
  %v4352 = vpop.f32.mrb[0].mxu0
  %v4353 = vand.u32 %v2001, 4294901760
  %4354 = vmatprep.mubr.f32.mxu0 %v4353
  %v4355 = vand.u32 %v1745, 4294901760
  %4356 = vmatmul.mubr.f32.gmra.mrb[0].mxu0 %v4355
  %v4357 = vpop.f32.mrb[0].mxu0
  %v4358 = vadd.f32 %v4149, %v4357
  %v4359 = vpop.f32.mrb[0].mxu0
  %v4360 = vand.u32 %v2015, 4294901760
  %4361 = vmatprep.mubr.f32.mxu0 %v4360
  %v4362 = vand.u32 %v1759, 4294901760
  %4363 = vmatmul.mubr.f32.gmra.mrb[0].mxu0 %v4362
  %v4364 = vpop.f32.mrb[0].mxu0
  %v4365 = vadd.f32 %v4156, %v4364
  %v4366 = vpop.f32.mrb[0].mxu0
  %v4367 = vand.u32 %v2029, 4294901760
  %4368 = vmatprep.mubr.f32.mxu0 %v4367
  %v4369 = vand.u32 %v1773, 4294901760
  %4370 = vmatmul.mubr.f32.gmra.mrb[0].mxu0 %v4369
  %v4371 = vpop.f32.mrb[0].mxu0
  %v4372 = vadd.f32 %v4163, %v4371
  %v4373 = vpop.f32.mrb[0].mxu0
  %4374 = vdwg.mxu0
  %4375 = vmatprep.subr.mxu0 0.0
  %v4376 = vand.u32 %v2554, 4294901760
  %4377 = vmatpush1.msra.mxu0 %v4376
  %4378 = vmatprep.subr.mxu0 0.0
  %v4379 = vand.u32 %v2555, 4294901760
  %4380 = vmatpush1.msra.mxu0 %v4379
  %4381 = vmatprep.subr.mxu0 0.0
  %v4382 = vand.u32 %v2556, 4294901760
  %4383 = vmatpush1.msra.mxu0 %v4382
  %4384 = vmatprep.subr.mxu0 0.0
  %v4385 = vand.u32 %v2557, 4294901760
  %4386 = vmatpush1.msra.mxu0 %v4385
  %4387 = vmatprep.subr.mxu0 0.0
  %v4388 = vand.u32 %v2558, 4294901760
  %4389 = vmatpush1.msra.mxu0 %v4388
  %4390 = vmatprep.subr.mxu0 0.0
  %v4391 = vand.u32 %v2559, 4294901760
  %4392 = vmatpush1.msra.mxu0 %v4391
  %4393 = vmatprep.subr.mxu0 0.0
  %v4394 = vand.u32 %v2560, 4294901760
  %4395 = vmatpush1.msra.mxu0 %v4394
  %4396 = vmatprep.subr.mxu0 0.0
  %v4397 = vand.u32 %v2561, 4294901760
  %4398 = vmatpush1.msra.mxu0 %v4397
  %4399 = vmatprep.subr.mxu0 0.0
  %v4400 = vand.u32 %v2562, 4294901760
  %4401 = vmatpush1.msra.mxu0 %v4400
  %4402 = vmatprep.subr.mxu0 0.0
  %v4403 = vand.u32 %v2563, 4294901760
  %4404 = vmatpush1.msra.mxu0 %v4403
  %4405 = vmatprep.subr.mxu0 0.0
  %v4406 = vand.u32 %v2564, 4294901760
  %4407 = vmatpush1.msra.mxu0 %v4406
  %4408 = vmatprep.subr.mxu0 0.0
  %v4409 = vand.u32 %v2565, 4294901760
  %4410 = vmatpush1.msra.mxu0 %v4409
  %4411 = vmatprep.subr.mxu0 0.0
  %v4412 = vand.u32 %v2566, 4294901760
  %4413 = vmatpush1.msra.mxu0 %v4412
  %4414 = vmatprep.subr.mxu0 0.0
  %v4415 = vand.u32 %v2567, 4294901760
  %4416 = vmatpush1.msra.mxu0 %v4415
  %4417 = vmatprep.subr.mxu0 0.0
  %v4418 = vand.u32 %v2568, 4294901760
  %4419 = vmatpush1.msra.mxu0 %v4418
  %4420 = vmatprep.subr.mxu0 0.0
  %v4421 = vand.u32 %v2569, 4294901760
  %4422 = vmatpush1.msra.mxu0 %v4421
  %4423 = vmatprep.subr.mxu0 0.0
  %v4424 = vand.u32 %v2570, 4294901760
  %4425 = vmatpush1.msra.mxu0 %v4424
  %4426 = vmatprep.subr.mxu0 0.0
  %v4427 = vand.u32 %v2571, 4294901760
  %4428 = vmatpush1.msra.mxu0 %v4427
  %4429 = vmatprep.subr.mxu0 0.0
  %v4430 = vand.u32 %v2572, 4294901760
  %4431 = vmatpush1.msra.mxu0 %v4430
  %4432 = vmatprep.subr.mxu0 0.0
  %v4433 = vand.u32 %v2573, 4294901760
  %4434 = vmatpush1.msra.mxu0 %v4433
  %4435 = vmatprep.subr.mxu0 0.0
  %v4436 = vand.u32 %v2574, 4294901760
  %4437 = vmatpush1.msra.mxu0 %v4436
  %4438 = vmatprep.subr.mxu0 0.0
  %v4439 = vand.u32 %v2575, 4294901760
  %4440 = vmatpush1.msra.mxu0 %v4439
  %4441 = vmatprep.subr.mxu0 0.0
  %v4442 = vand.u32 %v2576, 4294901760
  %4443 = vmatpush1.msra.mxu0 %v4442
  %4444 = vmatprep.subr.mxu0 0.0
  %v4445 = vand.u32 %v2577, 4294901760
  %4446 = vmatpush1.msra.mxu0 %v4445
  %4447 = vmatprep.subr.mxu0 0.0
  %v4448 = vand.u32 %v2578, 4294901760
  %4449 = vmatpush1.msra.mxu0 %v4448
  %4450 = vmatprep.subr.mxu0 0.0
  %v4451 = vand.u32 %v2579, 4294901760
  %4452 = vmatpush1.msra.mxu0 %v4451
  %4453 = vmatprep.subr.mxu0 0.0
  %v4454 = vand.u32 %v2580, 4294901760
  %4455 = vmatpush1.msra.mxu0 %v4454
  %4456 = vmatprep.subr.mxu0 0.0
  %v4457 = vand.u32 %v2581, 4294901760
  %4458 = vmatpush1.msra.mxu0 %v4457
  %4459 = vmatprep.subr.mxu0 0.0
  %v4460 = vand.u32 %v2582, 4294901760
  %4461 = vmatpush1.msra.mxu0 %v4460
  %4462 = vmatprep.subr.mxu0 0.0
  %v4463 = vand.u32 %v2583, 4294901760
  %4464 = vmatpush1.msra.mxu0 %v4463
  %4465 = vmatprep.subr.mxu0 0.0
  %v4466 = vand.u32 %v2584, 4294901760
  %4467 = vmatpush1.msra.mxu0 %v4466
  %4468 = vmatprep.subr.mxu0 0.0
  %v4469 = vand.u32 %v2585, 4294901760
  %4470 = vmatpush1.msra.mxu0 %v4469
  %v4471 = vand.u32 %v1577, 4294901760
  %v4472 = vsub.f32 %v1577, %v4471
  %v4473 = vand.u32 %v4472, 4294901760
  %v4474 = vsub.f32 %v4472, %v4473
  %v4475 = vand.u32 %v4474, 4294901760
  %4476 = vmatprep.mubr.f32.mxu0 %v4475
  %v4477 = vand.u32 %v2075, 4294901760
  %v4478 = vsub.f32 %v2075, %v4477
  %v4479 = vand.u32 %v4478, 4294901760
  %v4480 = vsub.f32 %v4478, %v4479
  %v4481 = vand.u32 %v4480, 4294901760
  %4482 = vmatmul.mubr.f32.gmra.mrb[0].mxu0 %v4481
  %v4483 = vpop.f32.mrb[0].mxu0
  %v4484 = vadd.f32 %v4267, %v4483
  %v4485 = vpop.f32.mrb[0].mxu0
  %v4486 = vand.u32 %v1591, 4294901760
  %v4487 = vsub.f32 %v1591, %v4486
  %v4488 = vand.u32 %v4487, 4294901760
  %v4489 = vsub.f32 %v4487, %v4488
  %v4490 = vand.u32 %v4489, 4294901760
  %4491 = vmatprep.mubr.f32.mxu0 %v4490
  %v4492 = vand.u32 %v2089, 4294901760
  %v4493 = vsub.f32 %v2089, %v4492
  %v4494 = vand.u32 %v4493, 4294901760
  %v4495 = vsub.f32 %v4493, %v4494
  %v4496 = vand.u32 %v4495, 4294901760
  %4497 = vmatmul.mubr.f32.gmra.mrb[0].mxu0 %v4496
  %v4498 = vpop.f32.mrb[0].mxu0
  %v4499 = vadd.f32 %v4274, %v4498
  %v4500 = vpop.f32.mrb[0].mxu0
  %v4501 = vand.u32 %v1605, 4294901760
  %v4502 = vsub.f32 %v1605, %v4501
  %v4503 = vand.u32 %v4502, 4294901760
  %v4504 = vsub.f32 %v4502, %v4503
  %v4505 = vand.u32 %v4504, 4294901760
  %4506 = vmatprep.mubr.f32.mxu0 %v4505
  %v4507 = vand.u32 %v2103, 4294901760
  %v4508 = vsub.f32 %v2103, %v4507
  %v4509 = vand.u32 %v4508, 4294901760
  %v4510 = vsub.f32 %v4508, %v4509
  %v4511 = vand.u32 %v4510, 4294901760
  %4512 = vmatmul.mubr.f32.gmra.mrb[0].mxu0 %v4511
  %v4513 = vpop.f32.mrb[0].mxu0
  %v4514 = vadd.f32 %v4281, %v4513
  %v4515 = vpop.f32.mrb[0].mxu0
  %v4516 = vand.u32 %v1619, 4294901760
  %v4517 = vsub.f32 %v1619, %v4516
  %v4518 = vand.u32 %v4517, 4294901760
  %v4519 = vsub.f32 %v4517, %v4518
  %v4520 = vand.u32 %v4519, 4294901760
  %4521 = vmatprep.mubr.f32.mxu0 %v4520
  %v4522 = vand.u32 %v2117, 4294901760
  %v4523 = vsub.f32 %v2117, %v4522
  %v4524 = vand.u32 %v4523, 4294901760
  %v4525 = vsub.f32 %v4523, %v4524
  %v4526 = vand.u32 %v4525, 4294901760
  %4527 = vmatmul.mubr.f32.gmra.mrb[0].mxu0 %v4526
  %v4528 = vpop.f32.mrb[0].mxu0
  %v4529 = vadd.f32 %v4288, %v4528
  %v4530 = vpop.f32.mrb[0].mxu0
  %v4531 = vand.u32 %v1633, 4294901760
  %v4532 = vsub.f32 %v1633, %v4531
  %v4533 = vand.u32 %v4532, 4294901760
  %v4534 = vsub.f32 %v4532, %v4533
  %v4535 = vand.u32 %v4534, 4294901760
  %4536 = vmatprep.mubr.f32.mxu0 %v4535
  %v4537 = vand.u32 %v2131, 4294901760
  %v4538 = vsub.f32 %v2131, %v4537
  %v4539 = vand.u32 %v4538, 4294901760
  %v4540 = vsub.f32 %v4538, %v4539
  %v4541 = vand.u32 %v4540, 4294901760
  %4542 = vmatmul.mubr.f32.gmra.mrb[0].mxu0 %v4541
  %v4543 = vpop.f32.mrb[0].mxu0
  %v4544 = vadd.f32 %v4295, %v4543
  %v4545 = vpop.f32.mrb[0].mxu0
  %v4546 = vand.u32 %v1647, 4294901760
  %v4547 = vsub.f32 %v1647, %v4546
  %v4548 = vand.u32 %v4547, 4294901760
  %v4549 = vsub.f32 %v4547, %v4548
  %v4550 = vand.u32 %v4549, 4294901760
  %4551 = vmatprep.mubr.f32.mxu0 %v4550
  %v4552 = vand.u32 %v2145, 4294901760
  %v4553 = vsub.f32 %v2145, %v4552
  %v4554 = vand.u32 %v4553, 4294901760
  %v4555 = vsub.f32 %v4553, %v4554
  %v4556 = vand.u32 %v4555, 4294901760
  %4557 = vmatmul.mubr.f32.gmra.mrb[0].mxu0 %v4556
  %v4558 = vpop.f32.mrb[0].mxu0
  %v4559 = vadd.f32 %v4302, %v4558
  %v4560 = vpop.f32.mrb[0].mxu0
  %v4561 = vand.u32 %v1661, 4294901760
  %v4562 = vsub.f32 %v1661, %v4561
  %v4563 = vand.u32 %v4562, 4294901760
  %v4564 = vsub.f32 %v4562, %v4563
  %v4565 = vand.u32 %v4564, 4294901760
  %4566 = vmatprep.mubr.f32.mxu0 %v4565
  %v4567 = vand.u32 %v2159, 4294901760
  %v4568 = vsub.f32 %v2159, %v4567
  %v4569 = vand.u32 %v4568, 4294901760
  %v4570 = vsub.f32 %v4568, %v4569
  %v4571 = vand.u32 %v4570, 4294901760
  %4572 = vmatmul.mubr.f32.gmra.mrb[0].mxu0 %v4571
  %v4573 = vpop.f32.mrb[0].mxu0
  %v4574 = vadd.f32 %v4309, %v4573
  %v4575 = vpop.f32.mrb[0].mxu0
  %v4576 = vand.u32 %v2331, 4294901760
  %v4577 = vsub.f32 %v2331, %v4576
  %v4578 = vand.u32 %v4577, 4294901760
  %v4579 = vsub.f32 %v4577, %v4578
  %v4580 = vand.u32 %v4579, 4294901760
  %4581 = vmatprep.mubr.f32.mxu0 %v4580
  %v4582 = vand.u32 %v2173, 4294901760
  %v4583 = vsub.f32 %v2173, %v4582
  %v4584 = vand.u32 %v4583, 4294901760
  %v4585 = vsub.f32 %v4583, %v4584
  %v4586 = vand.u32 %v4585, 4294901760
  %4587 = vmatmul.mubr.f32.gmra.mrb[0].mxu0 %v4586
  %v4588 = vpop.f32.mrb[0].mxu0
  %v4589 = vadd.f32 %v4316, %v4588
  %v4590 = vpop.f32.mrb[0].mxu0
  %v4591 = vand.u32 %v1689, 4294901760
  %v4592 = vsub.f32 %v1689, %v4591
  %v4593 = vand.u32 %v4592, 4294901760
  %v4594 = vsub.f32 %v4592, %v4593
  %v4595 = vand.u32 %v4594, 4294901760
  %4596 = vmatprep.mubr.f32.mxu0 %v4595
  %v4597 = vand.u32 %v2187, 4294901760
  %v4598 = vsub.f32 %v2187, %v4597
  %v4599 = vand.u32 %v4598, 4294901760
  %v4600 = vsub.f32 %v4598, %v4599
  %v4601 = vand.u32 %v4600, 4294901760
  %4602 = vmatmul.mubr.f32.gmra.mrb[0].mxu0 %v4601
  %v4603 = vpop.f32.mrb[0].mxu0
  %v4604 = vadd.f32 %v4323, %v4603
  %v4605 = vpop.f32.mrb[0].mxu0
  %v4606 = vand.u32 %v1703, 4294901760
  %v4607 = vsub.f32 %v1703, %v4606
  %v4608 = vand.u32 %v4607, 4294901760
  %v4609 = vsub.f32 %v4607, %v4608
  %v4610 = vand.u32 %v4609, 4294901760
  %4611 = vmatprep.mubr.f32.mxu0 %v4610
  %v4612 = vand.u32 %v2201, 4294901760
  %v4613 = vsub.f32 %v2201, %v4612
  %v4614 = vand.u32 %v4613, 4294901760
  %v4615 = vsub.f32 %v4613, %v4614
  %v4616 = vand.u32 %v4615, 4294901760
  %4617 = vmatmul.mubr.f32.gmra.mrb[0].mxu0 %v4616
  %v4618 = vpop.f32.mrb[0].mxu0
  %v4619 = vadd.f32 %v4330, %v4618
  %v4620 = vpop.f32.mrb[0].mxu0
  %v4621 = vand.u32 %v1717, 4294901760
  %v4622 = vsub.f32 %v1717, %v4621
  %v4623 = vand.u32 %v4622, 4294901760
  %v4624 = vsub.f32 %v4622, %v4623
  %v4625 = vand.u32 %v4624, 4294901760
  %4626 = vmatprep.mubr.f32.mxu0 %v4625
  %v4627 = vand.u32 %v2215, 4294901760
  %v4628 = vsub.f32 %v2215, %v4627
  %v4629 = vand.u32 %v4628, 4294901760
  %v4630 = vsub.f32 %v4628, %v4629
  %v4631 = vand.u32 %v4630, 4294901760
  %4632 = vmatmul.mubr.f32.gmra.mrb[0].mxu0 %v4631
  %v4633 = vpop.f32.mrb[0].mxu0
  %v4634 = vadd.f32 %v4337, %v4633
  %v4635 = vpop.f32.mrb[0].mxu0
  %v4636 = vand.u32 %v1731, 4294901760
  %v4637 = vsub.f32 %v1731, %v4636
  %v4638 = vand.u32 %v4637, 4294901760
  %v4639 = vsub.f32 %v4637, %v4638
  %v4640 = vand.u32 %v4639, 4294901760
  %4641 = vmatprep.mubr.f32.mxu0 %v4640
  %v4642 = vand.u32 %v2229, 4294901760
  %v4643 = vsub.f32 %v2229, %v4642
  %v4644 = vand.u32 %v4643, 4294901760
  %v4645 = vsub.f32 %v4643, %v4644
  %v4646 = vand.u32 %v4645, 4294901760
  %4647 = vmatmul.mubr.f32.gmra.mrb[0].mxu0 %v4646
  %v4648 = vpop.f32.mrb[0].mxu0
  %v4649 = vadd.f32 %v4344, %v4648
  %v4650 = vpop.f32.mrb[0].mxu0
  %v4651 = vand.u32 %v1745, 4294901760
  %v4652 = vsub.f32 %v1745, %v4651
  %v4653 = vand.u32 %v4652, 4294901760
  %v4654 = vsub.f32 %v4652, %v4653
  %v4655 = vand.u32 %v4654, 4294901760
  %4656 = vmatprep.mubr.f32.mxu0 %v4655
  %v4657 = vand.u32 %v2243, 4294901760
  %v4658 = vsub.f32 %v2243, %v4657
  %v4659 = vand.u32 %v4658, 4294901760
  %v4660 = vsub.f32 %v4658, %v4659
  %v4661 = vand.u32 %v4660, 4294901760
  %4662 = vmatmul.mubr.f32.gmra.mrb[0].mxu0 %v4661
  %v4663 = vpop.f32.mrb[0].mxu0
  %v4664 = vadd.f32 %v4351, %v4663
  %v4665 = vpop.f32.mrb[0].mxu0
  %v4666 = vand.u32 %v1759, 4294901760
  %v4667 = vsub.f32 %v1759, %v4666
  %v4668 = vand.u32 %v4667, 4294901760
  %v4669 = vsub.f32 %v4667, %v4668
  %v4670 = vand.u32 %v4669, 4294901760
  %4671 = vmatprep.mubr.f32.mxu0 %v4670
  %v4672 = vand.u32 %v2257, 4294901760
  %v4673 = vsub.f32 %v2257, %v4672
  %v4674 = vand.u32 %v4673, 4294901760
  %v4675 = vsub.f32 %v4673, %v4674
  %v4676 = vand.u32 %v4675, 4294901760
  %4677 = vmatmul.mubr.f32.gmra.mrb[0].mxu0 %v4676
  %v4678 = vpop.f32.mrb[0].mxu0
  %v4679 = vadd.f32 %v4358, %v4678
  %v4680 = vpop.f32.mrb[0].mxu0
  %v4681 = vand.u32 %v1773, 4294901760
  %v4682 = vsub.f32 %v1773, %v4681
  %v4683 = vand.u32 %v4682, 4294901760
  %v4684 = vsub.f32 %v4682, %v4683
  %v4685 = vand.u32 %v4684, 4294901760
  %4686 = vmatprep.mubr.f32.mxu0 %v4685
  %v4687 = vand.u32 %v2271, 4294901760
  %v4688 = vsub.f32 %v2271, %v4687
  %v4689 = vand.u32 %v4688, 4294901760
  %v4690 = vsub.f32 %v4688, %v4689
  %v4691 = vand.u32 %v4690, 4294901760
  %4692 = vmatmul.mubr.f32.gmra.mrb[0].mxu0 %v4691
  %v4693 = vpop.f32.mrb[0].mxu0
  %v4694 = vadd.f32 %v4365, %v4693
  %v4695 = vpop.f32.mrb[0].mxu0
  %v4696 = vand.u32 %v2345, 4294901760
  %v4697 = vsub.f32 %v2345, %v4696
  %v4698 = vand.u32 %v4697, 4294901760
  %v4699 = vsub.f32 %v4697, %v4698
  %v4700 = vand.u32 %v4699, 4294901760
  %4701 = vmatprep.mubr.f32.mxu0 %v4700
  %v4702 = vand.u32 %v2285, 4294901760
  %v4703 = vsub.f32 %v2285, %v4702
  %v4704 = vand.u32 %v4703, 4294901760
  %v4705 = vsub.f32 %v4703, %v4704
  %v4706 = vand.u32 %v4705, 4294901760
  %4707 = vmatmul.mubr.f32.gmra.mrb[0].mxu0 %v4706
  %v4708 = vpop.f32.mrb[0].mxu0
  %v4709 = vadd.f32 %v4372, %v4708
  %v4710 = vpop.f32.mrb[0].mxu0
  %4711 = vdwg.mxu0
  %4712 = vmatprep.subr.mxu0 0.0
  %v4713 = vand.u32 %v2554, 4294901760
  %v4714 = vsub.f32 %v2554, %v4713
  %v4715 = vand.u32 %v4714, 4294901760
  %v4716 = vsub.f32 %v4714, %v4715
  %v4717 = vand.u32 %v4716, 4294901760
  %4718 = vmatpush1.msra.mxu0 %v4717
  %4719 = vmatprep.subr.mxu0 0.0
  %v4720 = vand.u32 %v2555, 4294901760
  %v4721 = vsub.f32 %v2555, %v4720
  %v4722 = vand.u32 %v4721, 4294901760
  %v4723 = vsub.f32 %v4721, %v4722
  %v4724 = vand.u32 %v4723, 4294901760
  %4725 = vmatpush1.msra.mxu0 %v4724
  %4726 = vmatprep.subr.mxu0 0.0
  %v4727 = vand.u32 %v2556, 4294901760
  %v4728 = vsub.f32 %v2556, %v4727
  %v4729 = vand.u32 %v4728, 4294901760
  %v4730 = vsub.f32 %v4728, %v4729
  %v4731 = vand.u32 %v4730, 4294901760
  %4732 = vmatpush1.msra.mxu0 %v4731
  %4733 = vmatprep.subr.mxu0 0.0
  %v4734 = vand.u32 %v2557, 4294901760
  %v4735 = vsub.f32 %v2557, %v4734
  %v4736 = vand.u32 %v4735, 4294901760
  %v4737 = vsub.f32 %v4735, %v4736
  %v4738 = vand.u32 %v4737, 4294901760
  %4739 = vmatpush1.msra.mxu0 %v4738
  %4740 = vmatprep.subr.mxu0 0.0
  %v4741 = vand.u32 %v2558, 4294901760
  %v4742 = vsub.f32 %v2558, %v4741
  %v4743 = vand.u32 %v4742, 4294901760
  %v4744 = vsub.f32 %v4742, %v4743
  %v4745 = vand.u32 %v4744, 4294901760
  %4746 = vmatpush1.msra.mxu0 %v4745
  %4747 = vmatprep.subr.mxu0 0.0
  %v4748 = vand.u32 %v2559, 4294901760
  %v4749 = vsub.f32 %v2559, %v4748
  %v4750 = vand.u32 %v4749, 4294901760
  %v4751 = vsub.f32 %v4749, %v4750
  %v4752 = vand.u32 %v4751, 4294901760
  %4753 = vmatpush1.msra.mxu0 %v4752
  %4754 = vmatprep.subr.mxu0 0.0
  %v4755 = vand.u32 %v2560, 4294901760
  %v4756 = vsub.f32 %v2560, %v4755
  %v4757 = vand.u32 %v4756, 4294901760
  %v4758 = vsub.f32 %v4756, %v4757
  %v4759 = vand.u32 %v4758, 4294901760
  %4760 = vmatpush1.msra.mxu0 %v4759
  %4761 = vmatprep.subr.mxu0 0.0
  %v4762 = vand.u32 %v2561, 4294901760
  %v4763 = vsub.f32 %v2561, %v4762
  %v4764 = vand.u32 %v4763, 4294901760
  %v4765 = vsub.f32 %v4763, %v4764
  %v4766 = vand.u32 %v4765, 4294901760
  %4767 = vmatpush1.msra.mxu0 %v4766
  %4768 = vmatprep.subr.mxu0 0.0
  %v4769 = vand.u32 %v2562, 4294901760
  %v4770 = vsub.f32 %v2562, %v4769
  %v4771 = vand.u32 %v4770, 4294901760
  %v4772 = vsub.f32 %v4770, %v4771
  %v4773 = vand.u32 %v4772, 4294901760
  %4774 = vmatpush1.msra.mxu0 %v4773
  %4775 = vmatprep.subr.mxu0 0.0
  %v4776 = vand.u32 %v2563, 4294901760
  %v4777 = vsub.f32 %v2563, %v4776
  %v4778 = vand.u32 %v4777, 4294901760
  %v4779 = vsub.f32 %v4777, %v4778
  %v4780 = vand.u32 %v4779, 4294901760
  %4781 = vmatpush1.msra.mxu0 %v4780
  %4782 = vmatprep.subr.mxu0 0.0
  %v4783 = vand.u32 %v2564, 4294901760
  %v4784 = vsub.f32 %v2564, %v4783
  %v4785 = vand.u32 %v4784, 4294901760
  %v4786 = vsub.f32 %v4784, %v4785
  %v4787 = vand.u32 %v4786, 4294901760
  %4788 = vmatpush1.msra.mxu0 %v4787
  %4789 = vmatprep.subr.mxu0 0.0
  %v4790 = vand.u32 %v2565, 4294901760
  %v4791 = vsub.f32 %v2565, %v4790
  %v4792 = vand.u32 %v4791, 4294901760
  %v4793 = vsub.f32 %v4791, %v4792
  %v4794 = vand.u32 %v4793, 4294901760
  %4795 = vmatpush1.msra.mxu0 %v4794
  %4796 = vmatprep.subr.mxu0 0.0
  %v4797 = vand.u32 %v2566, 4294901760
  %v4798 = vsub.f32 %v2566, %v4797
  %v4799 = vand.u32 %v4798, 4294901760
  %v4800 = vsub.f32 %v4798, %v4799
  %v4801 = vand.u32 %v4800, 4294901760
  %4802 = vmatpush1.msra.mxu0 %v4801
  %4803 = vmatprep.subr.mxu0 0.0
  %v4804 = vand.u32 %v2567, 4294901760
  %v4805 = vsub.f32 %v2567, %v4804
  %v4806 = vand.u32 %v4805, 4294901760
  %v4807 = vsub.f32 %v4805, %v4806
  %v4808 = vand.u32 %v4807, 4294901760
  %4809 = vmatpush1.msra.mxu0 %v4808
  %4810 = vmatprep.subr.mxu0 0.0
  %v4811 = vand.u32 %v2568, 4294901760
  %v4812 = vsub.f32 %v2568, %v4811
  %v4813 = vand.u32 %v4812, 4294901760
  %v4814 = vsub.f32 %v4812, %v4813
  %v4815 = vand.u32 %v4814, 4294901760
  %4816 = vmatpush1.msra.mxu0 %v4815
  %4817 = vmatprep.subr.mxu0 0.0
  %v4818 = vand.u32 %v2569, 4294901760
  %v4819 = vsub.f32 %v2569, %v4818
  %v4820 = vand.u32 %v4819, 4294901760
  %v4821 = vsub.f32 %v4819, %v4820
  %v4822 = vand.u32 %v4821, 4294901760
  %4823 = vmatpush1.msra.mxu0 %v4822
  %4824 = vmatprep.subr.mxu0 0.0
  %v4825 = vand.u32 %v2570, 4294901760
  %v4826 = vsub.f32 %v2570, %v4825
  %v4827 = vand.u32 %v4826, 4294901760
  %v4828 = vsub.f32 %v4826, %v4827
  %v4829 = vand.u32 %v4828, 4294901760
  %4830 = vmatpush1.msra.mxu0 %v4829
  %4831 = vmatprep.subr.mxu0 0.0
  %v4832 = vand.u32 %v2571, 4294901760
  %v4833 = vsub.f32 %v2571, %v4832
  %v4834 = vand.u32 %v4833, 4294901760
  %v4835 = vsub.f32 %v4833, %v4834
  %v4836 = vand.u32 %v4835, 4294901760
  %4837 = vmatpush1.msra.mxu0 %v4836
  %4838 = vmatprep.subr.mxu0 0.0
  %v4839 = vand.u32 %v2572, 4294901760
  %v4840 = vsub.f32 %v2572, %v4839
  %v4841 = vand.u32 %v4840, 4294901760
  %v4842 = vsub.f32 %v4840, %v4841
  %v4843 = vand.u32 %v4842, 4294901760
  %4844 = vmatpush1.msra.mxu0 %v4843
  %4845 = vmatprep.subr.mxu0 0.0
  %v4846 = vand.u32 %v2573, 4294901760
  %v4847 = vsub.f32 %v2573, %v4846
  %v4848 = vand.u32 %v4847, 4294901760
  %v4849 = vsub.f32 %v4847, %v4848
  %v4850 = vand.u32 %v4849, 4294901760
  %4851 = vmatpush1.msra.mxu0 %v4850
  %4852 = vmatprep.subr.mxu0 0.0
  %v4853 = vand.u32 %v2574, 4294901760
  %v4854 = vsub.f32 %v2574, %v4853
  %v4855 = vand.u32 %v4854, 4294901760
  %v4856 = vsub.f32 %v4854, %v4855
  %v4857 = vand.u32 %v4856, 4294901760
  %4858 = vmatpush1.msra.mxu0 %v4857
  %4859 = vmatprep.subr.mxu0 0.0
  %v4860 = vand.u32 %v2575, 4294901760
  %v4861 = vsub.f32 %v2575, %v4860
  %v4862 = vand.u32 %v4861, 4294901760
  %v4863 = vsub.f32 %v4861, %v4862
  %v4864 = vand.u32 %v4863, 4294901760
  %4865 = vmatpush1.msra.mxu0 %v4864
  %4866 = vmatprep.subr.mxu0 0.0
  %v4867 = vand.u32 %v2576, 4294901760
  %v4868 = vsub.f32 %v2576, %v4867
  %v4869 = vand.u32 %v4868, 4294901760
  %v4870 = vsub.f32 %v4868, %v4869
  %v4871 = vand.u32 %v4870, 4294901760
  %4872 = vmatpush1.msra.mxu0 %v4871
  %4873 = vmatprep.subr.mxu0 0.0
  %v4874 = vand.u32 %v2577, 4294901760
  %v4875 = vsub.f32 %v2577, %v4874
  %v4876 = vand.u32 %v4875, 4294901760
  %v4877 = vsub.f32 %v4875, %v4876
  %v4878 = vand.u32 %v4877, 4294901760
  %4879 = vmatpush1.msra.mxu0 %v4878
  %4880 = vmatprep.subr.mxu0 0.0
  %v4881 = vand.u32 %v2578, 4294901760
  %v4882 = vsub.f32 %v2578, %v4881
  %v4883 = vand.u32 %v4882, 4294901760
  %v4884 = vsub.f32 %v4882, %v4883
  %v4885 = vand.u32 %v4884, 4294901760
  %4886 = vmatpush1.msra.mxu0 %v4885
  %4887 = vmatprep.subr.mxu0 0.0
  %v4888 = vand.u32 %v2579, 4294901760
  %v4889 = vsub.f32 %v2579, %v4888
  %v4890 = vand.u32 %v4889, 4294901760
  %v4891 = vsub.f32 %v4889, %v4890
  %v4892 = vand.u32 %v4891, 4294901760
  %4893 = vmatpush1.msra.mxu0 %v4892
  %4894 = vmatprep.subr.mxu0 0.0
  %v4895 = vand.u32 %v2580, 4294901760
  %v4896 = vsub.f32 %v2580, %v4895
  %v4897 = vand.u32 %v4896, 4294901760
  %v4898 = vsub.f32 %v4896, %v4897
  %v4899 = vand.u32 %v4898, 4294901760
  %4900 = vmatpush1.msra.mxu0 %v4899
  %4901 = vmatprep.subr.mxu0 0.0
  %v4902 = vand.u32 %v2581, 4294901760
  %v4903 = vsub.f32 %v2581, %v4902
  %v4904 = vand.u32 %v4903, 4294901760
  %v4905 = vsub.f32 %v4903, %v4904
  %v4906 = vand.u32 %v4905, 4294901760
  %4907 = vmatpush1.msra.mxu0 %v4906
  %4908 = vmatprep.subr.mxu0 0.0
  %v4909 = vand.u32 %v2582, 4294901760
  %v4910 = vsub.f32 %v2582, %v4909
  %v4911 = vand.u32 %v4910, 4294901760
  %v4912 = vsub.f32 %v4910, %v4911
  %v4913 = vand.u32 %v4912, 4294901760
  %4914 = vmatpush1.msra.mxu0 %v4913
  %4915 = vmatprep.subr.mxu0 0.0
  %v4916 = vand.u32 %v2583, 4294901760
  %v4917 = vsub.f32 %v2583, %v4916
  %v4918 = vand.u32 %v4917, 4294901760
  %v4919 = vsub.f32 %v4917, %v4918
  %v4920 = vand.u32 %v4919, 4294901760
  %4921 = vmatpush1.msra.mxu0 %v4920
  %4922 = vmatprep.subr.mxu0 0.0
  %v4923 = vand.u32 %v2584, 4294901760
  %v4924 = vsub.f32 %v2584, %v4923
  %v4925 = vand.u32 %v4924, 4294901760
  %v4926 = vsub.f32 %v4924, %v4925
  %v4927 = vand.u32 %v4926, 4294901760
  %4928 = vmatpush1.msra.mxu0 %v4927
  %4929 = vmatprep.subr.mxu0 0.0
  %v4930 = vand.u32 %v2585, 4294901760
  %v4931 = vsub.f32 %v2585, %v4930
  %v4932 = vand.u32 %v4931, 4294901760
  %v4933 = vsub.f32 %v4931, %v4932
  %v4934 = vand.u32 %v4933, 4294901760
  %4935 = vmatpush1.msra.mxu0 %v4934
  %v4936 = vand.u32 %v1577, 4294901760
  %4937 = vmatprep.mubr.f32.mxu0 %v4936
  %v4938 = vand.u32 %v2075, 4294901760
  %4939 = vmatmul.mubr.f32.gmra.mrb[0].mxu0 %v4938
  %v4940 = vpop.f32.mrb[0].mxu0
  %v4941 = vadd.f32 %v4484, %v4940
  %v4942 = vpop.f32.mrb[0].mxu0
  %v4943 = vand.u32 %v1591, 4294901760
  %4944 = vmatprep.mubr.f32.mxu0 %v4943
  %v4945 = vand.u32 %v2089, 4294901760
  %4946 = vmatmul.mubr.f32.gmra.mrb[0].mxu0 %v4945
  %v4947 = vpop.f32.mrb[0].mxu0
  %v4948 = vadd.f32 %v4499, %v4947
  %v4949 = vpop.f32.mrb[0].mxu0
  %v4950 = vand.u32 %v1605, 4294901760
  %4951 = vmatprep.mubr.f32.mxu0 %v4950
  %v4952 = vand.u32 %v2103, 4294901760
  %4953 = vmatmul.mubr.f32.gmra.mrb[0].mxu0 %v4952
  %v4954 = vpop.f32.mrb[0].mxu0
  %v4955 = vadd.f32 %v4514, %v4954
  %v4956 = vpop.f32.mrb[0].mxu0
  %v4957 = vand.u32 %v1619, 4294901760
  %4958 = vmatprep.mubr.f32.mxu0 %v4957
  %v4959 = vand.u32 %v2117, 4294901760
  %4960 = vmatmul.mubr.f32.gmra.mrb[0].mxu0 %v4959
  %v4961 = vpop.f32.mrb[0].mxu0
  %v4962 = vadd.f32 %v4529, %v4961
  %v4963 = vpop.f32.mrb[0].mxu0
  %v4964 = vand.u32 %v1633, 4294901760
  %4965 = vmatprep.mubr.f32.mxu0 %v4964
  %v4966 = vand.u32 %v2131, 4294901760
  %4967 = vmatmul.mubr.f32.gmra.mrb[0].mxu0 %v4966
  %v4968 = vpop.f32.mrb[0].mxu0
  %v4969 = vadd.f32 %v4544, %v4968
  %v4970 = vpop.f32.mrb[0].mxu0
  %v4971 = vand.u32 %v1647, 4294901760
  %4972 = vmatprep.mubr.f32.mxu0 %v4971
  %v4973 = vand.u32 %v2145, 4294901760
  %4974 = vmatmul.mubr.f32.gmra.mrb[0].mxu0 %v4973
  %v4975 = vpop.f32.mrb[0].mxu0
  %v4976 = vadd.f32 %v4559, %v4975
  %v4977 = vpop.f32.mrb[0].mxu0
  %v4978 = vand.u32 %v1661, 4294901760
  %4979 = vmatprep.mubr.f32.mxu0 %v4978
  %v4980 = vand.u32 %v2159, 4294901760
  %4981 = vmatmul.mubr.f32.gmra.mrb[0].mxu0 %v4980
  %v4982 = vpop.f32.mrb[0].mxu0
  %v4983 = vadd.f32 %v4574, %v4982
  %v4984 = vpop.f32.mrb[0].mxu0
  %v4985 = vand.u32 %v2331, 4294901760
  %4986 = vmatprep.mubr.f32.mxu0 %v4985
  %v4987 = vand.u32 %v2173, 4294901760
  %4988 = vmatmul.mubr.f32.gmra.mrb[0].mxu0 %v4987
  %v4989 = vpop.f32.mrb[0].mxu0
  %v4990 = vadd.f32 %v4589, %v4989
  %v4991 = vpop.f32.mrb[0].mxu0
  %v4992 = vand.u32 %v1689, 4294901760
  %4993 = vmatprep.mubr.f32.mxu0 %v4992
  %v4994 = vand.u32 %v2187, 4294901760
  %4995 = vmatmul.mubr.f32.gmra.mrb[0].mxu0 %v4994
  %v4996 = vpop.f32.mrb[0].mxu0
  %v4997 = vadd.f32 %v4604, %v4996
  %v4998 = vpop.f32.mrb[0].mxu0
  %v4999 = vand.u32 %v1703, 4294901760
  %5000 = vmatprep.mubr.f32.mxu0 %v4999
  %v5001 = vand.u32 %v2201, 4294901760
  %5002 = vmatmul.mubr.f32.gmra.mrb[0].mxu0 %v5001
  %v5003 = vpop.f32.mrb[0].mxu0
  %v5004 = vadd.f32 %v4619, %v5003
  %v5005 = vpop.f32.mrb[0].mxu0
  %v5006 = vand.u32 %v1717, 4294901760
  %5007 = vmatprep.mubr.f32.mxu0 %v5006
  %v5008 = vand.u32 %v2215, 4294901760
  %5009 = vmatmul.mubr.f32.gmra.mrb[0].mxu0 %v5008
  %v5010 = vpop.f32.mrb[0].mxu0
  %v5011 = vadd.f32 %v4634, %v5010
  %v5012 = vpop.f32.mrb[0].mxu0
  %v5013 = vand.u32 %v1731, 4294901760
  %5014 = vmatprep.mubr.f32.mxu0 %v5013
  %v5015 = vand.u32 %v2229, 4294901760
  %5016 = vmatmul.mubr.f32.gmra.mrb[0].mxu0 %v5015
  %v5017 = vpop.f32.mrb[0].mxu0
  %v5018 = vadd.f32 %v4649, %v5017
  %v5019 = vpop.f32.mrb[0].mxu0
  %v5020 = vand.u32 %v1745, 4294901760
  %5021 = vmatprep.mubr.f32.mxu0 %v5020
  %v5022 = vand.u32 %v2243, 4294901760
  %5023 = vmatmul.mubr.f32.gmra.mrb[0].mxu0 %v5022
  %v5024 = vpop.f32.mrb[0].mxu0
  %v5025 = vadd.f32 %v4664, %v5024
  %v5026 = vpop.f32.mrb[0].mxu0
  %v5027 = vand.u32 %v1759, 4294901760
  %5028 = vmatprep.mubr.f32.mxu0 %v5027
  %v5029 = vand.u32 %v2257, 4294901760
  %5030 = vmatmul.mubr.f32.gmra.mrb[0].mxu0 %v5029
  %v5031 = vpop.f32.mrb[0].mxu0
  %v5032 = vadd.f32 %v4679, %v5031
  %v5033 = vpop.f32.mrb[0].mxu0
  %v5034 = vand.u32 %v1773, 4294901760
  %5035 = vmatprep.mubr.f32.mxu0 %v5034
  %v5036 = vand.u32 %v2271, 4294901760
  %5037 = vmatmul.mubr.f32.gmra.mrb[0].mxu0 %v5036
  %v5038 = vpop.f32.mrb[0].mxu0
  %v5039 = vadd.f32 %v4694, %v5038
  %v5040 = vpop.f32.mrb[0].mxu0
  %v5041 = vand.u32 %v2345, 4294901760
  %5042 = vmatprep.mubr.f32.mxu0 %v5041
  %v5043 = vand.u32 %v2285, 4294901760
  %5044 = vmatmul.mubr.f32.gmra.mrb[0].mxu0 %v5043
  %v5045 = vpop.f32.mrb[0].mxu0
  %v5046 = vadd.f32 %v4709, %v5045
  %v5047 = vpop.f32.mrb[0].mxu0
  %5048 = vdwg.mxu0
  %5049 = vmatprep.subr.mxu0 0.0
  %v5050 = vand.u32 %v2554, 4294901760
  %v5051 = vsub.f32 %v2554, %v5050
  %5052 = vmatpush1.msra.mxu0 %v5051
  %5053 = vmatprep.subr.mxu0 0.0
  %v5054 = vand.u32 %v2555, 4294901760
  %v5055 = vsub.f32 %v2555, %v5054
  %5056 = vmatpush1.msra.mxu0 %v5055
  %5057 = vmatprep.subr.mxu0 0.0
  %v5058 = vand.u32 %v2556, 4294901760
  %v5059 = vsub.f32 %v2556, %v5058
  %5060 = vmatpush1.msra.mxu0 %v5059
  %5061 = vmatprep.subr.mxu0 0.0
  %v5062 = vand.u32 %v2557, 4294901760
  %v5063 = vsub.f32 %v2557, %v5062
  %5064 = vmatpush1.msra.mxu0 %v5063
  %5065 = vmatprep.subr.mxu0 0.0
  %v5066 = vand.u32 %v2558, 4294901760
  %v5067 = vsub.f32 %v2558, %v5066
  %5068 = vmatpush1.msra.mxu0 %v5067
  %5069 = vmatprep.subr.mxu0 0.0
  %v5070 = vand.u32 %v2559, 4294901760
  %v5071 = vsub.f32 %v2559, %v5070
  %5072 = vmatpush1.msra.mxu0 %v5071
  %5073 = vmatprep.subr.mxu0 0.0
  %v5074 = vand.u32 %v2560, 4294901760
  %v5075 = vsub.f32 %v2560, %v5074
  %5076 = vmatpush1.msra.mxu0 %v5075
  %5077 = vmatprep.subr.mxu0 0.0
  %v5078 = vand.u32 %v2561, 4294901760
  %v5079 = vsub.f32 %v2561, %v5078
  %5080 = vmatpush1.msra.mxu0 %v5079
  %5081 = vmatprep.subr.mxu0 0.0
  %v5082 = vand.u32 %v2562, 4294901760
  %v5083 = vsub.f32 %v2562, %v5082
  %5084 = vmatpush1.msra.mxu0 %v5083
  %5085 = vmatprep.subr.mxu0 0.0
  %v5086 = vand.u32 %v2563, 4294901760
  %v5087 = vsub.f32 %v2563, %v5086
  %5088 = vmatpush1.msra.mxu0 %v5087
  %5089 = vmatprep.subr.mxu0 0.0
  %v5090 = vand.u32 %v2564, 4294901760
  %v5091 = vsub.f32 %v2564, %v5090
  %5092 = vmatpush1.msra.mxu0 %v5091
  %5093 = vmatprep.subr.mxu0 0.0
  %v5094 = vand.u32 %v2565, 4294901760
  %v5095 = vsub.f32 %v2565, %v5094
  %5096 = vmatpush1.msra.mxu0 %v5095
  %5097 = vmatprep.subr.mxu0 0.0
  %v5098 = vand.u32 %v2566, 4294901760
  %v5099 = vsub.f32 %v2566, %v5098
  %5100 = vmatpush1.msra.mxu0 %v5099
  %5101 = vmatprep.subr.mxu0 0.0
  %v5102 = vand.u32 %v2567, 4294901760
  %v5103 = vsub.f32 %v2567, %v5102
  %5104 = vmatpush1.msra.mxu0 %v5103
  %5105 = vmatprep.subr.mxu0 0.0
  %v5106 = vand.u32 %v2568, 4294901760
  %v5107 = vsub.f32 %v2568, %v5106
  %5108 = vmatpush1.msra.mxu0 %v5107
  %5109 = vmatprep.subr.mxu0 0.0
  %v5110 = vand.u32 %v2569, 4294901760
  %v5111 = vsub.f32 %v2569, %v5110
  %5112 = vmatpush1.msra.mxu0 %v5111
  %5113 = vmatprep.subr.mxu0 0.0
  %v5114 = vand.u32 %v2570, 4294901760
  %v5115 = vsub.f32 %v2570, %v5114
  %5116 = vmatpush1.msra.mxu0 %v5115
  %5117 = vmatprep.subr.mxu0 0.0
  %v5118 = vand.u32 %v2571, 4294901760
  %v5119 = vsub.f32 %v2571, %v5118
  %5120 = vmatpush1.msra.mxu0 %v5119
  %5121 = vmatprep.subr.mxu0 0.0
  %v5122 = vand.u32 %v2572, 4294901760
  %v5123 = vsub.f32 %v2572, %v5122
  %5124 = vmatpush1.msra.mxu0 %v5123
  %5125 = vmatprep.subr.mxu0 0.0
  %v5126 = vand.u32 %v2573, 4294901760
  %v5127 = vsub.f32 %v2573, %v5126
  %5128 = vmatpush1.msra.mxu0 %v5127
  %5129 = vmatprep.subr.mxu0 0.0
  %v5130 = vand.u32 %v2574, 4294901760
  %v5131 = vsub.f32 %v2574, %v5130
  %5132 = vmatpush1.msra.mxu0 %v5131
  %5133 = vmatprep.subr.mxu0 0.0
  %v5134 = vand.u32 %v2575, 4294901760
  %v5135 = vsub.f32 %v2575, %v5134
  %5136 = vmatpush1.msra.mxu0 %v5135
  %5137 = vmatprep.subr.mxu0 0.0
  %v5138 = vand.u32 %v2576, 4294901760
  %v5139 = vsub.f32 %v2576, %v5138
  %5140 = vmatpush1.msra.mxu0 %v5139
  %5141 = vmatprep.subr.mxu0 0.0
  %v5142 = vand.u32 %v2577, 4294901760
  %v5143 = vsub.f32 %v2577, %v5142
  %5144 = vmatpush1.msra.mxu0 %v5143
  %5145 = vmatprep.subr.mxu0 0.0
  %v5146 = vand.u32 %v2578, 4294901760
  %v5147 = vsub.f32 %v2578, %v5146
  %5148 = vmatpush1.msra.mxu0 %v5147
  %5149 = vmatprep.subr.mxu0 0.0
  %v5150 = vand.u32 %v2579, 4294901760
  %v5151 = vsub.f32 %v2579, %v5150
  %5152 = vmatpush1.msra.mxu0 %v5151
  %5153 = vmatprep.subr.mxu0 0.0
  %v5154 = vand.u32 %v2580, 4294901760
  %v5155 = vsub.f32 %v2580, %v5154
  %5156 = vmatpush1.msra.mxu0 %v5155
  %5157 = vmatprep.subr.mxu0 0.0
  %v5158 = vand.u32 %v2581, 4294901760
  %v5159 = vsub.f32 %v2581, %v5158
  %5160 = vmatpush1.msra.mxu0 %v5159
  %5161 = vmatprep.subr.mxu0 0.0
  %v5162 = vand.u32 %v2582, 4294901760
  %v5163 = vsub.f32 %v2582, %v5162
  %5164 = vmatpush1.msra.mxu0 %v5163
  %5165 = vmatprep.subr.mxu0 0.0
  %v5166 = vand.u32 %v2583, 4294901760
  %v5167 = vsub.f32 %v2583, %v5166
  %5168 = vmatpush1.msra.mxu0 %v5167
  %5169 = vmatprep.subr.mxu0 0.0
  %v5170 = vand.u32 %v2584, 4294901760
  %v5171 = vsub.f32 %v2584, %v5170
  %5172 = vmatpush1.msra.mxu0 %v5171
  %5173 = vmatprep.subr.mxu0 0.0
  %v5174 = vand.u32 %v2585, 4294901760
  %v5175 = vsub.f32 %v2585, %v5174
  %5176 = vmatpush1.msra.mxu0 %v5175
  %v5177 = vand.u32 %v1577, 4294901760
  %v5178 = vsub.f32 %v1577, %v5177
  %5179 = vmatprep.mubr.f32.mxu0 %v5178
  %v5180 = vand.u32 %v2075, 4294901760
  %v5181 = vsub.f32 %v2075, %v5180
  %5182 = vmatmul.mubr.f32.gmra.mrb[0].mxu0 %v5181
  %v5183 = vpop.f32.mrb[0].mxu0
  %v5184 = vadd.f32 %v4941, %v5183
  %v5185 = vpop.f32.mrb[0].mxu0
  %v5186 = vand.u32 %v1591, 4294901760
  %v5187 = vsub.f32 %v1591, %v5186
  %5188 = vmatprep.mubr.f32.mxu0 %v5187
  %v5189 = vand.u32 %v2089, 4294901760
  %v5190 = vsub.f32 %v2089, %v5189
  %5191 = vmatmul.mubr.f32.gmra.mrb[0].mxu0 %v5190
  %v5192 = vpop.f32.mrb[0].mxu0
  %v5193 = vadd.f32 %v4948, %v5192
  %v5194 = vpop.f32.mrb[0].mxu0
  %v5195 = vand.u32 %v1605, 4294901760
  %v5196 = vsub.f32 %v1605, %v5195
  %5197 = vmatprep.mubr.f32.mxu0 %v5196
  %v5198 = vand.u32 %v2103, 4294901760
  %v5199 = vsub.f32 %v2103, %v5198
  %5200 = vmatmul.mubr.f32.gmra.mrb[0].mxu0 %v5199
  %v5201 = vpop.f32.mrb[0].mxu0
  %v5202 = vadd.f32 %v4955, %v5201
  %v5203 = vpop.f32.mrb[0].mxu0
  %v5204 = vand.u32 %v1619, 4294901760
  %v5205 = vsub.f32 %v1619, %v5204
  %5206 = vmatprep.mubr.f32.mxu0 %v5205
  %v5207 = vand.u32 %v2117, 4294901760
  %v5208 = vsub.f32 %v2117, %v5207
  %5209 = vmatmul.mubr.f32.gmra.mrb[0].mxu0 %v5208
  %v5210 = vpop.f32.mrb[0].mxu0
  %v5211 = vadd.f32 %v4962, %v5210
  %v5212 = vpop.f32.mrb[0].mxu0
  %v5213 = vand.u32 %v1633, 4294901760
  %v5214 = vsub.f32 %v1633, %v5213
  %5215 = vmatprep.mubr.f32.mxu0 %v5214
  %v5216 = vand.u32 %v2131, 4294901760
  %v5217 = vsub.f32 %v2131, %v5216
  %5218 = vmatmul.mubr.f32.gmra.mrb[0].mxu0 %v5217
  %v5219 = vpop.f32.mrb[0].mxu0
  %v5220 = vadd.f32 %v4969, %v5219
  %v5221 = vpop.f32.mrb[0].mxu0
  %v5222 = vand.u32 %v1647, 4294901760
  %v5223 = vsub.f32 %v1647, %v5222
  %5224 = vmatprep.mubr.f32.mxu0 %v5223
  %v5225 = vand.u32 %v2145, 4294901760
  %v5226 = vsub.f32 %v2145, %v5225
  %5227 = vmatmul.mubr.f32.gmra.mrb[0].mxu0 %v5226
  %v5228 = vpop.f32.mrb[0].mxu0
  %v5229 = vadd.f32 %v4976, %v5228
  %v5230 = vpop.f32.mrb[0].mxu0
  %v5231 = vand.u32 %v1661, 4294901760
  %v5232 = vsub.f32 %v1661, %v5231
  %5233 = vmatprep.mubr.f32.mxu0 %v5232
  %v5234 = vand.u32 %v2159, 4294901760
  %v5235 = vsub.f32 %v2159, %v5234
  %5236 = vmatmul.mubr.f32.gmra.mrb[0].mxu0 %v5235
  %v5237 = vpop.f32.mrb[0].mxu0
  %v5238 = vadd.f32 %v4983, %v5237
  %v5239 = vpop.f32.mrb[0].mxu0
  %v5240 = vand.u32 %v2331, 4294901760
  %v5241 = vsub.f32 %v2331, %v5240
  %5242 = vmatprep.mubr.f32.mxu0 %v5241
  %v5243 = vand.u32 %v2173, 4294901760
  %v5244 = vsub.f32 %v2173, %v5243
  %5245 = vmatmul.mubr.f32.gmra.mrb[0].mxu0 %v5244
  %v5246 = vpop.f32.mrb[0].mxu0
  %v5247 = vadd.f32 %v4990, %v5246
  %v5248 = vpop.f32.mrb[0].mxu0
  %v5249 = vand.u32 %v1689, 4294901760
  %v5250 = vsub.f32 %v1689, %v5249
  %5251 = vmatprep.mubr.f32.mxu0 %v5250
  %v5252 = vand.u32 %v2187, 4294901760
  %v5253 = vsub.f32 %v2187, %v5252
  %5254 = vmatmul.mubr.f32.gmra.mrb[0].mxu0 %v5253
  %v5255 = vpop.f32.mrb[0].mxu0
  %v5256 = vadd.f32 %v4997, %v5255
  %v5257 = vpop.f32.mrb[0].mxu0
  %v5258 = vand.u32 %v1703, 4294901760
  %v5259 = vsub.f32 %v1703, %v5258
  %5260 = vmatprep.mubr.f32.mxu0 %v5259
  %v5261 = vand.u32 %v2201, 4294901760
  %v5262 = vsub.f32 %v2201, %v5261
  %5263 = vmatmul.mubr.f32.gmra.mrb[0].mxu0 %v5262
  %v5264 = vpop.f32.mrb[0].mxu0
  %v5265 = vadd.f32 %v5004, %v5264
  %v5266 = vpop.f32.mrb[0].mxu0
  %v5267 = vand.u32 %v1717, 4294901760
  %v5268 = vsub.f32 %v1717, %v5267
  %5269 = vmatprep.mubr.f32.mxu0 %v5268
  %v5270 = vand.u32 %v2215, 4294901760
  %v5271 = vsub.f32 %v2215, %v5270
  %5272 = vmatmul.mubr.f32.gmra.mrb[0].mxu0 %v5271
  %v5273 = vpop.f32.mrb[0].mxu0
  %v5274 = vadd.f32 %v5011, %v5273
  %v5275 = vpop.f32.mrb[0].mxu0
  %v5276 = vand.u32 %v1731, 4294901760
  %v5277 = vsub.f32 %v1731, %v5276
  %5278 = vmatprep.mubr.f32.mxu0 %v5277
  %v5279 = vand.u32 %v2229, 4294901760
  %v5280 = vsub.f32 %v2229, %v5279
  %5281 = vmatmul.mubr.f32.gmra.mrb[0].mxu0 %v5280
  %v5282 = vpop.f32.mrb[0].mxu0
  %v5283 = vadd.f32 %v5018, %v5282
  %v5284 = vpop.f32.mrb[0].mxu0
  %v5285 = vand.u32 %v1745, 4294901760
  %v5286 = vsub.f32 %v1745, %v5285
  %5287 = vmatprep.mubr.f32.mxu0 %v5286
  %v5288 = vand.u32 %v2243, 4294901760
  %v5289 = vsub.f32 %v2243, %v5288
  %5290 = vmatmul.mubr.f32.gmra.mrb[0].mxu0 %v5289
  %v5291 = vpop.f32.mrb[0].mxu0
  %v5292 = vadd.f32 %v5025, %v5291
  %v5293 = vpop.f32.mrb[0].mxu0
  %v5294 = vand.u32 %v1759, 4294901760
  %v5295 = vsub.f32 %v1759, %v5294
  %5296 = vmatprep.mubr.f32.mxu0 %v5295
  %v5297 = vand.u32 %v2257, 4294901760
  %v5298 = vsub.f32 %v2257, %v5297
  %5299 = vmatmul.mubr.f32.gmra.mrb[0].mxu0 %v5298
  %v5300 = vpop.f32.mrb[0].mxu0
  %v5301 = vadd.f32 %v5032, %v5300
  %v5302 = vpop.f32.mrb[0].mxu0
  %v5303 = vand.u32 %v1773, 4294901760
  %v5304 = vsub.f32 %v1773, %v5303
  %5305 = vmatprep.mubr.f32.mxu0 %v5304
  %v5306 = vand.u32 %v2271, 4294901760
  %v5307 = vsub.f32 %v2271, %v5306
  %5308 = vmatmul.mubr.f32.gmra.mrb[0].mxu0 %v5307
  %v5309 = vpop.f32.mrb[0].mxu0
  %v5310 = vadd.f32 %v5039, %v5309
  %v5311 = vpop.f32.mrb[0].mxu0
  %v5312 = vand.u32 %v2345, 4294901760
  %v5313 = vsub.f32 %v2345, %v5312
  %5314 = vmatprep.mubr.f32.mxu0 %v5313
  %v5315 = vand.u32 %v2285, 4294901760
  %v5316 = vsub.f32 %v2285, %v5315
  %5317 = vmatmul.mubr.f32.gmra.mrb[0].mxu0 %v5316
  %v5318 = vpop.f32.mrb[0].mxu0
  %v5319 = vadd.f32 %v5046, %v5318
  %v5320 = vpop.f32.mrb[0].mxu0
  %5321 = vdwg.mxu0
  %5322 = vmatprep.subr.mxu0 0.0
  %v5323 = vand.u32 %v2554, 4294901760
  %5324 = vmatpush1.msra.mxu0 %v5323
  %5325 = vmatprep.subr.mxu0 0.0
  %v5326 = vand.u32 %v2555, 4294901760
  %5327 = vmatpush1.msra.mxu0 %v5326
  %5328 = vmatprep.subr.mxu0 0.0
  %v5329 = vand.u32 %v2556, 4294901760
  %5330 = vmatpush1.msra.mxu0 %v5329
  %5331 = vmatprep.subr.mxu0 0.0
  %v5332 = vand.u32 %v2557, 4294901760
  %5333 = vmatpush1.msra.mxu0 %v5332
  %5334 = vmatprep.subr.mxu0 0.0
  %v5335 = vand.u32 %v2558, 4294901760
  %5336 = vmatpush1.msra.mxu0 %v5335
  %5337 = vmatprep.subr.mxu0 0.0
  %v5338 = vand.u32 %v2559, 4294901760
  %5339 = vmatpush1.msra.mxu0 %v5338
  %5340 = vmatprep.subr.mxu0 0.0
  %v5341 = vand.u32 %v2560, 4294901760
  %5342 = vmatpush1.msra.mxu0 %v5341
  %5343 = vmatprep.subr.mxu0 0.0
  %v5344 = vand.u32 %v2561, 4294901760
  %5345 = vmatpush1.msra.mxu0 %v5344
  %5346 = vmatprep.subr.mxu0 0.0
  %v5347 = vand.u32 %v2562, 4294901760
  %5348 = vmatpush1.msra.mxu0 %v5347
  %5349 = vmatprep.subr.mxu0 0.0
  %v5350 = vand.u32 %v2563, 4294901760
  %5351 = vmatpush1.msra.mxu0 %v5350
  %5352 = vmatprep.subr.mxu0 0.0
  %v5353 = vand.u32 %v2564, 4294901760
  %5354 = vmatpush1.msra.mxu0 %v5353
  %5355 = vmatprep.subr.mxu0 0.0
  %v5356 = vand.u32 %v2565, 4294901760
  %5357 = vmatpush1.msra.mxu0 %v5356
  %5358 = vmatprep.subr.mxu0 0.0
  %v5359 = vand.u32 %v2566, 4294901760
  %5360 = vmatpush1.msra.mxu0 %v5359
  %5361 = vmatprep.subr.mxu0 0.0
  %v5362 = vand.u32 %v2567, 4294901760
  %5363 = vmatpush1.msra.mxu0 %v5362
  %5364 = vmatprep.subr.mxu0 0.0
  %v5365 = vand.u32 %v2568, 4294901760
  %5366 = vmatpush1.msra.mxu0 %v5365
  %5367 = vmatprep.subr.mxu0 0.0
  %v5368 = vand.u32 %v2569, 4294901760
  %5369 = vmatpush1.msra.mxu0 %v5368
  %5370 = vmatprep.subr.mxu0 0.0
  %v5371 = vand.u32 %v2570, 4294901760
  %5372 = vmatpush1.msra.mxu0 %v5371
  %5373 = vmatprep.subr.mxu0 0.0
  %v5374 = vand.u32 %v2571, 4294901760
  %5375 = vmatpush1.msra.mxu0 %v5374
  %5376 = vmatprep.subr.mxu0 0.0
  %v5377 = vand.u32 %v2572, 4294901760
  %5378 = vmatpush1.msra.mxu0 %v5377
  %5379 = vmatprep.subr.mxu0 0.0
  %v5380 = vand.u32 %v2573, 4294901760
  %5381 = vmatpush1.msra.mxu0 %v5380
  %5382 = vmatprep.subr.mxu0 0.0
  %v5383 = vand.u32 %v2574, 4294901760
  %5384 = vmatpush1.msra.mxu0 %v5383
  %5385 = vmatprep.subr.mxu0 0.0
  %v5386 = vand.u32 %v2575, 4294901760
  %5387 = vmatpush1.msra.mxu0 %v5386
  %5388 = vmatprep.subr.mxu0 0.0
  %v5389 = vand.u32 %v2576, 4294901760
  %5390 = vmatpush1.msra.mxu0 %v5389
  %5391 = vmatprep.subr.mxu0 0.0
  %v5392 = vand.u32 %v2577, 4294901760
  %5393 = vmatpush1.msra.mxu0 %v5392
  %5394 = vmatprep.subr.mxu0 0.0
  %v5395 = vand.u32 %v2578, 4294901760
  %5396 = vmatpush1.msra.mxu0 %v5395
  %5397 = vmatprep.subr.mxu0 0.0
  %v5398 = vand.u32 %v2579, 4294901760
  %5399 = vmatpush1.msra.mxu0 %v5398
  %5400 = vmatprep.subr.mxu0 0.0
  %v5401 = vand.u32 %v2580, 4294901760
  %5402 = vmatpush1.msra.mxu0 %v5401
  %5403 = vmatprep.subr.mxu0 0.0
  %v5404 = vand.u32 %v2581, 4294901760
  %5405 = vmatpush1.msra.mxu0 %v5404
  %5406 = vmatprep.subr.mxu0 0.0
  %v5407 = vand.u32 %v2582, 4294901760
  %5408 = vmatpush1.msra.mxu0 %v5407
  %5409 = vmatprep.subr.mxu0 0.0
  %v5410 = vand.u32 %v2583, 4294901760
  %5411 = vmatpush1.msra.mxu0 %v5410
  %5412 = vmatprep.subr.mxu0 0.0
  %v5413 = vand.u32 %v2584, 4294901760
  %5414 = vmatpush1.msra.mxu0 %v5413
  %5415 = vmatprep.subr.mxu0 0.0
  %v5416 = vand.u32 %v2585, 4294901760
  %5417 = vmatpush1.msra.mxu0 %v5416
  %v5418 = vand.u32 %v1577, 4294901760
  %v5419 = vsub.f32 %v1577, %v5418
  %v5420 = vand.u32 %v5419, 4294901760
  %5421 = vmatprep.mubr.f32.mxu0 %v5420
  %v5422 = vand.u32 %v2075, 4294901760
  %v5423 = vsub.f32 %v2075, %v5422
  %v5424 = vand.u32 %v5423, 4294901760
  %5425 = vmatmul.mubr.f32.gmra.mrb[0].mxu0 %v5424
  %v5426 = vpop.f32.mrb[0].mxu0
  %v5427 = vadd.f32 %v5184, %v5426
  %v5428 = vpop.f32.mrb[0].mxu0
  %v5429 = vand.u32 %v1591, 4294901760
  %v5430 = vsub.f32 %v1591, %v5429
  %v5431 = vand.u32 %v5430, 4294901760
  %5432 = vmatprep.mubr.f32.mxu0 %v5431
  %v5433 = vand.u32 %v2089, 4294901760
  %v5434 = vsub.f32 %v2089, %v5433
  %v5435 = vand.u32 %v5434, 4294901760
  %5436 = vmatmul.mubr.f32.gmra.mrb[0].mxu0 %v5435
  %v5437 = vpop.f32.mrb[0].mxu0
  %v5438 = vadd.f32 %v5193, %v5437
  %v5439 = vpop.f32.mrb[0].mxu0
  %v5440 = vand.u32 %v1605, 4294901760
  %v5441 = vsub.f32 %v1605, %v5440
  %v5442 = vand.u32 %v5441, 4294901760
  %5443 = vmatprep.mubr.f32.mxu0 %v5442
  %v5444 = vand.u32 %v2103, 4294901760
  %v5445 = vsub.f32 %v2103, %v5444
  %v5446 = vand.u32 %v5445, 4294901760
  %5447 = vmatmul.mubr.f32.gmra.mrb[0].mxu0 %v5446
  %v5448 = vpop.f32.mrb[0].mxu0
  %v5449 = vadd.f32 %v5202, %v5448
  %v5450 = vpop.f32.mrb[0].mxu0
  %v5451 = vand.u32 %v1619, 4294901760
  %v5452 = vsub.f32 %v1619, %v5451
  %v5453 = vand.u32 %v5452, 4294901760
  %5454 = vmatprep.mubr.f32.mxu0 %v5453
  %v5455 = vand.u32 %v2117, 4294901760
  %v5456 = vsub.f32 %v2117, %v5455
  %v5457 = vand.u32 %v5456, 4294901760
  %5458 = vmatmul.mubr.f32.gmra.mrb[0].mxu0 %v5457
  %v5459 = vpop.f32.mrb[0].mxu0
  %v5460 = vadd.f32 %v5211, %v5459
  %v5461 = vpop.f32.mrb[0].mxu0
  %v5462 = vand.u32 %v1633, 4294901760
  %v5463 = vsub.f32 %v1633, %v5462
  %v5464 = vand.u32 %v5463, 4294901760
  %5465 = vmatprep.mubr.f32.mxu0 %v5464
  %v5466 = vand.u32 %v2131, 4294901760
  %v5467 = vsub.f32 %v2131, %v5466
  %v5468 = vand.u32 %v5467, 4294901760
  %5469 = vmatmul.mubr.f32.gmra.mrb[0].mxu0 %v5468
  %v5470 = vpop.f32.mrb[0].mxu0
  %v5471 = vadd.f32 %v5220, %v5470
  %v5472 = vpop.f32.mrb[0].mxu0
  %v5473 = vand.u32 %v1647, 4294901760
  %v5474 = vsub.f32 %v1647, %v5473
  %v5475 = vand.u32 %v5474, 4294901760
  %5476 = vmatprep.mubr.f32.mxu0 %v5475
  %v5477 = vand.u32 %v2145, 4294901760
  %v5478 = vsub.f32 %v2145, %v5477
  %v5479 = vand.u32 %v5478, 4294901760
  %5480 = vmatmul.mubr.f32.gmra.mrb[0].mxu0 %v5479
  %v5481 = vpop.f32.mrb[0].mxu0
  %v5482 = vadd.f32 %v5229, %v5481
  %v5483 = vpop.f32.mrb[0].mxu0
  %v5484 = vand.u32 %v1661, 4294901760
  %v5485 = vsub.f32 %v1661, %v5484
  %v5486 = vand.u32 %v5485, 4294901760
  %5487 = vmatprep.mubr.f32.mxu0 %v5486
  %v5488 = vand.u32 %v2159, 4294901760
  %v5489 = vsub.f32 %v2159, %v5488
  %v5490 = vand.u32 %v5489, 4294901760
  %5491 = vmatmul.mubr.f32.gmra.mrb[0].mxu0 %v5490
  %v5492 = vpop.f32.mrb[0].mxu0
  %v5493 = vadd.f32 %v5238, %v5492
  %v5494 = vpop.f32.mrb[0].mxu0
  %v5495 = vand.u32 %v2331, 4294901760
  %v5496 = vsub.f32 %v2331, %v5495
  %v5497 = vand.u32 %v5496, 4294901760
  %5498 = vmatprep.mubr.f32.mxu0 %v5497
  %v5499 = vand.u32 %v2173, 4294901760
  %v5500 = vsub.f32 %v2173, %v5499
  %v5501 = vand.u32 %v5500, 4294901760
  %5502 = vmatmul.mubr.f32.gmra.mrb[0].mxu0 %v5501
  %v5503 = vpop.f32.mrb[0].mxu0
  %v5504 = vadd.f32 %v5247, %v5503
  %v5505 = vpop.f32.mrb[0].mxu0
  %v5506 = vand.u32 %v1689, 4294901760
  %v5507 = vsub.f32 %v1689, %v5506
  %v5508 = vand.u32 %v5507, 4294901760
  %5509 = vmatprep.mubr.f32.mxu0 %v5508
  %v5510 = vand.u32 %v2187, 4294901760
  %v5511 = vsub.f32 %v2187, %v5510
  %v5512 = vand.u32 %v5511, 4294901760
  %5513 = vmatmul.mubr.f32.gmra.mrb[0].mxu0 %v5512
  %v5514 = vpop.f32.mrb[0].mxu0
  %v5515 = vadd.f32 %v5256, %v5514
  %v5516 = vpop.f32.mrb[0].mxu0
  %v5517 = vand.u32 %v1703, 4294901760
  %v5518 = vsub.f32 %v1703, %v5517
  %v5519 = vand.u32 %v5518, 4294901760
  %5520 = vmatprep.mubr.f32.mxu0 %v5519
  %v5521 = vand.u32 %v2201, 4294901760
  %v5522 = vsub.f32 %v2201, %v5521
  %v5523 = vand.u32 %v5522, 4294901760
  %5524 = vmatmul.mubr.f32.gmra.mrb[0].mxu0 %v5523
  %v5525 = vpop.f32.mrb[0].mxu0
  %v5526 = vadd.f32 %v5265, %v5525
  %v5527 = vpop.f32.mrb[0].mxu0
  %v5528 = vand.u32 %v1717, 4294901760
  %v5529 = vsub.f32 %v1717, %v5528
  %v5530 = vand.u32 %v5529, 4294901760
  %5531 = vmatprep.mubr.f32.mxu0 %v5530
  %v5532 = vand.u32 %v2215, 4294901760
  %v5533 = vsub.f32 %v2215, %v5532
  %v5534 = vand.u32 %v5533, 4294901760
  %5535 = vmatmul.mubr.f32.gmra.mrb[0].mxu0 %v5534
  %v5536 = vpop.f32.mrb[0].mxu0
  %v5537 = vadd.f32 %v5274, %v5536
  %v5538 = vpop.f32.mrb[0].mxu0
  %v5539 = vand.u32 %v1731, 4294901760
  %v5540 = vsub.f32 %v1731, %v5539
  %v5541 = vand.u32 %v5540, 4294901760
  %5542 = vmatprep.mubr.f32.mxu0 %v5541
  %v5543 = vand.u32 %v2229, 4294901760
  %v5544 = vsub.f32 %v2229, %v5543
  %v5545 = vand.u32 %v5544, 4294901760
  %5546 = vmatmul.mubr.f32.gmra.mrb[0].mxu0 %v5545
  %v5547 = vpop.f32.mrb[0].mxu0
  %v5548 = vadd.f32 %v5283, %v5547
  %v5549 = vpop.f32.mrb[0].mxu0
  %v5550 = vand.u32 %v1745, 4294901760
  %v5551 = vsub.f32 %v1745, %v5550
  %v5552 = vand.u32 %v5551, 4294901760
  %5553 = vmatprep.mubr.f32.mxu0 %v5552
  %v5554 = vand.u32 %v2243, 4294901760
  %v5555 = vsub.f32 %v2243, %v5554
  %v5556 = vand.u32 %v5555, 4294901760
  %5557 = vmatmul.mubr.f32.gmra.mrb[0].mxu0 %v5556
  %v5558 = vpop.f32.mrb[0].mxu0
  %v5559 = vadd.f32 %v5292, %v5558
  %v5560 = vpop.f32.mrb[0].mxu0
  %v5561 = vand.u32 %v1759, 4294901760
  %v5562 = vsub.f32 %v1759, %v5561
  %v5563 = vand.u32 %v5562, 4294901760
  %5564 = vmatprep.mubr.f32.mxu0 %v5563
  %v5565 = vand.u32 %v2257, 4294901760
  %v5566 = vsub.f32 %v2257, %v5565
  %v5567 = vand.u32 %v5566, 4294901760
  %5568 = vmatmul.mubr.f32.gmra.mrb[0].mxu0 %v5567
  %v5569 = vpop.f32.mrb[0].mxu0
  %v5570 = vadd.f32 %v5301, %v5569
  %v5571 = vpop.f32.mrb[0].mxu0
  %v5572 = vand.u32 %v1773, 4294901760
  %v5573 = vsub.f32 %v1773, %v5572
  %v5574 = vand.u32 %v5573, 4294901760
  %5575 = vmatprep.mubr.f32.mxu0 %v5574
  %v5576 = vand.u32 %v2271, 4294901760
  %v5577 = vsub.f32 %v2271, %v5576
  %v5578 = vand.u32 %v5577, 4294901760
  %5579 = vmatmul.mubr.f32.gmra.mrb[0].mxu0 %v5578
  %v5580 = vpop.f32.mrb[0].mxu0
  %v5581 = vadd.f32 %v5310, %v5580
  %v5582 = vpop.f32.mrb[0].mxu0
  %v5583 = vand.u32 %v2345, 4294901760
  %v5584 = vsub.f32 %v2345, %v5583
  %v5585 = vand.u32 %v5584, 4294901760
  %5586 = vmatprep.mubr.f32.mxu0 %v5585
  %v5587 = vand.u32 %v2285, 4294901760
  %v5588 = vsub.f32 %v2285, %v5587
  %v5589 = vand.u32 %v5588, 4294901760
  %5590 = vmatmul.mubr.f32.gmra.mrb[0].mxu0 %v5589
  %v5591 = vpop.f32.mrb[0].mxu0
  %v5592 = vadd.f32 %v5319, %v5591
  %v5593 = vpop.f32.mrb[0].mxu0
  %5594 = vdwg.mxu0
  %5595 = vmatprep.subr.mxu0 0.0
  %v5596 = vand.u32 %v2554, 4294901760
  %v5597 = vsub.f32 %v2554, %v5596
  %v5598 = vand.u32 %v5597, 4294901760
  %5599 = vmatpush1.msra.mxu0 %v5598
  %5600 = vmatprep.subr.mxu0 0.0
  %v5601 = vand.u32 %v2555, 4294901760
  %v5602 = vsub.f32 %v2555, %v5601
  %v5603 = vand.u32 %v5602, 4294901760
  %5604 = vmatpush1.msra.mxu0 %v5603
  %5605 = vmatprep.subr.mxu0 0.0
  %v5606 = vand.u32 %v2556, 4294901760
  %v5607 = vsub.f32 %v2556, %v5606
  %v5608 = vand.u32 %v5607, 4294901760
  %5609 = vmatpush1.msra.mxu0 %v5608
  %5610 = vmatprep.subr.mxu0 0.0
  %v5611 = vand.u32 %v2557, 4294901760
  %v5612 = vsub.f32 %v2557, %v5611
  %v5613 = vand.u32 %v5612, 4294901760
  %5614 = vmatpush1.msra.mxu0 %v5613
  %5615 = vmatprep.subr.mxu0 0.0
  %v5616 = vand.u32 %v2558, 4294901760
  %v5617 = vsub.f32 %v2558, %v5616
  %v5618 = vand.u32 %v5617, 4294901760
  %5619 = vmatpush1.msra.mxu0 %v5618
  %5620 = vmatprep.subr.mxu0 0.0
  %v5621 = vand.u32 %v2559, 4294901760
  %v5622 = vsub.f32 %v2559, %v5621
  %v5623 = vand.u32 %v5622, 4294901760
  %5624 = vmatpush1.msra.mxu0 %v5623
  %5625 = vmatprep.subr.mxu0 0.0
  %v5626 = vand.u32 %v2560, 4294901760
  %v5627 = vsub.f32 %v2560, %v5626
  %v5628 = vand.u32 %v5627, 4294901760
  %5629 = vmatpush1.msra.mxu0 %v5628
  %5630 = vmatprep.subr.mxu0 0.0
  %v5631 = vand.u32 %v2561, 4294901760
  %v5632 = vsub.f32 %v2561, %v5631
  %v5633 = vand.u32 %v5632, 4294901760
  %5634 = vmatpush1.msra.mxu0 %v5633
  %5635 = vmatprep.subr.mxu0 0.0
  %v5636 = vand.u32 %v2562, 4294901760
  %v5637 = vsub.f32 %v2562, %v5636
  %v5638 = vand.u32 %v5637, 4294901760
  %5639 = vmatpush1.msra.mxu0 %v5638
  %5640 = vmatprep.subr.mxu0 0.0
  %v5641 = vand.u32 %v2563, 4294901760
  %v5642 = vsub.f32 %v2563, %v5641
  %v5643 = vand.u32 %v5642, 4294901760
  %5644 = vmatpush1.msra.mxu0 %v5643
  %5645 = vmatprep.subr.mxu0 0.0
  %v5646 = vand.u32 %v2564, 4294901760
  %v5647 = vsub.f32 %v2564, %v5646
  %v5648 = vand.u32 %v5647, 4294901760
  %5649 = vmatpush1.msra.mxu0 %v5648
  %5650 = vmatprep.subr.mxu0 0.0
  %v5651 = vand.u32 %v2565, 4294901760
  %v5652 = vsub.f32 %v2565, %v5651
  %v5653 = vand.u32 %v5652, 4294901760
  %5654 = vmatpush1.msra.mxu0 %v5653
  %5655 = vmatprep.subr.mxu0 0.0
  %v5656 = vand.u32 %v2566, 4294901760
  %v5657 = vsub.f32 %v2566, %v5656
  %v5658 = vand.u32 %v5657, 4294901760
  %5659 = vmatpush1.msra.mxu0 %v5658
  %5660 = vmatprep.subr.mxu0 0.0
  %v5661 = vand.u32 %v2567, 4294901760
  %v5662 = vsub.f32 %v2567, %v5661
  %v5663 = vand.u32 %v5662, 4294901760
  %5664 = vmatpush1.msra.mxu0 %v5663
  %5665 = vmatprep.subr.mxu0 0.0
  %v5666 = vand.u32 %v2568, 4294901760
  %v5667 = vsub.f32 %v2568, %v5666
  %v5668 = vand.u32 %v5667, 4294901760
  %5669 = vmatpush1.msra.mxu0 %v5668
  %5670 = vmatprep.subr.mxu0 0.0
  %v5671 = vand.u32 %v2569, 4294901760
  %v5672 = vsub.f32 %v2569, %v5671
  %v5673 = vand.u32 %v5672, 4294901760
  %5674 = vmatpush1.msra.mxu0 %v5673
  %5675 = vmatprep.subr.mxu0 0.0
  %v5676 = vand.u32 %v2570, 4294901760
  %v5677 = vsub.f32 %v2570, %v5676
  %v5678 = vand.u32 %v5677, 4294901760
  %5679 = vmatpush1.msra.mxu0 %v5678
  %5680 = vmatprep.subr.mxu0 0.0
  %v5681 = vand.u32 %v2571, 4294901760
  %v5682 = vsub.f32 %v2571, %v5681
  %v5683 = vand.u32 %v5682, 4294901760
  %5684 = vmatpush1.msra.mxu0 %v5683
  %5685 = vmatprep.subr.mxu0 0.0
  %v5686 = vand.u32 %v2572, 4294901760
  %v5687 = vsub.f32 %v2572, %v5686
  %v5688 = vand.u32 %v5687, 4294901760
  %5689 = vmatpush1.msra.mxu0 %v5688
  %5690 = vmatprep.subr.mxu0 0.0
  %v5691 = vand.u32 %v2573, 4294901760
  %v5692 = vsub.f32 %v2573, %v5691
  %v5693 = vand.u32 %v5692, 4294901760
  %5694 = vmatpush1.msra.mxu0 %v5693
  %5695 = vmatprep.subr.mxu0 0.0
  %v5696 = vand.u32 %v2574, 4294901760
  %v5697 = vsub.f32 %v2574, %v5696
  %v5698 = vand.u32 %v5697, 4294901760
  %5699 = vmatpush1.msra.mxu0 %v5698
  %5700 = vmatprep.subr.mxu0 0.0
  %v5701 = vand.u32 %v2575, 4294901760
  %v5702 = vsub.f32 %v2575, %v5701
  %v5703 = vand.u32 %v5702, 4294901760
  %5704 = vmatpush1.msra.mxu0 %v5703
  %5705 = vmatprep.subr.mxu0 0.0
  %v5706 = vand.u32 %v2576, 4294901760
  %v5707 = vsub.f32 %v2576, %v5706
  %v5708 = vand.u32 %v5707, 4294901760
  %5709 = vmatpush1.msra.mxu0 %v5708
  %5710 = vmatprep.subr.mxu0 0.0
  %v5711 = vand.u32 %v2577, 4294901760
  %v5712 = vsub.f32 %v2577, %v5711
  %v5713 = vand.u32 %v5712, 4294901760
  %5714 = vmatpush1.msra.mxu0 %v5713
  %5715 = vmatprep.subr.mxu0 0.0
  %v5716 = vand.u32 %v2578, 4294901760
  %v5717 = vsub.f32 %v2578, %v5716
  %v5718 = vand.u32 %v5717, 4294901760
  %5719 = vmatpush1.msra.mxu0 %v5718
  %5720 = vmatprep.subr.mxu0 0.0
  %v5721 = vand.u32 %v2579, 4294901760
  %v5722 = vsub.f32 %v2579, %v5721
  %v5723 = vand.u32 %v5722, 4294901760
  %5724 = vmatpush1.msra.mxu0 %v5723
  %5725 = vmatprep.subr.mxu0 0.0
  %v5726 = vand.u32 %v2580, 4294901760
  %v5727 = vsub.f32 %v2580, %v5726
  %v5728 = vand.u32 %v5727, 4294901760
  %5729 = vmatpush1.msra.mxu0 %v5728
  %5730 = vmatprep.subr.mxu0 0.0
  %v5731 = vand.u32 %v2581, 4294901760
  %v5732 = vsub.f32 %v2581, %v5731
  %v5733 = vand.u32 %v5732, 4294901760
  %5734 = vmatpush1.msra.mxu0 %v5733
  %5735 = vmatprep.subr.mxu0 0.0
  %v5736 = vand.u32 %v2582, 4294901760
  %v5737 = vsub.f32 %v2582, %v5736
  %v5738 = vand.u32 %v5737, 4294901760
  %5739 = vmatpush1.msra.mxu0 %v5738
  %5740 = vmatprep.subr.mxu0 0.0
  %v5741 = vand.u32 %v2583, 4294901760
  %v5742 = vsub.f32 %v2583, %v5741
  %v5743 = vand.u32 %v5742, 4294901760
  %5744 = vmatpush1.msra.mxu0 %v5743
  %5745 = vmatprep.subr.mxu0 0.0
  %v5746 = vand.u32 %v2584, 4294901760
  %v5747 = vsub.f32 %v2584, %v5746
  %v5748 = vand.u32 %v5747, 4294901760
  %5749 = vmatpush1.msra.mxu0 %v5748
  %5750 = vmatprep.subr.mxu0 0.0
  %v5751 = vand.u32 %v2585, 4294901760
  %v5752 = vsub.f32 %v2585, %v5751
  %v5753 = vand.u32 %v5752, 4294901760
  %5754 = vmatpush1.msra.mxu0 %v5753
  %v5755 = vand.u32 %v1577, 4294901760
  %5756 = vmatprep.mubr.f32.mxu0 %v5755
  %v5757 = vand.u32 %v2075, 4294901760
  %5758 = vmatmul.mubr.f32.gmra.mrb[0].mxu0 %v5757
  %v5759 = vpop.f32.mrb[0].mxu0
  %v5760 = vadd.f32 %v5427, %v5759
  %v5761 = vpop.f32.mrb[0].mxu0
  %v5762 = vand.u32 %v1591, 4294901760
  %5763 = vmatprep.mubr.f32.mxu0 %v5762
  %v5764 = vand.u32 %v2089, 4294901760
  %5765 = vmatmul.mubr.f32.gmra.mrb[0].mxu0 %v5764
  %v5766 = vpop.f32.mrb[0].mxu0
  %v5767 = vadd.f32 %v5438, %v5766
  %v5768 = vpop.f32.mrb[0].mxu0
  %v5769 = vand.u32 %v1605, 4294901760
  %5770 = vmatprep.mubr.f32.mxu0 %v5769
  %v5771 = vand.u32 %v2103, 4294901760
  %5772 = vmatmul.mubr.f32.gmra.mrb[0].mxu0 %v5771
  %v5773 = vpop.f32.mrb[0].mxu0
  %v5774 = vadd.f32 %v5449, %v5773
  %v5775 = vpop.f32.mrb[0].mxu0
  %v5776 = vand.u32 %v1619, 4294901760
  %5777 = vmatprep.mubr.f32.mxu0 %v5776
  %v5778 = vand.u32 %v2117, 4294901760
  %5779 = vmatmul.mubr.f32.gmra.mrb[0].mxu0 %v5778
  %v5780 = vpop.f32.mrb[0].mxu0
  %v5781 = vadd.f32 %v5460, %v5780
  %v5782 = vpop.f32.mrb[0].mxu0
  %v5783 = vand.u32 %v1633, 4294901760
  %5784 = vmatprep.mubr.f32.mxu0 %v5783
  %v5785 = vand.u32 %v2131, 4294901760
  %5786 = vmatmul.mubr.f32.gmra.mrb[0].mxu0 %v5785
  %v5787 = vpop.f32.mrb[0].mxu0
  %v5788 = vadd.f32 %v5471, %v5787
  %v5789 = vpop.f32.mrb[0].mxu0
  %v5790 = vand.u32 %v1647, 4294901760
  %5791 = vmatprep.mubr.f32.mxu0 %v5790
  %v5792 = vand.u32 %v2145, 4294901760
  %5793 = vmatmul.mubr.f32.gmra.mrb[0].mxu0 %v5792
  %v5794 = vpop.f32.mrb[0].mxu0
  %v5795 = vadd.f32 %v5482, %v5794
  %v5796 = vpop.f32.mrb[0].mxu0
  %v5797 = vand.u32 %v1661, 4294901760
  %5798 = vmatprep.mubr.f32.mxu0 %v5797
  %v5799 = vand.u32 %v2159, 4294901760
  %5800 = vmatmul.mubr.f32.gmra.mrb[0].mxu0 %v5799
  %v5801 = vpop.f32.mrb[0].mxu0
  %v5802 = vadd.f32 %v5493, %v5801
  %v5803 = vpop.f32.mrb[0].mxu0
  %v5804 = vand.u32 %v2331, 4294901760
  %5805 = vmatprep.mubr.f32.mxu0 %v5804
  %v5806 = vand.u32 %v2173, 4294901760
  %5807 = vmatmul.mubr.f32.gmra.mrb[0].mxu0 %v5806
  %v5808 = vpop.f32.mrb[0].mxu0
  %v5809 = vadd.f32 %v5504, %v5808
  %v5810 = vpop.f32.mrb[0].mxu0
  %v5811 = vand.u32 %v1689, 4294901760
  %5812 = vmatprep.mubr.f32.mxu0 %v5811
  %v5813 = vand.u32 %v2187, 4294901760
  %5814 = vmatmul.mubr.f32.gmra.mrb[0].mxu0 %v5813
  %v5815 = vpop.f32.mrb[0].mxu0
  %v5816 = vadd.f32 %v5515, %v5815
  %v5817 = vpop.f32.mrb[0].mxu0
  %v5818 = vand.u32 %v1703, 4294901760
  %5819 = vmatprep.mubr.f32.mxu0 %v5818
  %v5820 = vand.u32 %v2201, 4294901760
  %5821 = vmatmul.mubr.f32.gmra.mrb[0].mxu0 %v5820
  %v5822 = vpop.f32.mrb[0].mxu0
  %v5823 = vadd.f32 %v5526, %v5822
  %v5824 = vpop.f32.mrb[0].mxu0
  %v5825 = vand.u32 %v1717, 4294901760
  %5826 = vmatprep.mubr.f32.mxu0 %v5825
  %v5827 = vand.u32 %v2215, 4294901760
  %5828 = vmatmul.mubr.f32.gmra.mrb[0].mxu0 %v5827
  %v5829 = vpop.f32.mrb[0].mxu0
  %v5830 = vadd.f32 %v5537, %v5829
  %v5831 = vpop.f32.mrb[0].mxu0
  %v5832 = vand.u32 %v1731, 4294901760
  %5833 = vmatprep.mubr.f32.mxu0 %v5832
  %v5834 = vand.u32 %v2229, 4294901760
  %5835 = vmatmul.mubr.f32.gmra.mrb[0].mxu0 %v5834
  %v5836 = vpop.f32.mrb[0].mxu0
  %v5837 = vadd.f32 %v5548, %v5836
  %v5838 = vpop.f32.mrb[0].mxu0
  %v5839 = vand.u32 %v1745, 4294901760
  %5840 = vmatprep.mubr.f32.mxu0 %v5839
  %v5841 = vand.u32 %v2243, 4294901760
  %5842 = vmatmul.mubr.f32.gmra.mrb[0].mxu0 %v5841
  %v5843 = vpop.f32.mrb[0].mxu0
  %v5844 = vadd.f32 %v5559, %v5843
  %v5845 = vpop.f32.mrb[0].mxu0
  %v5846 = vand.u32 %v1759, 4294901760
  %5847 = vmatprep.mubr.f32.mxu0 %v5846
  %v5848 = vand.u32 %v2257, 4294901760
  %5849 = vmatmul.mubr.f32.gmra.mrb[0].mxu0 %v5848
  %v5850 = vpop.f32.mrb[0].mxu0
  %v5851 = vadd.f32 %v5570, %v5850
  %v5852 = vpop.f32.mrb[0].mxu0
  %v5853 = vand.u32 %v1773, 4294901760
  %5854 = vmatprep.mubr.f32.mxu0 %v5853
  %v5855 = vand.u32 %v2271, 4294901760
  %5856 = vmatmul.mubr.f32.gmra.mrb[0].mxu0 %v5855
  %v5857 = vpop.f32.mrb[0].mxu0
  %v5858 = vadd.f32 %v5581, %v5857
  %v5859 = vpop.f32.mrb[0].mxu0
  %v5860 = vand.u32 %v2345, 4294901760
  %5861 = vmatprep.mubr.f32.mxu0 %v5860
  %v5862 = vand.u32 %v2285, 4294901760
  %5863 = vmatmul.mubr.f32.gmra.mrb[0].mxu0 %v5862
  %v5864 = vpop.f32.mrb[0].mxu0
  %v5865 = vadd.f32 %v5592, %v5864
  %v5866 = vpop.f32.mrb[0].mxu0
  %5867 = vdwg.mxu0
  %5868 = vmatprep.subr.mxu0 0.0
  %v5869 = vand.u32 %v2554, 4294901760
  %5870 = vmatpush1.msra.mxu0 %v5869
  %5871 = vmatprep.subr.mxu0 0.0
  %v5872 = vand.u32 %v2555, 4294901760
  %5873 = vmatpush1.msra.mxu0 %v5872
  %5874 = vmatprep.subr.mxu0 0.0
  %v5875 = vand.u32 %v2556, 4294901760
  %5876 = vmatpush1.msra.mxu0 %v5875
  %5877 = vmatprep.subr.mxu0 0.0
  %v5878 = vand.u32 %v2557, 4294901760
  %5879 = vmatpush1.msra.mxu0 %v5878
  %5880 = vmatprep.subr.mxu0 0.0
  %v5881 = vand.u32 %v2558, 4294901760
  %5882 = vmatpush1.msra.mxu0 %v5881
  %5883 = vmatprep.subr.mxu0 0.0
  %v5884 = vand.u32 %v2559, 4294901760
  %5885 = vmatpush1.msra.mxu0 %v5884
  %5886 = vmatprep.subr.mxu0 0.0
  %v5887 = vand.u32 %v2560, 4294901760
  %5888 = vmatpush1.msra.mxu0 %v5887
  %5889 = vmatprep.subr.mxu0 0.0
  %v5890 = vand.u32 %v2561, 4294901760
  %5891 = vmatpush1.msra.mxu0 %v5890
  %5892 = vmatprep.subr.mxu0 0.0
  %v5893 = vand.u32 %v2562, 4294901760
  %5894 = vmatpush1.msra.mxu0 %v5893
  %5895 = vmatprep.subr.mxu0 0.0
  %v5896 = vand.u32 %v2563, 4294901760
  %5897 = vmatpush1.msra.mxu0 %v5896
  %5898 = vmatprep.subr.mxu0 0.0
  %v5899 = vand.u32 %v2564, 4294901760
  %5900 = vmatpush1.msra.mxu0 %v5899
  %5901 = vmatprep.subr.mxu0 0.0
  %v5902 = vand.u32 %v2565, 4294901760
  %5903 = vmatpush1.msra.mxu0 %v5902
  %5904 = vmatprep.subr.mxu0 0.0
  %v5905 = vand.u32 %v2566, 4294901760
  %5906 = vmatpush1.msra.mxu0 %v5905
  %5907 = vmatprep.subr.mxu0 0.0
  %v5908 = vand.u32 %v2567, 4294901760
  %5909 = vmatpush1.msra.mxu0 %v5908
  %5910 = vmatprep.subr.mxu0 0.0
  %v5911 = vand.u32 %v2568, 4294901760
  %5912 = vmatpush1.msra.mxu0 %v5911
  %5913 = vmatprep.subr.mxu0 0.0
  %v5914 = vand.u32 %v2569, 4294901760
  %5915 = vmatpush1.msra.mxu0 %v5914
  %5916 = vmatprep.subr.mxu0 0.0
  %v5917 = vand.u32 %v2570, 4294901760
  %5918 = vmatpush1.msra.mxu0 %v5917
  %5919 = vmatprep.subr.mxu0 0.0
  %v5920 = vand.u32 %v2571, 4294901760
  %5921 = vmatpush1.msra.mxu0 %v5920
  %5922 = vmatprep.subr.mxu0 0.0
  %v5923 = vand.u32 %v2572, 4294901760
  %5924 = vmatpush1.msra.mxu0 %v5923
  %5925 = vmatprep.subr.mxu0 0.0
  %v5926 = vand.u32 %v2573, 4294901760
  %5927 = vmatpush1.msra.mxu0 %v5926
  %5928 = vmatprep.subr.mxu0 0.0
  %v5929 = vand.u32 %v2574, 4294901760
  %5930 = vmatpush1.msra.mxu0 %v5929
  %5931 = vmatprep.subr.mxu0 0.0
  %v5932 = vand.u32 %v2575, 4294901760
  %5933 = vmatpush1.msra.mxu0 %v5932
  %5934 = vmatprep.subr.mxu0 0.0
  %v5935 = vand.u32 %v2576, 4294901760
  %5936 = vmatpush1.msra.mxu0 %v5935
  %5937 = vmatprep.subr.mxu0 0.0
  %v5938 = vand.u32 %v2577, 4294901760
  %5939 = vmatpush1.msra.mxu0 %v5938
  %5940 = vmatprep.subr.mxu0 0.0
  %v5941 = vand.u32 %v2578, 4294901760
  %5942 = vmatpush1.msra.mxu0 %v5941
  %5943 = vmatprep.subr.mxu0 0.0
  %v5944 = vand.u32 %v2579, 4294901760
  %5945 = vmatpush1.msra.mxu0 %v5944
  %5946 = vmatprep.subr.mxu0 0.0
  %v5947 = vand.u32 %v2580, 4294901760
  %5948 = vmatpush1.msra.mxu0 %v5947
  %5949 = vmatprep.subr.mxu0 0.0
  %v5950 = vand.u32 %v2581, 4294901760
  %5951 = vmatpush1.msra.mxu0 %v5950
  %5952 = vmatprep.subr.mxu0 0.0
  %v5953 = vand.u32 %v2582, 4294901760
  %5954 = vmatpush1.msra.mxu0 %v5953
  %5955 = vmatprep.subr.mxu0 0.0
  %v5956 = vand.u32 %v2583, 4294901760
  %5957 = vmatpush1.msra.mxu0 %v5956
  %5958 = vmatprep.subr.mxu0 0.0
  %v5959 = vand.u32 %v2584, 4294901760
  %5960 = vmatpush1.msra.mxu0 %v5959
  %5961 = vmatprep.subr.mxu0 0.0
  %v5962 = vand.u32 %v2585, 4294901760
  %5963 = vmatpush1.msra.mxu0 %v5962
  %v5964 = vand.u32 %v1577, 4294901760
  %5965 = vmatprep.mubr.f32.mxu0 %v5964
  %v5966 = vand.u32 %v2075, 4294901760
  %5967 = vmatmul.mubr.f32.gmra.mrb[0].mxu0 %v5966
  %v5968 = vpop.f32.mrb[0].mxu0
  %v5969 = vadd.f32 %v5760, %v5968
  %v5970 = vpop.f32.mrb[0].mxu0
  %v5971 = vand.u32 %v1591, 4294901760
  %5972 = vmatprep.mubr.f32.mxu0 %v5971
  %v5973 = vand.u32 %v2089, 4294901760
  %5974 = vmatmul.mubr.f32.gmra.mrb[0].mxu0 %v5973
  %v5975 = vpop.f32.mrb[0].mxu0
  %v5976 = vadd.f32 %v5767, %v5975
  %v5977 = vpop.f32.mrb[0].mxu0
  %v5978 = vand.u32 %v1605, 4294901760
  %5979 = vmatprep.mubr.f32.mxu0 %v5978
  %v5980 = vand.u32 %v2103, 4294901760
  %5981 = vmatmul.mubr.f32.gmra.mrb[0].mxu0 %v5980
  %v5982 = vpop.f32.mrb[0].mxu0
  %v5983 = vadd.f32 %v5774, %v5982
  %v5984 = vpop.f32.mrb[0].mxu0
  %v5985 = vand.u32 %v1619, 4294901760
  %5986 = vmatprep.mubr.f32.mxu0 %v5985
  %v5987 = vand.u32 %v2117, 4294901760
  %5988 = vmatmul.mubr.f32.gmra.mrb[0].mxu0 %v5987
  %v5989 = vpop.f32.mrb[0].mxu0
  %v5990 = vadd.f32 %v5781, %v5989
  %v5991 = vpop.f32.mrb[0].mxu0
  %v5992 = vand.u32 %v1633, 4294901760
  %5993 = vmatprep.mubr.f32.mxu0 %v5992
  %v5994 = vand.u32 %v2131, 4294901760
  %5995 = vmatmul.mubr.f32.gmra.mrb[0].mxu0 %v5994
  %v5996 = vpop.f32.mrb[0].mxu0
  %v5997 = vadd.f32 %v5788, %v5996
  %v5998 = vpop.f32.mrb[0].mxu0
  %v5999 = vand.u32 %v1647, 4294901760
  %6000 = vmatprep.mubr.f32.mxu0 %v5999
  %v6001 = vand.u32 %v2145, 4294901760
  %6002 = vmatmul.mubr.f32.gmra.mrb[0].mxu0 %v6001
  %v6003 = vpop.f32.mrb[0].mxu0
  %v6004 = vadd.f32 %v5795, %v6003
  %v6005 = vpop.f32.mrb[0].mxu0
  %v6006 = vand.u32 %v1661, 4294901760
  %6007 = vmatprep.mubr.f32.mxu0 %v6006
  %v6008 = vand.u32 %v2159, 4294901760
  %6009 = vmatmul.mubr.f32.gmra.mrb[0].mxu0 %v6008
  %v6010 = vpop.f32.mrb[0].mxu0
  %v6011 = vadd.f32 %v5802, %v6010
  %v6012 = vpop.f32.mrb[0].mxu0
  %v6013 = vand.u32 %v2331, 4294901760
  %6014 = vmatprep.mubr.f32.mxu0 %v6013
  %v6015 = vand.u32 %v2173, 4294901760
  %6016 = vmatmul.mubr.f32.gmra.mrb[0].mxu0 %v6015
  %v6017 = vpop.f32.mrb[0].mxu0
  %v6018 = vadd.f32 %v5809, %v6017
  %v6019 = vpop.f32.mrb[0].mxu0
  %v6020 = vand.u32 %v1689, 4294901760
  %6021 = vmatprep.mubr.f32.mxu0 %v6020
  %v6022 = vand.u32 %v2187, 4294901760
  %6023 = vmatmul.mubr.f32.gmra.mrb[0].mxu0 %v6022
  %v6024 = vpop.f32.mrb[0].mxu0
  %v6025 = vadd.f32 %v5816, %v6024
  %v6026 = vpop.f32.mrb[0].mxu0
  %v6027 = vand.u32 %v1703, 4294901760
  %6028 = vmatprep.mubr.f32.mxu0 %v6027
  %v6029 = vand.u32 %v2201, 4294901760
  %6030 = vmatmul.mubr.f32.gmra.mrb[0].mxu0 %v6029
  %v6031 = vpop.f32.mrb[0].mxu0
  %v6032 = vadd.f32 %v5823, %v6031
  %v6033 = vpop.f32.mrb[0].mxu0
  %v6034 = vand.u32 %v1717, 4294901760
  %6035 = vmatprep.mubr.f32.mxu0 %v6034
  %v6036 = vand.u32 %v2215, 4294901760
  %6037 = vmatmul.mubr.f32.gmra.mrb[0].mxu0 %v6036
  %v6038 = vpop.f32.mrb[0].mxu0
  %v6039 = vadd.f32 %v5830, %v6038
  %v6040 = vpop.f32.mrb[0].mxu0
  %v6041 = vand.u32 %v1731, 4294901760
  %6042 = vmatprep.mubr.f32.mxu0 %v6041
  %v6043 = vand.u32 %v2229, 4294901760
  %6044 = vmatmul.mubr.f32.gmra.mrb[0].mxu0 %v6043
  %v6045 = vpop.f32.mrb[0].mxu0
  %v6046 = vadd.f32 %v5837, %v6045
  %v6047 = vpop.f32.mrb[0].mxu0
  %v6048 = vand.u32 %v1745, 4294901760
  %6049 = vmatprep.mubr.f32.mxu0 %v6048
  %v6050 = vand.u32 %v2243, 4294901760
  %6051 = vmatmul.mubr.f32.gmra.mrb[0].mxu0 %v6050
  %v6052 = vpop.f32.mrb[0].mxu0
  %v6053 = vadd.f32 %v5844, %v6052
  %v6054 = vpop.f32.mrb[0].mxu0
  %v6055 = vand.u32 %v1759, 4294901760
  %6056 = vmatprep.mubr.f32.mxu0 %v6055
  %v6057 = vand.u32 %v2257, 4294901760
  %6058 = vmatmul.mubr.f32.gmra.mrb[0].mxu0 %v6057
  %v6059 = vpop.f32.mrb[0].mxu0
  %v6060 = vadd.f32 %v5851, %v6059
  %v6061 = vpop.f32.mrb[0].mxu0
  %v6062 = vand.u32 %v1773, 4294901760
  %6063 = vmatprep.mubr.f32.mxu0 %v6062
  %v6064 = vand.u32 %v2271, 4294901760
  %6065 = vmatmul.mubr.f32.gmra.mrb[0].mxu0 %v6064
  %v6066 = vpop.f32.mrb[0].mxu0
  %v6067 = vadd.f32 %v5858, %v6066
  %v6068 = vpop.f32.mrb[0].mxu0
  %v6069 = vand.u32 %v2345, 4294901760
  %6070 = vmatprep.mubr.f32.mxu0 %v6069
  %v6071 = vand.u32 %v2285, 4294901760
  %6072 = vmatmul.mubr.f32.gmra.mrb[0].mxu0 %v6071
  %v6073 = vpop.f32.mrb[0].mxu0
  %v6074 = vadd.f32 %v5865, %v6073
  %v6075 = vpop.f32.mrb[0].mxu0
  %6076 = vdwg.mxu0
  %6077 = vmatprep.subr.mxu0 0.0
  %v6078 = vand.u32 %v2586, 4294901760
  %6079 = vmatpush1.msra.mxu0 %v6078
  %6080 = vmatprep.subr.mxu0 0.0
  %v6081 = vand.u32 %v2587, 4294901760
  %6082 = vmatpush1.msra.mxu0 %v6081
  %6083 = vmatprep.subr.mxu0 0.0
  %v6084 = vand.u32 %v2588, 4294901760
  %6085 = vmatpush1.msra.mxu0 %v6084
  %6086 = vmatprep.subr.mxu0 0.0
  %v6087 = vand.u32 %v2589, 4294901760
  %6088 = vmatpush1.msra.mxu0 %v6087
  %6089 = vmatprep.subr.mxu0 0.0
  %v6090 = vand.u32 %v2590, 4294901760
  %6091 = vmatpush1.msra.mxu0 %v6090
  %6092 = vmatprep.subr.mxu0 0.0
  %v6093 = vand.u32 %v2591, 4294901760
  %6094 = vmatpush1.msra.mxu0 %v6093
  %6095 = vmatprep.subr.mxu0 0.0
  %v6096 = vand.u32 %v2592, 4294901760
  %6097 = vmatpush1.msra.mxu0 %v6096
  %6098 = vmatprep.subr.mxu0 0.0
  %v6099 = vand.u32 %v2593, 4294901760
  %6100 = vmatpush1.msra.mxu0 %v6099
  %6101 = vmatprep.subr.mxu0 0.0
  %v6102 = vand.u32 %v2594, 4294901760
  %6103 = vmatpush1.msra.mxu0 %v6102
  %6104 = vmatprep.subr.mxu0 0.0
  %v6105 = vand.u32 %v2595, 4294901760
  %6106 = vmatpush1.msra.mxu0 %v6105
  %6107 = vmatprep.subr.mxu0 0.0
  %v6108 = vand.u32 %v2596, 4294901760
  %6109 = vmatpush1.msra.mxu0 %v6108
  %6110 = vmatprep.subr.mxu0 0.0
  %v6111 = vand.u32 %v2597, 4294901760
  %6112 = vmatpush1.msra.mxu0 %v6111
  %6113 = vmatprep.subr.mxu0 0.0
  %v6114 = vand.u32 %v2598, 4294901760
  %6115 = vmatpush1.msra.mxu0 %v6114
  %6116 = vmatprep.subr.mxu0 0.0
  %v6117 = vand.u32 %v2599, 4294901760
  %6118 = vmatpush1.msra.mxu0 %v6117
  %6119 = vmatprep.subr.mxu0 0.0
  %v6120 = vand.u32 %v2600, 4294901760
  %6121 = vmatpush1.msra.mxu0 %v6120
  %6122 = vmatprep.subr.mxu0 0.0
  %v6123 = vand.u32 %v2601, 4294901760
  %6124 = vmatpush1.msra.mxu0 %v6123
  %6125 = vmatprep.subr.mxu0 0.0
  %v6126 = vand.u32 %v2602, 4294901760
  %6127 = vmatpush1.msra.mxu0 %v6126
  %6128 = vmatprep.subr.mxu0 0.0
  %v6129 = vand.u32 %v2603, 4294901760
  %6130 = vmatpush1.msra.mxu0 %v6129
  %6131 = vmatprep.subr.mxu0 0.0
  %v6132 = vand.u32 %v2604, 4294901760
  %6133 = vmatpush1.msra.mxu0 %v6132
  %6134 = vmatprep.subr.mxu0 0.0
  %v6135 = vand.u32 %v2605, 4294901760
  %6136 = vmatpush1.msra.mxu0 %v6135
  %6137 = vmatprep.subr.mxu0 0.0
  %v6138 = vand.u32 %v2606, 4294901760
  %6139 = vmatpush1.msra.mxu0 %v6138
  %6140 = vmatprep.subr.mxu0 0.0
  %v6141 = vand.u32 %v2607, 4294901760
  %6142 = vmatpush1.msra.mxu0 %v6141
  %6143 = vmatprep.subr.mxu0 0.0
  %v6144 = vand.u32 %v2608, 4294901760
  %6145 = vmatpush1.msra.mxu0 %v6144
  %6146 = vmatprep.subr.mxu0 0.0
  %v6147 = vand.u32 %v2609, 4294901760
  %6148 = vmatpush1.msra.mxu0 %v6147
  %6149 = vmatprep.subr.mxu0 0.0
  %v6150 = vand.u32 %v2610, 4294901760
  %6151 = vmatpush1.msra.mxu0 %v6150
  %6152 = vmatprep.subr.mxu0 0.0
  %v6153 = vand.u32 %v2611, 4294901760
  %6154 = vmatpush1.msra.mxu0 %v6153
  %6155 = vmatprep.subr.mxu0 0.0
  %v6156 = vand.u32 %v2612, 4294901760
  %6157 = vmatpush1.msra.mxu0 %v6156
  %6158 = vmatprep.subr.mxu0 0.0
  %v6159 = vand.u32 %v2613, 4294901760
  %6160 = vmatpush1.msra.mxu0 %v6159
  %6161 = vmatprep.subr.mxu0 0.0
  %v6162 = vand.u32 %v2614, 4294901760
  %6163 = vmatpush1.msra.mxu0 %v6162
  %6164 = vmatprep.subr.mxu0 0.0
  %v6165 = vand.u32 %v2615, 4294901760
  %6166 = vmatpush1.msra.mxu0 %v6165
  %6167 = vmatprep.subr.mxu0 0.0
  %v6168 = vand.u32 %v2616, 4294901760
  %6169 = vmatpush1.msra.mxu0 %v6168
  %6170 = vmatprep.subr.mxu0 0.0
  %v6171 = vand.u32 %v2617, 4294901760
  %6172 = vmatpush1.msra.mxu0 %v6171
  %v6173 = vand.u32 %v2089, 4294901760
  %v6174 = vsub.f32 %v2089, %v6173
  %v6175 = vand.u32 %v6174, 4294901760
  %v6176 = vsub.f32 %v6174, %v6175
  %v6177 = vand.u32 %v6176, 4294901760
  %6178 = vmatprep.mubr.f32.mxu0 %v6177
  %v6179 = vand.u32 %v1833, 4294901760
  %v6180 = vsub.f32 %v1833, %v6179
  %v6181 = vand.u32 %v6180, 4294901760
  %v6182 = vsub.f32 %v6180, %v6181
  %v6183 = vand.u32 %v6182, 4294901760
  %6184 = vmatmul.mubr.f32.gmra.mrb[0].mxu0 %v6183
  %v6185 = vpop.f32.mrb[0].mxu0
  %v6186 = vadd.f32 %v5969, %v6185
  %v6187 = vpop.f32.mrb[0].mxu0
  %v6188 = vand.u32 %v2103, 4294901760
  %v6189 = vsub.f32 %v2103, %v6188
  %v6190 = vand.u32 %v6189, 4294901760
  %v6191 = vsub.f32 %v6189, %v6190
  %v6192 = vand.u32 %v6191, 4294901760
  %6193 = vmatprep.mubr.f32.mxu0 %v6192
  %v6194 = vand.u32 %v1847, 4294901760
  %v6195 = vsub.f32 %v1847, %v6194
  %v6196 = vand.u32 %v6195, 4294901760
  %v6197 = vsub.f32 %v6195, %v6196
  %v6198 = vand.u32 %v6197, 4294901760
  %6199 = vmatmul.mubr.f32.gmra.mrb[0].mxu0 %v6198
  %v6200 = vpop.f32.mrb[0].mxu0
  %v6201 = vadd.f32 %v5976, %v6200
  %v6202 = vpop.f32.mrb[0].mxu0
  %v6203 = vand.u32 %v2117, 4294901760
  %v6204 = vsub.f32 %v2117, %v6203
  %v6205 = vand.u32 %v6204, 4294901760
  %v6206 = vsub.f32 %v6204, %v6205
  %v6207 = vand.u32 %v6206, 4294901760
  %6208 = vmatprep.mubr.f32.mxu0 %v6207
  %v6209 = vand.u32 %v1861, 4294901760
  %v6210 = vsub.f32 %v1861, %v6209
  %v6211 = vand.u32 %v6210, 4294901760
  %v6212 = vsub.f32 %v6210, %v6211
  %v6213 = vand.u32 %v6212, 4294901760
  %6214 = vmatmul.mubr.f32.gmra.mrb[0].mxu0 %v6213
  %v6215 = vpop.f32.mrb[0].mxu0
  %v6216 = vadd.f32 %v5983, %v6215
  %v6217 = vpop.f32.mrb[0].mxu0
  %v6218 = vand.u32 %v2131, 4294901760
  %v6219 = vsub.f32 %v2131, %v6218
  %v6220 = vand.u32 %v6219, 4294901760
  %v6221 = vsub.f32 %v6219, %v6220
  %v6222 = vand.u32 %v6221, 4294901760
  %6223 = vmatprep.mubr.f32.mxu0 %v6222
  %v6224 = vand.u32 %v1875, 4294901760
  %v6225 = vsub.f32 %v1875, %v6224
  %v6226 = vand.u32 %v6225, 4294901760
  %v6227 = vsub.f32 %v6225, %v6226
  %v6228 = vand.u32 %v6227, 4294901760
  %6229 = vmatmul.mubr.f32.gmra.mrb[0].mxu0 %v6228
  %v6230 = vpop.f32.mrb[0].mxu0
  %v6231 = vadd.f32 %v5990, %v6230
  %v6232 = vpop.f32.mrb[0].mxu0
  %v6233 = vand.u32 %v2145, 4294901760
  %v6234 = vsub.f32 %v2145, %v6233
  %v6235 = vand.u32 %v6234, 4294901760
  %v6236 = vsub.f32 %v6234, %v6235
  %v6237 = vand.u32 %v6236, 4294901760
  %6238 = vmatprep.mubr.f32.mxu0 %v6237
  %v6239 = vand.u32 %v1889, 4294901760
  %v6240 = vsub.f32 %v1889, %v6239
  %v6241 = vand.u32 %v6240, 4294901760
  %v6242 = vsub.f32 %v6240, %v6241
  %v6243 = vand.u32 %v6242, 4294901760
  %6244 = vmatmul.mubr.f32.gmra.mrb[0].mxu0 %v6243
  %v6245 = vpop.f32.mrb[0].mxu0
  %v6246 = vadd.f32 %v5997, %v6245
  %v6247 = vpop.f32.mrb[0].mxu0
  %v6248 = vand.u32 %v2159, 4294901760
  %v6249 = vsub.f32 %v2159, %v6248
  %v6250 = vand.u32 %v6249, 4294901760
  %v6251 = vsub.f32 %v6249, %v6250
  %v6252 = vand.u32 %v6251, 4294901760
  %6253 = vmatprep.mubr.f32.mxu0 %v6252
  %v6254 = vand.u32 %v1903, 4294901760
  %v6255 = vsub.f32 %v1903, %v6254
  %v6256 = vand.u32 %v6255, 4294901760
  %v6257 = vsub.f32 %v6255, %v6256
  %v6258 = vand.u32 %v6257, 4294901760
  %6259 = vmatmul.mubr.f32.gmra.mrb[0].mxu0 %v6258
  %v6260 = vpop.f32.mrb[0].mxu0
  %v6261 = vadd.f32 %v6004, %v6260
  %v6262 = vpop.f32.mrb[0].mxu0
  %v6263 = vand.u32 %v2173, 4294901760
  %v6264 = vsub.f32 %v2173, %v6263
  %v6265 = vand.u32 %v6264, 4294901760
  %v6266 = vsub.f32 %v6264, %v6265
  %v6267 = vand.u32 %v6266, 4294901760
  %6268 = vmatprep.mubr.f32.mxu0 %v6267
  %v6269 = vand.u32 %v1917, 4294901760
  %v6270 = vsub.f32 %v1917, %v6269
  %v6271 = vand.u32 %v6270, 4294901760
  %v6272 = vsub.f32 %v6270, %v6271
  %v6273 = vand.u32 %v6272, 4294901760
  %6274 = vmatmul.mubr.f32.gmra.mrb[0].mxu0 %v6273
  %v6275 = vpop.f32.mrb[0].mxu0
  %v6276 = vadd.f32 %v6011, %v6275
  %v6277 = vpop.f32.mrb[0].mxu0
  %v6278 = vand.u32 %v2395, 4294901760
  %v6279 = vsub.f32 %v2395, %v6278
  %v6280 = vand.u32 %v6279, 4294901760
  %v6281 = vsub.f32 %v6279, %v6280
  %v6282 = vand.u32 %v6281, 4294901760
  %6283 = vmatprep.mubr.f32.mxu0 %v6282
  %v6284 = vand.u32 %v2363, 4294901760
  %v6285 = vsub.f32 %v2363, %v6284
  %v6286 = vand.u32 %v6285, 4294901760
  %v6287 = vsub.f32 %v6285, %v6286
  %v6288 = vand.u32 %v6287, 4294901760
  %6289 = vmatmul.mubr.f32.gmra.mrb[0].mxu0 %v6288
  %v6290 = vpop.f32.mrb[0].mxu0
  %v6291 = vadd.f32 %v6018, %v6290
  %v6292 = vpop.f32.mrb[0].mxu0
  %v6293 = vand.u32 %v2201, 4294901760
  %v6294 = vsub.f32 %v2201, %v6293
  %v6295 = vand.u32 %v6294, 4294901760
  %v6296 = vsub.f32 %v6294, %v6295
  %v6297 = vand.u32 %v6296, 4294901760
  %6298 = vmatprep.mubr.f32.mxu0 %v6297
  %v6299 = vand.u32 %v1945, 4294901760
  %v6300 = vsub.f32 %v1945, %v6299
  %v6301 = vand.u32 %v6300, 4294901760
  %v6302 = vsub.f32 %v6300, %v6301
  %v6303 = vand.u32 %v6302, 4294901760
  %6304 = vmatmul.mubr.f32.gmra.mrb[0].mxu0 %v6303
  %v6305 = vpop.f32.mrb[0].mxu0
  %v6306 = vadd.f32 %v6025, %v6305
  %v6307 = vpop.f32.mrb[0].mxu0
  %v6308 = vand.u32 %v2215, 4294901760
  %v6309 = vsub.f32 %v2215, %v6308
  %v6310 = vand.u32 %v6309, 4294901760
  %v6311 = vsub.f32 %v6309, %v6310
  %v6312 = vand.u32 %v6311, 4294901760
  %6313 = vmatprep.mubr.f32.mxu0 %v6312
  %v6314 = vand.u32 %v1959, 4294901760
  %v6315 = vsub.f32 %v1959, %v6314
  %v6316 = vand.u32 %v6315, 4294901760
  %v6317 = vsub.f32 %v6315, %v6316
  %v6318 = vand.u32 %v6317, 4294901760
  %6319 = vmatmul.mubr.f32.gmra.mrb[0].mxu0 %v6318
  %v6320 = vpop.f32.mrb[0].mxu0
  %v6321 = vadd.f32 %v6032, %v6320
  %v6322 = vpop.f32.mrb[0].mxu0
  %v6323 = vand.u32 %v2229, 4294901760
  %v6324 = vsub.f32 %v2229, %v6323
  %v6325 = vand.u32 %v6324, 4294901760
  %v6326 = vsub.f32 %v6324, %v6325
  %v6327 = vand.u32 %v6326, 4294901760
  %6328 = vmatprep.mubr.f32.mxu0 %v6327
  %v6329 = vand.u32 %v1973, 4294901760
  %v6330 = vsub.f32 %v1973, %v6329
  %v6331 = vand.u32 %v6330, 4294901760
  %v6332 = vsub.f32 %v6330, %v6331
  %v6333 = vand.u32 %v6332, 4294901760
  %6334 = vmatmul.mubr.f32.gmra.mrb[0].mxu0 %v6333
  %v6335 = vpop.f32.mrb[0].mxu0
  %v6336 = vadd.f32 %v6039, %v6335
  %v6337 = vpop.f32.mrb[0].mxu0
  %v6338 = vand.u32 %v2243, 4294901760
  %v6339 = vsub.f32 %v2243, %v6338
  %v6340 = vand.u32 %v6339, 4294901760
  %v6341 = vsub.f32 %v6339, %v6340
  %v6342 = vand.u32 %v6341, 4294901760
  %6343 = vmatprep.mubr.f32.mxu0 %v6342
  %v6344 = vand.u32 %v1987, 4294901760
  %v6345 = vsub.f32 %v1987, %v6344
  %v6346 = vand.u32 %v6345, 4294901760
  %v6347 = vsub.f32 %v6345, %v6346
  %v6348 = vand.u32 %v6347, 4294901760
  %6349 = vmatmul.mubr.f32.gmra.mrb[0].mxu0 %v6348
  %v6350 = vpop.f32.mrb[0].mxu0
  %v6351 = vadd.f32 %v6046, %v6350
  %v6352 = vpop.f32.mrb[0].mxu0
  %v6353 = vand.u32 %v2257, 4294901760
  %v6354 = vsub.f32 %v2257, %v6353
  %v6355 = vand.u32 %v6354, 4294901760
  %v6356 = vsub.f32 %v6354, %v6355
  %v6357 = vand.u32 %v6356, 4294901760
  %6358 = vmatprep.mubr.f32.mxu0 %v6357
  %v6359 = vand.u32 %v2001, 4294901760
  %v6360 = vsub.f32 %v2001, %v6359
  %v6361 = vand.u32 %v6360, 4294901760
  %v6362 = vsub.f32 %v6360, %v6361
  %v6363 = vand.u32 %v6362, 4294901760
  %6364 = vmatmul.mubr.f32.gmra.mrb[0].mxu0 %v6363
  %v6365 = vpop.f32.mrb[0].mxu0
  %v6366 = vadd.f32 %v6053, %v6365
  %v6367 = vpop.f32.mrb[0].mxu0
  %v6368 = vand.u32 %v2271, 4294901760
  %v6369 = vsub.f32 %v2271, %v6368
  %v6370 = vand.u32 %v6369, 4294901760
  %v6371 = vsub.f32 %v6369, %v6370
  %v6372 = vand.u32 %v6371, 4294901760
  %6373 = vmatprep.mubr.f32.mxu0 %v6372
  %v6374 = vand.u32 %v2015, 4294901760
  %v6375 = vsub.f32 %v2015, %v6374
  %v6376 = vand.u32 %v6375, 4294901760
  %v6377 = vsub.f32 %v6375, %v6376
  %v6378 = vand.u32 %v6377, 4294901760
  %6379 = vmatmul.mubr.f32.gmra.mrb[0].mxu0 %v6378
  %v6380 = vpop.f32.mrb[0].mxu0
  %v6381 = vadd.f32 %v6060, %v6380
  %v6382 = vpop.f32.mrb[0].mxu0
  %v6383 = vand.u32 %v2285, 4294901760
  %v6384 = vsub.f32 %v2285, %v6383
  %v6385 = vand.u32 %v6384, 4294901760
  %v6386 = vsub.f32 %v6384, %v6385
  %v6387 = vand.u32 %v6386, 4294901760
  %6388 = vmatprep.mubr.f32.mxu0 %v6387
  %v6389 = vand.u32 %v2029, 4294901760
  %v6390 = vsub.f32 %v2029, %v6389
  %v6391 = vand.u32 %v6390, 4294901760
  %v6392 = vsub.f32 %v6390, %v6391
  %v6393 = vand.u32 %v6392, 4294901760
  %6394 = vmatmul.mubr.f32.gmra.mrb[0].mxu0 %v6393
  %v6395 = vpop.f32.mrb[0].mxu0
  %v6396 = vadd.f32 %v6067, %v6395
  %v6397 = vpop.f32.mrb[0].mxu0
  %v6398 = vand.u32 %v2409, 4294901760
  %v6399 = vsub.f32 %v2409, %v6398
  %v6400 = vand.u32 %v6399, 4294901760
  %v6401 = vsub.f32 %v6399, %v6400
  %v6402 = vand.u32 %v6401, 4294901760
  %6403 = vmatprep.mubr.f32.mxu0 %v6402
  %v6404 = vand.u32 %v2377, 4294901760
  %v6405 = vsub.f32 %v2377, %v6404
  %v6406 = vand.u32 %v6405, 4294901760
  %v6407 = vsub.f32 %v6405, %v6406
  %v6408 = vand.u32 %v6407, 4294901760
  %6409 = vmatmul.mubr.f32.gmra.mrb[0].mxu0 %v6408
  %v6410 = vpop.f32.mrb[0].mxu0
  %v6411 = vadd.f32 %v6074, %v6410
  %v6412 = vpop.f32.mrb[0].mxu0
  %6413 = vdwg.mxu0
  %6414 = vmatprep.subr.mxu0 0.0
  %v6415 = vand.u32 %v2586, 4294901760
  %v6416 = vsub.f32 %v2586, %v6415
  %v6417 = vand.u32 %v6416, 4294901760
  %v6418 = vsub.f32 %v6416, %v6417
  %v6419 = vand.u32 %v6418, 4294901760
  %6420 = vmatpush1.msra.mxu0 %v6419
  %6421 = vmatprep.subr.mxu0 0.0
  %v6422 = vand.u32 %v2587, 4294901760
  %v6423 = vsub.f32 %v2587, %v6422
  %v6424 = vand.u32 %v6423, 4294901760
  %v6425 = vsub.f32 %v6423, %v6424
  %v6426 = vand.u32 %v6425, 4294901760
  %6427 = vmatpush1.msra.mxu0 %v6426
  %6428 = vmatprep.subr.mxu0 0.0
  %v6429 = vand.u32 %v2588, 4294901760
  %v6430 = vsub.f32 %v2588, %v6429
  %v6431 = vand.u32 %v6430, 4294901760
  %v6432 = vsub.f32 %v6430, %v6431
  %v6433 = vand.u32 %v6432, 4294901760
  %6434 = vmatpush1.msra.mxu0 %v6433
  %6435 = vmatprep.subr.mxu0 0.0
  %v6436 = vand.u32 %v2589, 4294901760
  %v6437 = vsub.f32 %v2589, %v6436
  %v6438 = vand.u32 %v6437, 4294901760
  %v6439 = vsub.f32 %v6437, %v6438
  %v6440 = vand.u32 %v6439, 4294901760
  %6441 = vmatpush1.msra.mxu0 %v6440
  %6442 = vmatprep.subr.mxu0 0.0
  %v6443 = vand.u32 %v2590, 4294901760
  %v6444 = vsub.f32 %v2590, %v6443
  %v6445 = vand.u32 %v6444, 4294901760
  %v6446 = vsub.f32 %v6444, %v6445
  %v6447 = vand.u32 %v6446, 4294901760
  %6448 = vmatpush1.msra.mxu0 %v6447
  %6449 = vmatprep.subr.mxu0 0.0
  %v6450 = vand.u32 %v2591, 4294901760
  %v6451 = vsub.f32 %v2591, %v6450
  %v6452 = vand.u32 %v6451, 4294901760
  %v6453 = vsub.f32 %v6451, %v6452
  %v6454 = vand.u32 %v6453, 4294901760
  %6455 = vmatpush1.msra.mxu0 %v6454
  %6456 = vmatprep.subr.mxu0 0.0
  %v6457 = vand.u32 %v2592, 4294901760
  %v6458 = vsub.f32 %v2592, %v6457
  %v6459 = vand.u32 %v6458, 4294901760
  %v6460 = vsub.f32 %v6458, %v6459
  %v6461 = vand.u32 %v6460, 4294901760
  %6462 = vmatpush1.msra.mxu0 %v6461
  %6463 = vmatprep.subr.mxu0 0.0
  %v6464 = vand.u32 %v2593, 4294901760
  %v6465 = vsub.f32 %v2593, %v6464
  %v6466 = vand.u32 %v6465, 4294901760
  %v6467 = vsub.f32 %v6465, %v6466
  %v6468 = vand.u32 %v6467, 4294901760
  %6469 = vmatpush1.msra.mxu0 %v6468
  %6470 = vmatprep.subr.mxu0 0.0
  %v6471 = vand.u32 %v2594, 4294901760
  %v6472 = vsub.f32 %v2594, %v6471
  %v6473 = vand.u32 %v6472, 4294901760
  %v6474 = vsub.f32 %v6472, %v6473
  %v6475 = vand.u32 %v6474, 4294901760
  %6476 = vmatpush1.msra.mxu0 %v6475
  %6477 = vmatprep.subr.mxu0 0.0
  %v6478 = vand.u32 %v2595, 4294901760
  %v6479 = vsub.f32 %v2595, %v6478
  %v6480 = vand.u32 %v6479, 4294901760
  %v6481 = vsub.f32 %v6479, %v6480
  %v6482 = vand.u32 %v6481, 4294901760
  %6483 = vmatpush1.msra.mxu0 %v6482
  %6484 = vmatprep.subr.mxu0 0.0
  %v6485 = vand.u32 %v2596, 4294901760
  %v6486 = vsub.f32 %v2596, %v6485
  %v6487 = vand.u32 %v6486, 4294901760
  %v6488 = vsub.f32 %v6486, %v6487
  %v6489 = vand.u32 %v6488, 4294901760
  %6490 = vmatpush1.msra.mxu0 %v6489
  %6491 = vmatprep.subr.mxu0 0.0
  %v6492 = vand.u32 %v2597, 4294901760
  %v6493 = vsub.f32 %v2597, %v6492
  %v6494 = vand.u32 %v6493, 4294901760
  %v6495 = vsub.f32 %v6493, %v6494
  %v6496 = vand.u32 %v6495, 4294901760
  %6497 = vmatpush1.msra.mxu0 %v6496
  %6498 = vmatprep.subr.mxu0 0.0
  %v6499 = vand.u32 %v2598, 4294901760
  %v6500 = vsub.f32 %v2598, %v6499
  %v6501 = vand.u32 %v6500, 4294901760
  %v6502 = vsub.f32 %v6500, %v6501
  %v6503 = vand.u32 %v6502, 4294901760
  %6504 = vmatpush1.msra.mxu0 %v6503
  %6505 = vmatprep.subr.mxu0 0.0
  %v6506 = vand.u32 %v2599, 4294901760
  %v6507 = vsub.f32 %v2599, %v6506
  %v6508 = vand.u32 %v6507, 4294901760
  %v6509 = vsub.f32 %v6507, %v6508
  %v6510 = vand.u32 %v6509, 4294901760
  %6511 = vmatpush1.msra.mxu0 %v6510
  %6512 = vmatprep.subr.mxu0 0.0
  %v6513 = vand.u32 %v2600, 4294901760
  %v6514 = vsub.f32 %v2600, %v6513
  %v6515 = vand.u32 %v6514, 4294901760
  %v6516 = vsub.f32 %v6514, %v6515
  %v6517 = vand.u32 %v6516, 4294901760
  %6518 = vmatpush1.msra.mxu0 %v6517
  %6519 = vmatprep.subr.mxu0 0.0
  %v6520 = vand.u32 %v2601, 4294901760
  %v6521 = vsub.f32 %v2601, %v6520
  %v6522 = vand.u32 %v6521, 4294901760
  %v6523 = vsub.f32 %v6521, %v6522
  %v6524 = vand.u32 %v6523, 4294901760
  %6525 = vmatpush1.msra.mxu0 %v6524
  %6526 = vmatprep.subr.mxu0 0.0
  %v6527 = vand.u32 %v2602, 4294901760
  %v6528 = vsub.f32 %v2602, %v6527
  %v6529 = vand.u32 %v6528, 4294901760
  %v6530 = vsub.f32 %v6528, %v6529
  %v6531 = vand.u32 %v6530, 4294901760
  %6532 = vmatpush1.msra.mxu0 %v6531
  %6533 = vmatprep.subr.mxu0 0.0
  %v6534 = vand.u32 %v2603, 4294901760
  %v6535 = vsub.f32 %v2603, %v6534
  %v6536 = vand.u32 %v6535, 4294901760
  %v6537 = vsub.f32 %v6535, %v6536
  %v6538 = vand.u32 %v6537, 4294901760
  %6539 = vmatpush1.msra.mxu0 %v6538
  %6540 = vmatprep.subr.mxu0 0.0
  %v6541 = vand.u32 %v2604, 4294901760
  %v6542 = vsub.f32 %v2604, %v6541
  %v6543 = vand.u32 %v6542, 4294901760
  %v6544 = vsub.f32 %v6542, %v6543
  %v6545 = vand.u32 %v6544, 4294901760
  %6546 = vmatpush1.msra.mxu0 %v6545
  %6547 = vmatprep.subr.mxu0 0.0
  %v6548 = vand.u32 %v2605, 4294901760
  %v6549 = vsub.f32 %v2605, %v6548
  %v6550 = vand.u32 %v6549, 4294901760
  %v6551 = vsub.f32 %v6549, %v6550
  %v6552 = vand.u32 %v6551, 4294901760
  %6553 = vmatpush1.msra.mxu0 %v6552
  %6554 = vmatprep.subr.mxu0 0.0
  %v6555 = vand.u32 %v2606, 4294901760
  %v6556 = vsub.f32 %v2606, %v6555
  %v6557 = vand.u32 %v6556, 4294901760
  %v6558 = vsub.f32 %v6556, %v6557
  %v6559 = vand.u32 %v6558, 4294901760
  %6560 = vmatpush1.msra.mxu0 %v6559
  %6561 = vmatprep.subr.mxu0 0.0
  %v6562 = vand.u32 %v2607, 4294901760
  %v6563 = vsub.f32 %v2607, %v6562
  %v6564 = vand.u32 %v6563, 4294901760
  %v6565 = vsub.f32 %v6563, %v6564
  %v6566 = vand.u32 %v6565, 4294901760
  %6567 = vmatpush1.msra.mxu0 %v6566
  %6568 = vmatprep.subr.mxu0 0.0
  %v6569 = vand.u32 %v2608, 4294901760
  %v6570 = vsub.f32 %v2608, %v6569
  %v6571 = vand.u32 %v6570, 4294901760
  %v6572 = vsub.f32 %v6570, %v6571
  %v6573 = vand.u32 %v6572, 4294901760
  %6574 = vmatpush1.msra.mxu0 %v6573
  %6575 = vmatprep.subr.mxu0 0.0
  %v6576 = vand.u32 %v2609, 4294901760
  %v6577 = vsub.f32 %v2609, %v6576
  %v6578 = vand.u32 %v6577, 4294901760
  %v6579 = vsub.f32 %v6577, %v6578
  %v6580 = vand.u32 %v6579, 4294901760
  %6581 = vmatpush1.msra.mxu0 %v6580
  %6582 = vmatprep.subr.mxu0 0.0
  %v6583 = vand.u32 %v2610, 4294901760
  %v6584 = vsub.f32 %v2610, %v6583
  %v6585 = vand.u32 %v6584, 4294901760
  %v6586 = vsub.f32 %v6584, %v6585
  %v6587 = vand.u32 %v6586, 4294901760
  %6588 = vmatpush1.msra.mxu0 %v6587
  %6589 = vmatprep.subr.mxu0 0.0
  %v6590 = vand.u32 %v2611, 4294901760
  %v6591 = vsub.f32 %v2611, %v6590
  %v6592 = vand.u32 %v6591, 4294901760
  %v6593 = vsub.f32 %v6591, %v6592
  %v6594 = vand.u32 %v6593, 4294901760
  %6595 = vmatpush1.msra.mxu0 %v6594
  %6596 = vmatprep.subr.mxu0 0.0
  %v6597 = vand.u32 %v2612, 4294901760
  %v6598 = vsub.f32 %v2612, %v6597
  %v6599 = vand.u32 %v6598, 4294901760
  %v6600 = vsub.f32 %v6598, %v6599
  %v6601 = vand.u32 %v6600, 4294901760
  %6602 = vmatpush1.msra.mxu0 %v6601
  %6603 = vmatprep.subr.mxu0 0.0
  %v6604 = vand.u32 %v2613, 4294901760
  %v6605 = vsub.f32 %v2613, %v6604
  %v6606 = vand.u32 %v6605, 4294901760
  %v6607 = vsub.f32 %v6605, %v6606
  %v6608 = vand.u32 %v6607, 4294901760
  %6609 = vmatpush1.msra.mxu0 %v6608
  %6610 = vmatprep.subr.mxu0 0.0
  %v6611 = vand.u32 %v2614, 4294901760
  %v6612 = vsub.f32 %v2614, %v6611
  %v6613 = vand.u32 %v6612, 4294901760
  %v6614 = vsub.f32 %v6612, %v6613
  %v6615 = vand.u32 %v6614, 4294901760
  %6616 = vmatpush1.msra.mxu0 %v6615
  %6617 = vmatprep.subr.mxu0 0.0
  %v6618 = vand.u32 %v2615, 4294901760
  %v6619 = vsub.f32 %v2615, %v6618
  %v6620 = vand.u32 %v6619, 4294901760
  %v6621 = vsub.f32 %v6619, %v6620
  %v6622 = vand.u32 %v6621, 4294901760
  %6623 = vmatpush1.msra.mxu0 %v6622
  %6624 = vmatprep.subr.mxu0 0.0
  %v6625 = vand.u32 %v2616, 4294901760
  %v6626 = vsub.f32 %v2616, %v6625
  %v6627 = vand.u32 %v6626, 4294901760
  %v6628 = vsub.f32 %v6626, %v6627
  %v6629 = vand.u32 %v6628, 4294901760
  %6630 = vmatpush1.msra.mxu0 %v6629
  %6631 = vmatprep.subr.mxu0 0.0
  %v6632 = vand.u32 %v2617, 4294901760
  %v6633 = vsub.f32 %v2617, %v6632
  %v6634 = vand.u32 %v6633, 4294901760
  %v6635 = vsub.f32 %v6633, %v6634
  %v6636 = vand.u32 %v6635, 4294901760
  %6637 = vmatpush1.msra.mxu0 %v6636
  %v6638 = vand.u32 %v2089, 4294901760
  %6639 = vmatprep.mubr.f32.mxu0 %v6638
  %v6640 = vand.u32 %v1833, 4294901760
  %6641 = vmatmul.mubr.f32.gmra.mrb[0].mxu0 %v6640
  %v6642 = vpop.f32.mrb[0].mxu0
  %v6643 = vadd.f32 %v6186, %v6642
  %v6644 = vpop.f32.mrb[0].mxu0
  %v6645 = vand.u32 %v2103, 4294901760
  %6646 = vmatprep.mubr.f32.mxu0 %v6645
  %v6647 = vand.u32 %v1847, 4294901760
  %6648 = vmatmul.mubr.f32.gmra.mrb[0].mxu0 %v6647
  %v6649 = vpop.f32.mrb[0].mxu0
  %v6650 = vadd.f32 %v6201, %v6649
  %v6651 = vpop.f32.mrb[0].mxu0
  %v6652 = vand.u32 %v2117, 4294901760
  %6653 = vmatprep.mubr.f32.mxu0 %v6652
  %v6654 = vand.u32 %v1861, 4294901760
  %6655 = vmatmul.mubr.f32.gmra.mrb[0].mxu0 %v6654
  %v6656 = vpop.f32.mrb[0].mxu0
  %v6657 = vadd.f32 %v6216, %v6656
  %v6658 = vpop.f32.mrb[0].mxu0
  %v6659 = vand.u32 %v2131, 4294901760
  %6660 = vmatprep.mubr.f32.mxu0 %v6659
  %v6661 = vand.u32 %v1875, 4294901760
  %6662 = vmatmul.mubr.f32.gmra.mrb[0].mxu0 %v6661
  %v6663 = vpop.f32.mrb[0].mxu0
  %v6664 = vadd.f32 %v6231, %v6663
  %v6665 = vpop.f32.mrb[0].mxu0
  %v6666 = vand.u32 %v2145, 4294901760
  %6667 = vmatprep.mubr.f32.mxu0 %v6666
  %v6668 = vand.u32 %v1889, 4294901760
  %6669 = vmatmul.mubr.f32.gmra.mrb[0].mxu0 %v6668
  %v6670 = vpop.f32.mrb[0].mxu0
  %v6671 = vadd.f32 %v6246, %v6670
  %v6672 = vpop.f32.mrb[0].mxu0
  %v6673 = vand.u32 %v2159, 4294901760
  %6674 = vmatprep.mubr.f32.mxu0 %v6673
  %v6675 = vand.u32 %v1903, 4294901760
  %6676 = vmatmul.mubr.f32.gmra.mrb[0].mxu0 %v6675
  %v6677 = vpop.f32.mrb[0].mxu0
  %v6678 = vadd.f32 %v6261, %v6677
  %v6679 = vpop.f32.mrb[0].mxu0
  %v6680 = vand.u32 %v2173, 4294901760
  %6681 = vmatprep.mubr.f32.mxu0 %v6680
  %v6682 = vand.u32 %v1917, 4294901760
  %6683 = vmatmul.mubr.f32.gmra.mrb[0].mxu0 %v6682
  %v6684 = vpop.f32.mrb[0].mxu0
  %v6685 = vadd.f32 %v6276, %v6684
  %v6686 = vpop.f32.mrb[0].mxu0
  %v6687 = vand.u32 %v2395, 4294901760
  %6688 = vmatprep.mubr.f32.mxu0 %v6687
  %v6689 = vand.u32 %v2363, 4294901760
  %6690 = vmatmul.mubr.f32.gmra.mrb[0].mxu0 %v6689
  %v6691 = vpop.f32.mrb[0].mxu0
  %v6692 = vadd.f32 %v6291, %v6691
  %v6693 = vpop.f32.mrb[0].mxu0
  %v6694 = vand.u32 %v2201, 4294901760
  %6695 = vmatprep.mubr.f32.mxu0 %v6694
  %v6696 = vand.u32 %v1945, 4294901760
  %6697 = vmatmul.mubr.f32.gmra.mrb[0].mxu0 %v6696
  %v6698 = vpop.f32.mrb[0].mxu0
  %v6699 = vadd.f32 %v6306, %v6698
  %v6700 = vpop.f32.mrb[0].mxu0
  %v6701 = vand.u32 %v2215, 4294901760
  %6702 = vmatprep.mubr.f32.mxu0 %v6701
  %v6703 = vand.u32 %v1959, 4294901760
  %6704 = vmatmul.mubr.f32.gmra.mrb[0].mxu0 %v6703
  %v6705 = vpop.f32.mrb[0].mxu0
  %v6706 = vadd.f32 %v6321, %v6705
  %v6707 = vpop.f32.mrb[0].mxu0
  %v6708 = vand.u32 %v2229, 4294901760
  %6709 = vmatprep.mubr.f32.mxu0 %v6708
  %v6710 = vand.u32 %v1973, 4294901760
  %6711 = vmatmul.mubr.f32.gmra.mrb[0].mxu0 %v6710
  %v6712 = vpop.f32.mrb[0].mxu0
  %v6713 = vadd.f32 %v6336, %v6712
  %v6714 = vpop.f32.mrb[0].mxu0
  %v6715 = vand.u32 %v2243, 4294901760
  %6716 = vmatprep.mubr.f32.mxu0 %v6715
  %v6717 = vand.u32 %v1987, 4294901760
  %6718 = vmatmul.mubr.f32.gmra.mrb[0].mxu0 %v6717
  %v6719 = vpop.f32.mrb[0].mxu0
  %v6720 = vadd.f32 %v6351, %v6719
  %v6721 = vpop.f32.mrb[0].mxu0
  %v6722 = vand.u32 %v2257, 4294901760
  %6723 = vmatprep.mubr.f32.mxu0 %v6722
  %v6724 = vand.u32 %v2001, 4294901760
  %6725 = vmatmul.mubr.f32.gmra.mrb[0].mxu0 %v6724
  %v6726 = vpop.f32.mrb[0].mxu0
  %v6727 = vadd.f32 %v6366, %v6726
  %v6728 = vpop.f32.mrb[0].mxu0
  %v6729 = vand.u32 %v2271, 4294901760
  %6730 = vmatprep.mubr.f32.mxu0 %v6729
  %v6731 = vand.u32 %v2015, 4294901760
  %6732 = vmatmul.mubr.f32.gmra.mrb[0].mxu0 %v6731
  %v6733 = vpop.f32.mrb[0].mxu0
  %v6734 = vadd.f32 %v6381, %v6733
  %v6735 = vpop.f32.mrb[0].mxu0
  %v6736 = vand.u32 %v2285, 4294901760
  %6737 = vmatprep.mubr.f32.mxu0 %v6736
  %v6738 = vand.u32 %v2029, 4294901760
  %6739 = vmatmul.mubr.f32.gmra.mrb[0].mxu0 %v6738
  %v6740 = vpop.f32.mrb[0].mxu0
  %v6741 = vadd.f32 %v6396, %v6740
  %v6742 = vpop.f32.mrb[0].mxu0
  %v6743 = vand.u32 %v2409, 4294901760
  %6744 = vmatprep.mubr.f32.mxu0 %v6743
  %v6745 = vand.u32 %v2377, 4294901760
  %6746 = vmatmul.mubr.f32.gmra.mrb[0].mxu0 %v6745
  %v6747 = vpop.f32.mrb[0].mxu0
  %v6748 = vadd.f32 %v6411, %v6747
  %v6749 = vpop.f32.mrb[0].mxu0
  %6750 = vdwg.mxu0
  %6751 = vmatprep.subr.mxu0 0.0
  %v6752 = vand.u32 %v2586, 4294901760
  %v6753 = vsub.f32 %v2586, %v6752
  %6754 = vmatpush1.msra.mxu0 %v6753
  %6755 = vmatprep.subr.mxu0 0.0
  %v6756 = vand.u32 %v2587, 4294901760
  %v6757 = vsub.f32 %v2587, %v6756
  %6758 = vmatpush1.msra.mxu0 %v6757
  %6759 = vmatprep.subr.mxu0 0.0
  %v6760 = vand.u32 %v2588, 4294901760
  %v6761 = vsub.f32 %v2588, %v6760
  %6762 = vmatpush1.msra.mxu0 %v6761
  %6763 = vmatprep.subr.mxu0 0.0
  %v6764 = vand.u32 %v2589, 4294901760
  %v6765 = vsub.f32 %v2589, %v6764
  %6766 = vmatpush1.msra.mxu0 %v6765
  %6767 = vmatprep.subr.mxu0 0.0
  %v6768 = vand.u32 %v2590, 4294901760
  %v6769 = vsub.f32 %v2590, %v6768
  %6770 = vmatpush1.msra.mxu0 %v6769
  %6771 = vmatprep.subr.mxu0 0.0
  %v6772 = vand.u32 %v2591, 4294901760
  %v6773 = vsub.f32 %v2591, %v6772
  %6774 = vmatpush1.msra.mxu0 %v6773
  %6775 = vmatprep.subr.mxu0 0.0
  %v6776 = vand.u32 %v2592, 4294901760
  %v6777 = vsub.f32 %v2592, %v6776
  %6778 = vmatpush1.msra.mxu0 %v6777
  %6779 = vmatprep.subr.mxu0 0.0
  %v6780 = vand.u32 %v2593, 4294901760
  %v6781 = vsub.f32 %v2593, %v6780
  %6782 = vmatpush1.msra.mxu0 %v6781
  %6783 = vmatprep.subr.mxu0 0.0
  %v6784 = vand.u32 %v2594, 4294901760
  %v6785 = vsub.f32 %v2594, %v6784
  %6786 = vmatpush1.msra.mxu0 %v6785
  %6787 = vmatprep.subr.mxu0 0.0
  %v6788 = vand.u32 %v2595, 4294901760
  %v6789 = vsub.f32 %v2595, %v6788
  %6790 = vmatpush1.msra.mxu0 %v6789
  %6791 = vmatprep.subr.mxu0 0.0
  %v6792 = vand.u32 %v2596, 4294901760
  %v6793 = vsub.f32 %v2596, %v6792
  %6794 = vmatpush1.msra.mxu0 %v6793
  %6795 = vmatprep.subr.mxu0 0.0
  %v6796 = vand.u32 %v2597, 4294901760
  %v6797 = vsub.f32 %v2597, %v6796
  %6798 = vmatpush1.msra.mxu0 %v6797
  %6799 = vmatprep.subr.mxu0 0.0
  %v6800 = vand.u32 %v2598, 4294901760
  %v6801 = vsub.f32 %v2598, %v6800
  %6802 = vmatpush1.msra.mxu0 %v6801
  %6803 = vmatprep.subr.mxu0 0.0
  %v6804 = vand.u32 %v2599, 4294901760
  %v6805 = vsub.f32 %v2599, %v6804
  %6806 = vmatpush1.msra.mxu0 %v6805
  %6807 = vmatprep.subr.mxu0 0.0
  %v6808 = vand.u32 %v2600, 4294901760
  %v6809 = vsub.f32 %v2600, %v6808
  %6810 = vmatpush1.msra.mxu0 %v6809
  %6811 = vmatprep.subr.mxu0 0.0
  %v6812 = vand.u32 %v2601, 4294901760
  %v6813 = vsub.f32 %v2601, %v6812
  %6814 = vmatpush1.msra.mxu0 %v6813
  %6815 = vmatprep.subr.mxu0 0.0
  %v6816 = vand.u32 %v2602, 4294901760
  %v6817 = vsub.f32 %v2602, %v6816
  %6818 = vmatpush1.msra.mxu0 %v6817
  %6819 = vmatprep.subr.mxu0 0.0
  %v6820 = vand.u32 %v2603, 4294901760
  %v6821 = vsub.f32 %v2603, %v6820
  %6822 = vmatpush1.msra.mxu0 %v6821
  %6823 = vmatprep.subr.mxu0 0.0
  %v6824 = vand.u32 %v2604, 4294901760
  %v6825 = vsub.f32 %v2604, %v6824
  %6826 = vmatpush1.msra.mxu0 %v6825
  %6827 = vmatprep.subr.mxu0 0.0
  %v6828 = vand.u32 %v2605, 4294901760
  %v6829 = vsub.f32 %v2605, %v6828
  %6830 = vmatpush1.msra.mxu0 %v6829
  %6831 = vmatprep.subr.mxu0 0.0
  %v6832 = vand.u32 %v2606, 4294901760
  %v6833 = vsub.f32 %v2606, %v6832
  %6834 = vmatpush1.msra.mxu0 %v6833
  %6835 = vmatprep.subr.mxu0 0.0
  %v6836 = vand.u32 %v2607, 4294901760
  %v6837 = vsub.f32 %v2607, %v6836
  %6838 = vmatpush1.msra.mxu0 %v6837
  %6839 = vmatprep.subr.mxu0 0.0
  %v6840 = vand.u32 %v2608, 4294901760
  %v6841 = vsub.f32 %v2608, %v6840
  %6842 = vmatpush1.msra.mxu0 %v6841
  %6843 = vmatprep.subr.mxu0 0.0
  %v6844 = vand.u32 %v2609, 4294901760
  %v6845 = vsub.f32 %v2609, %v6844
  %6846 = vmatpush1.msra.mxu0 %v6845
  %6847 = vmatprep.subr.mxu0 0.0
  %v6848 = vand.u32 %v2610, 4294901760
  %v6849 = vsub.f32 %v2610, %v6848
  %6850 = vmatpush1.msra.mxu0 %v6849
  %6851 = vmatprep.subr.mxu0 0.0
  %v6852 = vand.u32 %v2611, 4294901760
  %v6853 = vsub.f32 %v2611, %v6852
  %6854 = vmatpush1.msra.mxu0 %v6853
  %6855 = vmatprep.subr.mxu0 0.0
  %v6856 = vand.u32 %v2612, 4294901760
  %v6857 = vsub.f32 %v2612, %v6856
  %6858 = vmatpush1.msra.mxu0 %v6857
  %6859 = vmatprep.subr.mxu0 0.0
  %v6860 = vand.u32 %v2613, 4294901760
  %v6861 = vsub.f32 %v2613, %v6860
  %6862 = vmatpush1.msra.mxu0 %v6861
  %6863 = vmatprep.subr.mxu0 0.0
  %v6864 = vand.u32 %v2614, 4294901760
  %v6865 = vsub.f32 %v2614, %v6864
  %6866 = vmatpush1.msra.mxu0 %v6865
  %6867 = vmatprep.subr.mxu0 0.0
  %v6868 = vand.u32 %v2615, 4294901760
  %v6869 = vsub.f32 %v2615, %v6868
  %6870 = vmatpush1.msra.mxu0 %v6869
  %6871 = vmatprep.subr.mxu0 0.0
  %v6872 = vand.u32 %v2616, 4294901760
  %v6873 = vsub.f32 %v2616, %v6872
  %6874 = vmatpush1.msra.mxu0 %v6873
  %6875 = vmatprep.subr.mxu0 0.0
  %v6876 = vand.u32 %v2617, 4294901760
  %v6877 = vsub.f32 %v2617, %v6876
  %6878 = vmatpush1.msra.mxu0 %v6877
  %v6879 = vand.u32 %v2089, 4294901760
  %v6880 = vsub.f32 %v2089, %v6879
  %6881 = vmatprep.mubr.f32.mxu0 %v6880
  %v6882 = vand.u32 %v1833, 4294901760
  %v6883 = vsub.f32 %v1833, %v6882
  %6884 = vmatmul.mubr.f32.gmra.mrb[0].mxu0 %v6883
  %v6885 = vpop.f32.mrb[0].mxu0
  %v6886 = vadd.f32 %v6643, %v6885
  %v6887 = vpop.f32.mrb[0].mxu0
  %v6888 = vand.u32 %v2103, 4294901760
  %v6889 = vsub.f32 %v2103, %v6888
  %6890 = vmatprep.mubr.f32.mxu0 %v6889
  %v6891 = vand.u32 %v1847, 4294901760
  %v6892 = vsub.f32 %v1847, %v6891
  %6893 = vmatmul.mubr.f32.gmra.mrb[0].mxu0 %v6892
  %v6894 = vpop.f32.mrb[0].mxu0
  %v6895 = vadd.f32 %v6650, %v6894
  %v6896 = vpop.f32.mrb[0].mxu0
  %v6897 = vand.u32 %v2117, 4294901760
  %v6898 = vsub.f32 %v2117, %v6897
  %6899 = vmatprep.mubr.f32.mxu0 %v6898
  %v6900 = vand.u32 %v1861, 4294901760
  %v6901 = vsub.f32 %v1861, %v6900
  %6902 = vmatmul.mubr.f32.gmra.mrb[0].mxu0 %v6901
  %v6903 = vpop.f32.mrb[0].mxu0
  %v6904 = vadd.f32 %v6657, %v6903
  %v6905 = vpop.f32.mrb[0].mxu0
  %v6906 = vand.u32 %v2131, 4294901760
  %v6907 = vsub.f32 %v2131, %v6906
  %6908 = vmatprep.mubr.f32.mxu0 %v6907
  %v6909 = vand.u32 %v1875, 4294901760
  %v6910 = vsub.f32 %v1875, %v6909
  %6911 = vmatmul.mubr.f32.gmra.mrb[0].mxu0 %v6910
  %v6912 = vpop.f32.mrb[0].mxu0
  %v6913 = vadd.f32 %v6664, %v6912
  %v6914 = vpop.f32.mrb[0].mxu0
  %v6915 = vand.u32 %v2145, 4294901760
  %v6916 = vsub.f32 %v2145, %v6915
  %6917 = vmatprep.mubr.f32.mxu0 %v6916
  %v6918 = vand.u32 %v1889, 4294901760
  %v6919 = vsub.f32 %v1889, %v6918
  %6920 = vmatmul.mubr.f32.gmra.mrb[0].mxu0 %v6919
  %v6921 = vpop.f32.mrb[0].mxu0
  %v6922 = vadd.f32 %v6671, %v6921
  %v6923 = vpop.f32.mrb[0].mxu0
  %v6924 = vand.u32 %v2159, 4294901760
  %v6925 = vsub.f32 %v2159, %v6924
  %6926 = vmatprep.mubr.f32.mxu0 %v6925
  %v6927 = vand.u32 %v1903, 4294901760
  %v6928 = vsub.f32 %v1903, %v6927
  %6929 = vmatmul.mubr.f32.gmra.mrb[0].mxu0 %v6928
  %v6930 = vpop.f32.mrb[0].mxu0
  %v6931 = vadd.f32 %v6678, %v6930
  %v6932 = vpop.f32.mrb[0].mxu0
  %v6933 = vand.u32 %v2173, 4294901760
  %v6934 = vsub.f32 %v2173, %v6933
  %6935 = vmatprep.mubr.f32.mxu0 %v6934
  %v6936 = vand.u32 %v1917, 4294901760
  %v6937 = vsub.f32 %v1917, %v6936
  %6938 = vmatmul.mubr.f32.gmra.mrb[0].mxu0 %v6937
  %v6939 = vpop.f32.mrb[0].mxu0
  %v6940 = vadd.f32 %v6685, %v6939
  %v6941 = vpop.f32.mrb[0].mxu0
  %v6942 = vand.u32 %v2395, 4294901760
  %v6943 = vsub.f32 %v2395, %v6942
  %6944 = vmatprep.mubr.f32.mxu0 %v6943
  %v6945 = vand.u32 %v2363, 4294901760
  %v6946 = vsub.f32 %v2363, %v6945
  %6947 = vmatmul.mubr.f32.gmra.mrb[0].mxu0 %v6946
  %v6948 = vpop.f32.mrb[0].mxu0
  %v6949 = vadd.f32 %v6692, %v6948
  %v6950 = vpop.f32.mrb[0].mxu0
  %v6951 = vand.u32 %v2201, 4294901760
  %v6952 = vsub.f32 %v2201, %v6951
  %6953 = vmatprep.mubr.f32.mxu0 %v6952
  %v6954 = vand.u32 %v1945, 4294901760
  %v6955 = vsub.f32 %v1945, %v6954
  %6956 = vmatmul.mubr.f32.gmra.mrb[0].mxu0 %v6955
  %v6957 = vpop.f32.mrb[0].mxu0
  %v6958 = vadd.f32 %v6699, %v6957
  %v6959 = vpop.f32.mrb[0].mxu0
  %v6960 = vand.u32 %v2215, 4294901760
  %v6961 = vsub.f32 %v2215, %v6960
  %6962 = vmatprep.mubr.f32.mxu0 %v6961
  %v6963 = vand.u32 %v1959, 4294901760
  %v6964 = vsub.f32 %v1959, %v6963
  %6965 = vmatmul.mubr.f32.gmra.mrb[0].mxu0 %v6964
  %v6966 = vpop.f32.mrb[0].mxu0
  %v6967 = vadd.f32 %v6706, %v6966
  %v6968 = vpop.f32.mrb[0].mxu0
  %v6969 = vand.u32 %v2229, 4294901760
  %v6970 = vsub.f32 %v2229, %v6969
  %6971 = vmatprep.mubr.f32.mxu0 %v6970
  %v6972 = vand.u32 %v1973, 4294901760
  %v6973 = vsub.f32 %v1973, %v6972
  %6974 = vmatmul.mubr.f32.gmra.mrb[0].mxu0 %v6973
  %v6975 = vpop.f32.mrb[0].mxu0
  %v6976 = vadd.f32 %v6713, %v6975
  %v6977 = vpop.f32.mrb[0].mxu0
  %v6978 = vand.u32 %v2243, 4294901760
  %v6979 = vsub.f32 %v2243, %v6978
  %6980 = vmatprep.mubr.f32.mxu0 %v6979
  %v6981 = vand.u32 %v1987, 4294901760
  %v6982 = vsub.f32 %v1987, %v6981
  %6983 = vmatmul.mubr.f32.gmra.mrb[0].mxu0 %v6982
  %v6984 = vpop.f32.mrb[0].mxu0
  %v6985 = vadd.f32 %v6720, %v6984
  %v6986 = vpop.f32.mrb[0].mxu0
  %v6987 = vand.u32 %v2257, 4294901760
  %v6988 = vsub.f32 %v2257, %v6987
  %6989 = vmatprep.mubr.f32.mxu0 %v6988
  %v6990 = vand.u32 %v2001, 4294901760
  %v6991 = vsub.f32 %v2001, %v6990
  %6992 = vmatmul.mubr.f32.gmra.mrb[0].mxu0 %v6991
  %v6993 = vpop.f32.mrb[0].mxu0
  %v6994 = vadd.f32 %v6727, %v6993
  %v6995 = vpop.f32.mrb[0].mxu0
  %v6996 = vand.u32 %v2271, 4294901760
  %v6997 = vsub.f32 %v2271, %v6996
  %6998 = vmatprep.mubr.f32.mxu0 %v6997
  %v6999 = vand.u32 %v2015, 4294901760
  %v7000 = vsub.f32 %v2015, %v6999
  %7001 = vmatmul.mubr.f32.gmra.mrb[0].mxu0 %v7000
  %v7002 = vpop.f32.mrb[0].mxu0
  %v7003 = vadd.f32 %v6734, %v7002
  %v7004 = vpop.f32.mrb[0].mxu0
  %v7005 = vand.u32 %v2285, 4294901760
  %v7006 = vsub.f32 %v2285, %v7005
  %7007 = vmatprep.mubr.f32.mxu0 %v7006
  %v7008 = vand.u32 %v2029, 4294901760
  %v7009 = vsub.f32 %v2029, %v7008
  %7010 = vmatmul.mubr.f32.gmra.mrb[0].mxu0 %v7009
  %v7011 = vpop.f32.mrb[0].mxu0
  %v7012 = vadd.f32 %v6741, %v7011
  %v7013 = vpop.f32.mrb[0].mxu0
  %v7014 = vand.u32 %v2409, 4294901760
  %v7015 = vsub.f32 %v2409, %v7014
  %7016 = vmatprep.mubr.f32.mxu0 %v7015
  %v7017 = vand.u32 %v2377, 4294901760
  %v7018 = vsub.f32 %v2377, %v7017
  %7019 = vmatmul.mubr.f32.gmra.mrb[0].mxu0 %v7018
  %v7020 = vpop.f32.mrb[0].mxu0
  %v7021 = vadd.f32 %v6748, %v7020
  %v7022 = vpop.f32.mrb[0].mxu0
  %7023 = vdwg.mxu0
  %7024 = vmatprep.subr.mxu0 0.0
  %v7025 = vand.u32 %v2586, 4294901760
  %7026 = vmatpush1.msra.mxu0 %v7025
  %7027 = vmatprep.subr.mxu0 0.0
  %v7028 = vand.u32 %v2587, 4294901760
  %7029 = vmatpush1.msra.mxu0 %v7028
  %7030 = vmatprep.subr.mxu0 0.0
  %v7031 = vand.u32 %v2588, 4294901760
  %7032 = vmatpush1.msra.mxu0 %v7031
  %7033 = vmatprep.subr.mxu0 0.0
  %v7034 = vand.u32 %v2589, 4294901760
  %7035 = vmatpush1.msra.mxu0 %v7034
  %7036 = vmatprep.subr.mxu0 0.0
  %v7037 = vand.u32 %v2590, 4294901760
  %7038 = vmatpush1.msra.mxu0 %v7037
  %7039 = vmatprep.subr.mxu0 0.0
  %v7040 = vand.u32 %v2591, 4294901760
  %7041 = vmatpush1.msra.mxu0 %v7040
  %7042 = vmatprep.subr.mxu0 0.0
  %v7043 = vand.u32 %v2592, 4294901760
  %7044 = vmatpush1.msra.mxu0 %v7043
  %7045 = vmatprep.subr.mxu0 0.0
  %v7046 = vand.u32 %v2593, 4294901760
  %7047 = vmatpush1.msra.mxu0 %v7046
  %7048 = vmatprep.subr.mxu0 0.0
  %v7049 = vand.u32 %v2594, 4294901760
  %7050 = vmatpush1.msra.mxu0 %v7049
  %7051 = vmatprep.subr.mxu0 0.0
  %v7052 = vand.u32 %v2595, 4294901760
  %7053 = vmatpush1.msra.mxu0 %v7052
  %7054 = vmatprep.subr.mxu0 0.0
  %v7055 = vand.u32 %v2596, 4294901760
  %7056 = vmatpush1.msra.mxu0 %v7055
  %7057 = vmatprep.subr.mxu0 0.0
  %v7058 = vand.u32 %v2597, 4294901760
  %7059 = vmatpush1.msra.mxu0 %v7058
  %7060 = vmatprep.subr.mxu0 0.0
  %v7061 = vand.u32 %v2598, 4294901760
  %7062 = vmatpush1.msra.mxu0 %v7061
  %7063 = vmatprep.subr.mxu0 0.0
  %v7064 = vand.u32 %v2599, 4294901760
  %7065 = vmatpush1.msra.mxu0 %v7064
  %7066 = vmatprep.subr.mxu0 0.0
  %v7067 = vand.u32 %v2600, 4294901760
  %7068 = vmatpush1.msra.mxu0 %v7067
  %7069 = vmatprep.subr.mxu0 0.0
  %v7070 = vand.u32 %v2601, 4294901760
  %7071 = vmatpush1.msra.mxu0 %v7070
  %7072 = vmatprep.subr.mxu0 0.0
  %v7073 = vand.u32 %v2602, 4294901760
  %7074 = vmatpush1.msra.mxu0 %v7073
  %7075 = vmatprep.subr.mxu0 0.0
  %v7076 = vand.u32 %v2603, 4294901760
  %7077 = vmatpush1.msra.mxu0 %v7076
  %7078 = vmatprep.subr.mxu0 0.0
  %v7079 = vand.u32 %v2604, 4294901760
  %7080 = vmatpush1.msra.mxu0 %v7079
  %7081 = vmatprep.subr.mxu0 0.0
  %v7082 = vand.u32 %v2605, 4294901760
  %7083 = vmatpush1.msra.mxu0 %v7082
  %7084 = vmatprep.subr.mxu0 0.0
  %v7085 = vand.u32 %v2606, 4294901760
  %7086 = vmatpush1.msra.mxu0 %v7085
  %7087 = vmatprep.subr.mxu0 0.0
  %v7088 = vand.u32 %v2607, 4294901760
  %7089 = vmatpush1.msra.mxu0 %v7088
  %7090 = vmatprep.subr.mxu0 0.0
  %v7091 = vand.u32 %v2608, 4294901760
  %7092 = vmatpush1.msra.mxu0 %v7091
  %7093 = vmatprep.subr.mxu0 0.0
  %v7094 = vand.u32 %v2609, 4294901760
  %7095 = vmatpush1.msra.mxu0 %v7094
  %7096 = vmatprep.subr.mxu0 0.0
  %v7097 = vand.u32 %v2610, 4294901760
  %7098 = vmatpush1.msra.mxu0 %v7097
  %7099 = vmatprep.subr.mxu0 0.0
  %v7100 = vand.u32 %v2611, 4294901760
  %7101 = vmatpush1.msra.mxu0 %v7100
  %7102 = vmatprep.subr.mxu0 0.0
  %v7103 = vand.u32 %v2612, 4294901760
  %7104 = vmatpush1.msra.mxu0 %v7103
  %7105 = vmatprep.subr.mxu0 0.0
  %v7106 = vand.u32 %v2613, 4294901760
  %7107 = vmatpush1.msra.mxu0 %v7106
  %7108 = vmatprep.subr.mxu0 0.0
  %v7109 = vand.u32 %v2614, 4294901760
  %7110 = vmatpush1.msra.mxu0 %v7109
  %7111 = vmatprep.subr.mxu0 0.0
  %v7112 = vand.u32 %v2615, 4294901760
  %7113 = vmatpush1.msra.mxu0 %v7112
  %7114 = vmatprep.subr.mxu0 0.0
  %v7115 = vand.u32 %v2616, 4294901760
  %7116 = vmatpush1.msra.mxu0 %v7115
  %7117 = vmatprep.subr.mxu0 0.0
  %v7118 = vand.u32 %v2617, 4294901760
  %7119 = vmatpush1.msra.mxu0 %v7118
  %v7120 = vand.u32 %v2089, 4294901760
  %v7121 = vsub.f32 %v2089, %v7120
  %v7122 = vand.u32 %v7121, 4294901760
  %7123 = vmatprep.mubr.f32.mxu0 %v7122
  %v7124 = vand.u32 %v1833, 4294901760
  %v7125 = vsub.f32 %v1833, %v7124
  %v7126 = vand.u32 %v7125, 4294901760
  %7127 = vmatmul.mubr.f32.gmra.mrb[0].mxu0 %v7126
  %v7128 = vpop.f32.mrb[0].mxu0
  %v7129 = vadd.f32 %v6886, %v7128
  %v7130 = vpop.f32.mrb[0].mxu0
  %v7131 = vand.u32 %v2103, 4294901760
  %v7132 = vsub.f32 %v2103, %v7131
  %v7133 = vand.u32 %v7132, 4294901760
  %7134 = vmatprep.mubr.f32.mxu0 %v7133
  %v7135 = vand.u32 %v1847, 4294901760
  %v7136 = vsub.f32 %v1847, %v7135
  %v7137 = vand.u32 %v7136, 4294901760
  %7138 = vmatmul.mubr.f32.gmra.mrb[0].mxu0 %v7137
  %v7139 = vpop.f32.mrb[0].mxu0
  %v7140 = vadd.f32 %v6895, %v7139
  %v7141 = vpop.f32.mrb[0].mxu0
  %v7142 = vand.u32 %v2117, 4294901760
  %v7143 = vsub.f32 %v2117, %v7142
  %v7144 = vand.u32 %v7143, 4294901760
  %7145 = vmatprep.mubr.f32.mxu0 %v7144
  %v7146 = vand.u32 %v1861, 4294901760
  %v7147 = vsub.f32 %v1861, %v7146
  %v7148 = vand.u32 %v7147, 4294901760
  %7149 = vmatmul.mubr.f32.gmra.mrb[0].mxu0 %v7148
  %v7150 = vpop.f32.mrb[0].mxu0
  %v7151 = vadd.f32 %v6904, %v7150
  %v7152 = vpop.f32.mrb[0].mxu0
  %v7153 = vand.u32 %v2131, 4294901760
  %v7154 = vsub.f32 %v2131, %v7153
  %v7155 = vand.u32 %v7154, 4294901760
  %7156 = vmatprep.mubr.f32.mxu0 %v7155
  %v7157 = vand.u32 %v1875, 4294901760
  %v7158 = vsub.f32 %v1875, %v7157
  %v7159 = vand.u32 %v7158, 4294901760
  %7160 = vmatmul.mubr.f32.gmra.mrb[0].mxu0 %v7159
  %v7161 = vpop.f32.mrb[0].mxu0
  %v7162 = vadd.f32 %v6913, %v7161
  %v7163 = vpop.f32.mrb[0].mxu0
  %v7164 = vand.u32 %v2145, 4294901760
  %v7165 = vsub.f32 %v2145, %v7164
  %v7166 = vand.u32 %v7165, 4294901760
  %7167 = vmatprep.mubr.f32.mxu0 %v7166
  %v7168 = vand.u32 %v1889, 4294901760
  %v7169 = vsub.f32 %v1889, %v7168
  %v7170 = vand.u32 %v7169, 4294901760
  %7171 = vmatmul.mubr.f32.gmra.mrb[0].mxu0 %v7170
  %v7172 = vpop.f32.mrb[0].mxu0
  %v7173 = vadd.f32 %v6922, %v7172
  %v7174 = vpop.f32.mrb[0].mxu0
  %v7175 = vand.u32 %v2159, 4294901760
  %v7176 = vsub.f32 %v2159, %v7175
  %v7177 = vand.u32 %v7176, 4294901760
  %7178 = vmatprep.mubr.f32.mxu0 %v7177
  %v7179 = vand.u32 %v1903, 4294901760
  %v7180 = vsub.f32 %v1903, %v7179
  %v7181 = vand.u32 %v7180, 4294901760
  %7182 = vmatmul.mubr.f32.gmra.mrb[0].mxu0 %v7181
  %v7183 = vpop.f32.mrb[0].mxu0
  %v7184 = vadd.f32 %v6931, %v7183
  %v7185 = vpop.f32.mrb[0].mxu0
  %v7186 = vand.u32 %v2173, 4294901760
  %v7187 = vsub.f32 %v2173, %v7186
  %v7188 = vand.u32 %v7187, 4294901760
  %7189 = vmatprep.mubr.f32.mxu0 %v7188
  %v7190 = vand.u32 %v1917, 4294901760
  %v7191 = vsub.f32 %v1917, %v7190
  %v7192 = vand.u32 %v7191, 4294901760
  %7193 = vmatmul.mubr.f32.gmra.mrb[0].mxu0 %v7192
  %v7194 = vpop.f32.mrb[0].mxu0
  %v7195 = vadd.f32 %v6940, %v7194
  %v7196 = vpop.f32.mrb[0].mxu0
  %v7197 = vand.u32 %v2395, 4294901760
  %v7198 = vsub.f32 %v2395, %v7197
  %v7199 = vand.u32 %v7198, 4294901760
  %7200 = vmatprep.mubr.f32.mxu0 %v7199
  %v7201 = vand.u32 %v2363, 4294901760
  %v7202 = vsub.f32 %v2363, %v7201
  %v7203 = vand.u32 %v7202, 4294901760
  %7204 = vmatmul.mubr.f32.gmra.mrb[0].mxu0 %v7203
  %v7205 = vpop.f32.mrb[0].mxu0
  %v7206 = vadd.f32 %v6949, %v7205
  %v7207 = vpop.f32.mrb[0].mxu0
  %v7208 = vand.u32 %v2201, 4294901760
  %v7209 = vsub.f32 %v2201, %v7208
  %v7210 = vand.u32 %v7209, 4294901760
  %7211 = vmatprep.mubr.f32.mxu0 %v7210
  %v7212 = vand.u32 %v1945, 4294901760
  %v7213 = vsub.f32 %v1945, %v7212
  %v7214 = vand.u32 %v7213, 4294901760
  %7215 = vmatmul.mubr.f32.gmra.mrb[0].mxu0 %v7214
  %v7216 = vpop.f32.mrb[0].mxu0
  %v7217 = vadd.f32 %v6958, %v7216
  %v7218 = vpop.f32.mrb[0].mxu0
  %v7219 = vand.u32 %v2215, 4294901760
  %v7220 = vsub.f32 %v2215, %v7219
  %v7221 = vand.u32 %v7220, 4294901760
  %7222 = vmatprep.mubr.f32.mxu0 %v7221
  %v7223 = vand.u32 %v1959, 4294901760
  %v7224 = vsub.f32 %v1959, %v7223
  %v7225 = vand.u32 %v7224, 4294901760
  %7226 = vmatmul.mubr.f32.gmra.mrb[0].mxu0 %v7225
  %v7227 = vpop.f32.mrb[0].mxu0
  %v7228 = vadd.f32 %v6967, %v7227
  %v7229 = vpop.f32.mrb[0].mxu0
  %v7230 = vand.u32 %v2229, 4294901760
  %v7231 = vsub.f32 %v2229, %v7230
  %v7232 = vand.u32 %v7231, 4294901760
  %7233 = vmatprep.mubr.f32.mxu0 %v7232
  %v7234 = vand.u32 %v1973, 4294901760
  %v7235 = vsub.f32 %v1973, %v7234
  %v7236 = vand.u32 %v7235, 4294901760
  %7237 = vmatmul.mubr.f32.gmra.mrb[0].mxu0 %v7236
  %v7238 = vpop.f32.mrb[0].mxu0
  %v7239 = vadd.f32 %v6976, %v7238
  %v7240 = vpop.f32.mrb[0].mxu0
  %v7241 = vand.u32 %v2243, 4294901760
  %v7242 = vsub.f32 %v2243, %v7241
  %v7243 = vand.u32 %v7242, 4294901760
  %7244 = vmatprep.mubr.f32.mxu0 %v7243
  %v7245 = vand.u32 %v1987, 4294901760
  %v7246 = vsub.f32 %v1987, %v7245
  %v7247 = vand.u32 %v7246, 4294901760
  %7248 = vmatmul.mubr.f32.gmra.mrb[0].mxu0 %v7247
  %v7249 = vpop.f32.mrb[0].mxu0
  %v7250 = vadd.f32 %v6985, %v7249
  %v7251 = vpop.f32.mrb[0].mxu0
  %v7252 = vand.u32 %v2257, 4294901760
  %v7253 = vsub.f32 %v2257, %v7252
  %v7254 = vand.u32 %v7253, 4294901760
  %7255 = vmatprep.mubr.f32.mxu0 %v7254
  %v7256 = vand.u32 %v2001, 4294901760
  %v7257 = vsub.f32 %v2001, %v7256
  %v7258 = vand.u32 %v7257, 4294901760
  %7259 = vmatmul.mubr.f32.gmra.mrb[0].mxu0 %v7258
  %v7260 = vpop.f32.mrb[0].mxu0
  %v7261 = vadd.f32 %v6994, %v7260
  %v7262 = vpop.f32.mrb[0].mxu0
  %v7263 = vand.u32 %v2271, 4294901760
  %v7264 = vsub.f32 %v2271, %v7263
  %v7265 = vand.u32 %v7264, 4294901760
  %7266 = vmatprep.mubr.f32.mxu0 %v7265
  %v7267 = vand.u32 %v2015, 4294901760
  %v7268 = vsub.f32 %v2015, %v7267
  %v7269 = vand.u32 %v7268, 4294901760
  %7270 = vmatmul.mubr.f32.gmra.mrb[0].mxu0 %v7269
  %v7271 = vpop.f32.mrb[0].mxu0
  %v7272 = vadd.f32 %v7003, %v7271
  %v7273 = vpop.f32.mrb[0].mxu0
  %v7274 = vand.u32 %v2285, 4294901760
  %v7275 = vsub.f32 %v2285, %v7274
  %v7276 = vand.u32 %v7275, 4294901760
  %7277 = vmatprep.mubr.f32.mxu0 %v7276
  %v7278 = vand.u32 %v2029, 4294901760
  %v7279 = vsub.f32 %v2029, %v7278
  %v7280 = vand.u32 %v7279, 4294901760
  %7281 = vmatmul.mubr.f32.gmra.mrb[0].mxu0 %v7280
  %v7282 = vpop.f32.mrb[0].mxu0
  %v7283 = vadd.f32 %v7012, %v7282
  %v7284 = vpop.f32.mrb[0].mxu0
  %v7285 = vand.u32 %v2409, 4294901760
  %v7286 = vsub.f32 %v2409, %v7285
  %v7287 = vand.u32 %v7286, 4294901760
  %7288 = vmatprep.mubr.f32.mxu0 %v7287
  %v7289 = vand.u32 %v2377, 4294901760
  %v7290 = vsub.f32 %v2377, %v7289
  %v7291 = vand.u32 %v7290, 4294901760
  %7292 = vmatmul.mubr.f32.gmra.mrb[0].mxu0 %v7291
  %v7293 = vpop.f32.mrb[0].mxu0
  %v7294 = vadd.f32 %v7021, %v7293
  %v7295 = vpop.f32.mrb[0].mxu0
  %7296 = vdwg.mxu0
  %7297 = vmatprep.subr.mxu0 0.0
  %v7298 = vand.u32 %v2586, 4294901760
  %v7299 = vsub.f32 %v2586, %v7298
  %v7300 = vand.u32 %v7299, 4294901760
  %7301 = vmatpush1.msra.mxu0 %v7300
  %7302 = vmatprep.subr.mxu0 0.0
  %v7303 = vand.u32 %v2587, 4294901760
  %v7304 = vsub.f32 %v2587, %v7303
  %v7305 = vand.u32 %v7304, 4294901760
  %7306 = vmatpush1.msra.mxu0 %v7305
  %7307 = vmatprep.subr.mxu0 0.0
  %v7308 = vand.u32 %v2588, 4294901760
  %v7309 = vsub.f32 %v2588, %v7308
  %v7310 = vand.u32 %v7309, 4294901760
  %7311 = vmatpush1.msra.mxu0 %v7310
  %7312 = vmatprep.subr.mxu0 0.0
  %v7313 = vand.u32 %v2589, 4294901760
  %v7314 = vsub.f32 %v2589, %v7313
  %v7315 = vand.u32 %v7314, 4294901760
  %7316 = vmatpush1.msra.mxu0 %v7315
  %7317 = vmatprep.subr.mxu0 0.0
  %v7318 = vand.u32 %v2590, 4294901760
  %v7319 = vsub.f32 %v2590, %v7318
  %v7320 = vand.u32 %v7319, 4294901760
  %7321 = vmatpush1.msra.mxu0 %v7320
  %7322 = vmatprep.subr.mxu0 0.0
  %v7323 = vand.u32 %v2591, 4294901760
  %v7324 = vsub.f32 %v2591, %v7323
  %v7325 = vand.u32 %v7324, 4294901760
  %7326 = vmatpush1.msra.mxu0 %v7325
  %7327 = vmatprep.subr.mxu0 0.0
  %v7328 = vand.u32 %v2592, 4294901760
  %v7329 = vsub.f32 %v2592, %v7328
  %v7330 = vand.u32 %v7329, 4294901760
  %7331 = vmatpush1.msra.mxu0 %v7330
  %7332 = vmatprep.subr.mxu0 0.0
  %v7333 = vand.u32 %v2593, 4294901760
  %v7334 = vsub.f32 %v2593, %v7333
  %v7335 = vand.u32 %v7334, 4294901760
  %7336 = vmatpush1.msra.mxu0 %v7335
  %7337 = vmatprep.subr.mxu0 0.0
  %v7338 = vand.u32 %v2594, 4294901760
  %v7339 = vsub.f32 %v2594, %v7338
  %v7340 = vand.u32 %v7339, 4294901760
  %7341 = vmatpush1.msra.mxu0 %v7340
  %7342 = vmatprep.subr.mxu0 0.0
  %v7343 = vand.u32 %v2595, 4294901760
  %v7344 = vsub.f32 %v2595, %v7343
  %v7345 = vand.u32 %v7344, 4294901760
  %7346 = vmatpush1.msra.mxu0 %v7345
  %7347 = vmatprep.subr.mxu0 0.0
  %v7348 = vand.u32 %v2596, 4294901760
  %v7349 = vsub.f32 %v2596, %v7348
  %v7350 = vand.u32 %v7349, 4294901760
  %7351 = vmatpush1.msra.mxu0 %v7350
  %7352 = vmatprep.subr.mxu0 0.0
  %v7353 = vand.u32 %v2597, 4294901760
  %v7354 = vsub.f32 %v2597, %v7353
  %v7355 = vand.u32 %v7354, 4294901760
  %7356 = vmatpush1.msra.mxu0 %v7355
  %7357 = vmatprep.subr.mxu0 0.0
  %v7358 = vand.u32 %v2598, 4294901760
  %v7359 = vsub.f32 %v2598, %v7358
  %v7360 = vand.u32 %v7359, 4294901760
  %7361 = vmatpush1.msra.mxu0 %v7360
  %7362 = vmatprep.subr.mxu0 0.0
  %v7363 = vand.u32 %v2599, 4294901760
  %v7364 = vsub.f32 %v2599, %v7363
  %v7365 = vand.u32 %v7364, 4294901760
  %7366 = vmatpush1.msra.mxu0 %v7365
  %7367 = vmatprep.subr.mxu0 0.0
  %v7368 = vand.u32 %v2600, 4294901760
  %v7369 = vsub.f32 %v2600, %v7368
  %v7370 = vand.u32 %v7369, 4294901760
  %7371 = vmatpush1.msra.mxu0 %v7370
  %7372 = vmatprep.subr.mxu0 0.0
  %v7373 = vand.u32 %v2601, 4294901760
  %v7374 = vsub.f32 %v2601, %v7373
  %v7375 = vand.u32 %v7374, 4294901760
  %7376 = vmatpush1.msra.mxu0 %v7375
  %7377 = vmatprep.subr.mxu0 0.0
  %v7378 = vand.u32 %v2602, 4294901760
  %v7379 = vsub.f32 %v2602, %v7378
  %v7380 = vand.u32 %v7379, 4294901760
  %7381 = vmatpush1.msra.mxu0 %v7380
  %7382 = vmatprep.subr.mxu0 0.0
  %v7383 = vand.u32 %v2603, 4294901760
  %v7384 = vsub.f32 %v2603, %v7383
  %v7385 = vand.u32 %v7384, 4294901760
  %7386 = vmatpush1.msra.mxu0 %v7385
  %7387 = vmatprep.subr.mxu0 0.0
  %v7388 = vand.u32 %v2604, 4294901760
  %v7389 = vsub.f32 %v2604, %v7388
  %v7390 = vand.u32 %v7389, 4294901760
  %7391 = vmatpush1.msra.mxu0 %v7390
  %7392 = vmatprep.subr.mxu0 0.0
  %v7393 = vand.u32 %v2605, 4294901760
  %v7394 = vsub.f32 %v2605, %v7393
  %v7395 = vand.u32 %v7394, 4294901760
  %7396 = vmatpush1.msra.mxu0 %v7395
  %7397 = vmatprep.subr.mxu0 0.0
  %v7398 = vand.u32 %v2606, 4294901760
  %v7399 = vsub.f32 %v2606, %v7398
  %v7400 = vand.u32 %v7399, 4294901760
  %7401 = vmatpush1.msra.mxu0 %v7400
  %7402 = vmatprep.subr.mxu0 0.0
  %v7403 = vand.u32 %v2607, 4294901760
  %v7404 = vsub.f32 %v2607, %v7403
  %v7405 = vand.u32 %v7404, 4294901760
  %7406 = vmatpush1.msra.mxu0 %v7405
  %7407 = vmatprep.subr.mxu0 0.0
  %v7408 = vand.u32 %v2608, 4294901760
  %v7409 = vsub.f32 %v2608, %v7408
  %v7410 = vand.u32 %v7409, 4294901760
  %7411 = vmatpush1.msra.mxu0 %v7410
  %7412 = vmatprep.subr.mxu0 0.0
  %v7413 = vand.u32 %v2609, 4294901760
  %v7414 = vsub.f32 %v2609, %v7413
  %v7415 = vand.u32 %v7414, 4294901760
  %7416 = vmatpush1.msra.mxu0 %v7415
  %7417 = vmatprep.subr.mxu0 0.0
  %v7418 = vand.u32 %v2610, 4294901760
  %v7419 = vsub.f32 %v2610, %v7418
  %v7420 = vand.u32 %v7419, 4294901760
  %7421 = vmatpush1.msra.mxu0 %v7420
  %7422 = vmatprep.subr.mxu0 0.0
  %v7423 = vand.u32 %v2611, 4294901760
  %v7424 = vsub.f32 %v2611, %v7423
  %v7425 = vand.u32 %v7424, 4294901760
  %7426 = vmatpush1.msra.mxu0 %v7425
  %7427 = vmatprep.subr.mxu0 0.0
  %v7428 = vand.u32 %v2612, 4294901760
  %v7429 = vsub.f32 %v2612, %v7428
  %v7430 = vand.u32 %v7429, 4294901760
  %7431 = vmatpush1.msra.mxu0 %v7430
  %7432 = vmatprep.subr.mxu0 0.0
  %v7433 = vand.u32 %v2613, 4294901760
  %v7434 = vsub.f32 %v2613, %v7433
  %v7435 = vand.u32 %v7434, 4294901760
  %7436 = vmatpush1.msra.mxu0 %v7435
  %7437 = vmatprep.subr.mxu0 0.0
  %v7438 = vand.u32 %v2614, 4294901760
  %v7439 = vsub.f32 %v2614, %v7438
  %v7440 = vand.u32 %v7439, 4294901760
  %7441 = vmatpush1.msra.mxu0 %v7440
  %7442 = vmatprep.subr.mxu0 0.0
  %v7443 = vand.u32 %v2615, 4294901760
  %v7444 = vsub.f32 %v2615, %v7443
  %v7445 = vand.u32 %v7444, 4294901760
  %7446 = vmatpush1.msra.mxu0 %v7445
  %7447 = vmatprep.subr.mxu0 0.0
  %v7448 = vand.u32 %v2616, 4294901760
  %v7449 = vsub.f32 %v2616, %v7448
  %v7450 = vand.u32 %v7449, 4294901760
  %7451 = vmatpush1.msra.mxu0 %v7450
  %7452 = vmatprep.subr.mxu0 0.0
  %v7453 = vand.u32 %v2617, 4294901760
  %v7454 = vsub.f32 %v2617, %v7453
  %v7455 = vand.u32 %v7454, 4294901760
  %7456 = vmatpush1.msra.mxu0 %v7455
  %v7457 = vand.u32 %v2089, 4294901760
  %7458 = vmatprep.mubr.f32.mxu0 %v7457
  %v7459 = vand.u32 %v1833, 4294901760
  %7460 = vmatmul.mubr.f32.gmra.mrb[0].mxu0 %v7459
  %v7461 = vpop.f32.mrb[0].mxu0
  %v7462 = vadd.f32 %v7129, %v7461
  %v7463 = vpop.f32.mrb[0].mxu0
  %v7464 = vand.u32 %v2103, 4294901760
  %7465 = vmatprep.mubr.f32.mxu0 %v7464
  %v7466 = vand.u32 %v1847, 4294901760
  %7467 = vmatmul.mubr.f32.gmra.mrb[0].mxu0 %v7466
  %v7468 = vpop.f32.mrb[0].mxu0
  %v7469 = vadd.f32 %v7140, %v7468
  %v7470 = vpop.f32.mrb[0].mxu0
  %v7471 = vand.u32 %v2117, 4294901760
  %7472 = vmatprep.mubr.f32.mxu0 %v7471
  %v7473 = vand.u32 %v1861, 4294901760
  %7474 = vmatmul.mubr.f32.gmra.mrb[0].mxu0 %v7473
  %v7475 = vpop.f32.mrb[0].mxu0
  %v7476 = vadd.f32 %v7151, %v7475
  %v7477 = vpop.f32.mrb[0].mxu0
  %v7478 = vand.u32 %v2131, 4294901760
  %7479 = vmatprep.mubr.f32.mxu0 %v7478
  %v7480 = vand.u32 %v1875, 4294901760
  %7481 = vmatmul.mubr.f32.gmra.mrb[0].mxu0 %v7480
  %v7482 = vpop.f32.mrb[0].mxu0
  %v7483 = vadd.f32 %v7162, %v7482
  %v7484 = vpop.f32.mrb[0].mxu0
  %v7485 = vand.u32 %v2145, 4294901760
  %7486 = vmatprep.mubr.f32.mxu0 %v7485
  %v7487 = vand.u32 %v1889, 4294901760
  %7488 = vmatmul.mubr.f32.gmra.mrb[0].mxu0 %v7487
  %v7489 = vpop.f32.mrb[0].mxu0
  %v7490 = vadd.f32 %v7173, %v7489
  %v7491 = vpop.f32.mrb[0].mxu0
  %v7492 = vand.u32 %v2159, 4294901760
  %7493 = vmatprep.mubr.f32.mxu0 %v7492
  %v7494 = vand.u32 %v1903, 4294901760
  %7495 = vmatmul.mubr.f32.gmra.mrb[0].mxu0 %v7494
  %v7496 = vpop.f32.mrb[0].mxu0
  %v7497 = vadd.f32 %v7184, %v7496
  %v7498 = vpop.f32.mrb[0].mxu0
  %v7499 = vand.u32 %v2173, 4294901760
  %7500 = vmatprep.mubr.f32.mxu0 %v7499
  %v7501 = vand.u32 %v1917, 4294901760
  %7502 = vmatmul.mubr.f32.gmra.mrb[0].mxu0 %v7501
  %v7503 = vpop.f32.mrb[0].mxu0
  %v7504 = vadd.f32 %v7195, %v7503
  %v7505 = vpop.f32.mrb[0].mxu0
  %v7506 = vand.u32 %v2395, 4294901760
  %7507 = vmatprep.mubr.f32.mxu0 %v7506
  %v7508 = vand.u32 %v2363, 4294901760
  %7509 = vmatmul.mubr.f32.gmra.mrb[0].mxu0 %v7508
  %v7510 = vpop.f32.mrb[0].mxu0
  %v7511 = vadd.f32 %v7206, %v7510
  %v7512 = vpop.f32.mrb[0].mxu0
  %v7513 = vand.u32 %v2201, 4294901760
  %7514 = vmatprep.mubr.f32.mxu0 %v7513
  %v7515 = vand.u32 %v1945, 4294901760
  %7516 = vmatmul.mubr.f32.gmra.mrb[0].mxu0 %v7515
  %v7517 = vpop.f32.mrb[0].mxu0
  %v7518 = vadd.f32 %v7217, %v7517
  %v7519 = vpop.f32.mrb[0].mxu0
  %v7520 = vand.u32 %v2215, 4294901760
  %7521 = vmatprep.mubr.f32.mxu0 %v7520
  %v7522 = vand.u32 %v1959, 4294901760
  %7523 = vmatmul.mubr.f32.gmra.mrb[0].mxu0 %v7522
  %v7524 = vpop.f32.mrb[0].mxu0
  %v7525 = vadd.f32 %v7228, %v7524
  %v7526 = vpop.f32.mrb[0].mxu0
  %v7527 = vand.u32 %v2229, 4294901760
  %7528 = vmatprep.mubr.f32.mxu0 %v7527
  %v7529 = vand.u32 %v1973, 4294901760
  %7530 = vmatmul.mubr.f32.gmra.mrb[0].mxu0 %v7529
  %v7531 = vpop.f32.mrb[0].mxu0
  %v7532 = vadd.f32 %v7239, %v7531
  %v7533 = vpop.f32.mrb[0].mxu0
  %v7534 = vand.u32 %v2243, 4294901760
  %7535 = vmatprep.mubr.f32.mxu0 %v7534
  %v7536 = vand.u32 %v1987, 4294901760
  %7537 = vmatmul.mubr.f32.gmra.mrb[0].mxu0 %v7536
  %v7538 = vpop.f32.mrb[0].mxu0
  %v7539 = vadd.f32 %v7250, %v7538
  %v7540 = vpop.f32.mrb[0].mxu0
  %v7541 = vand.u32 %v2257, 4294901760
  %7542 = vmatprep.mubr.f32.mxu0 %v7541
  %v7543 = vand.u32 %v2001, 4294901760
  %7544 = vmatmul.mubr.f32.gmra.mrb[0].mxu0 %v7543
  %v7545 = vpop.f32.mrb[0].mxu0
  %v7546 = vadd.f32 %v7261, %v7545
  %v7547 = vpop.f32.mrb[0].mxu0
  %v7548 = vand.u32 %v2271, 4294901760
  %7549 = vmatprep.mubr.f32.mxu0 %v7548
  %v7550 = vand.u32 %v2015, 4294901760
  %7551 = vmatmul.mubr.f32.gmra.mrb[0].mxu0 %v7550
  %v7552 = vpop.f32.mrb[0].mxu0
  %v7553 = vadd.f32 %v7272, %v7552
  %v7554 = vpop.f32.mrb[0].mxu0
  %v7555 = vand.u32 %v2285, 4294901760
  %7556 = vmatprep.mubr.f32.mxu0 %v7555
  %v7557 = vand.u32 %v2029, 4294901760
  %7558 = vmatmul.mubr.f32.gmra.mrb[0].mxu0 %v7557
  %v7559 = vpop.f32.mrb[0].mxu0
  %v7560 = vadd.f32 %v7283, %v7559
  %v7561 = vpop.f32.mrb[0].mxu0
  %v7562 = vand.u32 %v2409, 4294901760
  %7563 = vmatprep.mubr.f32.mxu0 %v7562
  %v7564 = vand.u32 %v2377, 4294901760
  %7565 = vmatmul.mubr.f32.gmra.mrb[0].mxu0 %v7564
  %v7566 = vpop.f32.mrb[0].mxu0
  %v7567 = vadd.f32 %v7294, %v7566
  %v7568 = vpop.f32.mrb[0].mxu0
  %7569 = vdwg.mxu0
  %7570 = vmatprep.subr.mxu0 0.0
  %v7571 = vand.u32 %v2586, 4294901760
  %7572 = vmatpush1.msra.mxu0 %v7571
  %7573 = vmatprep.subr.mxu0 0.0
  %v7574 = vand.u32 %v2587, 4294901760
  %7575 = vmatpush1.msra.mxu0 %v7574
  %7576 = vmatprep.subr.mxu0 0.0
  %v7577 = vand.u32 %v2588, 4294901760
  %7578 = vmatpush1.msra.mxu0 %v7577
  %7579 = vmatprep.subr.mxu0 0.0
  %v7580 = vand.u32 %v2589, 4294901760
  %7581 = vmatpush1.msra.mxu0 %v7580
  %7582 = vmatprep.subr.mxu0 0.0
  %v7583 = vand.u32 %v2590, 4294901760
  %7584 = vmatpush1.msra.mxu0 %v7583
  %7585 = vmatprep.subr.mxu0 0.0
  %v7586 = vand.u32 %v2591, 4294901760
  %7587 = vmatpush1.msra.mxu0 %v7586
  %7588 = vmatprep.subr.mxu0 0.0
  %v7589 = vand.u32 %v2592, 4294901760
  %7590 = vmatpush1.msra.mxu0 %v7589
  %7591 = vmatprep.subr.mxu0 0.0
  %v7592 = vand.u32 %v2593, 4294901760
  %7593 = vmatpush1.msra.mxu0 %v7592
  %7594 = vmatprep.subr.mxu0 0.0
  %v7595 = vand.u32 %v2594, 4294901760
  %7596 = vmatpush1.msra.mxu0 %v7595
  %7597 = vmatprep.subr.mxu0 0.0
  %v7598 = vand.u32 %v2595, 4294901760
  %7599 = vmatpush1.msra.mxu0 %v7598
  %7600 = vmatprep.subr.mxu0 0.0
  %v7601 = vand.u32 %v2596, 4294901760
  %7602 = vmatpush1.msra.mxu0 %v7601
  %7603 = vmatprep.subr.mxu0 0.0
  %v7604 = vand.u32 %v2597, 4294901760
  %7605 = vmatpush1.msra.mxu0 %v7604
  %7606 = vmatprep.subr.mxu0 0.0
  %v7607 = vand.u32 %v2598, 4294901760
  %7608 = vmatpush1.msra.mxu0 %v7607
  %7609 = vmatprep.subr.mxu0 0.0
  %v7610 = vand.u32 %v2599, 4294901760
  %7611 = vmatpush1.msra.mxu0 %v7610
  %7612 = vmatprep.subr.mxu0 0.0
  %v7613 = vand.u32 %v2600, 4294901760
  %7614 = vmatpush1.msra.mxu0 %v7613
  %7615 = vmatprep.subr.mxu0 0.0
  %v7616 = vand.u32 %v2601, 4294901760
  %7617 = vmatpush1.msra.mxu0 %v7616
  %7618 = vmatprep.subr.mxu0 0.0
  %v7619 = vand.u32 %v2602, 4294901760
  %7620 = vmatpush1.msra.mxu0 %v7619
  %7621 = vmatprep.subr.mxu0 0.0
  %v7622 = vand.u32 %v2603, 4294901760
  %7623 = vmatpush1.msra.mxu0 %v7622
  %7624 = vmatprep.subr.mxu0 0.0
  %v7625 = vand.u32 %v2604, 4294901760
  %7626 = vmatpush1.msra.mxu0 %v7625
  %7627 = vmatprep.subr.mxu0 0.0
  %v7628 = vand.u32 %v2605, 4294901760
  %7629 = vmatpush1.msra.mxu0 %v7628
  %7630 = vmatprep.subr.mxu0 0.0
  %v7631 = vand.u32 %v2606, 4294901760
  %7632 = vmatpush1.msra.mxu0 %v7631
  %7633 = vmatprep.subr.mxu0 0.0
  %v7634 = vand.u32 %v2607, 4294901760
  %7635 = vmatpush1.msra.mxu0 %v7634
  %7636 = vmatprep.subr.mxu0 0.0
  %v7637 = vand.u32 %v2608, 4294901760
  %7638 = vmatpush1.msra.mxu0 %v7637
  %7639 = vmatprep.subr.mxu0 0.0
  %v7640 = vand.u32 %v2609, 4294901760
  %7641 = vmatpush1.msra.mxu0 %v7640
  %7642 = vmatprep.subr.mxu0 0.0
  %v7643 = vand.u32 %v2610, 4294901760
  %7644 = vmatpush1.msra.mxu0 %v7643
  %7645 = vmatprep.subr.mxu0 0.0
  %v7646 = vand.u32 %v2611, 4294901760
  %7647 = vmatpush1.msra.mxu0 %v7646
  %7648 = vmatprep.subr.mxu0 0.0
  %v7649 = vand.u32 %v2612, 4294901760
  %7650 = vmatpush1.msra.mxu0 %v7649
  %7651 = vmatprep.subr.mxu0 0.0
  %v7652 = vand.u32 %v2613, 4294901760
  %7653 = vmatpush1.msra.mxu0 %v7652
  %7654 = vmatprep.subr.mxu0 0.0
  %v7655 = vand.u32 %v2614, 4294901760
  %7656 = vmatpush1.msra.mxu0 %v7655
  %7657 = vmatprep.subr.mxu0 0.0
  %v7658 = vand.u32 %v2615, 4294901760
  %7659 = vmatpush1.msra.mxu0 %v7658
  %7660 = vmatprep.subr.mxu0 0.0
  %v7661 = vand.u32 %v2616, 4294901760
  %7662 = vmatpush1.msra.mxu0 %v7661
  %7663 = vmatprep.subr.mxu0 0.0
  %v7664 = vand.u32 %v2617, 4294901760
  %7665 = vmatpush1.msra.mxu0 %v7664
  %v7666 = vand.u32 %v2089, 4294901760
  %7667 = vmatprep.mubr.f32.mxu0 %v7666
  %v7668 = vand.u32 %v1833, 4294901760
  %7669 = vmatmul.mubr.f32.gmra.mrb[0].mxu0 %v7668
  %v7670 = vpop.f32.mrb[0].mxu0
  %v7671 = vadd.f32 %v7462, %v7670
  %v7672 = vpop.f32.mrb[0].mxu0
  %v7673 = vand.u32 %v2103, 4294901760
  %7674 = vmatprep.mubr.f32.mxu0 %v7673
  %v7675 = vand.u32 %v1847, 4294901760
  %7676 = vmatmul.mubr.f32.gmra.mrb[0].mxu0 %v7675
  %v7677 = vpop.f32.mrb[0].mxu0
  %v7678 = vadd.f32 %v7469, %v7677
  %v7679 = vpop.f32.mrb[0].mxu0
  %v7680 = vand.u32 %v2117, 4294901760
  %7681 = vmatprep.mubr.f32.mxu0 %v7680
  %v7682 = vand.u32 %v1861, 4294901760
  %7683 = vmatmul.mubr.f32.gmra.mrb[0].mxu0 %v7682
  %v7684 = vpop.f32.mrb[0].mxu0
  %v7685 = vadd.f32 %v7476, %v7684
  %v7686 = vpop.f32.mrb[0].mxu0
  %v7687 = vand.u32 %v2131, 4294901760
  %7688 = vmatprep.mubr.f32.mxu0 %v7687
  %v7689 = vand.u32 %v1875, 4294901760
  %7690 = vmatmul.mubr.f32.gmra.mrb[0].mxu0 %v7689
  %v7691 = vpop.f32.mrb[0].mxu0
  %v7692 = vadd.f32 %v7483, %v7691
  %v7693 = vpop.f32.mrb[0].mxu0
  %v7694 = vand.u32 %v2145, 4294901760
  %7695 = vmatprep.mubr.f32.mxu0 %v7694
  %v7696 = vand.u32 %v1889, 4294901760
  %7697 = vmatmul.mubr.f32.gmra.mrb[0].mxu0 %v7696
  %v7698 = vpop.f32.mrb[0].mxu0
  %v7699 = vadd.f32 %v7490, %v7698
  %v7700 = vpop.f32.mrb[0].mxu0
  %v7701 = vand.u32 %v2159, 4294901760
  %7702 = vmatprep.mubr.f32.mxu0 %v7701
  %v7703 = vand.u32 %v1903, 4294901760
  %7704 = vmatmul.mubr.f32.gmra.mrb[0].mxu0 %v7703
  %v7705 = vpop.f32.mrb[0].mxu0
  %v7706 = vadd.f32 %v7497, %v7705
  %v7707 = vpop.f32.mrb[0].mxu0
  %v7708 = vand.u32 %v2173, 4294901760
  %7709 = vmatprep.mubr.f32.mxu0 %v7708
  %v7710 = vand.u32 %v1917, 4294901760
  %7711 = vmatmul.mubr.f32.gmra.mrb[0].mxu0 %v7710
  %v7712 = vpop.f32.mrb[0].mxu0
  %v7713 = vadd.f32 %v7504, %v7712
  %v7714 = vpop.f32.mrb[0].mxu0
  %v7715 = vand.u32 %v2395, 4294901760
  %7716 = vmatprep.mubr.f32.mxu0 %v7715
  %v7717 = vand.u32 %v2363, 4294901760
  %7718 = vmatmul.mubr.f32.gmra.mrb[0].mxu0 %v7717
  %v7719 = vpop.f32.mrb[0].mxu0
  %v7720 = vadd.f32 %v7511, %v7719
  %v7721 = vpop.f32.mrb[0].mxu0
  %v7722 = vand.u32 %v2201, 4294901760
  %7723 = vmatprep.mubr.f32.mxu0 %v7722
  %v7724 = vand.u32 %v1945, 4294901760
  %7725 = vmatmul.mubr.f32.gmra.mrb[0].mxu0 %v7724
  %v7726 = vpop.f32.mrb[0].mxu0
  %v7727 = vadd.f32 %v7518, %v7726
  %v7728 = vpop.f32.mrb[0].mxu0
  %v7729 = vand.u32 %v2215, 4294901760
  %7730 = vmatprep.mubr.f32.mxu0 %v7729
  %v7731 = vand.u32 %v1959, 4294901760
  %7732 = vmatmul.mubr.f32.gmra.mrb[0].mxu0 %v7731
  %v7733 = vpop.f32.mrb[0].mxu0
  %v7734 = vadd.f32 %v7525, %v7733
  %v7735 = vpop.f32.mrb[0].mxu0
  %v7736 = vand.u32 %v2229, 4294901760
  %7737 = vmatprep.mubr.f32.mxu0 %v7736
  %v7738 = vand.u32 %v1973, 4294901760
  %7739 = vmatmul.mubr.f32.gmra.mrb[0].mxu0 %v7738
  %v7740 = vpop.f32.mrb[0].mxu0
  %v7741 = vadd.f32 %v7532, %v7740
  %v7742 = vpop.f32.mrb[0].mxu0
  %v7743 = vand.u32 %v2243, 4294901760
  %7744 = vmatprep.mubr.f32.mxu0 %v7743
  %v7745 = vand.u32 %v1987, 4294901760
  %7746 = vmatmul.mubr.f32.gmra.mrb[0].mxu0 %v7745
  %v7747 = vpop.f32.mrb[0].mxu0
  %v7748 = vadd.f32 %v7539, %v7747
  %v7749 = vpop.f32.mrb[0].mxu0
  %v7750 = vand.u32 %v2257, 4294901760
  %7751 = vmatprep.mubr.f32.mxu0 %v7750
  %v7752 = vand.u32 %v2001, 4294901760
  %7753 = vmatmul.mubr.f32.gmra.mrb[0].mxu0 %v7752
  %v7754 = vpop.f32.mrb[0].mxu0
  %v7755 = vadd.f32 %v7546, %v7754
  %v7756 = vpop.f32.mrb[0].mxu0
  %v7757 = vand.u32 %v2271, 4294901760
  %7758 = vmatprep.mubr.f32.mxu0 %v7757
  %v7759 = vand.u32 %v2015, 4294901760
  %7760 = vmatmul.mubr.f32.gmra.mrb[0].mxu0 %v7759
  %v7761 = vpop.f32.mrb[0].mxu0
  %v7762 = vadd.f32 %v7553, %v7761
  %v7763 = vpop.f32.mrb[0].mxu0
  %v7764 = vand.u32 %v2285, 4294901760
  %7765 = vmatprep.mubr.f32.mxu0 %v7764
  %v7766 = vand.u32 %v2029, 4294901760
  %7767 = vmatmul.mubr.f32.gmra.mrb[0].mxu0 %v7766
  %v7768 = vpop.f32.mrb[0].mxu0
  %v7769 = vadd.f32 %v7560, %v7768
  %v7770 = vpop.f32.mrb[0].mxu0
  %v7771 = vand.u32 %v2409, 4294901760
  %7772 = vmatprep.mubr.f32.mxu0 %v7771
  %v7773 = vand.u32 %v2377, 4294901760
  %7774 = vmatmul.mubr.f32.gmra.mrb[0].mxu0 %v7773
  %v7775 = vpop.f32.mrb[0].mxu0
  %v7776 = vadd.f32 %v7567, %v7775
  %v7777 = vpop.f32.mrb[0].mxu0
  %7778 = vdwg.mxu0
  %7779 = vmatprep.subr.mxu0 0.0
  %v7780 = vand.u32 %v2618, 4294901760
  %7781 = vmatpush1.msra.mxu0 %v7780
  %7782 = vmatprep.subr.mxu0 0.0
  %v7783 = vand.u32 %v2619, 4294901760
  %7784 = vmatpush1.msra.mxu0 %v7783
  %7785 = vmatprep.subr.mxu0 0.0
  %v7786 = vand.u32 %v2620, 4294901760
  %7787 = vmatpush1.msra.mxu0 %v7786
  %7788 = vmatprep.subr.mxu0 0.0
  %v7789 = vand.u32 %v2621, 4294901760
  %7790 = vmatpush1.msra.mxu0 %v7789
  %7791 = vmatprep.subr.mxu0 0.0
  %v7792 = vand.u32 %v2622, 4294901760
  %7793 = vmatpush1.msra.mxu0 %v7792
  %7794 = vmatprep.subr.mxu0 0.0
  %v7795 = vand.u32 %v2623, 4294901760
  %7796 = vmatpush1.msra.mxu0 %v7795
  %7797 = vmatprep.subr.mxu0 0.0
  %v7798 = vand.u32 %v2624, 4294901760
  %7799 = vmatpush1.msra.mxu0 %v7798
  %7800 = vmatprep.subr.mxu0 0.0
  %v7801 = vand.u32 %v2625, 4294901760
  %7802 = vmatpush1.msra.mxu0 %v7801
  %7803 = vmatprep.subr.mxu0 0.0
  %v7804 = vand.u32 %v2626, 4294901760
  %7805 = vmatpush1.msra.mxu0 %v7804
  %7806 = vmatprep.subr.mxu0 0.0
  %v7807 = vand.u32 %v2627, 4294901760
  %7808 = vmatpush1.msra.mxu0 %v7807
  %7809 = vmatprep.subr.mxu0 0.0
  %v7810 = vand.u32 %v2628, 4294901760
  %7811 = vmatpush1.msra.mxu0 %v7810
  %7812 = vmatprep.subr.mxu0 0.0
  %v7813 = vand.u32 %v2629, 4294901760
  %7814 = vmatpush1.msra.mxu0 %v7813
  %7815 = vmatprep.subr.mxu0 0.0
  %v7816 = vand.u32 %v2630, 4294901760
  %7817 = vmatpush1.msra.mxu0 %v7816
  %7818 = vmatprep.subr.mxu0 0.0
  %v7819 = vand.u32 %v2631, 4294901760
  %7820 = vmatpush1.msra.mxu0 %v7819
  %7821 = vmatprep.subr.mxu0 0.0
  %v7822 = vand.u32 %v2632, 4294901760
  %7823 = vmatpush1.msra.mxu0 %v7822
  %7824 = vmatprep.subr.mxu0 0.0
  %v7825 = vand.u32 %v2633, 4294901760
  %7826 = vmatpush1.msra.mxu0 %v7825
  %7827 = vmatprep.subr.mxu0 0.0
  %v7828 = vand.u32 %v2634, 4294901760
  %7829 = vmatpush1.msra.mxu0 %v7828
  %7830 = vmatprep.subr.mxu0 0.0
  %v7831 = vand.u32 %v2635, 4294901760
  %7832 = vmatpush1.msra.mxu0 %v7831
  %7833 = vmatprep.subr.mxu0 0.0
  %v7834 = vand.u32 %v2636, 4294901760
  %7835 = vmatpush1.msra.mxu0 %v7834
  %7836 = vmatprep.subr.mxu0 0.0
  %v7837 = vand.u32 %v2637, 4294901760
  %7838 = vmatpush1.msra.mxu0 %v7837
  %7839 = vmatprep.subr.mxu0 0.0
  %v7840 = vand.u32 %v2638, 4294901760
  %7841 = vmatpush1.msra.mxu0 %v7840
  %7842 = vmatprep.subr.mxu0 0.0
  %v7843 = vand.u32 %v2639, 4294901760
  %7844 = vmatpush1.msra.mxu0 %v7843
  %7845 = vmatprep.subr.mxu0 0.0
  %v7846 = vand.u32 %v2640, 4294901760
  %7847 = vmatpush1.msra.mxu0 %v7846
  %7848 = vmatprep.subr.mxu0 0.0
  %v7849 = vand.u32 %v2641, 4294901760
  %7850 = vmatpush1.msra.mxu0 %v7849
  %7851 = vmatprep.subr.mxu0 0.0
  %v7852 = vand.u32 %v2642, 4294901760
  %7853 = vmatpush1.msra.mxu0 %v7852
  %7854 = vmatprep.subr.mxu0 0.0
  %v7855 = vand.u32 %v2643, 4294901760
  %7856 = vmatpush1.msra.mxu0 %v7855
  %7857 = vmatprep.subr.mxu0 0.0
  %v7858 = vand.u32 %v2644, 4294901760
  %7859 = vmatpush1.msra.mxu0 %v7858
  %7860 = vmatprep.subr.mxu0 0.0
  %v7861 = vand.u32 %v2645, 4294901760
  %7862 = vmatpush1.msra.mxu0 %v7861
  %7863 = vmatprep.subr.mxu0 0.0
  %v7864 = vand.u32 %v2646, 4294901760
  %7865 = vmatpush1.msra.mxu0 %v7864
  %7866 = vmatprep.subr.mxu0 0.0
  %v7867 = vand.u32 %v2647, 4294901760
  %7868 = vmatpush1.msra.mxu0 %v7867
  %7869 = vmatprep.subr.mxu0 0.0
  %v7870 = vand.u32 %v2648, 4294901760
  %7871 = vmatpush1.msra.mxu0 %v7870
  %7872 = vmatprep.subr.mxu0 0.0
  %v7873 = vand.u32 %v2649, 4294901760
  %7874 = vmatpush1.msra.mxu0 %v7873
  %v7875 = vand.u32 %v1847, 4294901760
  %v7876 = vsub.f32 %v1847, %v7875
  %v7877 = vand.u32 %v7876, 4294901760
  %v7878 = vsub.f32 %v7876, %v7877
  %v7879 = vand.u32 %v7878, 4294901760
  %7880 = vmatprep.mubr.f32.mxu0 %v7879
  %v7881 = vand.u32 %v1591, 4294901760
  %v7882 = vsub.f32 %v1591, %v7881
  %v7883 = vand.u32 %v7882, 4294901760
  %v7884 = vsub.f32 %v7882, %v7883
  %v7885 = vand.u32 %v7884, 4294901760
  %7886 = vmatmul.mubr.f32.gmra.mrb[0].mxu0 %v7885
  %v7887 = vpop.f32.mrb[0].mxu0
  %v7888 = vadd.f32 %v7671, %v7887
  %v7889 = vpop.f32.mrb[0].mxu0
  %v7890 = vand.u32 %v1861, 4294901760
  %v7891 = vsub.f32 %v1861, %v7890
  %v7892 = vand.u32 %v7891, 4294901760
  %v7893 = vsub.f32 %v7891, %v7892
  %v7894 = vand.u32 %v7893, 4294901760
  %7895 = vmatprep.mubr.f32.mxu0 %v7894
  %v7896 = vand.u32 %v1605, 4294901760
  %v7897 = vsub.f32 %v1605, %v7896
  %v7898 = vand.u32 %v7897, 4294901760
  %v7899 = vsub.f32 %v7897, %v7898
  %v7900 = vand.u32 %v7899, 4294901760
  %7901 = vmatmul.mubr.f32.gmra.mrb[0].mxu0 %v7900
  %v7902 = vpop.f32.mrb[0].mxu0
  %v7903 = vadd.f32 %v7678, %v7902
  %v7904 = vpop.f32.mrb[0].mxu0
  %v7905 = vand.u32 %v1875, 4294901760
  %v7906 = vsub.f32 %v1875, %v7905
  %v7907 = vand.u32 %v7906, 4294901760
  %v7908 = vsub.f32 %v7906, %v7907
  %v7909 = vand.u32 %v7908, 4294901760
  %7910 = vmatprep.mubr.f32.mxu0 %v7909
  %v7911 = vand.u32 %v1619, 4294901760
  %v7912 = vsub.f32 %v1619, %v7911
  %v7913 = vand.u32 %v7912, 4294901760
  %v7914 = vsub.f32 %v7912, %v7913
  %v7915 = vand.u32 %v7914, 4294901760
  %7916 = vmatmul.mubr.f32.gmra.mrb[0].mxu0 %v7915
  %v7917 = vpop.f32.mrb[0].mxu0
  %v7918 = vadd.f32 %v7685, %v7917
  %v7919 = vpop.f32.mrb[0].mxu0
  %v7920 = vand.u32 %v1889, 4294901760
  %v7921 = vsub.f32 %v1889, %v7920
  %v7922 = vand.u32 %v7921, 4294901760
  %v7923 = vsub.f32 %v7921, %v7922
  %v7924 = vand.u32 %v7923, 4294901760
  %7925 = vmatprep.mubr.f32.mxu0 %v7924
  %v7926 = vand.u32 %v1633, 4294901760
  %v7927 = vsub.f32 %v1633, %v7926
  %v7928 = vand.u32 %v7927, 4294901760
  %v7929 = vsub.f32 %v7927, %v7928
  %v7930 = vand.u32 %v7929, 4294901760
  %7931 = vmatmul.mubr.f32.gmra.mrb[0].mxu0 %v7930
  %v7932 = vpop.f32.mrb[0].mxu0
  %v7933 = vadd.f32 %v7692, %v7932
  %v7934 = vpop.f32.mrb[0].mxu0
  %v7935 = vand.u32 %v1903, 4294901760
  %v7936 = vsub.f32 %v1903, %v7935
  %v7937 = vand.u32 %v7936, 4294901760
  %v7938 = vsub.f32 %v7936, %v7937
  %v7939 = vand.u32 %v7938, 4294901760
  %7940 = vmatprep.mubr.f32.mxu0 %v7939
  %v7941 = vand.u32 %v1647, 4294901760
  %v7942 = vsub.f32 %v1647, %v7941
  %v7943 = vand.u32 %v7942, 4294901760
  %v7944 = vsub.f32 %v7942, %v7943
  %v7945 = vand.u32 %v7944, 4294901760
  %7946 = vmatmul.mubr.f32.gmra.mrb[0].mxu0 %v7945
  %v7947 = vpop.f32.mrb[0].mxu0
  %v7948 = vadd.f32 %v7699, %v7947
  %v7949 = vpop.f32.mrb[0].mxu0
  %v7950 = vand.u32 %v1917, 4294901760
  %v7951 = vsub.f32 %v1917, %v7950
  %v7952 = vand.u32 %v7951, 4294901760
  %v7953 = vsub.f32 %v7951, %v7952
  %v7954 = vand.u32 %v7953, 4294901760
  %7955 = vmatprep.mubr.f32.mxu0 %v7954
  %v7956 = vand.u32 %v1661, 4294901760
  %v7957 = vsub.f32 %v1661, %v7956
  %v7958 = vand.u32 %v7957, 4294901760
  %v7959 = vsub.f32 %v7957, %v7958
  %v7960 = vand.u32 %v7959, 4294901760
  %7961 = vmatmul.mubr.f32.gmra.mrb[0].mxu0 %v7960
  %v7962 = vpop.f32.mrb[0].mxu0
  %v7963 = vadd.f32 %v7706, %v7962
  %v7964 = vpop.f32.mrb[0].mxu0
  %v7965 = vand.u32 %v2363, 4294901760
  %v7966 = vsub.f32 %v2363, %v7965
  %v7967 = vand.u32 %v7966, 4294901760
  %v7968 = vsub.f32 %v7966, %v7967
  %v7969 = vand.u32 %v7968, 4294901760
  %7970 = vmatprep.mubr.f32.mxu0 %v7969
  %v7971 = vand.u32 %v2331, 4294901760
  %v7972 = vsub.f32 %v2331, %v7971
  %v7973 = vand.u32 %v7972, 4294901760
  %v7974 = vsub.f32 %v7972, %v7973
  %v7975 = vand.u32 %v7974, 4294901760
  %7976 = vmatmul.mubr.f32.gmra.mrb[0].mxu0 %v7975
  %v7977 = vpop.f32.mrb[0].mxu0
  %v7978 = vadd.f32 %v7713, %v7977
  %v7979 = vpop.f32.mrb[0].mxu0
  %v7980 = vand.u32 %v2473, 4294901760
  %v7981 = vsub.f32 %v2473, %v7980
  %v7982 = vand.u32 %v7981, 4294901760
  %v7983 = vsub.f32 %v7981, %v7982
  %v7984 = vand.u32 %v7983, 4294901760
  %7985 = vmatprep.mubr.f32.mxu0 %v7984
  %v7986 = vand.u32 %v2441, 4294901760
  %v7987 = vsub.f32 %v2441, %v7986
  %v7988 = vand.u32 %v7987, 4294901760
  %v7989 = vsub.f32 %v7987, %v7988
  %v7990 = vand.u32 %v7989, 4294901760
  %7991 = vmatmul.mubr.f32.gmra.mrb[0].mxu0 %v7990
  %v7992 = vpop.f32.mrb[0].mxu0
  %v7993 = vadd.f32 %v7720, %v7992
  %v7994 = vpop.f32.mrb[0].mxu0
  %v7995 = vand.u32 %v1959, 4294901760
  %v7996 = vsub.f32 %v1959, %v7995
  %v7997 = vand.u32 %v7996, 4294901760
  %v7998 = vsub.f32 %v7996, %v7997
  %v7999 = vand.u32 %v7998, 4294901760
  %8000 = vmatprep.mubr.f32.mxu0 %v7999
  %v8001 = vand.u32 %v1703, 4294901760
  %v8002 = vsub.f32 %v1703, %v8001
  %v8003 = vand.u32 %v8002, 4294901760
  %v8004 = vsub.f32 %v8002, %v8003
  %v8005 = vand.u32 %v8004, 4294901760
  %8006 = vmatmul.mubr.f32.gmra.mrb[0].mxu0 %v8005
  %v8007 = vpop.f32.mrb[0].mxu0
  %v8008 = vadd.f32 %v7727, %v8007
  %v8009 = vpop.f32.mrb[0].mxu0
  %v8010 = vand.u32 %v1973, 4294901760
  %v8011 = vsub.f32 %v1973, %v8010
  %v8012 = vand.u32 %v8011, 4294901760
  %v8013 = vsub.f32 %v8011, %v8012
  %v8014 = vand.u32 %v8013, 4294901760
  %8015 = vmatprep.mubr.f32.mxu0 %v8014
  %v8016 = vand.u32 %v1717, 4294901760
  %v8017 = vsub.f32 %v1717, %v8016
  %v8018 = vand.u32 %v8017, 4294901760
  %v8019 = vsub.f32 %v8017, %v8018
  %v8020 = vand.u32 %v8019, 4294901760
  %8021 = vmatmul.mubr.f32.gmra.mrb[0].mxu0 %v8020
  %v8022 = vpop.f32.mrb[0].mxu0
  %v8023 = vadd.f32 %v7734, %v8022
  %v8024 = vpop.f32.mrb[0].mxu0
  %v8025 = vand.u32 %v1987, 4294901760
  %v8026 = vsub.f32 %v1987, %v8025
  %v8027 = vand.u32 %v8026, 4294901760
  %v8028 = vsub.f32 %v8026, %v8027
  %v8029 = vand.u32 %v8028, 4294901760
  %8030 = vmatprep.mubr.f32.mxu0 %v8029
  %v8031 = vand.u32 %v1731, 4294901760
  %v8032 = vsub.f32 %v1731, %v8031
  %v8033 = vand.u32 %v8032, 4294901760
  %v8034 = vsub.f32 %v8032, %v8033
  %v8035 = vand.u32 %v8034, 4294901760
  %8036 = vmatmul.mubr.f32.gmra.mrb[0].mxu0 %v8035
  %v8037 = vpop.f32.mrb[0].mxu0
  %v8038 = vadd.f32 %v7741, %v8037
  %v8039 = vpop.f32.mrb[0].mxu0
  %v8040 = vand.u32 %v2001, 4294901760
  %v8041 = vsub.f32 %v2001, %v8040
  %v8042 = vand.u32 %v8041, 4294901760
  %v8043 = vsub.f32 %v8041, %v8042
  %v8044 = vand.u32 %v8043, 4294901760
  %8045 = vmatprep.mubr.f32.mxu0 %v8044
  %v8046 = vand.u32 %v1745, 4294901760
  %v8047 = vsub.f32 %v1745, %v8046
  %v8048 = vand.u32 %v8047, 4294901760
  %v8049 = vsub.f32 %v8047, %v8048
  %v8050 = vand.u32 %v8049, 4294901760
  %8051 = vmatmul.mubr.f32.gmra.mrb[0].mxu0 %v8050
  %v8052 = vpop.f32.mrb[0].mxu0
  %v8053 = vadd.f32 %v7748, %v8052
  %v8054 = vpop.f32.mrb[0].mxu0
  %v8055 = vand.u32 %v2015, 4294901760
  %v8056 = vsub.f32 %v2015, %v8055
  %v8057 = vand.u32 %v8056, 4294901760
  %v8058 = vsub.f32 %v8056, %v8057
  %v8059 = vand.u32 %v8058, 4294901760
  %8060 = vmatprep.mubr.f32.mxu0 %v8059
  %v8061 = vand.u32 %v1759, 4294901760
  %v8062 = vsub.f32 %v1759, %v8061
  %v8063 = vand.u32 %v8062, 4294901760
  %v8064 = vsub.f32 %v8062, %v8063
  %v8065 = vand.u32 %v8064, 4294901760
  %8066 = vmatmul.mubr.f32.gmra.mrb[0].mxu0 %v8065
  %v8067 = vpop.f32.mrb[0].mxu0
  %v8068 = vadd.f32 %v7755, %v8067
  %v8069 = vpop.f32.mrb[0].mxu0
  %v8070 = vand.u32 %v2029, 4294901760
  %v8071 = vsub.f32 %v2029, %v8070
  %v8072 = vand.u32 %v8071, 4294901760
  %v8073 = vsub.f32 %v8071, %v8072
  %v8074 = vand.u32 %v8073, 4294901760
  %8075 = vmatprep.mubr.f32.mxu0 %v8074
  %v8076 = vand.u32 %v1773, 4294901760
  %v8077 = vsub.f32 %v1773, %v8076
  %v8078 = vand.u32 %v8077, 4294901760
  %v8079 = vsub.f32 %v8077, %v8078
  %v8080 = vand.u32 %v8079, 4294901760
  %8081 = vmatmul.mubr.f32.gmra.mrb[0].mxu0 %v8080
  %v8082 = vpop.f32.mrb[0].mxu0
  %v8083 = vadd.f32 %v7762, %v8082
  %v8084 = vpop.f32.mrb[0].mxu0
  %v8085 = vand.u32 %v2377, 4294901760
  %v8086 = vsub.f32 %v2377, %v8085
  %v8087 = vand.u32 %v8086, 4294901760
  %v8088 = vsub.f32 %v8086, %v8087
  %v8089 = vand.u32 %v8088, 4294901760
  %8090 = vmatprep.mubr.f32.mxu0 %v8089
  %v8091 = vand.u32 %v2345, 4294901760
  %v8092 = vsub.f32 %v2345, %v8091
  %v8093 = vand.u32 %v8092, 4294901760
  %v8094 = vsub.f32 %v8092, %v8093
  %v8095 = vand.u32 %v8094, 4294901760
  %8096 = vmatmul.mubr.f32.gmra.mrb[0].mxu0 %v8095
  %v8097 = vpop.f32.mrb[0].mxu0
  %v8098 = vadd.f32 %v7769, %v8097
  %v8099 = vpop.f32.mrb[0].mxu0
  %v8100 = vand.u32 %v2487, 4294901760
  %v8101 = vsub.f32 %v2487, %v8100
  %v8102 = vand.u32 %v8101, 4294901760
  %v8103 = vsub.f32 %v8101, %v8102
  %v8104 = vand.u32 %v8103, 4294901760
  %8105 = vmatprep.mubr.f32.mxu0 %v8104
  %v8106 = vand.u32 %v2455, 4294901760
  %v8107 = vsub.f32 %v2455, %v8106
  %v8108 = vand.u32 %v8107, 4294901760
  %v8109 = vsub.f32 %v8107, %v8108
  %v8110 = vand.u32 %v8109, 4294901760
  %8111 = vmatmul.mubr.f32.gmra.mrb[0].mxu0 %v8110
  %v8112 = vpop.f32.mrb[0].mxu0
  %v8113 = vadd.f32 %v7776, %v8112
  %v8114 = vpop.f32.mrb[0].mxu0
  %8115 = vdwg.mxu0
  %8116 = vmatprep.subr.mxu0 0.0
  %v8117 = vand.u32 %v2618, 4294901760
  %v8118 = vsub.f32 %v2618, %v8117
  %v8119 = vand.u32 %v8118, 4294901760
  %v8120 = vsub.f32 %v8118, %v8119
  %v8121 = vand.u32 %v8120, 4294901760
  %8122 = vmatpush1.msra.mxu0 %v8121
  %8123 = vmatprep.subr.mxu0 0.0
  %v8124 = vand.u32 %v2619, 4294901760
  %v8125 = vsub.f32 %v2619, %v8124
  %v8126 = vand.u32 %v8125, 4294901760
  %v8127 = vsub.f32 %v8125, %v8126
  %v8128 = vand.u32 %v8127, 4294901760
  %8129 = vmatpush1.msra.mxu0 %v8128
  %8130 = vmatprep.subr.mxu0 0.0
  %v8131 = vand.u32 %v2620, 4294901760
  %v8132 = vsub.f32 %v2620, %v8131
  %v8133 = vand.u32 %v8132, 4294901760
  %v8134 = vsub.f32 %v8132, %v8133
  %v8135 = vand.u32 %v8134, 4294901760
  %8136 = vmatpush1.msra.mxu0 %v8135
  %8137 = vmatprep.subr.mxu0 0.0
  %v8138 = vand.u32 %v2621, 4294901760
  %v8139 = vsub.f32 %v2621, %v8138
  %v8140 = vand.u32 %v8139, 4294901760
  %v8141 = vsub.f32 %v8139, %v8140
  %v8142 = vand.u32 %v8141, 4294901760
  %8143 = vmatpush1.msra.mxu0 %v8142
  %8144 = vmatprep.subr.mxu0 0.0
  %v8145 = vand.u32 %v2622, 4294901760
  %v8146 = vsub.f32 %v2622, %v8145
  %v8147 = vand.u32 %v8146, 4294901760
  %v8148 = vsub.f32 %v8146, %v8147
  %v8149 = vand.u32 %v8148, 4294901760
  %8150 = vmatpush1.msra.mxu0 %v8149
  %8151 = vmatprep.subr.mxu0 0.0
  %v8152 = vand.u32 %v2623, 4294901760
  %v8153 = vsub.f32 %v2623, %v8152
  %v8154 = vand.u32 %v8153, 4294901760
  %v8155 = vsub.f32 %v8153, %v8154
  %v8156 = vand.u32 %v8155, 4294901760
  %8157 = vmatpush1.msra.mxu0 %v8156
  %8158 = vmatprep.subr.mxu0 0.0
  %v8159 = vand.u32 %v2624, 4294901760
  %v8160 = vsub.f32 %v2624, %v8159
  %v8161 = vand.u32 %v8160, 4294901760
  %v8162 = vsub.f32 %v8160, %v8161
  %v8163 = vand.u32 %v8162, 4294901760
  %8164 = vmatpush1.msra.mxu0 %v8163
  %8165 = vmatprep.subr.mxu0 0.0
  %v8166 = vand.u32 %v2625, 4294901760
  %v8167 = vsub.f32 %v2625, %v8166
  %v8168 = vand.u32 %v8167, 4294901760
  %v8169 = vsub.f32 %v8167, %v8168
  %v8170 = vand.u32 %v8169, 4294901760
  %8171 = vmatpush1.msra.mxu0 %v8170
  %8172 = vmatprep.subr.mxu0 0.0
  %v8173 = vand.u32 %v2626, 4294901760
  %v8174 = vsub.f32 %v2626, %v8173
  %v8175 = vand.u32 %v8174, 4294901760
  %v8176 = vsub.f32 %v8174, %v8175
  %v8177 = vand.u32 %v8176, 4294901760
  %8178 = vmatpush1.msra.mxu0 %v8177
  %8179 = vmatprep.subr.mxu0 0.0
  %v8180 = vand.u32 %v2627, 4294901760
  %v8181 = vsub.f32 %v2627, %v8180
  %v8182 = vand.u32 %v8181, 4294901760
  %v8183 = vsub.f32 %v8181, %v8182
  %v8184 = vand.u32 %v8183, 4294901760
  %8185 = vmatpush1.msra.mxu0 %v8184
  %8186 = vmatprep.subr.mxu0 0.0
  %v8187 = vand.u32 %v2628, 4294901760
  %v8188 = vsub.f32 %v2628, %v8187
  %v8189 = vand.u32 %v8188, 4294901760
  %v8190 = vsub.f32 %v8188, %v8189
  %v8191 = vand.u32 %v8190, 4294901760
  %8192 = vmatpush1.msra.mxu0 %v8191
  %8193 = vmatprep.subr.mxu0 0.0
  %v8194 = vand.u32 %v2629, 4294901760
  %v8195 = vsub.f32 %v2629, %v8194
  %v8196 = vand.u32 %v8195, 4294901760
  %v8197 = vsub.f32 %v8195, %v8196
  %v8198 = vand.u32 %v8197, 4294901760
  %8199 = vmatpush1.msra.mxu0 %v8198
  %8200 = vmatprep.subr.mxu0 0.0
  %v8201 = vand.u32 %v2630, 4294901760
  %v8202 = vsub.f32 %v2630, %v8201
  %v8203 = vand.u32 %v8202, 4294901760
  %v8204 = vsub.f32 %v8202, %v8203
  %v8205 = vand.u32 %v8204, 4294901760
  %8206 = vmatpush1.msra.mxu0 %v8205
  %8207 = vmatprep.subr.mxu0 0.0
  %v8208 = vand.u32 %v2631, 4294901760
  %v8209 = vsub.f32 %v2631, %v8208
  %v8210 = vand.u32 %v8209, 4294901760
  %v8211 = vsub.f32 %v8209, %v8210
  %v8212 = vand.u32 %v8211, 4294901760
  %8213 = vmatpush1.msra.mxu0 %v8212
  %8214 = vmatprep.subr.mxu0 0.0
  %v8215 = vand.u32 %v2632, 4294901760
  %v8216 = vsub.f32 %v2632, %v8215
  %v8217 = vand.u32 %v8216, 4294901760
  %v8218 = vsub.f32 %v8216, %v8217
  %v8219 = vand.u32 %v8218, 4294901760
  %8220 = vmatpush1.msra.mxu0 %v8219
  %8221 = vmatprep.subr.mxu0 0.0
  %v8222 = vand.u32 %v2633, 4294901760
  %v8223 = vsub.f32 %v2633, %v8222
  %v8224 = vand.u32 %v8223, 4294901760
  %v8225 = vsub.f32 %v8223, %v8224
  %v8226 = vand.u32 %v8225, 4294901760
  %8227 = vmatpush1.msra.mxu0 %v8226
  %8228 = vmatprep.subr.mxu0 0.0
  %v8229 = vand.u32 %v2634, 4294901760
  %v8230 = vsub.f32 %v2634, %v8229
  %v8231 = vand.u32 %v8230, 4294901760
  %v8232 = vsub.f32 %v8230, %v8231
  %v8233 = vand.u32 %v8232, 4294901760
  %8234 = vmatpush1.msra.mxu0 %v8233
  %8235 = vmatprep.subr.mxu0 0.0
  %v8236 = vand.u32 %v2635, 4294901760
  %v8237 = vsub.f32 %v2635, %v8236
  %v8238 = vand.u32 %v8237, 4294901760
  %v8239 = vsub.f32 %v8237, %v8238
  %v8240 = vand.u32 %v8239, 4294901760
  %8241 = vmatpush1.msra.mxu0 %v8240
  %8242 = vmatprep.subr.mxu0 0.0
  %v8243 = vand.u32 %v2636, 4294901760
  %v8244 = vsub.f32 %v2636, %v8243
  %v8245 = vand.u32 %v8244, 4294901760
  %v8246 = vsub.f32 %v8244, %v8245
  %v8247 = vand.u32 %v8246, 4294901760
  %8248 = vmatpush1.msra.mxu0 %v8247
  %8249 = vmatprep.subr.mxu0 0.0
  %v8250 = vand.u32 %v2637, 4294901760
  %v8251 = vsub.f32 %v2637, %v8250
  %v8252 = vand.u32 %v8251, 4294901760
  %v8253 = vsub.f32 %v8251, %v8252
  %v8254 = vand.u32 %v8253, 4294901760
  %8255 = vmatpush1.msra.mxu0 %v8254
  %8256 = vmatprep.subr.mxu0 0.0
  %v8257 = vand.u32 %v2638, 4294901760
  %v8258 = vsub.f32 %v2638, %v8257
  %v8259 = vand.u32 %v8258, 4294901760
  %v8260 = vsub.f32 %v8258, %v8259
  %v8261 = vand.u32 %v8260, 4294901760
  %8262 = vmatpush1.msra.mxu0 %v8261
  %8263 = vmatprep.subr.mxu0 0.0
  %v8264 = vand.u32 %v2639, 4294901760
  %v8265 = vsub.f32 %v2639, %v8264
  %v8266 = vand.u32 %v8265, 4294901760
  %v8267 = vsub.f32 %v8265, %v8266
  %v8268 = vand.u32 %v8267, 4294901760
  %8269 = vmatpush1.msra.mxu0 %v8268
  %8270 = vmatprep.subr.mxu0 0.0
  %v8271 = vand.u32 %v2640, 4294901760
  %v8272 = vsub.f32 %v2640, %v8271
  %v8273 = vand.u32 %v8272, 4294901760
  %v8274 = vsub.f32 %v8272, %v8273
  %v8275 = vand.u32 %v8274, 4294901760
  %8276 = vmatpush1.msra.mxu0 %v8275
  %8277 = vmatprep.subr.mxu0 0.0
  %v8278 = vand.u32 %v2641, 4294901760
  %v8279 = vsub.f32 %v2641, %v8278
  %v8280 = vand.u32 %v8279, 4294901760
  %v8281 = vsub.f32 %v8279, %v8280
  %v8282 = vand.u32 %v8281, 4294901760
  %8283 = vmatpush1.msra.mxu0 %v8282
  %8284 = vmatprep.subr.mxu0 0.0
  %v8285 = vand.u32 %v2642, 4294901760
  %v8286 = vsub.f32 %v2642, %v8285
  %v8287 = vand.u32 %v8286, 4294901760
  %v8288 = vsub.f32 %v8286, %v8287
  %v8289 = vand.u32 %v8288, 4294901760
  %8290 = vmatpush1.msra.mxu0 %v8289
  %8291 = vmatprep.subr.mxu0 0.0
  %v8292 = vand.u32 %v2643, 4294901760
  %v8293 = vsub.f32 %v2643, %v8292
  %v8294 = vand.u32 %v8293, 4294901760
  %v8295 = vsub.f32 %v8293, %v8294
  %v8296 = vand.u32 %v8295, 4294901760
  %8297 = vmatpush1.msra.mxu0 %v8296
  %8298 = vmatprep.subr.mxu0 0.0
  %v8299 = vand.u32 %v2644, 4294901760
  %v8300 = vsub.f32 %v2644, %v8299
  %v8301 = vand.u32 %v8300, 4294901760
  %v8302 = vsub.f32 %v8300, %v8301
  %v8303 = vand.u32 %v8302, 4294901760
  %8304 = vmatpush1.msra.mxu0 %v8303
  %8305 = vmatprep.subr.mxu0 0.0
  %v8306 = vand.u32 %v2645, 4294901760
  %v8307 = vsub.f32 %v2645, %v8306
  %v8308 = vand.u32 %v8307, 4294901760
  %v8309 = vsub.f32 %v8307, %v8308
  %v8310 = vand.u32 %v8309, 4294901760
  %8311 = vmatpush1.msra.mxu0 %v8310
  %8312 = vmatprep.subr.mxu0 0.0
  %v8313 = vand.u32 %v2646, 4294901760
  %v8314 = vsub.f32 %v2646, %v8313
  %v8315 = vand.u32 %v8314, 4294901760
  %v8316 = vsub.f32 %v8314, %v8315
  %v8317 = vand.u32 %v8316, 4294901760
  %8318 = vmatpush1.msra.mxu0 %v8317
  %8319 = vmatprep.subr.mxu0 0.0
  %v8320 = vand.u32 %v2647, 4294901760
  %v8321 = vsub.f32 %v2647, %v8320
  %v8322 = vand.u32 %v8321, 4294901760
  %v8323 = vsub.f32 %v8321, %v8322
  %v8324 = vand.u32 %v8323, 4294901760
  %8325 = vmatpush1.msra.mxu0 %v8324
  %8326 = vmatprep.subr.mxu0 0.0
  %v8327 = vand.u32 %v2648, 4294901760
  %v8328 = vsub.f32 %v2648, %v8327
  %v8329 = vand.u32 %v8328, 4294901760
  %v8330 = vsub.f32 %v8328, %v8329
  %v8331 = vand.u32 %v8330, 4294901760
  %8332 = vmatpush1.msra.mxu0 %v8331
  %8333 = vmatprep.subr.mxu0 0.0
  %v8334 = vand.u32 %v2649, 4294901760
  %v8335 = vsub.f32 %v2649, %v8334
  %v8336 = vand.u32 %v8335, 4294901760
  %v8337 = vsub.f32 %v8335, %v8336
  %v8338 = vand.u32 %v8337, 4294901760
  %8339 = vmatpush1.msra.mxu0 %v8338
  %v8340 = vand.u32 %v1847, 4294901760
  %8341 = vmatprep.mubr.f32.mxu0 %v8340
  %v8342 = vand.u32 %v1591, 4294901760
  %8343 = vmatmul.mubr.f32.gmra.mrb[0].mxu0 %v8342
  %v8344 = vpop.f32.mrb[0].mxu0
  %v8345 = vadd.f32 %v7888, %v8344
  %v8346 = vpop.f32.mrb[0].mxu0
  %v8347 = vand.u32 %v1861, 4294901760
  %8348 = vmatprep.mubr.f32.mxu0 %v8347
  %v8349 = vand.u32 %v1605, 4294901760
  %8350 = vmatmul.mubr.f32.gmra.mrb[0].mxu0 %v8349
  %v8351 = vpop.f32.mrb[0].mxu0
  %v8352 = vadd.f32 %v7903, %v8351
  %v8353 = vpop.f32.mrb[0].mxu0
  %v8354 = vand.u32 %v1875, 4294901760
  %8355 = vmatprep.mubr.f32.mxu0 %v8354
  %v8356 = vand.u32 %v1619, 4294901760
  %8357 = vmatmul.mubr.f32.gmra.mrb[0].mxu0 %v8356
  %v8358 = vpop.f32.mrb[0].mxu0
  %v8359 = vadd.f32 %v7918, %v8358
  %v8360 = vpop.f32.mrb[0].mxu0
  %v8361 = vand.u32 %v1889, 4294901760
  %8362 = vmatprep.mubr.f32.mxu0 %v8361
  %v8363 = vand.u32 %v1633, 4294901760
  %8364 = vmatmul.mubr.f32.gmra.mrb[0].mxu0 %v8363
  %v8365 = vpop.f32.mrb[0].mxu0
  %v8366 = vadd.f32 %v7933, %v8365
  %v8367 = vpop.f32.mrb[0].mxu0
  %v8368 = vand.u32 %v1903, 4294901760
  %8369 = vmatprep.mubr.f32.mxu0 %v8368
  %v8370 = vand.u32 %v1647, 4294901760
  %8371 = vmatmul.mubr.f32.gmra.mrb[0].mxu0 %v8370
  %v8372 = vpop.f32.mrb[0].mxu0
  %v8373 = vadd.f32 %v7948, %v8372
  %v8374 = vpop.f32.mrb[0].mxu0
  %v8375 = vand.u32 %v1917, 4294901760
  %8376 = vmatprep.mubr.f32.mxu0 %v8375
  %v8377 = vand.u32 %v1661, 4294901760
  %8378 = vmatmul.mubr.f32.gmra.mrb[0].mxu0 %v8377
  %v8379 = vpop.f32.mrb[0].mxu0
  %v8380 = vadd.f32 %v7963, %v8379
  %v8381 = vpop.f32.mrb[0].mxu0
  %v8382 = vand.u32 %v2363, 4294901760
  %8383 = vmatprep.mubr.f32.mxu0 %v8382
  %v8384 = vand.u32 %v2331, 4294901760
  %8385 = vmatmul.mubr.f32.gmra.mrb[0].mxu0 %v8384
  %v8386 = vpop.f32.mrb[0].mxu0
  %v8387 = vadd.f32 %v7978, %v8386
  %v8388 = vpop.f32.mrb[0].mxu0
  %v8389 = vand.u32 %v2473, 4294901760
  %8390 = vmatprep.mubr.f32.mxu0 %v8389
  %v8391 = vand.u32 %v2441, 4294901760
  %8392 = vmatmul.mubr.f32.gmra.mrb[0].mxu0 %v8391
  %v8393 = vpop.f32.mrb[0].mxu0
  %v8394 = vadd.f32 %v7993, %v8393
  %v8395 = vpop.f32.mrb[0].mxu0
  %v8396 = vand.u32 %v1959, 4294901760
  %8397 = vmatprep.mubr.f32.mxu0 %v8396
  %v8398 = vand.u32 %v1703, 4294901760
  %8399 = vmatmul.mubr.f32.gmra.mrb[0].mxu0 %v8398
  %v8400 = vpop.f32.mrb[0].mxu0
  %v8401 = vadd.f32 %v8008, %v8400
  %v8402 = vpop.f32.mrb[0].mxu0
  %v8403 = vand.u32 %v1973, 4294901760
  %8404 = vmatprep.mubr.f32.mxu0 %v8403
  %v8405 = vand.u32 %v1717, 4294901760
  %8406 = vmatmul.mubr.f32.gmra.mrb[0].mxu0 %v8405
  %v8407 = vpop.f32.mrb[0].mxu0
  %v8408 = vadd.f32 %v8023, %v8407
  %v8409 = vpop.f32.mrb[0].mxu0
  %v8410 = vand.u32 %v1987, 4294901760
  %8411 = vmatprep.mubr.f32.mxu0 %v8410
  %v8412 = vand.u32 %v1731, 4294901760
  %8413 = vmatmul.mubr.f32.gmra.mrb[0].mxu0 %v8412
  %v8414 = vpop.f32.mrb[0].mxu0
  %v8415 = vadd.f32 %v8038, %v8414
  %v8416 = vpop.f32.mrb[0].mxu0
  %v8417 = vand.u32 %v2001, 4294901760
  %8418 = vmatprep.mubr.f32.mxu0 %v8417
  %v8419 = vand.u32 %v1745, 4294901760
  %8420 = vmatmul.mubr.f32.gmra.mrb[0].mxu0 %v8419
  %v8421 = vpop.f32.mrb[0].mxu0
  %v8422 = vadd.f32 %v8053, %v8421
  %v8423 = vpop.f32.mrb[0].mxu0
  %v8424 = vand.u32 %v2015, 4294901760
  %8425 = vmatprep.mubr.f32.mxu0 %v8424
  %v8426 = vand.u32 %v1759, 4294901760
  %8427 = vmatmul.mubr.f32.gmra.mrb[0].mxu0 %v8426
  %v8428 = vpop.f32.mrb[0].mxu0
  %v8429 = vadd.f32 %v8068, %v8428
  %v8430 = vpop.f32.mrb[0].mxu0
  %v8431 = vand.u32 %v2029, 4294901760
  %8432 = vmatprep.mubr.f32.mxu0 %v8431
  %v8433 = vand.u32 %v1773, 4294901760
  %8434 = vmatmul.mubr.f32.gmra.mrb[0].mxu0 %v8433
  %v8435 = vpop.f32.mrb[0].mxu0
  %v8436 = vadd.f32 %v8083, %v8435
  %v8437 = vpop.f32.mrb[0].mxu0
  %v8438 = vand.u32 %v2377, 4294901760
  %8439 = vmatprep.mubr.f32.mxu0 %v8438
  %v8440 = vand.u32 %v2345, 4294901760
  %8441 = vmatmul.mubr.f32.gmra.mrb[0].mxu0 %v8440
  %v8442 = vpop.f32.mrb[0].mxu0
  %v8443 = vadd.f32 %v8098, %v8442
  %v8444 = vpop.f32.mrb[0].mxu0
  %v8445 = vand.u32 %v2487, 4294901760
  %8446 = vmatprep.mubr.f32.mxu0 %v8445
  %v8447 = vand.u32 %v2455, 4294901760
  %8448 = vmatmul.mubr.f32.gmra.mrb[0].mxu0 %v8447
  %v8449 = vpop.f32.mrb[0].mxu0
  %v8450 = vadd.f32 %v8113, %v8449
  %v8451 = vpop.f32.mrb[0].mxu0
  %8452 = vdwg.mxu0
  %8453 = vmatprep.subr.mxu0 0.0
  %v8454 = vand.u32 %v2618, 4294901760
  %v8455 = vsub.f32 %v2618, %v8454
  %8456 = vmatpush1.msra.mxu0 %v8455
  %8457 = vmatprep.subr.mxu0 0.0
  %v8458 = vand.u32 %v2619, 4294901760
  %v8459 = vsub.f32 %v2619, %v8458
  %8460 = vmatpush1.msra.mxu0 %v8459
  %8461 = vmatprep.subr.mxu0 0.0
  %v8462 = vand.u32 %v2620, 4294901760
  %v8463 = vsub.f32 %v2620, %v8462
  %8464 = vmatpush1.msra.mxu0 %v8463
  %8465 = vmatprep.subr.mxu0 0.0
  %v8466 = vand.u32 %v2621, 4294901760
  %v8467 = vsub.f32 %v2621, %v8466
  %8468 = vmatpush1.msra.mxu0 %v8467
  %8469 = vmatprep.subr.mxu0 0.0
  %v8470 = vand.u32 %v2622, 4294901760
  %v8471 = vsub.f32 %v2622, %v8470
  %8472 = vmatpush1.msra.mxu0 %v8471
  %8473 = vmatprep.subr.mxu0 0.0
  %v8474 = vand.u32 %v2623, 4294901760
  %v8475 = vsub.f32 %v2623, %v8474
  %8476 = vmatpush1.msra.mxu0 %v8475
  %8477 = vmatprep.subr.mxu0 0.0
  %v8478 = vand.u32 %v2624, 4294901760
  %v8479 = vsub.f32 %v2624, %v8478
  %8480 = vmatpush1.msra.mxu0 %v8479
  %8481 = vmatprep.subr.mxu0 0.0
  %v8482 = vand.u32 %v2625, 4294901760
  %v8483 = vsub.f32 %v2625, %v8482
  %8484 = vmatpush1.msra.mxu0 %v8483
  %8485 = vmatprep.subr.mxu0 0.0
  %v8486 = vand.u32 %v2626, 4294901760
  %v8487 = vsub.f32 %v2626, %v8486
  %8488 = vmatpush1.msra.mxu0 %v8487
  %8489 = vmatprep.subr.mxu0 0.0
  %v8490 = vand.u32 %v2627, 4294901760
  %v8491 = vsub.f32 %v2627, %v8490
  %8492 = vmatpush1.msra.mxu0 %v8491
  %8493 = vmatprep.subr.mxu0 0.0
  %v8494 = vand.u32 %v2628, 4294901760
  %v8495 = vsub.f32 %v2628, %v8494
  %8496 = vmatpush1.msra.mxu0 %v8495
  %8497 = vmatprep.subr.mxu0 0.0
  %v8498 = vand.u32 %v2629, 4294901760
  %v8499 = vsub.f32 %v2629, %v8498
  %8500 = vmatpush1.msra.mxu0 %v8499
  %8501 = vmatprep.subr.mxu0 0.0
  %v8502 = vand.u32 %v2630, 4294901760
  %v8503 = vsub.f32 %v2630, %v8502
  %8504 = vmatpush1.msra.mxu0 %v8503
  %8505 = vmatprep.subr.mxu0 0.0
  %v8506 = vand.u32 %v2631, 4294901760
  %v8507 = vsub.f32 %v2631, %v8506
  %8508 = vmatpush1.msra.mxu0 %v8507
  %8509 = vmatprep.subr.mxu0 0.0
  %v8510 = vand.u32 %v2632, 4294901760
  %v8511 = vsub.f32 %v2632, %v8510
  %8512 = vmatpush1.msra.mxu0 %v8511
  %8513 = vmatprep.subr.mxu0 0.0
  %v8514 = vand.u32 %v2633, 4294901760
  %v8515 = vsub.f32 %v2633, %v8514
  %8516 = vmatpush1.msra.mxu0 %v8515
  %8517 = vmatprep.subr.mxu0 0.0
  %v8518 = vand.u32 %v2634, 4294901760
  %v8519 = vsub.f32 %v2634, %v8518
  %8520 = vmatpush1.msra.mxu0 %v8519
  %8521 = vmatprep.subr.mxu0 0.0
  %v8522 = vand.u32 %v2635, 4294901760
  %v8523 = vsub.f32 %v2635, %v8522
  %8524 = vmatpush1.msra.mxu0 %v8523
  %8525 = vmatprep.subr.mxu0 0.0
  %v8526 = vand.u32 %v2636, 4294901760
  %v8527 = vsub.f32 %v2636, %v8526
  %8528 = vmatpush1.msra.mxu0 %v8527
  %8529 = vmatprep.subr.mxu0 0.0
  %v8530 = vand.u32 %v2637, 4294901760
  %v8531 = vsub.f32 %v2637, %v8530
  %8532 = vmatpush1.msra.mxu0 %v8531
  %8533 = vmatprep.subr.mxu0 0.0
  %v8534 = vand.u32 %v2638, 4294901760
  %v8535 = vsub.f32 %v2638, %v8534
  %8536 = vmatpush1.msra.mxu0 %v8535
  %8537 = vmatprep.subr.mxu0 0.0
  %v8538 = vand.u32 %v2639, 4294901760
  %v8539 = vsub.f32 %v2639, %v8538
  %8540 = vmatpush1.msra.mxu0 %v8539
  %8541 = vmatprep.subr.mxu0 0.0
  %v8542 = vand.u32 %v2640, 4294901760
  %v8543 = vsub.f32 %v2640, %v8542
  %8544 = vmatpush1.msra.mxu0 %v8543
  %8545 = vmatprep.subr.mxu0 0.0
  %v8546 = vand.u32 %v2641, 4294901760
  %v8547 = vsub.f32 %v2641, %v8546
  %8548 = vmatpush1.msra.mxu0 %v8547
  %8549 = vmatprep.subr.mxu0 0.0
  %v8550 = vand.u32 %v2642, 4294901760
  %v8551 = vsub.f32 %v2642, %v8550
  %8552 = vmatpush1.msra.mxu0 %v8551
  %8553 = vmatprep.subr.mxu0 0.0
  %v8554 = vand.u32 %v2643, 4294901760
  %v8555 = vsub.f32 %v2643, %v8554
  %8556 = vmatpush1.msra.mxu0 %v8555
  %8557 = vmatprep.subr.mxu0 0.0
  %v8558 = vand.u32 %v2644, 4294901760
  %v8559 = vsub.f32 %v2644, %v8558
  %8560 = vmatpush1.msra.mxu0 %v8559
  %8561 = vmatprep.subr.mxu0 0.0
  %v8562 = vand.u32 %v2645, 4294901760
  %v8563 = vsub.f32 %v2645, %v8562
  %8564 = vmatpush1.msra.mxu0 %v8563
  %8565 = vmatprep.subr.mxu0 0.0
  %v8566 = vand.u32 %v2646, 4294901760
  %v8567 = vsub.f32 %v2646, %v8566
  %8568 = vmatpush1.msra.mxu0 %v8567
  %8569 = vmatprep.subr.mxu0 0.0
  %v8570 = vand.u32 %v2647, 4294901760
  %v8571 = vsub.f32 %v2647, %v8570
  %8572 = vmatpush1.msra.mxu0 %v8571
  %8573 = vmatprep.subr.mxu0 0.0
  %v8574 = vand.u32 %v2648, 4294901760
  %v8575 = vsub.f32 %v2648, %v8574
  %8576 = vmatpush1.msra.mxu0 %v8575
  %8577 = vmatprep.subr.mxu0 0.0
  %v8578 = vand.u32 %v2649, 4294901760
  %v8579 = vsub.f32 %v2649, %v8578
  %8580 = vmatpush1.msra.mxu0 %v8579
  %v8581 = vand.u32 %v1847, 4294901760
  %v8582 = vsub.f32 %v1847, %v8581
  %8583 = vmatprep.mubr.f32.mxu0 %v8582
  %v8584 = vand.u32 %v1591, 4294901760
  %v8585 = vsub.f32 %v1591, %v8584
  %8586 = vmatmul.mubr.f32.gmra.mrb[0].mxu0 %v8585
  %v8587 = vpop.f32.mrb[0].mxu0
  %v8588 = vadd.f32 %v8345, %v8587
  %v8589 = vpop.f32.mrb[0].mxu0
  %v8590 = vand.u32 %v1861, 4294901760
  %v8591 = vsub.f32 %v1861, %v8590
  %8592 = vmatprep.mubr.f32.mxu0 %v8591
  %v8593 = vand.u32 %v1605, 4294901760
  %v8594 = vsub.f32 %v1605, %v8593
  %8595 = vmatmul.mubr.f32.gmra.mrb[0].mxu0 %v8594
  %v8596 = vpop.f32.mrb[0].mxu0
  %v8597 = vadd.f32 %v8352, %v8596
  %v8598 = vpop.f32.mrb[0].mxu0
  %v8599 = vand.u32 %v1875, 4294901760
  %v8600 = vsub.f32 %v1875, %v8599
  %8601 = vmatprep.mubr.f32.mxu0 %v8600
  %v8602 = vand.u32 %v1619, 4294901760
  %v8603 = vsub.f32 %v1619, %v8602
  %8604 = vmatmul.mubr.f32.gmra.mrb[0].mxu0 %v8603
  %v8605 = vpop.f32.mrb[0].mxu0
  %v8606 = vadd.f32 %v8359, %v8605
  %v8607 = vpop.f32.mrb[0].mxu0
  %v8608 = vand.u32 %v1889, 4294901760
  %v8609 = vsub.f32 %v1889, %v8608
  %8610 = vmatprep.mubr.f32.mxu0 %v8609
  %v8611 = vand.u32 %v1633, 4294901760
  %v8612 = vsub.f32 %v1633, %v8611
  %8613 = vmatmul.mubr.f32.gmra.mrb[0].mxu0 %v8612
  %v8614 = vpop.f32.mrb[0].mxu0
  %v8615 = vadd.f32 %v8366, %v8614
  %v8616 = vpop.f32.mrb[0].mxu0
  %v8617 = vand.u32 %v1903, 4294901760
  %v8618 = vsub.f32 %v1903, %v8617
  %8619 = vmatprep.mubr.f32.mxu0 %v8618
  %v8620 = vand.u32 %v1647, 4294901760
  %v8621 = vsub.f32 %v1647, %v8620
  %8622 = vmatmul.mubr.f32.gmra.mrb[0].mxu0 %v8621
  %v8623 = vpop.f32.mrb[0].mxu0
  %v8624 = vadd.f32 %v8373, %v8623
  %v8625 = vpop.f32.mrb[0].mxu0
  %v8626 = vand.u32 %v1917, 4294901760
  %v8627 = vsub.f32 %v1917, %v8626
  %8628 = vmatprep.mubr.f32.mxu0 %v8627
  %v8629 = vand.u32 %v1661, 4294901760
  %v8630 = vsub.f32 %v1661, %v8629
  %8631 = vmatmul.mubr.f32.gmra.mrb[0].mxu0 %v8630
  %v8632 = vpop.f32.mrb[0].mxu0
  %v8633 = vadd.f32 %v8380, %v8632
  %v8634 = vpop.f32.mrb[0].mxu0
  %v8635 = vand.u32 %v2363, 4294901760
  %v8636 = vsub.f32 %v2363, %v8635
  %8637 = vmatprep.mubr.f32.mxu0 %v8636
  %v8638 = vand.u32 %v2331, 4294901760
  %v8639 = vsub.f32 %v2331, %v8638
  %8640 = vmatmul.mubr.f32.gmra.mrb[0].mxu0 %v8639
  %v8641 = vpop.f32.mrb[0].mxu0
  %v8642 = vadd.f32 %v8387, %v8641
  %v8643 = vpop.f32.mrb[0].mxu0
  %v8644 = vand.u32 %v2473, 4294901760
  %v8645 = vsub.f32 %v2473, %v8644
  %8646 = vmatprep.mubr.f32.mxu0 %v8645
  %v8647 = vand.u32 %v2441, 4294901760
  %v8648 = vsub.f32 %v2441, %v8647
  %8649 = vmatmul.mubr.f32.gmra.mrb[0].mxu0 %v8648
  %v8650 = vpop.f32.mrb[0].mxu0
  %v8651 = vadd.f32 %v8394, %v8650
  %v8652 = vpop.f32.mrb[0].mxu0
  %v8653 = vand.u32 %v1959, 4294901760
  %v8654 = vsub.f32 %v1959, %v8653
  %8655 = vmatprep.mubr.f32.mxu0 %v8654
  %v8656 = vand.u32 %v1703, 4294901760
  %v8657 = vsub.f32 %v1703, %v8656
  %8658 = vmatmul.mubr.f32.gmra.mrb[0].mxu0 %v8657
  %v8659 = vpop.f32.mrb[0].mxu0
  %v8660 = vadd.f32 %v8401, %v8659
  %v8661 = vpop.f32.mrb[0].mxu0
  %v8662 = vand.u32 %v1973, 4294901760
  %v8663 = vsub.f32 %v1973, %v8662
  %8664 = vmatprep.mubr.f32.mxu0 %v8663
  %v8665 = vand.u32 %v1717, 4294901760
  %v8666 = vsub.f32 %v1717, %v8665
  %8667 = vmatmul.mubr.f32.gmra.mrb[0].mxu0 %v8666
  %v8668 = vpop.f32.mrb[0].mxu0
  %v8669 = vadd.f32 %v8408, %v8668
  %v8670 = vpop.f32.mrb[0].mxu0
  %v8671 = vand.u32 %v1987, 4294901760
  %v8672 = vsub.f32 %v1987, %v8671
  %8673 = vmatprep.mubr.f32.mxu0 %v8672
  %v8674 = vand.u32 %v1731, 4294901760
  %v8675 = vsub.f32 %v1731, %v8674
  %8676 = vmatmul.mubr.f32.gmra.mrb[0].mxu0 %v8675
  %v8677 = vpop.f32.mrb[0].mxu0
  %v8678 = vadd.f32 %v8415, %v8677
  %v8679 = vpop.f32.mrb[0].mxu0
  %v8680 = vand.u32 %v2001, 4294901760
  %v8681 = vsub.f32 %v2001, %v8680
  %8682 = vmatprep.mubr.f32.mxu0 %v8681
  %v8683 = vand.u32 %v1745, 4294901760
  %v8684 = vsub.f32 %v1745, %v8683
  %8685 = vmatmul.mubr.f32.gmra.mrb[0].mxu0 %v8684
  %v8686 = vpop.f32.mrb[0].mxu0
  %v8687 = vadd.f32 %v8422, %v8686
  %v8688 = vpop.f32.mrb[0].mxu0
  %v8689 = vand.u32 %v2015, 4294901760
  %v8690 = vsub.f32 %v2015, %v8689
  %8691 = vmatprep.mubr.f32.mxu0 %v8690
  %v8692 = vand.u32 %v1759, 4294901760
  %v8693 = vsub.f32 %v1759, %v8692
  %8694 = vmatmul.mubr.f32.gmra.mrb[0].mxu0 %v8693
  %v8695 = vpop.f32.mrb[0].mxu0
  %v8696 = vadd.f32 %v8429, %v8695
  %v8697 = vpop.f32.mrb[0].mxu0
  %v8698 = vand.u32 %v2029, 4294901760
  %v8699 = vsub.f32 %v2029, %v8698
  %8700 = vmatprep.mubr.f32.mxu0 %v8699
  %v8701 = vand.u32 %v1773, 4294901760
  %v8702 = vsub.f32 %v1773, %v8701
  %8703 = vmatmul.mubr.f32.gmra.mrb[0].mxu0 %v8702
  %v8704 = vpop.f32.mrb[0].mxu0
  %v8705 = vadd.f32 %v8436, %v8704
  %v8706 = vpop.f32.mrb[0].mxu0
  %v8707 = vand.u32 %v2377, 4294901760
  %v8708 = vsub.f32 %v2377, %v8707
  %8709 = vmatprep.mubr.f32.mxu0 %v8708
  %v8710 = vand.u32 %v2345, 4294901760
  %v8711 = vsub.f32 %v2345, %v8710
  %8712 = vmatmul.mubr.f32.gmra.mrb[0].mxu0 %v8711
  %v8713 = vpop.f32.mrb[0].mxu0
  %v8714 = vadd.f32 %v8443, %v8713
  %v8715 = vpop.f32.mrb[0].mxu0
  %v8716 = vand.u32 %v2487, 4294901760
  %v8717 = vsub.f32 %v2487, %v8716
  %8718 = vmatprep.mubr.f32.mxu0 %v8717
  %v8719 = vand.u32 %v2455, 4294901760
  %v8720 = vsub.f32 %v2455, %v8719
  %8721 = vmatmul.mubr.f32.gmra.mrb[0].mxu0 %v8720
  %v8722 = vpop.f32.mrb[0].mxu0
  %v8723 = vadd.f32 %v8450, %v8722
  %v8724 = vpop.f32.mrb[0].mxu0
  %8725 = vdwg.mxu0
  %8726 = vmatprep.subr.mxu0 0.0
  %v8727 = vand.u32 %v2618, 4294901760
  %8728 = vmatpush1.msra.mxu0 %v8727
  %8729 = vmatprep.subr.mxu0 0.0
  %v8730 = vand.u32 %v2619, 4294901760
  %8731 = vmatpush1.msra.mxu0 %v8730
  %8732 = vmatprep.subr.mxu0 0.0
  %v8733 = vand.u32 %v2620, 4294901760
  %8734 = vmatpush1.msra.mxu0 %v8733
  %8735 = vmatprep.subr.mxu0 0.0
  %v8736 = vand.u32 %v2621, 4294901760
  %8737 = vmatpush1.msra.mxu0 %v8736
  %8738 = vmatprep.subr.mxu0 0.0
  %v8739 = vand.u32 %v2622, 4294901760
  %8740 = vmatpush1.msra.mxu0 %v8739
  %8741 = vmatprep.subr.mxu0 0.0
  %v8742 = vand.u32 %v2623, 4294901760
  %8743 = vmatpush1.msra.mxu0 %v8742
  %8744 = vmatprep.subr.mxu0 0.0
  %v8745 = vand.u32 %v2624, 4294901760
  %8746 = vmatpush1.msra.mxu0 %v8745
  %8747 = vmatprep.subr.mxu0 0.0
  %v8748 = vand.u32 %v2625, 4294901760
  %8749 = vmatpush1.msra.mxu0 %v8748
  %8750 = vmatprep.subr.mxu0 0.0
  %v8751 = vand.u32 %v2626, 4294901760
  %8752 = vmatpush1.msra.mxu0 %v8751
  %8753 = vmatprep.subr.mxu0 0.0
  %v8754 = vand.u32 %v2627, 4294901760
  %8755 = vmatpush1.msra.mxu0 %v8754
  %8756 = vmatprep.subr.mxu0 0.0
  %v8757 = vand.u32 %v2628, 4294901760
  %8758 = vmatpush1.msra.mxu0 %v8757
  %8759 = vmatprep.subr.mxu0 0.0
  %v8760 = vand.u32 %v2629, 4294901760
  %8761 = vmatpush1.msra.mxu0 %v8760
  %8762 = vmatprep.subr.mxu0 0.0
  %v8763 = vand.u32 %v2630, 4294901760
  %8764 = vmatpush1.msra.mxu0 %v8763
  %8765 = vmatprep.subr.mxu0 0.0
  %v8766 = vand.u32 %v2631, 4294901760
  %8767 = vmatpush1.msra.mxu0 %v8766
  %8768 = vmatprep.subr.mxu0 0.0
  %v8769 = vand.u32 %v2632, 4294901760
  %8770 = vmatpush1.msra.mxu0 %v8769
  %8771 = vmatprep.subr.mxu0 0.0
  %v8772 = vand.u32 %v2633, 4294901760
  %8773 = vmatpush1.msra.mxu0 %v8772
  %8774 = vmatprep.subr.mxu0 0.0
  %v8775 = vand.u32 %v2634, 4294901760
  %8776 = vmatpush1.msra.mxu0 %v8775
  %8777 = vmatprep.subr.mxu0 0.0
  %v8778 = vand.u32 %v2635, 4294901760
  %8779 = vmatpush1.msra.mxu0 %v8778
  %8780 = vmatprep.subr.mxu0 0.0
  %v8781 = vand.u32 %v2636, 4294901760
  %8782 = vmatpush1.msra.mxu0 %v8781
  %8783 = vmatprep.subr.mxu0 0.0
  %v8784 = vand.u32 %v2637, 4294901760
  %8785 = vmatpush1.msra.mxu0 %v8784
  %8786 = vmatprep.subr.mxu0 0.0
  %v8787 = vand.u32 %v2638, 4294901760
  %8788 = vmatpush1.msra.mxu0 %v8787
  %8789 = vmatprep.subr.mxu0 0.0
  %v8790 = vand.u32 %v2639, 4294901760
  %8791 = vmatpush1.msra.mxu0 %v8790
  %8792 = vmatprep.subr.mxu0 0.0
  %v8793 = vand.u32 %v2640, 4294901760
  %8794 = vmatpush1.msra.mxu0 %v8793
  %8795 = vmatprep.subr.mxu0 0.0
  %v8796 = vand.u32 %v2641, 4294901760
  %8797 = vmatpush1.msra.mxu0 %v8796
  %8798 = vmatprep.subr.mxu0 0.0
  %v8799 = vand.u32 %v2642, 4294901760
  %8800 = vmatpush1.msra.mxu0 %v8799
  %8801 = vmatprep.subr.mxu0 0.0
  %v8802 = vand.u32 %v2643, 4294901760
  %8803 = vmatpush1.msra.mxu0 %v8802
  %8804 = vmatprep.subr.mxu0 0.0
  %v8805 = vand.u32 %v2644, 4294901760
  %8806 = vmatpush1.msra.mxu0 %v8805
  %8807 = vmatprep.subr.mxu0 0.0
  %v8808 = vand.u32 %v2645, 4294901760
  %8809 = vmatpush1.msra.mxu0 %v8808
  %8810 = vmatprep.subr.mxu0 0.0
  %v8811 = vand.u32 %v2646, 4294901760
  %8812 = vmatpush1.msra.mxu0 %v8811
  %8813 = vmatprep.subr.mxu0 0.0
  %v8814 = vand.u32 %v2647, 4294901760
  %8815 = vmatpush1.msra.mxu0 %v8814
  %8816 = vmatprep.subr.mxu0 0.0
  %v8817 = vand.u32 %v2648, 4294901760
  %8818 = vmatpush1.msra.mxu0 %v8817
  %8819 = vmatprep.subr.mxu0 0.0
  %v8820 = vand.u32 %v2649, 4294901760
  %8821 = vmatpush1.msra.mxu0 %v8820
  %v8822 = vand.u32 %v1847, 4294901760
  %v8823 = vsub.f32 %v1847, %v8822
  %v8824 = vand.u32 %v8823, 4294901760
  %8825 = vmatprep.mubr.f32.mxu0 %v8824
  %v8826 = vand.u32 %v1591, 4294901760
  %v8827 = vsub.f32 %v1591, %v8826
  %v8828 = vand.u32 %v8827, 4294901760
  %8829 = vmatmul.mubr.f32.gmra.mrb[0].mxu0 %v8828
  %v8830 = vpop.f32.mrb[0].mxu0
  %v8831 = vadd.f32 %v8588, %v8830
  %v8832 = vpop.f32.mrb[0].mxu0
  %v8833 = vand.u32 %v1861, 4294901760
  %v8834 = vsub.f32 %v1861, %v8833
  %v8835 = vand.u32 %v8834, 4294901760
  %8836 = vmatprep.mubr.f32.mxu0 %v8835
  %v8837 = vand.u32 %v1605, 4294901760
  %v8838 = vsub.f32 %v1605, %v8837
  %v8839 = vand.u32 %v8838, 4294901760
  %8840 = vmatmul.mubr.f32.gmra.mrb[0].mxu0 %v8839
  %v8841 = vpop.f32.mrb[0].mxu0
  %v8842 = vadd.f32 %v8597, %v8841
  %v8843 = vpop.f32.mrb[0].mxu0
  %v8844 = vand.u32 %v1875, 4294901760
  %v8845 = vsub.f32 %v1875, %v8844
  %v8846 = vand.u32 %v8845, 4294901760
  %8847 = vmatprep.mubr.f32.mxu0 %v8846
  %v8848 = vand.u32 %v1619, 4294901760
  %v8849 = vsub.f32 %v1619, %v8848
  %v8850 = vand.u32 %v8849, 4294901760
  %8851 = vmatmul.mubr.f32.gmra.mrb[0].mxu0 %v8850
  %v8852 = vpop.f32.mrb[0].mxu0
  %v8853 = vadd.f32 %v8606, %v8852
  %v8854 = vpop.f32.mrb[0].mxu0
  %v8855 = vand.u32 %v1889, 4294901760
  %v8856 = vsub.f32 %v1889, %v8855
  %v8857 = vand.u32 %v8856, 4294901760
  %8858 = vmatprep.mubr.f32.mxu0 %v8857
  %v8859 = vand.u32 %v1633, 4294901760
  %v8860 = vsub.f32 %v1633, %v8859
  %v8861 = vand.u32 %v8860, 4294901760
  %8862 = vmatmul.mubr.f32.gmra.mrb[0].mxu0 %v8861
  %v8863 = vpop.f32.mrb[0].mxu0
  %v8864 = vadd.f32 %v8615, %v8863
  %v8865 = vpop.f32.mrb[0].mxu0
  %v8866 = vand.u32 %v1903, 4294901760
  %v8867 = vsub.f32 %v1903, %v8866
  %v8868 = vand.u32 %v8867, 4294901760
  %8869 = vmatprep.mubr.f32.mxu0 %v8868
  %v8870 = vand.u32 %v1647, 4294901760
  %v8871 = vsub.f32 %v1647, %v8870
  %v8872 = vand.u32 %v8871, 4294901760
  %8873 = vmatmul.mubr.f32.gmra.mrb[0].mxu0 %v8872
  %v8874 = vpop.f32.mrb[0].mxu0
  %v8875 = vadd.f32 %v8624, %v8874
  %v8876 = vpop.f32.mrb[0].mxu0
  %v8877 = vand.u32 %v1917, 4294901760
  %v8878 = vsub.f32 %v1917, %v8877
  %v8879 = vand.u32 %v8878, 4294901760
  %8880 = vmatprep.mubr.f32.mxu0 %v8879
  %v8881 = vand.u32 %v1661, 4294901760
  %v8882 = vsub.f32 %v1661, %v8881
  %v8883 = vand.u32 %v8882, 4294901760
  %8884 = vmatmul.mubr.f32.gmra.mrb[0].mxu0 %v8883
  %v8885 = vpop.f32.mrb[0].mxu0
  %v8886 = vadd.f32 %v8633, %v8885
  %v8887 = vpop.f32.mrb[0].mxu0
  %v8888 = vand.u32 %v2363, 4294901760
  %v8889 = vsub.f32 %v2363, %v8888
  %v8890 = vand.u32 %v8889, 4294901760
  %8891 = vmatprep.mubr.f32.mxu0 %v8890
  %v8892 = vand.u32 %v2331, 4294901760
  %v8893 = vsub.f32 %v2331, %v8892
  %v8894 = vand.u32 %v8893, 4294901760
  %8895 = vmatmul.mubr.f32.gmra.mrb[0].mxu0 %v8894
  %v8896 = vpop.f32.mrb[0].mxu0
  %v8897 = vadd.f32 %v8642, %v8896
  %v8898 = vpop.f32.mrb[0].mxu0
  %v8899 = vand.u32 %v2473, 4294901760
  %v8900 = vsub.f32 %v2473, %v8899
  %v8901 = vand.u32 %v8900, 4294901760
  %8902 = vmatprep.mubr.f32.mxu0 %v8901
  %v8903 = vand.u32 %v2441, 4294901760
  %v8904 = vsub.f32 %v2441, %v8903
  %v8905 = vand.u32 %v8904, 4294901760
  %8906 = vmatmul.mubr.f32.gmra.mrb[0].mxu0 %v8905
  %v8907 = vpop.f32.mrb[0].mxu0
  %v8908 = vadd.f32 %v8651, %v8907
  %v8909 = vpop.f32.mrb[0].mxu0
  %v8910 = vand.u32 %v1959, 4294901760
  %v8911 = vsub.f32 %v1959, %v8910
  %v8912 = vand.u32 %v8911, 4294901760
  %8913 = vmatprep.mubr.f32.mxu0 %v8912
  %v8914 = vand.u32 %v1703, 4294901760
  %v8915 = vsub.f32 %v1703, %v8914
  %v8916 = vand.u32 %v8915, 4294901760
  %8917 = vmatmul.mubr.f32.gmra.mrb[0].mxu0 %v8916
  %v8918 = vpop.f32.mrb[0].mxu0
  %v8919 = vadd.f32 %v8660, %v8918
  %v8920 = vpop.f32.mrb[0].mxu0
  %v8921 = vand.u32 %v1973, 4294901760
  %v8922 = vsub.f32 %v1973, %v8921
  %v8923 = vand.u32 %v8922, 4294901760
  %8924 = vmatprep.mubr.f32.mxu0 %v8923
  %v8925 = vand.u32 %v1717, 4294901760
  %v8926 = vsub.f32 %v1717, %v8925
  %v8927 = vand.u32 %v8926, 4294901760
  %8928 = vmatmul.mubr.f32.gmra.mrb[0].mxu0 %v8927
  %v8929 = vpop.f32.mrb[0].mxu0
  %v8930 = vadd.f32 %v8669, %v8929
  %v8931 = vpop.f32.mrb[0].mxu0
  %v8932 = vand.u32 %v1987, 4294901760
  %v8933 = vsub.f32 %v1987, %v8932
  %v8934 = vand.u32 %v8933, 4294901760
  %8935 = vmatprep.mubr.f32.mxu0 %v8934
  %v8936 = vand.u32 %v1731, 4294901760
  %v8937 = vsub.f32 %v1731, %v8936
  %v8938 = vand.u32 %v8937, 4294901760
  %8939 = vmatmul.mubr.f32.gmra.mrb[0].mxu0 %v8938
  %v8940 = vpop.f32.mrb[0].mxu0
  %v8941 = vadd.f32 %v8678, %v8940
  %v8942 = vpop.f32.mrb[0].mxu0
  %v8943 = vand.u32 %v2001, 4294901760
  %v8944 = vsub.f32 %v2001, %v8943
  %v8945 = vand.u32 %v8944, 4294901760
  %8946 = vmatprep.mubr.f32.mxu0 %v8945
  %v8947 = vand.u32 %v1745, 4294901760
  %v8948 = vsub.f32 %v1745, %v8947
  %v8949 = vand.u32 %v8948, 4294901760
  %8950 = vmatmul.mubr.f32.gmra.mrb[0].mxu0 %v8949
  %v8951 = vpop.f32.mrb[0].mxu0
  %v8952 = vadd.f32 %v8687, %v8951
  %v8953 = vpop.f32.mrb[0].mxu0
  %v8954 = vand.u32 %v2015, 4294901760
  %v8955 = vsub.f32 %v2015, %v8954
  %v8956 = vand.u32 %v8955, 4294901760
  %8957 = vmatprep.mubr.f32.mxu0 %v8956
  %v8958 = vand.u32 %v1759, 4294901760
  %v8959 = vsub.f32 %v1759, %v8958
  %v8960 = vand.u32 %v8959, 4294901760
  %8961 = vmatmul.mubr.f32.gmra.mrb[0].mxu0 %v8960
  %v8962 = vpop.f32.mrb[0].mxu0
  %v8963 = vadd.f32 %v8696, %v8962
  %v8964 = vpop.f32.mrb[0].mxu0
  %v8965 = vand.u32 %v2029, 4294901760
  %v8966 = vsub.f32 %v2029, %v8965
  %v8967 = vand.u32 %v8966, 4294901760
  %8968 = vmatprep.mubr.f32.mxu0 %v8967
  %v8969 = vand.u32 %v1773, 4294901760
  %v8970 = vsub.f32 %v1773, %v8969
  %v8971 = vand.u32 %v8970, 4294901760
  %8972 = vmatmul.mubr.f32.gmra.mrb[0].mxu0 %v8971
  %v8973 = vpop.f32.mrb[0].mxu0
  %v8974 = vadd.f32 %v8705, %v8973
  %v8975 = vpop.f32.mrb[0].mxu0
  %v8976 = vand.u32 %v2377, 4294901760
  %v8977 = vsub.f32 %v2377, %v8976
  %v8978 = vand.u32 %v8977, 4294901760
  %8979 = vmatprep.mubr.f32.mxu0 %v8978
  %v8980 = vand.u32 %v2345, 4294901760
  %v8981 = vsub.f32 %v2345, %v8980
  %v8982 = vand.u32 %v8981, 4294901760
  %8983 = vmatmul.mubr.f32.gmra.mrb[0].mxu0 %v8982
  %v8984 = vpop.f32.mrb[0].mxu0
  %v8985 = vadd.f32 %v8714, %v8984
  %v8986 = vpop.f32.mrb[0].mxu0
  %v8987 = vand.u32 %v2487, 4294901760
  %v8988 = vsub.f32 %v2487, %v8987
  %v8989 = vand.u32 %v8988, 4294901760
  %8990 = vmatprep.mubr.f32.mxu0 %v8989
  %v8991 = vand.u32 %v2455, 4294901760
  %v8992 = vsub.f32 %v2455, %v8991
  %v8993 = vand.u32 %v8992, 4294901760
  %8994 = vmatmul.mubr.f32.gmra.mrb[0].mxu0 %v8993
  %v8995 = vpop.f32.mrb[0].mxu0
  %v8996 = vadd.f32 %v8723, %v8995
  %v8997 = vpop.f32.mrb[0].mxu0
  %8998 = vdwg.mxu0
  %8999 = vmatprep.subr.mxu0 0.0
  %v9000 = vand.u32 %v2618, 4294901760
  %v9001 = vsub.f32 %v2618, %v9000
  %v9002 = vand.u32 %v9001, 4294901760
  %9003 = vmatpush1.msra.mxu0 %v9002
  %9004 = vmatprep.subr.mxu0 0.0
  %v9005 = vand.u32 %v2619, 4294901760
  %v9006 = vsub.f32 %v2619, %v9005
  %v9007 = vand.u32 %v9006, 4294901760
  %9008 = vmatpush1.msra.mxu0 %v9007
  %9009 = vmatprep.subr.mxu0 0.0
  %v9010 = vand.u32 %v2620, 4294901760
  %v9011 = vsub.f32 %v2620, %v9010
  %v9012 = vand.u32 %v9011, 4294901760
  %9013 = vmatpush1.msra.mxu0 %v9012
  %9014 = vmatprep.subr.mxu0 0.0
  %v9015 = vand.u32 %v2621, 4294901760
  %v9016 = vsub.f32 %v2621, %v9015
  %v9017 = vand.u32 %v9016, 4294901760
  %9018 = vmatpush1.msra.mxu0 %v9017
  %9019 = vmatprep.subr.mxu0 0.0
  %v9020 = vand.u32 %v2622, 4294901760
  %v9021 = vsub.f32 %v2622, %v9020
  %v9022 = vand.u32 %v9021, 4294901760
  %9023 = vmatpush1.msra.mxu0 %v9022
  %9024 = vmatprep.subr.mxu0 0.0
  %v9025 = vand.u32 %v2623, 4294901760
  %v9026 = vsub.f32 %v2623, %v9025
  %v9027 = vand.u32 %v9026, 4294901760
  %9028 = vmatpush1.msra.mxu0 %v9027
  %9029 = vmatprep.subr.mxu0 0.0
  %v9030 = vand.u32 %v2624, 4294901760
  %v9031 = vsub.f32 %v2624, %v9030
  %v9032 = vand.u32 %v9031, 4294901760
  %9033 = vmatpush1.msra.mxu0 %v9032
  %9034 = vmatprep.subr.mxu0 0.0
  %v9035 = vand.u32 %v2625, 4294901760
  %v9036 = vsub.f32 %v2625, %v9035
  %v9037 = vand.u32 %v9036, 4294901760
  %9038 = vmatpush1.msra.mxu0 %v9037
  %9039 = vmatprep.subr.mxu0 0.0
  %v9040 = vand.u32 %v2626, 4294901760
  %v9041 = vsub.f32 %v2626, %v9040
  %v9042 = vand.u32 %v9041, 4294901760
  %9043 = vmatpush1.msra.mxu0 %v9042
  %9044 = vmatprep.subr.mxu0 0.0
  %v9045 = vand.u32 %v2627, 4294901760
  %v9046 = vsub.f32 %v2627, %v9045
  %v9047 = vand.u32 %v9046, 4294901760
  %9048 = vmatpush1.msra.mxu0 %v9047
  %9049 = vmatprep.subr.mxu0 0.0
  %v9050 = vand.u32 %v2628, 4294901760
  %v9051 = vsub.f32 %v2628, %v9050
  %v9052 = vand.u32 %v9051, 4294901760
  %9053 = vmatpush1.msra.mxu0 %v9052
  %9054 = vmatprep.subr.mxu0 0.0
  %v9055 = vand.u32 %v2629, 4294901760
  %v9056 = vsub.f32 %v2629, %v9055
  %v9057 = vand.u32 %v9056, 4294901760
  %9058 = vmatpush1.msra.mxu0 %v9057
  %9059 = vmatprep.subr.mxu0 0.0
  %v9060 = vand.u32 %v2630, 4294901760
  %v9061 = vsub.f32 %v2630, %v9060
  %v9062 = vand.u32 %v9061, 4294901760
  %9063 = vmatpush1.msra.mxu0 %v9062
  %9064 = vmatprep.subr.mxu0 0.0
  %v9065 = vand.u32 %v2631, 4294901760
  %v9066 = vsub.f32 %v2631, %v9065
  %v9067 = vand.u32 %v9066, 4294901760
  %9068 = vmatpush1.msra.mxu0 %v9067
  %9069 = vmatprep.subr.mxu0 0.0
  %v9070 = vand.u32 %v2632, 4294901760
  %v9071 = vsub.f32 %v2632, %v9070
  %v9072 = vand.u32 %v9071, 4294901760
  %9073 = vmatpush1.msra.mxu0 %v9072
  %9074 = vmatprep.subr.mxu0 0.0
  %v9075 = vand.u32 %v2633, 4294901760
  %v9076 = vsub.f32 %v2633, %v9075
  %v9077 = vand.u32 %v9076, 4294901760
  %9078 = vmatpush1.msra.mxu0 %v9077
  %9079 = vmatprep.subr.mxu0 0.0
  %v9080 = vand.u32 %v2634, 4294901760
  %v9081 = vsub.f32 %v2634, %v9080
  %v9082 = vand.u32 %v9081, 4294901760
  %9083 = vmatpush1.msra.mxu0 %v9082
  %9084 = vmatprep.subr.mxu0 0.0
  %v9085 = vand.u32 %v2635, 4294901760
  %v9086 = vsub.f32 %v2635, %v9085
  %v9087 = vand.u32 %v9086, 4294901760
  %9088 = vmatpush1.msra.mxu0 %v9087
  %9089 = vmatprep.subr.mxu0 0.0
  %v9090 = vand.u32 %v2636, 4294901760
  %v9091 = vsub.f32 %v2636, %v9090
  %v9092 = vand.u32 %v9091, 4294901760
  %9093 = vmatpush1.msra.mxu0 %v9092
  %9094 = vmatprep.subr.mxu0 0.0
  %v9095 = vand.u32 %v2637, 4294901760
  %v9096 = vsub.f32 %v2637, %v9095
  %v9097 = vand.u32 %v9096, 4294901760
  %9098 = vmatpush1.msra.mxu0 %v9097
  %9099 = vmatprep.subr.mxu0 0.0
  %v9100 = vand.u32 %v2638, 4294901760
  %v9101 = vsub.f32 %v2638, %v9100
  %v9102 = vand.u32 %v9101, 4294901760
  %9103 = vmatpush1.msra.mxu0 %v9102
  %9104 = vmatprep.subr.mxu0 0.0
  %v9105 = vand.u32 %v2639, 4294901760
  %v9106 = vsub.f32 %v2639, %v9105
  %v9107 = vand.u32 %v9106, 4294901760
  %9108 = vmatpush1.msra.mxu0 %v9107
  %9109 = vmatprep.subr.mxu0 0.0
  %v9110 = vand.u32 %v2640, 4294901760
  %v9111 = vsub.f32 %v2640, %v9110
  %v9112 = vand.u32 %v9111, 4294901760
  %9113 = vmatpush1.msra.mxu0 %v9112
  %9114 = vmatprep.subr.mxu0 0.0
  %v9115 = vand.u32 %v2641, 4294901760
  %v9116 = vsub.f32 %v2641, %v9115
  %v9117 = vand.u32 %v9116, 4294901760
  %9118 = vmatpush1.msra.mxu0 %v9117
  %9119 = vmatprep.subr.mxu0 0.0
  %v9120 = vand.u32 %v2642, 4294901760
  %v9121 = vsub.f32 %v2642, %v9120
  %v9122 = vand.u32 %v9121, 4294901760
  %9123 = vmatpush1.msra.mxu0 %v9122
  %9124 = vmatprep.subr.mxu0 0.0
  %v9125 = vand.u32 %v2643, 4294901760
  %v9126 = vsub.f32 %v2643, %v9125
  %v9127 = vand.u32 %v9126, 4294901760
  %9128 = vmatpush1.msra.mxu0 %v9127
  %9129 = vmatprep.subr.mxu0 0.0
  %v9130 = vand.u32 %v2644, 4294901760
  %v9131 = vsub.f32 %v2644, %v9130
  %v9132 = vand.u32 %v9131, 4294901760
  %9133 = vmatpush1.msra.mxu0 %v9132
  %9134 = vmatprep.subr.mxu0 0.0
  %v9135 = vand.u32 %v2645, 4294901760
  %v9136 = vsub.f32 %v2645, %v9135
  %v9137 = vand.u32 %v9136, 4294901760
  %9138 = vmatpush1.msra.mxu0 %v9137
  %9139 = vmatprep.subr.mxu0 0.0
  %v9140 = vand.u32 %v2646, 4294901760
  %v9141 = vsub.f32 %v2646, %v9140
  %v9142 = vand.u32 %v9141, 4294901760
  %9143 = vmatpush1.msra.mxu0 %v9142
  %9144 = vmatprep.subr.mxu0 0.0
  %v9145 = vand.u32 %v2647, 4294901760
  %v9146 = vsub.f32 %v2647, %v9145
  %v9147 = vand.u32 %v9146, 4294901760
  %9148 = vmatpush1.msra.mxu0 %v9147
  %9149 = vmatprep.subr.mxu0 0.0
  %v9150 = vand.u32 %v2648, 4294901760
  %v9151 = vsub.f32 %v2648, %v9150
  %v9152 = vand.u32 %v9151, 4294901760
  %9153 = vmatpush1.msra.mxu0 %v9152
  %9154 = vmatprep.subr.mxu0 0.0
  %v9155 = vand.u32 %v2649, 4294901760
  %v9156 = vsub.f32 %v2649, %v9155
  %v9157 = vand.u32 %v9156, 4294901760
  %9158 = vmatpush1.msra.mxu0 %v9157
  %v9159 = vand.u32 %v1847, 4294901760
  %9160 = vmatprep.mubr.f32.mxu0 %v9159
  %v9161 = vand.u32 %v1591, 4294901760
  %9162 = vmatmul.mubr.f32.gmra.mrb[0].mxu0 %v9161
  %v9163 = vpop.f32.mrb[0].mxu0
  %v9164 = vadd.f32 %v8831, %v9163
  %v9165 = vpop.f32.mrb[0].mxu0
  %v9166 = vand.u32 %v1861, 4294901760
  %9167 = vmatprep.mubr.f32.mxu0 %v9166
  %v9168 = vand.u32 %v1605, 4294901760
  %9169 = vmatmul.mubr.f32.gmra.mrb[0].mxu0 %v9168
  %v9170 = vpop.f32.mrb[0].mxu0
  %v9171 = vadd.f32 %v8842, %v9170
  %v9172 = vpop.f32.mrb[0].mxu0
  %v9173 = vand.u32 %v1875, 4294901760
  %9174 = vmatprep.mubr.f32.mxu0 %v9173
  %v9175 = vand.u32 %v1619, 4294901760
  %9176 = vmatmul.mubr.f32.gmra.mrb[0].mxu0 %v9175
  %v9177 = vpop.f32.mrb[0].mxu0
  %v9178 = vadd.f32 %v8853, %v9177
  %v9179 = vpop.f32.mrb[0].mxu0
  %v9180 = vand.u32 %v1889, 4294901760
  %9181 = vmatprep.mubr.f32.mxu0 %v9180
  %v9182 = vand.u32 %v1633, 4294901760
  %9183 = vmatmul.mubr.f32.gmra.mrb[0].mxu0 %v9182
  %v9184 = vpop.f32.mrb[0].mxu0
  %v9185 = vadd.f32 %v8864, %v9184
  %v9186 = vpop.f32.mrb[0].mxu0
  %v9187 = vand.u32 %v1903, 4294901760
  %9188 = vmatprep.mubr.f32.mxu0 %v9187
  %v9189 = vand.u32 %v1647, 4294901760
  %9190 = vmatmul.mubr.f32.gmra.mrb[0].mxu0 %v9189
  %v9191 = vpop.f32.mrb[0].mxu0
  %v9192 = vadd.f32 %v8875, %v9191
  %v9193 = vpop.f32.mrb[0].mxu0
  %v9194 = vand.u32 %v1917, 4294901760
  %9195 = vmatprep.mubr.f32.mxu0 %v9194
  %v9196 = vand.u32 %v1661, 4294901760
  %9197 = vmatmul.mubr.f32.gmra.mrb[0].mxu0 %v9196
  %v9198 = vpop.f32.mrb[0].mxu0
  %v9199 = vadd.f32 %v8886, %v9198
  %v9200 = vpop.f32.mrb[0].mxu0
  %v9201 = vand.u32 %v2363, 4294901760
  %9202 = vmatprep.mubr.f32.mxu0 %v9201
  %v9203 = vand.u32 %v2331, 4294901760
  %9204 = vmatmul.mubr.f32.gmra.mrb[0].mxu0 %v9203
  %v9205 = vpop.f32.mrb[0].mxu0
  %v9206 = vadd.f32 %v8897, %v9205
  %v9207 = vpop.f32.mrb[0].mxu0
  %v9208 = vand.u32 %v2473, 4294901760
  %9209 = vmatprep.mubr.f32.mxu0 %v9208
  %v9210 = vand.u32 %v2441, 4294901760
  %9211 = vmatmul.mubr.f32.gmra.mrb[0].mxu0 %v9210
  %v9212 = vpop.f32.mrb[0].mxu0
  %v9213 = vadd.f32 %v8908, %v9212
  %v9214 = vpop.f32.mrb[0].mxu0
  %v9215 = vand.u32 %v1959, 4294901760
  %9216 = vmatprep.mubr.f32.mxu0 %v9215
  %v9217 = vand.u32 %v1703, 4294901760
  %9218 = vmatmul.mubr.f32.gmra.mrb[0].mxu0 %v9217
  %v9219 = vpop.f32.mrb[0].mxu0
  %v9220 = vadd.f32 %v8919, %v9219
  %v9221 = vpop.f32.mrb[0].mxu0
  %v9222 = vand.u32 %v1973, 4294901760
  %9223 = vmatprep.mubr.f32.mxu0 %v9222
  %v9224 = vand.u32 %v1717, 4294901760
  %9225 = vmatmul.mubr.f32.gmra.mrb[0].mxu0 %v9224
  %v9226 = vpop.f32.mrb[0].mxu0
  %v9227 = vadd.f32 %v8930, %v9226
  %v9228 = vpop.f32.mrb[0].mxu0
  %v9229 = vand.u32 %v1987, 4294901760
  %9230 = vmatprep.mubr.f32.mxu0 %v9229
  %v9231 = vand.u32 %v1731, 4294901760
  %9232 = vmatmul.mubr.f32.gmra.mrb[0].mxu0 %v9231
  %v9233 = vpop.f32.mrb[0].mxu0
  %v9234 = vadd.f32 %v8941, %v9233
  %v9235 = vpop.f32.mrb[0].mxu0
  %v9236 = vand.u32 %v2001, 4294901760
  %9237 = vmatprep.mubr.f32.mxu0 %v9236
  %v9238 = vand.u32 %v1745, 4294901760
  %9239 = vmatmul.mubr.f32.gmra.mrb[0].mxu0 %v9238
  %v9240 = vpop.f32.mrb[0].mxu0
  %v9241 = vadd.f32 %v8952, %v9240
  %v9242 = vpop.f32.mrb[0].mxu0
  %v9243 = vand.u32 %v2015, 4294901760
  %9244 = vmatprep.mubr.f32.mxu0 %v9243
  %v9245 = vand.u32 %v1759, 4294901760
  %9246 = vmatmul.mubr.f32.gmra.mrb[0].mxu0 %v9245
  %v9247 = vpop.f32.mrb[0].mxu0
  %v9248 = vadd.f32 %v8963, %v9247
  %v9249 = vpop.f32.mrb[0].mxu0
  %v9250 = vand.u32 %v2029, 4294901760
  %9251 = vmatprep.mubr.f32.mxu0 %v9250
  %v9252 = vand.u32 %v1773, 4294901760
  %9253 = vmatmul.mubr.f32.gmra.mrb[0].mxu0 %v9252
  %v9254 = vpop.f32.mrb[0].mxu0
  %v9255 = vadd.f32 %v8974, %v9254
  %v9256 = vpop.f32.mrb[0].mxu0
  %v9257 = vand.u32 %v2377, 4294901760
  %9258 = vmatprep.mubr.f32.mxu0 %v9257
  %v9259 = vand.u32 %v2345, 4294901760
  %9260 = vmatmul.mubr.f32.gmra.mrb[0].mxu0 %v9259
  %v9261 = vpop.f32.mrb[0].mxu0
  %v9262 = vadd.f32 %v8985, %v9261
  %v9263 = vpop.f32.mrb[0].mxu0
  %v9264 = vand.u32 %v2487, 4294901760
  %9265 = vmatprep.mubr.f32.mxu0 %v9264
  %v9266 = vand.u32 %v2455, 4294901760
  %9267 = vmatmul.mubr.f32.gmra.mrb[0].mxu0 %v9266
  %v9268 = vpop.f32.mrb[0].mxu0
  %v9269 = vadd.f32 %v8996, %v9268
  %v9270 = vpop.f32.mrb[0].mxu0
  %9271 = vdwg.mxu0
  %9272 = vmatprep.subr.mxu0 0.0
  %v9273 = vand.u32 %v2618, 4294901760
  %9274 = vmatpush1.msra.mxu0 %v9273
  %9275 = vmatprep.subr.mxu0 0.0
  %v9276 = vand.u32 %v2619, 4294901760
  %9277 = vmatpush1.msra.mxu0 %v9276
  %9278 = vmatprep.subr.mxu0 0.0
  %v9279 = vand.u32 %v2620, 4294901760
  %9280 = vmatpush1.msra.mxu0 %v9279
  %9281 = vmatprep.subr.mxu0 0.0
  %v9282 = vand.u32 %v2621, 4294901760
  %9283 = vmatpush1.msra.mxu0 %v9282
  %9284 = vmatprep.subr.mxu0 0.0
  %v9285 = vand.u32 %v2622, 4294901760
  %9286 = vmatpush1.msra.mxu0 %v9285
  %9287 = vmatprep.subr.mxu0 0.0
  %v9288 = vand.u32 %v2623, 4294901760
  %9289 = vmatpush1.msra.mxu0 %v9288
  %9290 = vmatprep.subr.mxu0 0.0
  %v9291 = vand.u32 %v2624, 4294901760
  %9292 = vmatpush1.msra.mxu0 %v9291
  %9293 = vmatprep.subr.mxu0 0.0
  %v9294 = vand.u32 %v2625, 4294901760
  %9295 = vmatpush1.msra.mxu0 %v9294
  %9296 = vmatprep.subr.mxu0 0.0
  %v9297 = vand.u32 %v2626, 4294901760
  %9298 = vmatpush1.msra.mxu0 %v9297
  %9299 = vmatprep.subr.mxu0 0.0
  %v9300 = vand.u32 %v2627, 4294901760
  %9301 = vmatpush1.msra.mxu0 %v9300
  %9302 = vmatprep.subr.mxu0 0.0
  %v9303 = vand.u32 %v2628, 4294901760
  %9304 = vmatpush1.msra.mxu0 %v9303
  %9305 = vmatprep.subr.mxu0 0.0
  %v9306 = vand.u32 %v2629, 4294901760
  %9307 = vmatpush1.msra.mxu0 %v9306
  %9308 = vmatprep.subr.mxu0 0.0
  %v9309 = vand.u32 %v2630, 4294901760
  %9310 = vmatpush1.msra.mxu0 %v9309
  %9311 = vmatprep.subr.mxu0 0.0
  %v9312 = vand.u32 %v2631, 4294901760
  %9313 = vmatpush1.msra.mxu0 %v9312
  %9314 = vmatprep.subr.mxu0 0.0
  %v9315 = vand.u32 %v2632, 4294901760
  %9316 = vmatpush1.msra.mxu0 %v9315
  %9317 = vmatprep.subr.mxu0 0.0
  %v9318 = vand.u32 %v2633, 4294901760
  %9319 = vmatpush1.msra.mxu0 %v9318
  %9320 = vmatprep.subr.mxu0 0.0
  %v9321 = vand.u32 %v2634, 4294901760
  %9322 = vmatpush1.msra.mxu0 %v9321
  %9323 = vmatprep.subr.mxu0 0.0
  %v9324 = vand.u32 %v2635, 4294901760
  %9325 = vmatpush1.msra.mxu0 %v9324
  %9326 = vmatprep.subr.mxu0 0.0
  %v9327 = vand.u32 %v2636, 4294901760
  %9328 = vmatpush1.msra.mxu0 %v9327
  %9329 = vmatprep.subr.mxu0 0.0
  %v9330 = vand.u32 %v2637, 4294901760
  %9331 = vmatpush1.msra.mxu0 %v9330
  %9332 = vmatprep.subr.mxu0 0.0
  %v9333 = vand.u32 %v2638, 4294901760
  %9334 = vmatpush1.msra.mxu0 %v9333
  %9335 = vmatprep.subr.mxu0 0.0
  %v9336 = vand.u32 %v2639, 4294901760
  %9337 = vmatpush1.msra.mxu0 %v9336
  %9338 = vmatprep.subr.mxu0 0.0
  %v9339 = vand.u32 %v2640, 4294901760
  %9340 = vmatpush1.msra.mxu0 %v9339
  %9341 = vmatprep.subr.mxu0 0.0
  %v9342 = vand.u32 %v2641, 4294901760
  %9343 = vmatpush1.msra.mxu0 %v9342
  %9344 = vmatprep.subr.mxu0 0.0
  %v9345 = vand.u32 %v2642, 4294901760
  %9346 = vmatpush1.msra.mxu0 %v9345
  %9347 = vmatprep.subr.mxu0 0.0
  %v9348 = vand.u32 %v2643, 4294901760
  %9349 = vmatpush1.msra.mxu0 %v9348
  %9350 = vmatprep.subr.mxu0 0.0
  %v9351 = vand.u32 %v2644, 4294901760
  %9352 = vmatpush1.msra.mxu0 %v9351
  %9353 = vmatprep.subr.mxu0 0.0
  %v9354 = vand.u32 %v2645, 4294901760
  %9355 = vmatpush1.msra.mxu0 %v9354
  %9356 = vmatprep.subr.mxu0 0.0
  %v9357 = vand.u32 %v2646, 4294901760
  %9358 = vmatpush1.msra.mxu0 %v9357
  %9359 = vmatprep.subr.mxu0 0.0
  %v9360 = vand.u32 %v2647, 4294901760
  %9361 = vmatpush1.msra.mxu0 %v9360
  %9362 = vmatprep.subr.mxu0 0.0
  %v9363 = vand.u32 %v2648, 4294901760
  %9364 = vmatpush1.msra.mxu0 %v9363
  %9365 = vmatprep.subr.mxu0 0.0
  %v9366 = vand.u32 %v2649, 4294901760
  %9367 = vmatpush1.msra.mxu0 %v9366
  %v9368 = vand.u32 %v1847, 4294901760
  %9369 = vmatprep.mubr.f32.mxu0 %v9368
  %v9370 = vand.u32 %v1591, 4294901760
  %9371 = vmatmul.mubr.f32.gmra.mrb[0].mxu0 %v9370
  %v9372 = vpop.f32.mrb[0].mxu0
  %v9373 = vadd.f32 %v9164, %v9372
  %v9374 = vpop.f32.mrb[0].mxu0
  %v9375 = vand.u32 %v1861, 4294901760
  %9376 = vmatprep.mubr.f32.mxu0 %v9375
  %v9377 = vand.u32 %v1605, 4294901760
  %9378 = vmatmul.mubr.f32.gmra.mrb[0].mxu0 %v9377
  %v9379 = vpop.f32.mrb[0].mxu0
  %v9380 = vadd.f32 %v9171, %v9379
  %v9381 = vpop.f32.mrb[0].mxu0
  %v9382 = vand.u32 %v1875, 4294901760
  %9383 = vmatprep.mubr.f32.mxu0 %v9382
  %v9384 = vand.u32 %v1619, 4294901760
  %9385 = vmatmul.mubr.f32.gmra.mrb[0].mxu0 %v9384
  %v9386 = vpop.f32.mrb[0].mxu0
  %v9387 = vadd.f32 %v9178, %v9386
  %v9388 = vpop.f32.mrb[0].mxu0
  %v9389 = vand.u32 %v1889, 4294901760
  %9390 = vmatprep.mubr.f32.mxu0 %v9389
  %v9391 = vand.u32 %v1633, 4294901760
  %9392 = vmatmul.mubr.f32.gmra.mrb[0].mxu0 %v9391
  %v9393 = vpop.f32.mrb[0].mxu0
  %v9394 = vadd.f32 %v9185, %v9393
  %v9395 = vpop.f32.mrb[0].mxu0
  %v9396 = vand.u32 %v1903, 4294901760
  %9397 = vmatprep.mubr.f32.mxu0 %v9396
  %v9398 = vand.u32 %v1647, 4294901760
  %9399 = vmatmul.mubr.f32.gmra.mrb[0].mxu0 %v9398
  %v9400 = vpop.f32.mrb[0].mxu0
  %v9401 = vadd.f32 %v9192, %v9400
  %v9402 = vpop.f32.mrb[0].mxu0
  %v9403 = vand.u32 %v1917, 4294901760
  %9404 = vmatprep.mubr.f32.mxu0 %v9403
  %v9405 = vand.u32 %v1661, 4294901760
  %9406 = vmatmul.mubr.f32.gmra.mrb[0].mxu0 %v9405
  %v9407 = vpop.f32.mrb[0].mxu0
  %v9408 = vadd.f32 %v9199, %v9407
  %v9409 = vpop.f32.mrb[0].mxu0
  %v9410 = vand.u32 %v2363, 4294901760
  %9411 = vmatprep.mubr.f32.mxu0 %v9410
  %v9412 = vand.u32 %v2331, 4294901760
  %9413 = vmatmul.mubr.f32.gmra.mrb[0].mxu0 %v9412
  %v9414 = vpop.f32.mrb[0].mxu0
  %v9415 = vadd.f32 %v9206, %v9414
  %v9416 = vpop.f32.mrb[0].mxu0
  %v9417 = vand.u32 %v2473, 4294901760
  %9418 = vmatprep.mubr.f32.mxu0 %v9417
  %v9419 = vand.u32 %v2441, 4294901760
  %9420 = vmatmul.mubr.f32.gmra.mrb[0].mxu0 %v9419
  %v9421 = vpop.f32.mrb[0].mxu0
  %v9422 = vadd.f32 %v9213, %v9421
  %v9423 = vpop.f32.mrb[0].mxu0
  %v9424 = vand.u32 %v1959, 4294901760
  %9425 = vmatprep.mubr.f32.mxu0 %v9424
  %v9426 = vand.u32 %v1703, 4294901760
  %9427 = vmatmul.mubr.f32.gmra.mrb[0].mxu0 %v9426
  %v9428 = vpop.f32.mrb[0].mxu0
  %v9429 = vadd.f32 %v9220, %v9428
  %v9430 = vpop.f32.mrb[0].mxu0
  %v9431 = vand.u32 %v1973, 4294901760
  %9432 = vmatprep.mubr.f32.mxu0 %v9431
  %v9433 = vand.u32 %v1717, 4294901760
  %9434 = vmatmul.mubr.f32.gmra.mrb[0].mxu0 %v9433
  %v9435 = vpop.f32.mrb[0].mxu0
  %v9436 = vadd.f32 %v9227, %v9435
  %v9437 = vpop.f32.mrb[0].mxu0
  %v9438 = vand.u32 %v1987, 4294901760
  %9439 = vmatprep.mubr.f32.mxu0 %v9438
  %v9440 = vand.u32 %v1731, 4294901760
  %9441 = vmatmul.mubr.f32.gmra.mrb[0].mxu0 %v9440
  %v9442 = vpop.f32.mrb[0].mxu0
  %v9443 = vadd.f32 %v9234, %v9442
  %v9444 = vpop.f32.mrb[0].mxu0
  %v9445 = vand.u32 %v2001, 4294901760
  %9446 = vmatprep.mubr.f32.mxu0 %v9445
  %v9447 = vand.u32 %v1745, 4294901760
  %9448 = vmatmul.mubr.f32.gmra.mrb[0].mxu0 %v9447
  %v9449 = vpop.f32.mrb[0].mxu0
  %v9450 = vadd.f32 %v9241, %v9449
  %v9451 = vpop.f32.mrb[0].mxu0
  %v9452 = vand.u32 %v2015, 4294901760
  %9453 = vmatprep.mubr.f32.mxu0 %v9452
  %v9454 = vand.u32 %v1759, 4294901760
  %9455 = vmatmul.mubr.f32.gmra.mrb[0].mxu0 %v9454
  %v9456 = vpop.f32.mrb[0].mxu0
  %v9457 = vadd.f32 %v9248, %v9456
  %v9458 = vpop.f32.mrb[0].mxu0
  %v9459 = vand.u32 %v2029, 4294901760
  %9460 = vmatprep.mubr.f32.mxu0 %v9459
  %v9461 = vand.u32 %v1773, 4294901760
  %9462 = vmatmul.mubr.f32.gmra.mrb[0].mxu0 %v9461
  %v9463 = vpop.f32.mrb[0].mxu0
  %v9464 = vadd.f32 %v9255, %v9463
  %v9465 = vpop.f32.mrb[0].mxu0
  %v9466 = vand.u32 %v2377, 4294901760
  %9467 = vmatprep.mubr.f32.mxu0 %v9466
  %v9468 = vand.u32 %v2345, 4294901760
  %9469 = vmatmul.mubr.f32.gmra.mrb[0].mxu0 %v9468
  %v9470 = vpop.f32.mrb[0].mxu0
  %v9471 = vadd.f32 %v9262, %v9470
  %v9472 = vpop.f32.mrb[0].mxu0
  %v9473 = vand.u32 %v2487, 4294901760
  %9474 = vmatprep.mubr.f32.mxu0 %v9473
  %v9475 = vand.u32 %v2455, 4294901760
  %9476 = vmatmul.mubr.f32.gmra.mrb[0].mxu0 %v9475
  %v9477 = vpop.f32.mrb[0].mxu0
  %v9478 = vadd.f32 %v9269, %v9477
  %v9479 = vpop.f32.mrb[0].mxu0
  %9480 = vdwg.mxu0
  %9481 = vmatprep.subr.mxu0 0.0
  %v9482 = vand.u32 %v2650, 4294901760
  %9483 = vmatpush1.msra.mxu0 %v9482
  %9484 = vmatprep.subr.mxu0 0.0
  %v9485 = vand.u32 %v2651, 4294901760
  %9486 = vmatpush1.msra.mxu0 %v9485
  %9487 = vmatprep.subr.mxu0 0.0
  %v9488 = vand.u32 %v2652, 4294901760
  %9489 = vmatpush1.msra.mxu0 %v9488
  %9490 = vmatprep.subr.mxu0 0.0
  %v9491 = vand.u32 %v2653, 4294901760
  %9492 = vmatpush1.msra.mxu0 %v9491
  %9493 = vmatprep.subr.mxu0 0.0
  %v9494 = vand.u32 %v2654, 4294901760
  %9495 = vmatpush1.msra.mxu0 %v9494
  %9496 = vmatprep.subr.mxu0 0.0
  %v9497 = vand.u32 %v2655, 4294901760
  %9498 = vmatpush1.msra.mxu0 %v9497
  %9499 = vmatprep.subr.mxu0 0.0
  %v9500 = vand.u32 %v2656, 4294901760
  %9501 = vmatpush1.msra.mxu0 %v9500
  %9502 = vmatprep.subr.mxu0 0.0
  %v9503 = vand.u32 %v2657, 4294901760
  %9504 = vmatpush1.msra.mxu0 %v9503
  %9505 = vmatprep.subr.mxu0 0.0
  %v9506 = vand.u32 %v2658, 4294901760
  %9507 = vmatpush1.msra.mxu0 %v9506
  %9508 = vmatprep.subr.mxu0 0.0
  %v9509 = vand.u32 %v2659, 4294901760
  %9510 = vmatpush1.msra.mxu0 %v9509
  %9511 = vmatprep.subr.mxu0 0.0
  %v9512 = vand.u32 %v2660, 4294901760
  %9513 = vmatpush1.msra.mxu0 %v9512
  %9514 = vmatprep.subr.mxu0 0.0
  %v9515 = vand.u32 %v2661, 4294901760
  %9516 = vmatpush1.msra.mxu0 %v9515
  %9517 = vmatprep.subr.mxu0 0.0
  %v9518 = vand.u32 %v2662, 4294901760
  %9519 = vmatpush1.msra.mxu0 %v9518
  %9520 = vmatprep.subr.mxu0 0.0
  %v9521 = vand.u32 %v2663, 4294901760
  %9522 = vmatpush1.msra.mxu0 %v9521
  %9523 = vmatprep.subr.mxu0 0.0
  %v9524 = vand.u32 %v2664, 4294901760
  %9525 = vmatpush1.msra.mxu0 %v9524
  %9526 = vmatprep.subr.mxu0 0.0
  %v9527 = vand.u32 %v2665, 4294901760
  %9528 = vmatpush1.msra.mxu0 %v9527
  %9529 = vmatprep.subr.mxu0 0.0
  %9530 = vmatpush1.msra.mxu0 0.0
  %9531 = vmatprep.subr.mxu0 0.0
  %9532 = vmatpush1.msra.mxu0 0.0
  %9533 = vmatprep.subr.mxu0 0.0
  %9534 = vmatpush1.msra.mxu0 0.0
  %9535 = vmatprep.subr.mxu0 0.0
  %9536 = vmatpush1.msra.mxu0 0.0
  %9537 = vmatprep.subr.mxu0 0.0
  %9538 = vmatpush1.msra.mxu0 0.0
  %9539 = vmatprep.subr.mxu0 0.0
  %9540 = vmatpush1.msra.mxu0 0.0
  %9541 = vmatprep.subr.mxu0 0.0
  %9542 = vmatpush1.msra.mxu0 0.0
  %9543 = vmatprep.subr.mxu0 0.0
  %9544 = vmatpush1.msra.mxu0 0.0
  %9545 = vmatprep.subr.mxu0 0.0
  %9546 = vmatpush1.msra.mxu0 0.0
  %9547 = vmatprep.subr.mxu0 0.0
  %9548 = vmatpush1.msra.mxu0 0.0
  %9549 = vmatprep.subr.mxu0 0.0
  %9550 = vmatpush1.msra.mxu0 0.0
  %9551 = vmatprep.subr.mxu0 0.0
  %9552 = vmatpush1.msra.mxu0 0.0
  %9553 = vmatprep.subr.mxu0 0.0
  %9554 = vmatpush1.msra.mxu0 0.0
  %9555 = vmatprep.subr.mxu0 0.0
  %9556 = vmatpush1.msra.mxu0 0.0
  %9557 = vmatprep.subr.mxu0 0.0
  %9558 = vmatpush1.msra.mxu0 0.0
  %9559 = vmatprep.subr.mxu0 0.0
  %9560 = vmatpush1.msra.mxu0 0.0
  %9561 = vmatprep.mubr.f32.mxu0 0.0
  %v9562 = vand.u32 %v2103, 4294901760
  %v9563 = vsub.f32 %v2103, %v9562
  %v9564 = vand.u32 %v9563, 4294901760
  %v9565 = vsub.f32 %v9563, %v9564
  %v9566 = vand.u32 %v9565, 4294901760
  %9567 = vmatmul.mubr.f32.gmra.mrb[0].mxu0 %v9566
  %v9568 = vpop.f32.mrb[0].mxu0
  %v9569 = vadd.f32 %v9373, %v9568
  %v9570 = vpop.f32.mrb[0].mxu0
  %9571 = vmatprep.mubr.f32.mxu0 0.0
  %v9572 = vand.u32 %v2117, 4294901760
  %v9573 = vsub.f32 %v2117, %v9572
  %v9574 = vand.u32 %v9573, 4294901760
  %v9575 = vsub.f32 %v9573, %v9574
  %v9576 = vand.u32 %v9575, 4294901760
  %9577 = vmatmul.mubr.f32.gmra.mrb[0].mxu0 %v9576
  %v9578 = vpop.f32.mrb[0].mxu0
  %v9579 = vadd.f32 %v9380, %v9578
  %v9580 = vpop.f32.mrb[0].mxu0
  %9581 = vmatprep.mubr.f32.mxu0 0.0
  %v9582 = vand.u32 %v2131, 4294901760
  %v9583 = vsub.f32 %v2131, %v9582
  %v9584 = vand.u32 %v9583, 4294901760
  %v9585 = vsub.f32 %v9583, %v9584
  %v9586 = vand.u32 %v9585, 4294901760
  %9587 = vmatmul.mubr.f32.gmra.mrb[0].mxu0 %v9586
  %v9588 = vpop.f32.mrb[0].mxu0
  %v9589 = vadd.f32 %v9387, %v9588
  %v9590 = vpop.f32.mrb[0].mxu0
  %9591 = vmatprep.mubr.f32.mxu0 0.0
  %v9592 = vand.u32 %v2145, 4294901760
  %v9593 = vsub.f32 %v2145, %v9592
  %v9594 = vand.u32 %v9593, 4294901760
  %v9595 = vsub.f32 %v9593, %v9594
  %v9596 = vand.u32 %v9595, 4294901760
  %9597 = vmatmul.mubr.f32.gmra.mrb[0].mxu0 %v9596
  %v9598 = vpop.f32.mrb[0].mxu0
  %v9599 = vadd.f32 %v9394, %v9598
  %v9600 = vpop.f32.mrb[0].mxu0
  %9601 = vmatprep.mubr.f32.mxu0 0.0
  %v9602 = vand.u32 %v2159, 4294901760
  %v9603 = vsub.f32 %v2159, %v9602
  %v9604 = vand.u32 %v9603, 4294901760
  %v9605 = vsub.f32 %v9603, %v9604
  %v9606 = vand.u32 %v9605, 4294901760
  %9607 = vmatmul.mubr.f32.gmra.mrb[0].mxu0 %v9606
  %v9608 = vpop.f32.mrb[0].mxu0
  %v9609 = vadd.f32 %v9401, %v9608
  %v9610 = vpop.f32.mrb[0].mxu0
  %9611 = vmatprep.mubr.f32.mxu0 0.0
  %v9612 = vand.u32 %v2173, 4294901760
  %v9613 = vsub.f32 %v2173, %v9612
  %v9614 = vand.u32 %v9613, 4294901760
  %v9615 = vsub.f32 %v9613, %v9614
  %v9616 = vand.u32 %v9615, 4294901760
  %9617 = vmatmul.mubr.f32.gmra.mrb[0].mxu0 %v9616
  %v9618 = vpop.f32.mrb[0].mxu0
  %v9619 = vadd.f32 %v9408, %v9618
  %v9620 = vpop.f32.mrb[0].mxu0
  %9621 = vmatprep.mubr.f32.mxu0 0.0
  %v9622 = vand.u32 %v2395, 4294901760
  %v9623 = vsub.f32 %v2395, %v9622
  %v9624 = vand.u32 %v9623, 4294901760
  %v9625 = vsub.f32 %v9623, %v9624
  %v9626 = vand.u32 %v9625, 4294901760
  %9627 = vmatmul.mubr.f32.gmra.mrb[0].mxu0 %v9626
  %v9628 = vpop.f32.mrb[0].mxu0
  %v9629 = vadd.f32 %v9415, %v9628
  %v9630 = vpop.f32.mrb[0].mxu0
  %9631 = vmatprep.mubr.f32.mxu0 0.0
  %v9632 = vand.u32 %v2505, 4294901760
  %v9633 = vsub.f32 %v2505, %v9632
  %v9634 = vand.u32 %v9633, 4294901760
  %v9635 = vsub.f32 %v9633, %v9634
  %v9636 = vand.u32 %v9635, 4294901760
  %9637 = vmatmul.mubr.f32.gmra.mrb[0].mxu0 %v9636
  %v9638 = vpop.f32.mrb[0].mxu0
  %v9639 = vadd.f32 %v9422, %v9638
  %v9640 = vpop.f32.mrb[0].mxu0
  %9641 = vmatprep.mubr.f32.mxu0 0.0
  %v9642 = vand.u32 %v2215, 4294901760
  %v9643 = vsub.f32 %v2215, %v9642
  %v9644 = vand.u32 %v9643, 4294901760
  %v9645 = vsub.f32 %v9643, %v9644
  %v9646 = vand.u32 %v9645, 4294901760
  %9647 = vmatmul.mubr.f32.gmra.mrb[0].mxu0 %v9646
  %v9648 = vpop.f32.mrb[0].mxu0
  %v9649 = vadd.f32 %v9429, %v9648
  %v9650 = vpop.f32.mrb[0].mxu0
  %9651 = vmatprep.mubr.f32.mxu0 0.0
  %v9652 = vand.u32 %v2229, 4294901760
  %v9653 = vsub.f32 %v2229, %v9652
  %v9654 = vand.u32 %v9653, 4294901760
  %v9655 = vsub.f32 %v9653, %v9654
  %v9656 = vand.u32 %v9655, 4294901760
  %9657 = vmatmul.mubr.f32.gmra.mrb[0].mxu0 %v9656
  %v9658 = vpop.f32.mrb[0].mxu0
  %v9659 = vadd.f32 %v9436, %v9658
  %v9660 = vpop.f32.mrb[0].mxu0
  %9661 = vmatprep.mubr.f32.mxu0 0.0
  %v9662 = vand.u32 %v2243, 4294901760
  %v9663 = vsub.f32 %v2243, %v9662
  %v9664 = vand.u32 %v9663, 4294901760
  %v9665 = vsub.f32 %v9663, %v9664
  %v9666 = vand.u32 %v9665, 4294901760
  %9667 = vmatmul.mubr.f32.gmra.mrb[0].mxu0 %v9666
  %v9668 = vpop.f32.mrb[0].mxu0
  %v9669 = vadd.f32 %v9443, %v9668
  %v9670 = vpop.f32.mrb[0].mxu0
  %9671 = vmatprep.mubr.f32.mxu0 0.0
  %v9672 = vand.u32 %v2257, 4294901760
  %v9673 = vsub.f32 %v2257, %v9672
  %v9674 = vand.u32 %v9673, 4294901760
  %v9675 = vsub.f32 %v9673, %v9674
  %v9676 = vand.u32 %v9675, 4294901760
  %9677 = vmatmul.mubr.f32.gmra.mrb[0].mxu0 %v9676
  %v9678 = vpop.f32.mrb[0].mxu0
  %v9679 = vadd.f32 %v9450, %v9678
  %v9680 = vpop.f32.mrb[0].mxu0
  %9681 = vmatprep.mubr.f32.mxu0 0.0
  %v9682 = vand.u32 %v2271, 4294901760
  %v9683 = vsub.f32 %v2271, %v9682
  %v9684 = vand.u32 %v9683, 4294901760
  %v9685 = vsub.f32 %v9683, %v9684
  %v9686 = vand.u32 %v9685, 4294901760
  %9687 = vmatmul.mubr.f32.gmra.mrb[0].mxu0 %v9686
  %v9688 = vpop.f32.mrb[0].mxu0
  %v9689 = vadd.f32 %v9457, %v9688
  %v9690 = vpop.f32.mrb[0].mxu0
  %9691 = vmatprep.mubr.f32.mxu0 0.0
  %v9692 = vand.u32 %v2285, 4294901760
  %v9693 = vsub.f32 %v2285, %v9692
  %v9694 = vand.u32 %v9693, 4294901760
  %v9695 = vsub.f32 %v9693, %v9694
  %v9696 = vand.u32 %v9695, 4294901760
  %9697 = vmatmul.mubr.f32.gmra.mrb[0].mxu0 %v9696
  %v9698 = vpop.f32.mrb[0].mxu0
  %v9699 = vadd.f32 %v9464, %v9698
  %v9700 = vpop.f32.mrb[0].mxu0
  %9701 = vmatprep.mubr.f32.mxu0 0.0
  %v9702 = vand.u32 %v2409, 4294901760
  %v9703 = vsub.f32 %v2409, %v9702
  %v9704 = vand.u32 %v9703, 4294901760
  %v9705 = vsub.f32 %v9703, %v9704
  %v9706 = vand.u32 %v9705, 4294901760
  %9707 = vmatmul.mubr.f32.gmra.mrb[0].mxu0 %v9706
  %v9708 = vpop.f32.mrb[0].mxu0
  %v9709 = vadd.f32 %v9471, %v9708
  %v9710 = vpop.f32.mrb[0].mxu0
  %9711 = vmatprep.mubr.f32.mxu0 0.0
  %v9712 = vand.u32 %v2519, 4294901760
  %v9713 = vsub.f32 %v2519, %v9712
  %v9714 = vand.u32 %v9713, 4294901760
  %v9715 = vsub.f32 %v9713, %v9714
  %v9716 = vand.u32 %v9715, 4294901760
  %9717 = vmatmul.mubr.f32.gmra.mrb[0].mxu0 %v9716
  %v9718 = vpop.f32.mrb[0].mxu0
  %v9719 = vadd.f32 %v9478, %v9718
  %v9720 = vpop.f32.mrb[0].mxu0
  %9721 = vdwg.mxu0
  %9722 = vmatprep.subr.mxu0 0.0
  %v9723 = vand.u32 %v2650, 4294901760
  %v9724 = vsub.f32 %v2650, %v9723
  %v9725 = vand.u32 %v9724, 4294901760
  %v9726 = vsub.f32 %v9724, %v9725
  %v9727 = vand.u32 %v9726, 4294901760
  %9728 = vmatpush1.msra.mxu0 %v9727
  %9729 = vmatprep.subr.mxu0 0.0
  %v9730 = vand.u32 %v2651, 4294901760
  %v9731 = vsub.f32 %v2651, %v9730
  %v9732 = vand.u32 %v9731, 4294901760
  %v9733 = vsub.f32 %v9731, %v9732
  %v9734 = vand.u32 %v9733, 4294901760
  %9735 = vmatpush1.msra.mxu0 %v9734
  %9736 = vmatprep.subr.mxu0 0.0
  %v9737 = vand.u32 %v2652, 4294901760
  %v9738 = vsub.f32 %v2652, %v9737
  %v9739 = vand.u32 %v9738, 4294901760
  %v9740 = vsub.f32 %v9738, %v9739
  %v9741 = vand.u32 %v9740, 4294901760
  %9742 = vmatpush1.msra.mxu0 %v9741
  %9743 = vmatprep.subr.mxu0 0.0
  %v9744 = vand.u32 %v2653, 4294901760
  %v9745 = vsub.f32 %v2653, %v9744
  %v9746 = vand.u32 %v9745, 4294901760
  %v9747 = vsub.f32 %v9745, %v9746
  %v9748 = vand.u32 %v9747, 4294901760
  %9749 = vmatpush1.msra.mxu0 %v9748
  %9750 = vmatprep.subr.mxu0 0.0
  %v9751 = vand.u32 %v2654, 4294901760
  %v9752 = vsub.f32 %v2654, %v9751
  %v9753 = vand.u32 %v9752, 4294901760
  %v9754 = vsub.f32 %v9752, %v9753
  %v9755 = vand.u32 %v9754, 4294901760
  %9756 = vmatpush1.msra.mxu0 %v9755
  %9757 = vmatprep.subr.mxu0 0.0
  %v9758 = vand.u32 %v2655, 4294901760
  %v9759 = vsub.f32 %v2655, %v9758
  %v9760 = vand.u32 %v9759, 4294901760
  %v9761 = vsub.f32 %v9759, %v9760
  %v9762 = vand.u32 %v9761, 4294901760
  %9763 = vmatpush1.msra.mxu0 %v9762
  %9764 = vmatprep.subr.mxu0 0.0
  %v9765 = vand.u32 %v2656, 4294901760
  %v9766 = vsub.f32 %v2656, %v9765
  %v9767 = vand.u32 %v9766, 4294901760
  %v9768 = vsub.f32 %v9766, %v9767
  %v9769 = vand.u32 %v9768, 4294901760
  %9770 = vmatpush1.msra.mxu0 %v9769
  %9771 = vmatprep.subr.mxu0 0.0
  %v9772 = vand.u32 %v2657, 4294901760
  %v9773 = vsub.f32 %v2657, %v9772
  %v9774 = vand.u32 %v9773, 4294901760
  %v9775 = vsub.f32 %v9773, %v9774
  %v9776 = vand.u32 %v9775, 4294901760
  %9777 = vmatpush1.msra.mxu0 %v9776
  %9778 = vmatprep.subr.mxu0 0.0
  %v9779 = vand.u32 %v2658, 4294901760
  %v9780 = vsub.f32 %v2658, %v9779
  %v9781 = vand.u32 %v9780, 4294901760
  %v9782 = vsub.f32 %v9780, %v9781
  %v9783 = vand.u32 %v9782, 4294901760
  %9784 = vmatpush1.msra.mxu0 %v9783
  %9785 = vmatprep.subr.mxu0 0.0
  %v9786 = vand.u32 %v2659, 4294901760
  %v9787 = vsub.f32 %v2659, %v9786
  %v9788 = vand.u32 %v9787, 4294901760
  %v9789 = vsub.f32 %v9787, %v9788
  %v9790 = vand.u32 %v9789, 4294901760
  %9791 = vmatpush1.msra.mxu0 %v9790
  %9792 = vmatprep.subr.mxu0 0.0
  %v9793 = vand.u32 %v2660, 4294901760
  %v9794 = vsub.f32 %v2660, %v9793
  %v9795 = vand.u32 %v9794, 4294901760
  %v9796 = vsub.f32 %v9794, %v9795
  %v9797 = vand.u32 %v9796, 4294901760
  %9798 = vmatpush1.msra.mxu0 %v9797
  %9799 = vmatprep.subr.mxu0 0.0
  %v9800 = vand.u32 %v2661, 4294901760
  %v9801 = vsub.f32 %v2661, %v9800
  %v9802 = vand.u32 %v9801, 4294901760
  %v9803 = vsub.f32 %v9801, %v9802
  %v9804 = vand.u32 %v9803, 4294901760
  %9805 = vmatpush1.msra.mxu0 %v9804
  %9806 = vmatprep.subr.mxu0 0.0
  %v9807 = vand.u32 %v2662, 4294901760
  %v9808 = vsub.f32 %v2662, %v9807
  %v9809 = vand.u32 %v9808, 4294901760
  %v9810 = vsub.f32 %v9808, %v9809
  %v9811 = vand.u32 %v9810, 4294901760
  %9812 = vmatpush1.msra.mxu0 %v9811
  %9813 = vmatprep.subr.mxu0 0.0
  %v9814 = vand.u32 %v2663, 4294901760
  %v9815 = vsub.f32 %v2663, %v9814
  %v9816 = vand.u32 %v9815, 4294901760
  %v9817 = vsub.f32 %v9815, %v9816
  %v9818 = vand.u32 %v9817, 4294901760
  %9819 = vmatpush1.msra.mxu0 %v9818
  %9820 = vmatprep.subr.mxu0 0.0
  %v9821 = vand.u32 %v2664, 4294901760
  %v9822 = vsub.f32 %v2664, %v9821
  %v9823 = vand.u32 %v9822, 4294901760
  %v9824 = vsub.f32 %v9822, %v9823
  %v9825 = vand.u32 %v9824, 4294901760
  %9826 = vmatpush1.msra.mxu0 %v9825
  %9827 = vmatprep.subr.mxu0 0.0
  %v9828 = vand.u32 %v2665, 4294901760
  %v9829 = vsub.f32 %v2665, %v9828
  %v9830 = vand.u32 %v9829, 4294901760
  %v9831 = vsub.f32 %v9829, %v9830
  %v9832 = vand.u32 %v9831, 4294901760
  %9833 = vmatpush1.msra.mxu0 %v9832
  %9834 = vmatprep.subr.mxu0 0.0
  %9835 = vmatpush1.msra.mxu0 0.0
  %9836 = vmatprep.subr.mxu0 0.0
  %9837 = vmatpush1.msra.mxu0 0.0
  %9838 = vmatprep.subr.mxu0 0.0
  %9839 = vmatpush1.msra.mxu0 0.0
  %9840 = vmatprep.subr.mxu0 0.0
  %9841 = vmatpush1.msra.mxu0 0.0
  %9842 = vmatprep.subr.mxu0 0.0
  %9843 = vmatpush1.msra.mxu0 0.0
  %9844 = vmatprep.subr.mxu0 0.0
  %9845 = vmatpush1.msra.mxu0 0.0
  %9846 = vmatprep.subr.mxu0 0.0
  %9847 = vmatpush1.msra.mxu0 0.0
  %9848 = vmatprep.subr.mxu0 0.0
  %9849 = vmatpush1.msra.mxu0 0.0
  %9850 = vmatprep.subr.mxu0 0.0
  %9851 = vmatpush1.msra.mxu0 0.0
  %9852 = vmatprep.subr.mxu0 0.0
  %9853 = vmatpush1.msra.mxu0 0.0
  %9854 = vmatprep.subr.mxu0 0.0
  %9855 = vmatpush1.msra.mxu0 0.0
  %9856 = vmatprep.subr.mxu0 0.0
  %9857 = vmatpush1.msra.mxu0 0.0
  %9858 = vmatprep.subr.mxu0 0.0
  %9859 = vmatpush1.msra.mxu0 0.0
  %9860 = vmatprep.subr.mxu0 0.0
  %9861 = vmatpush1.msra.mxu0 0.0
  %9862 = vmatprep.subr.mxu0 0.0
  %9863 = vmatpush1.msra.mxu0 0.0
  %9864 = vmatprep.subr.mxu0 0.0
  %9865 = vmatpush1.msra.mxu0 0.0
  %9866 = vmatprep.mubr.f32.mxu0 0.0
  %v9867 = vand.u32 %v2103, 4294901760
  %9868 = vmatmul.mubr.f32.gmra.mrb[0].mxu0 %v9867
  %v9869 = vpop.f32.mrb[0].mxu0
  %v9870 = vadd.f32 %v9569, %v9869
  %v9871 = vpop.f32.mrb[0].mxu0
  %9872 = vmatprep.mubr.f32.mxu0 0.0
  %v9873 = vand.u32 %v2117, 4294901760
  %9874 = vmatmul.mubr.f32.gmra.mrb[0].mxu0 %v9873
  %v9875 = vpop.f32.mrb[0].mxu0
  %v9876 = vadd.f32 %v9579, %v9875
  %v9877 = vpop.f32.mrb[0].mxu0
  %9878 = vmatprep.mubr.f32.mxu0 0.0
  %v9879 = vand.u32 %v2131, 4294901760
  %9880 = vmatmul.mubr.f32.gmra.mrb[0].mxu0 %v9879
  %v9881 = vpop.f32.mrb[0].mxu0
  %v9882 = vadd.f32 %v9589, %v9881
  %v9883 = vpop.f32.mrb[0].mxu0
  %9884 = vmatprep.mubr.f32.mxu0 0.0
  %v9885 = vand.u32 %v2145, 4294901760
  %9886 = vmatmul.mubr.f32.gmra.mrb[0].mxu0 %v9885
  %v9887 = vpop.f32.mrb[0].mxu0
  %v9888 = vadd.f32 %v9599, %v9887
  %v9889 = vpop.f32.mrb[0].mxu0
  %9890 = vmatprep.mubr.f32.mxu0 0.0
  %v9891 = vand.u32 %v2159, 4294901760
  %9892 = vmatmul.mubr.f32.gmra.mrb[0].mxu0 %v9891
  %v9893 = vpop.f32.mrb[0].mxu0
  %v9894 = vadd.f32 %v9609, %v9893
  %v9895 = vpop.f32.mrb[0].mxu0
  %9896 = vmatprep.mubr.f32.mxu0 0.0
  %v9897 = vand.u32 %v2173, 4294901760
  %9898 = vmatmul.mubr.f32.gmra.mrb[0].mxu0 %v9897
  %v9899 = vpop.f32.mrb[0].mxu0
  %v9900 = vadd.f32 %v9619, %v9899
  %v9901 = vpop.f32.mrb[0].mxu0
  %9902 = vmatprep.mubr.f32.mxu0 0.0
  %v9903 = vand.u32 %v2395, 4294901760
  %9904 = vmatmul.mubr.f32.gmra.mrb[0].mxu0 %v9903
  %v9905 = vpop.f32.mrb[0].mxu0
  %v9906 = vadd.f32 %v9629, %v9905
  %v9907 = vpop.f32.mrb[0].mxu0
  %9908 = vmatprep.mubr.f32.mxu0 0.0
  %v9909 = vand.u32 %v2505, 4294901760
  %9910 = vmatmul.mubr.f32.gmra.mrb[0].mxu0 %v9909
  %v9911 = vpop.f32.mrb[0].mxu0
  %v9912 = vadd.f32 %v9639, %v9911
  %v9913 = vpop.f32.mrb[0].mxu0
  %9914 = vmatprep.mubr.f32.mxu0 0.0
  %v9915 = vand.u32 %v2215, 4294901760
  %9916 = vmatmul.mubr.f32.gmra.mrb[0].mxu0 %v9915
  %v9917 = vpop.f32.mrb[0].mxu0
  %v9918 = vadd.f32 %v9649, %v9917
  %v9919 = vpop.f32.mrb[0].mxu0
  %9920 = vmatprep.mubr.f32.mxu0 0.0
  %v9921 = vand.u32 %v2229, 4294901760
  %9922 = vmatmul.mubr.f32.gmra.mrb[0].mxu0 %v9921
  %v9923 = vpop.f32.mrb[0].mxu0
  %v9924 = vadd.f32 %v9659, %v9923
  %v9925 = vpop.f32.mrb[0].mxu0
  %9926 = vmatprep.mubr.f32.mxu0 0.0
  %v9927 = vand.u32 %v2243, 4294901760
  %9928 = vmatmul.mubr.f32.gmra.mrb[0].mxu0 %v9927
  %v9929 = vpop.f32.mrb[0].mxu0
  %v9930 = vadd.f32 %v9669, %v9929
  %v9931 = vpop.f32.mrb[0].mxu0
  %9932 = vmatprep.mubr.f32.mxu0 0.0
  %v9933 = vand.u32 %v2257, 4294901760
  %9934 = vmatmul.mubr.f32.gmra.mrb[0].mxu0 %v9933
  %v9935 = vpop.f32.mrb[0].mxu0
  %v9936 = vadd.f32 %v9679, %v9935
  %v9937 = vpop.f32.mrb[0].mxu0
  %9938 = vmatprep.mubr.f32.mxu0 0.0
  %v9939 = vand.u32 %v2271, 4294901760
  %9940 = vmatmul.mubr.f32.gmra.mrb[0].mxu0 %v9939
  %v9941 = vpop.f32.mrb[0].mxu0
  %v9942 = vadd.f32 %v9689, %v9941
  %v9943 = vpop.f32.mrb[0].mxu0
  %9944 = vmatprep.mubr.f32.mxu0 0.0
  %v9945 = vand.u32 %v2285, 4294901760
  %9946 = vmatmul.mubr.f32.gmra.mrb[0].mxu0 %v9945
  %v9947 = vpop.f32.mrb[0].mxu0
  %v9948 = vadd.f32 %v9699, %v9947
  %v9949 = vpop.f32.mrb[0].mxu0
  %9950 = vmatprep.mubr.f32.mxu0 0.0
  %v9951 = vand.u32 %v2409, 4294901760
  %9952 = vmatmul.mubr.f32.gmra.mrb[0].mxu0 %v9951
  %v9953 = vpop.f32.mrb[0].mxu0
  %v9954 = vadd.f32 %v9709, %v9953
  %v9955 = vpop.f32.mrb[0].mxu0
  %9956 = vmatprep.mubr.f32.mxu0 0.0
  %v9957 = vand.u32 %v2519, 4294901760
  %9958 = vmatmul.mubr.f32.gmra.mrb[0].mxu0 %v9957
  %v9959 = vpop.f32.mrb[0].mxu0
  %v9960 = vadd.f32 %v9719, %v9959
  %v9961 = vpop.f32.mrb[0].mxu0
  %9962 = vdwg.mxu0
  %9963 = vmatprep.subr.mxu0 0.0
  %v9964 = vand.u32 %v2650, 4294901760
  %v9965 = vsub.f32 %v2650, %v9964
  %9966 = vmatpush1.msra.mxu0 %v9965
  %9967 = vmatprep.subr.mxu0 0.0
  %v9968 = vand.u32 %v2651, 4294901760
  %v9969 = vsub.f32 %v2651, %v9968
  %9970 = vmatpush1.msra.mxu0 %v9969
  %9971 = vmatprep.subr.mxu0 0.0
  %v9972 = vand.u32 %v2652, 4294901760
  %v9973 = vsub.f32 %v2652, %v9972
  %9974 = vmatpush1.msra.mxu0 %v9973
  %9975 = vmatprep.subr.mxu0 0.0
  %v9976 = vand.u32 %v2653, 4294901760
  %v9977 = vsub.f32 %v2653, %v9976
  %9978 = vmatpush1.msra.mxu0 %v9977
  %9979 = vmatprep.subr.mxu0 0.0
  %v9980 = vand.u32 %v2654, 4294901760
  %v9981 = vsub.f32 %v2654, %v9980
  %9982 = vmatpush1.msra.mxu0 %v9981
  %9983 = vmatprep.subr.mxu0 0.0
  %v9984 = vand.u32 %v2655, 4294901760
  %v9985 = vsub.f32 %v2655, %v9984
  %9986 = vmatpush1.msra.mxu0 %v9985
  %9987 = vmatprep.subr.mxu0 0.0
  %v9988 = vand.u32 %v2656, 4294901760
  %v9989 = vsub.f32 %v2656, %v9988
  %9990 = vmatpush1.msra.mxu0 %v9989
  %9991 = vmatprep.subr.mxu0 0.0
  %v9992 = vand.u32 %v2657, 4294901760
  %v9993 = vsub.f32 %v2657, %v9992
  %9994 = vmatpush1.msra.mxu0 %v9993
  %9995 = vmatprep.subr.mxu0 0.0
  %v9996 = vand.u32 %v2658, 4294901760
  %v9997 = vsub.f32 %v2658, %v9996
  %9998 = vmatpush1.msra.mxu0 %v9997
  %9999 = vmatprep.subr.mxu0 0.0
  %v10000 = vand.u32 %v2659, 4294901760
  %v10001 = vsub.f32 %v2659, %v10000
  %10002 = vmatpush1.msra.mxu0 %v10001
  %10003 = vmatprep.subr.mxu0 0.0
  %v10004 = vand.u32 %v2660, 4294901760
  %v10005 = vsub.f32 %v2660, %v10004
  %10006 = vmatpush1.msra.mxu0 %v10005
  %10007 = vmatprep.subr.mxu0 0.0
  %v10008 = vand.u32 %v2661, 4294901760
  %v10009 = vsub.f32 %v2661, %v10008
  %10010 = vmatpush1.msra.mxu0 %v10009
  %10011 = vmatprep.subr.mxu0 0.0
  %v10012 = vand.u32 %v2662, 4294901760
  %v10013 = vsub.f32 %v2662, %v10012
  %10014 = vmatpush1.msra.mxu0 %v10013
  %10015 = vmatprep.subr.mxu0 0.0
  %v10016 = vand.u32 %v2663, 4294901760
  %v10017 = vsub.f32 %v2663, %v10016
  %10018 = vmatpush1.msra.mxu0 %v10017
  %10019 = vmatprep.subr.mxu0 0.0
  %v10020 = vand.u32 %v2664, 4294901760
  %v10021 = vsub.f32 %v2664, %v10020
  %10022 = vmatpush1.msra.mxu0 %v10021
  %10023 = vmatprep.subr.mxu0 0.0
  %v10024 = vand.u32 %v2665, 4294901760
  %v10025 = vsub.f32 %v2665, %v10024
  %10026 = vmatpush1.msra.mxu0 %v10025
  %10027 = vmatprep.subr.mxu0 0.0
  %10028 = vmatpush1.msra.mxu0 0.0
  %10029 = vmatprep.subr.mxu0 0.0
  %10030 = vmatpush1.msra.mxu0 0.0
  %10031 = vmatprep.subr.mxu0 0.0
  %10032 = vmatpush1.msra.mxu0 0.0
  %10033 = vmatprep.subr.mxu0 0.0
  %10034 = vmatpush1.msra.mxu0 0.0
  %10035 = vmatprep.subr.mxu0 0.0
  %10036 = vmatpush1.msra.mxu0 0.0
  %10037 = vmatprep.subr.mxu0 0.0
  %10038 = vmatpush1.msra.mxu0 0.0
  %10039 = vmatprep.subr.mxu0 0.0
  %10040 = vmatpush1.msra.mxu0 0.0
  %10041 = vmatprep.subr.mxu0 0.0
  %10042 = vmatpush1.msra.mxu0 0.0
  %10043 = vmatprep.subr.mxu0 0.0
  %10044 = vmatpush1.msra.mxu0 0.0
  %10045 = vmatprep.subr.mxu0 0.0
  %10046 = vmatpush1.msra.mxu0 0.0
  %10047 = vmatprep.subr.mxu0 0.0
  %10048 = vmatpush1.msra.mxu0 0.0
  %10049 = vmatprep.subr.mxu0 0.0
  %10050 = vmatpush1.msra.mxu0 0.0
  %10051 = vmatprep.subr.mxu0 0.0
  %10052 = vmatpush1.msra.mxu0 0.0
  %10053 = vmatprep.subr.mxu0 0.0
  %10054 = vmatpush1.msra.mxu0 0.0
  %10055 = vmatprep.subr.mxu0 0.0
  %10056 = vmatpush1.msra.mxu0 0.0
  %10057 = vmatprep.subr.mxu0 0.0
  %10058 = vmatpush1.msra.mxu0 0.0
  %10059 = vmatprep.mubr.f32.mxu0 0.0
  %v10060 = vand.u32 %v2103, 4294901760
  %v10061 = vsub.f32 %v2103, %v10060
  %10062 = vmatmul.mubr.f32.gmra.mrb[0].mxu0 %v10061
  %v10063 = vpop.f32.mrb[0].mxu0
  %v10064 = vadd.f32 %v9870, %v10063
  %v10065 = vpop.f32.mrb[0].mxu0
  %10066 = vmatprep.mubr.f32.mxu0 0.0
  %v10067 = vand.u32 %v2117, 4294901760
  %v10068 = vsub.f32 %v2117, %v10067
  %10069 = vmatmul.mubr.f32.gmra.mrb[0].mxu0 %v10068
  %v10070 = vpop.f32.mrb[0].mxu0
  %v10071 = vadd.f32 %v9876, %v10070
  %v10072 = vpop.f32.mrb[0].mxu0
  %10073 = vmatprep.mubr.f32.mxu0 0.0
  %v10074 = vand.u32 %v2131, 4294901760
  %v10075 = vsub.f32 %v2131, %v10074
  %10076 = vmatmul.mubr.f32.gmra.mrb[0].mxu0 %v10075
  %v10077 = vpop.f32.mrb[0].mxu0
  %v10078 = vadd.f32 %v9882, %v10077
  %v10079 = vpop.f32.mrb[0].mxu0
  %10080 = vmatprep.mubr.f32.mxu0 0.0
  %v10081 = vand.u32 %v2145, 4294901760
  %v10082 = vsub.f32 %v2145, %v10081
  %10083 = vmatmul.mubr.f32.gmra.mrb[0].mxu0 %v10082
  %v10084 = vpop.f32.mrb[0].mxu0
  %v10085 = vadd.f32 %v9888, %v10084
  %v10086 = vpop.f32.mrb[0].mxu0
  %10087 = vmatprep.mubr.f32.mxu0 0.0
  %v10088 = vand.u32 %v2159, 4294901760
  %v10089 = vsub.f32 %v2159, %v10088
  %10090 = vmatmul.mubr.f32.gmra.mrb[0].mxu0 %v10089
  %v10091 = vpop.f32.mrb[0].mxu0
  %v10092 = vadd.f32 %v9894, %v10091
  %v10093 = vpop.f32.mrb[0].mxu0
  %10094 = vmatprep.mubr.f32.mxu0 0.0
  %v10095 = vand.u32 %v2173, 4294901760
  %v10096 = vsub.f32 %v2173, %v10095
  %10097 = vmatmul.mubr.f32.gmra.mrb[0].mxu0 %v10096
  %v10098 = vpop.f32.mrb[0].mxu0
  %v10099 = vadd.f32 %v9900, %v10098
  %v10100 = vpop.f32.mrb[0].mxu0
  %10101 = vmatprep.mubr.f32.mxu0 0.0
  %v10102 = vand.u32 %v2395, 4294901760
  %v10103 = vsub.f32 %v2395, %v10102
  %10104 = vmatmul.mubr.f32.gmra.mrb[0].mxu0 %v10103
  %v10105 = vpop.f32.mrb[0].mxu0
  %v10106 = vadd.f32 %v9906, %v10105
  %v10107 = vpop.f32.mrb[0].mxu0
  %10108 = vmatprep.mubr.f32.mxu0 0.0
  %v10109 = vand.u32 %v2505, 4294901760
  %v10110 = vsub.f32 %v2505, %v10109
  %10111 = vmatmul.mubr.f32.gmra.mrb[0].mxu0 %v10110
  %v10112 = vpop.f32.mrb[0].mxu0
  %v10113 = vadd.f32 %v9912, %v10112
  %v10114 = vpop.f32.mrb[0].mxu0
  %10115 = vmatprep.mubr.f32.mxu0 0.0
  %v10116 = vand.u32 %v2215, 4294901760
  %v10117 = vsub.f32 %v2215, %v10116
  %10118 = vmatmul.mubr.f32.gmra.mrb[0].mxu0 %v10117
  %v10119 = vpop.f32.mrb[0].mxu0
  %v10120 = vadd.f32 %v9918, %v10119
  %v10121 = vpop.f32.mrb[0].mxu0
  %10122 = vmatprep.mubr.f32.mxu0 0.0
  %v10123 = vand.u32 %v2229, 4294901760
  %v10124 = vsub.f32 %v2229, %v10123
  %10125 = vmatmul.mubr.f32.gmra.mrb[0].mxu0 %v10124
  %v10126 = vpop.f32.mrb[0].mxu0
  %v10127 = vadd.f32 %v9924, %v10126
  %v10128 = vpop.f32.mrb[0].mxu0
  %10129 = vmatprep.mubr.f32.mxu0 0.0
  %v10130 = vand.u32 %v2243, 4294901760
  %v10131 = vsub.f32 %v2243, %v10130
  %10132 = vmatmul.mubr.f32.gmra.mrb[0].mxu0 %v10131
  %v10133 = vpop.f32.mrb[0].mxu0
  %v10134 = vadd.f32 %v9930, %v10133
  %v10135 = vpop.f32.mrb[0].mxu0
  %10136 = vmatprep.mubr.f32.mxu0 0.0
  %v10137 = vand.u32 %v2257, 4294901760
  %v10138 = vsub.f32 %v2257, %v10137
  %10139 = vmatmul.mubr.f32.gmra.mrb[0].mxu0 %v10138
  %v10140 = vpop.f32.mrb[0].mxu0
  %v10141 = vadd.f32 %v9936, %v10140
  %v10142 = vpop.f32.mrb[0].mxu0
  %10143 = vmatprep.mubr.f32.mxu0 0.0
  %v10144 = vand.u32 %v2271, 4294901760
  %v10145 = vsub.f32 %v2271, %v10144
  %10146 = vmatmul.mubr.f32.gmra.mrb[0].mxu0 %v10145
  %v10147 = vpop.f32.mrb[0].mxu0
  %v10148 = vadd.f32 %v9942, %v10147
  %v10149 = vpop.f32.mrb[0].mxu0
  %10150 = vmatprep.mubr.f32.mxu0 0.0
  %v10151 = vand.u32 %v2285, 4294901760
  %v10152 = vsub.f32 %v2285, %v10151
  %10153 = vmatmul.mubr.f32.gmra.mrb[0].mxu0 %v10152
  %v10154 = vpop.f32.mrb[0].mxu0
  %v10155 = vadd.f32 %v9948, %v10154
  %v10156 = vpop.f32.mrb[0].mxu0
  %10157 = vmatprep.mubr.f32.mxu0 0.0
  %v10158 = vand.u32 %v2409, 4294901760
  %v10159 = vsub.f32 %v2409, %v10158
  %10160 = vmatmul.mubr.f32.gmra.mrb[0].mxu0 %v10159
  %v10161 = vpop.f32.mrb[0].mxu0
  %v10162 = vadd.f32 %v9954, %v10161
  %v10163 = vpop.f32.mrb[0].mxu0
  %10164 = vmatprep.mubr.f32.mxu0 0.0
  %v10165 = vand.u32 %v2519, 4294901760
  %v10166 = vsub.f32 %v2519, %v10165
  %10167 = vmatmul.mubr.f32.gmra.mrb[0].mxu0 %v10166
  %v10168 = vpop.f32.mrb[0].mxu0
  %v10169 = vadd.f32 %v9960, %v10168
  %v10170 = vpop.f32.mrb[0].mxu0
  %10171 = vdwg.mxu0
  %10172 = vmatprep.subr.mxu0 0.0
  %v10173 = vand.u32 %v2650, 4294901760
  %10174 = vmatpush1.msra.mxu0 %v10173
  %10175 = vmatprep.subr.mxu0 0.0
  %v10176 = vand.u32 %v2651, 4294901760
  %10177 = vmatpush1.msra.mxu0 %v10176
  %10178 = vmatprep.subr.mxu0 0.0
  %v10179 = vand.u32 %v2652, 4294901760
  %10180 = vmatpush1.msra.mxu0 %v10179
  %10181 = vmatprep.subr.mxu0 0.0
  %v10182 = vand.u32 %v2653, 4294901760
  %10183 = vmatpush1.msra.mxu0 %v10182
  %10184 = vmatprep.subr.mxu0 0.0
  %v10185 = vand.u32 %v2654, 4294901760
  %10186 = vmatpush1.msra.mxu0 %v10185
  %10187 = vmatprep.subr.mxu0 0.0
  %v10188 = vand.u32 %v2655, 4294901760
  %10189 = vmatpush1.msra.mxu0 %v10188
  %10190 = vmatprep.subr.mxu0 0.0
  %v10191 = vand.u32 %v2656, 4294901760
  %10192 = vmatpush1.msra.mxu0 %v10191
  %10193 = vmatprep.subr.mxu0 0.0
  %v10194 = vand.u32 %v2657, 4294901760
  %10195 = vmatpush1.msra.mxu0 %v10194
  %10196 = vmatprep.subr.mxu0 0.0
  %v10197 = vand.u32 %v2658, 4294901760
  %10198 = vmatpush1.msra.mxu0 %v10197
  %10199 = vmatprep.subr.mxu0 0.0
  %v10200 = vand.u32 %v2659, 4294901760
  %10201 = vmatpush1.msra.mxu0 %v10200
  %10202 = vmatprep.subr.mxu0 0.0
  %v10203 = vand.u32 %v2660, 4294901760
  %10204 = vmatpush1.msra.mxu0 %v10203
  %10205 = vmatprep.subr.mxu0 0.0
  %v10206 = vand.u32 %v2661, 4294901760
  %10207 = vmatpush1.msra.mxu0 %v10206
  %10208 = vmatprep.subr.mxu0 0.0
  %v10209 = vand.u32 %v2662, 4294901760
  %10210 = vmatpush1.msra.mxu0 %v10209
  %10211 = vmatprep.subr.mxu0 0.0
  %v10212 = vand.u32 %v2663, 4294901760
  %10213 = vmatpush1.msra.mxu0 %v10212
  %10214 = vmatprep.subr.mxu0 0.0
  %v10215 = vand.u32 %v2664, 4294901760
  %10216 = vmatpush1.msra.mxu0 %v10215
  %10217 = vmatprep.subr.mxu0 0.0
  %v10218 = vand.u32 %v2665, 4294901760
  %10219 = vmatpush1.msra.mxu0 %v10218
  %10220 = vmatprep.subr.mxu0 0.0
  %10221 = vmatpush1.msra.mxu0 0.0
  %10222 = vmatprep.subr.mxu0 0.0
  %10223 = vmatpush1.msra.mxu0 0.0
  %10224 = vmatprep.subr.mxu0 0.0
  %10225 = vmatpush1.msra.mxu0 0.0
  %10226 = vmatprep.subr.mxu0 0.0
  %10227 = vmatpush1.msra.mxu0 0.0
  %10228 = vmatprep.subr.mxu0 0.0
  %10229 = vmatpush1.msra.mxu0 0.0
  %10230 = vmatprep.subr.mxu0 0.0
  %10231 = vmatpush1.msra.mxu0 0.0
  %10232 = vmatprep.subr.mxu0 0.0
  %10233 = vmatpush1.msra.mxu0 0.0
  %10234 = vmatprep.subr.mxu0 0.0
  %10235 = vmatpush1.msra.mxu0 0.0
  %10236 = vmatprep.subr.mxu0 0.0
  %10237 = vmatpush1.msra.mxu0 0.0
  %10238 = vmatprep.subr.mxu0 0.0
  %10239 = vmatpush1.msra.mxu0 0.0
  %10240 = vmatprep.subr.mxu0 0.0
  %10241 = vmatpush1.msra.mxu0 0.0
  %10242 = vmatprep.subr.mxu0 0.0
  %10243 = vmatpush1.msra.mxu0 0.0
  %10244 = vmatprep.subr.mxu0 0.0
  %10245 = vmatpush1.msra.mxu0 0.0
  %10246 = vmatprep.subr.mxu0 0.0
  %10247 = vmatpush1.msra.mxu0 0.0
  %10248 = vmatprep.subr.mxu0 0.0
  %10249 = vmatpush1.msra.mxu0 0.0
  %10250 = vmatprep.subr.mxu0 0.0
  %10251 = vmatpush1.msra.mxu0 0.0
  %10252 = vmatprep.mubr.f32.mxu0 0.0
  %v10253 = vand.u32 %v2103, 4294901760
  %v10254 = vsub.f32 %v2103, %v10253
  %v10255 = vand.u32 %v10254, 4294901760
  %10256 = vmatmul.mubr.f32.gmra.mrb[0].mxu0 %v10255
  %v10257 = vpop.f32.mrb[0].mxu0
  %v10258 = vadd.f32 %v10064, %v10257
  %v10259 = vpop.f32.mrb[0].mxu0
  %10260 = vmatprep.mubr.f32.mxu0 0.0
  %v10261 = vand.u32 %v2117, 4294901760
  %v10262 = vsub.f32 %v2117, %v10261
  %v10263 = vand.u32 %v10262, 4294901760
  %10264 = vmatmul.mubr.f32.gmra.mrb[0].mxu0 %v10263
  %v10265 = vpop.f32.mrb[0].mxu0
  %v10266 = vadd.f32 %v10071, %v10265
  %v10267 = vpop.f32.mrb[0].mxu0
  %10268 = vmatprep.mubr.f32.mxu0 0.0
  %v10269 = vand.u32 %v2131, 4294901760
  %v10270 = vsub.f32 %v2131, %v10269
  %v10271 = vand.u32 %v10270, 4294901760
  %10272 = vmatmul.mubr.f32.gmra.mrb[0].mxu0 %v10271
  %v10273 = vpop.f32.mrb[0].mxu0
  %v10274 = vadd.f32 %v10078, %v10273
  %v10275 = vpop.f32.mrb[0].mxu0
  %10276 = vmatprep.mubr.f32.mxu0 0.0
  %v10277 = vand.u32 %v2145, 4294901760
  %v10278 = vsub.f32 %v2145, %v10277
  %v10279 = vand.u32 %v10278, 4294901760
  %10280 = vmatmul.mubr.f32.gmra.mrb[0].mxu0 %v10279
  %v10281 = vpop.f32.mrb[0].mxu0
  %v10282 = vadd.f32 %v10085, %v10281
  %v10283 = vpop.f32.mrb[0].mxu0
  %10284 = vmatprep.mubr.f32.mxu0 0.0
  %v10285 = vand.u32 %v2159, 4294901760
  %v10286 = vsub.f32 %v2159, %v10285
  %v10287 = vand.u32 %v10286, 4294901760
  %10288 = vmatmul.mubr.f32.gmra.mrb[0].mxu0 %v10287
  %v10289 = vpop.f32.mrb[0].mxu0
  %v10290 = vadd.f32 %v10092, %v10289
  %v10291 = vpop.f32.mrb[0].mxu0
  %10292 = vmatprep.mubr.f32.mxu0 0.0
  %v10293 = vand.u32 %v2173, 4294901760
  %v10294 = vsub.f32 %v2173, %v10293
  %v10295 = vand.u32 %v10294, 4294901760
  %10296 = vmatmul.mubr.f32.gmra.mrb[0].mxu0 %v10295
  %v10297 = vpop.f32.mrb[0].mxu0
  %v10298 = vadd.f32 %v10099, %v10297
  %v10299 = vpop.f32.mrb[0].mxu0
  %10300 = vmatprep.mubr.f32.mxu0 0.0
  %v10301 = vand.u32 %v2395, 4294901760
  %v10302 = vsub.f32 %v2395, %v10301
  %v10303 = vand.u32 %v10302, 4294901760
  %10304 = vmatmul.mubr.f32.gmra.mrb[0].mxu0 %v10303
  %v10305 = vpop.f32.mrb[0].mxu0
  %v10306 = vadd.f32 %v10106, %v10305
  %v10307 = vpop.f32.mrb[0].mxu0
  %10308 = vmatprep.mubr.f32.mxu0 0.0
  %v10309 = vand.u32 %v2505, 4294901760
  %v10310 = vsub.f32 %v2505, %v10309
  %v10311 = vand.u32 %v10310, 4294901760
  %10312 = vmatmul.mubr.f32.gmra.mrb[0].mxu0 %v10311
  %v10313 = vpop.f32.mrb[0].mxu0
  %v10314 = vadd.f32 %v10113, %v10313
  %v10315 = vpop.f32.mrb[0].mxu0
  %10316 = vmatprep.mubr.f32.mxu0 0.0
  %v10317 = vand.u32 %v2215, 4294901760
  %v10318 = vsub.f32 %v2215, %v10317
  %v10319 = vand.u32 %v10318, 4294901760
  %10320 = vmatmul.mubr.f32.gmra.mrb[0].mxu0 %v10319
  %v10321 = vpop.f32.mrb[0].mxu0
  %v10322 = vadd.f32 %v10120, %v10321
  %v10323 = vpop.f32.mrb[0].mxu0
  %10324 = vmatprep.mubr.f32.mxu0 0.0
  %v10325 = vand.u32 %v2229, 4294901760
  %v10326 = vsub.f32 %v2229, %v10325
  %v10327 = vand.u32 %v10326, 4294901760
  %10328 = vmatmul.mubr.f32.gmra.mrb[0].mxu0 %v10327
  %v10329 = vpop.f32.mrb[0].mxu0
  %v10330 = vadd.f32 %v10127, %v10329
  %v10331 = vpop.f32.mrb[0].mxu0
  %10332 = vmatprep.mubr.f32.mxu0 0.0
  %v10333 = vand.u32 %v2243, 4294901760
  %v10334 = vsub.f32 %v2243, %v10333
  %v10335 = vand.u32 %v10334, 4294901760
  %10336 = vmatmul.mubr.f32.gmra.mrb[0].mxu0 %v10335
  %v10337 = vpop.f32.mrb[0].mxu0
  %v10338 = vadd.f32 %v10134, %v10337
  %v10339 = vpop.f32.mrb[0].mxu0
  %10340 = vmatprep.mubr.f32.mxu0 0.0
  %v10341 = vand.u32 %v2257, 4294901760
  %v10342 = vsub.f32 %v2257, %v10341
  %v10343 = vand.u32 %v10342, 4294901760
  %10344 = vmatmul.mubr.f32.gmra.mrb[0].mxu0 %v10343
  %v10345 = vpop.f32.mrb[0].mxu0
  %v10346 = vadd.f32 %v10141, %v10345
  %v10347 = vpop.f32.mrb[0].mxu0
  %10348 = vmatprep.mubr.f32.mxu0 0.0
  %v10349 = vand.u32 %v2271, 4294901760
  %v10350 = vsub.f32 %v2271, %v10349
  %v10351 = vand.u32 %v10350, 4294901760
  %10352 = vmatmul.mubr.f32.gmra.mrb[0].mxu0 %v10351
  %v10353 = vpop.f32.mrb[0].mxu0
  %v10354 = vadd.f32 %v10148, %v10353
  %v10355 = vpop.f32.mrb[0].mxu0
  %10356 = vmatprep.mubr.f32.mxu0 0.0
  %v10357 = vand.u32 %v2285, 4294901760
  %v10358 = vsub.f32 %v2285, %v10357
  %v10359 = vand.u32 %v10358, 4294901760
  %10360 = vmatmul.mubr.f32.gmra.mrb[0].mxu0 %v10359
  %v10361 = vpop.f32.mrb[0].mxu0
  %v10362 = vadd.f32 %v10155, %v10361
  %v10363 = vpop.f32.mrb[0].mxu0
  %10364 = vmatprep.mubr.f32.mxu0 0.0
  %v10365 = vand.u32 %v2409, 4294901760
  %v10366 = vsub.f32 %v2409, %v10365
  %v10367 = vand.u32 %v10366, 4294901760
  %10368 = vmatmul.mubr.f32.gmra.mrb[0].mxu0 %v10367
  %v10369 = vpop.f32.mrb[0].mxu0
  %v10370 = vadd.f32 %v10162, %v10369
  %v10371 = vpop.f32.mrb[0].mxu0
  %10372 = vmatprep.mubr.f32.mxu0 0.0
  %v10373 = vand.u32 %v2519, 4294901760
  %v10374 = vsub.f32 %v2519, %v10373
  %v10375 = vand.u32 %v10374, 4294901760
  %10376 = vmatmul.mubr.f32.gmra.mrb[0].mxu0 %v10375
  %v10377 = vpop.f32.mrb[0].mxu0
  %v10378 = vadd.f32 %v10169, %v10377
  %v10379 = vpop.f32.mrb[0].mxu0
  %10380 = vdwg.mxu0
  %10381 = vmatprep.subr.mxu0 0.0
  %v10382 = vand.u32 %v2650, 4294901760
  %v10383 = vsub.f32 %v2650, %v10382
  %v10384 = vand.u32 %v10383, 4294901760
  %10385 = vmatpush1.msra.mxu0 %v10384
  %10386 = vmatprep.subr.mxu0 0.0
  %v10387 = vand.u32 %v2651, 4294901760
  %v10388 = vsub.f32 %v2651, %v10387
  %v10389 = vand.u32 %v10388, 4294901760
  %10390 = vmatpush1.msra.mxu0 %v10389
  %10391 = vmatprep.subr.mxu0 0.0
  %v10392 = vand.u32 %v2652, 4294901760
  %v10393 = vsub.f32 %v2652, %v10392
  %v10394 = vand.u32 %v10393, 4294901760
  %10395 = vmatpush1.msra.mxu0 %v10394
  %10396 = vmatprep.subr.mxu0 0.0
  %v10397 = vand.u32 %v2653, 4294901760
  %v10398 = vsub.f32 %v2653, %v10397
  %v10399 = vand.u32 %v10398, 4294901760
  %10400 = vmatpush1.msra.mxu0 %v10399
  %10401 = vmatprep.subr.mxu0 0.0
  %v10402 = vand.u32 %v2654, 4294901760
  %v10403 = vsub.f32 %v2654, %v10402
  %v10404 = vand.u32 %v10403, 4294901760
  %10405 = vmatpush1.msra.mxu0 %v10404
  %10406 = vmatprep.subr.mxu0 0.0
  %v10407 = vand.u32 %v2655, 4294901760
  %v10408 = vsub.f32 %v2655, %v10407
  %v10409 = vand.u32 %v10408, 4294901760
  %10410 = vmatpush1.msra.mxu0 %v10409
  %10411 = vmatprep.subr.mxu0 0.0
  %v10412 = vand.u32 %v2656, 4294901760
  %v10413 = vsub.f32 %v2656, %v10412
  %v10414 = vand.u32 %v10413, 4294901760
  %10415 = vmatpush1.msra.mxu0 %v10414
  %10416 = vmatprep.subr.mxu0 0.0
  %v10417 = vand.u32 %v2657, 4294901760
  %v10418 = vsub.f32 %v2657, %v10417
  %v10419 = vand.u32 %v10418, 4294901760
  %10420 = vmatpush1.msra.mxu0 %v10419
  %10421 = vmatprep.subr.mxu0 0.0
  %v10422 = vand.u32 %v2658, 4294901760
  %v10423 = vsub.f32 %v2658, %v10422
  %v10424 = vand.u32 %v10423, 4294901760
  %10425 = vmatpush1.msra.mxu0 %v10424
  %10426 = vmatprep.subr.mxu0 0.0
  %v10427 = vand.u32 %v2659, 4294901760
  %v10428 = vsub.f32 %v2659, %v10427
  %v10429 = vand.u32 %v10428, 4294901760
  %10430 = vmatpush1.msra.mxu0 %v10429
  %10431 = vmatprep.subr.mxu0 0.0
  %v10432 = vand.u32 %v2660, 4294901760
  %v10433 = vsub.f32 %v2660, %v10432
  %v10434 = vand.u32 %v10433, 4294901760
  %10435 = vmatpush1.msra.mxu0 %v10434
  %10436 = vmatprep.subr.mxu0 0.0
  %v10437 = vand.u32 %v2661, 4294901760
  %v10438 = vsub.f32 %v2661, %v10437
  %v10439 = vand.u32 %v10438, 4294901760
  %10440 = vmatpush1.msra.mxu0 %v10439
  %10441 = vmatprep.subr.mxu0 0.0
  %v10442 = vand.u32 %v2662, 4294901760
  %v10443 = vsub.f32 %v2662, %v10442
  %v10444 = vand.u32 %v10443, 4294901760
  %10445 = vmatpush1.msra.mxu0 %v10444
  %10446 = vmatprep.subr.mxu0 0.0
  %v10447 = vand.u32 %v2663, 4294901760
  %v10448 = vsub.f32 %v2663, %v10447
  %v10449 = vand.u32 %v10448, 4294901760
  %10450 = vmatpush1.msra.mxu0 %v10449
  %10451 = vmatprep.subr.mxu0 0.0
  %v10452 = vand.u32 %v2664, 4294901760
  %v10453 = vsub.f32 %v2664, %v10452
  %v10454 = vand.u32 %v10453, 4294901760
  %10455 = vmatpush1.msra.mxu0 %v10454
  %10456 = vmatprep.subr.mxu0 0.0
  %v10457 = vand.u32 %v2665, 4294901760
  %v10458 = vsub.f32 %v2665, %v10457
  %v10459 = vand.u32 %v10458, 4294901760
  %10460 = vmatpush1.msra.mxu0 %v10459
  %10461 = vmatprep.subr.mxu0 0.0
  %10462 = vmatpush1.msra.mxu0 0.0
  %10463 = vmatprep.subr.mxu0 0.0
  %10464 = vmatpush1.msra.mxu0 0.0
  %10465 = vmatprep.subr.mxu0 0.0
  %10466 = vmatpush1.msra.mxu0 0.0
  %10467 = vmatprep.subr.mxu0 0.0
  %10468 = vmatpush1.msra.mxu0 0.0
  %10469 = vmatprep.subr.mxu0 0.0
  %10470 = vmatpush1.msra.mxu0 0.0
  %10471 = vmatprep.subr.mxu0 0.0
  %10472 = vmatpush1.msra.mxu0 0.0
  %10473 = vmatprep.subr.mxu0 0.0
  %10474 = vmatpush1.msra.mxu0 0.0
  %10475 = vmatprep.subr.mxu0 0.0
  %10476 = vmatpush1.msra.mxu0 0.0
  %10477 = vmatprep.subr.mxu0 0.0
  %10478 = vmatpush1.msra.mxu0 0.0
  %10479 = vmatprep.subr.mxu0 0.0
  %10480 = vmatpush1.msra.mxu0 0.0
  %10481 = vmatprep.subr.mxu0 0.0
  %10482 = vmatpush1.msra.mxu0 0.0
  %10483 = vmatprep.subr.mxu0 0.0
  %10484 = vmatpush1.msra.mxu0 0.0
  %10485 = vmatprep.subr.mxu0 0.0
  %10486 = vmatpush1.msra.mxu0 0.0
  %10487 = vmatprep.subr.mxu0 0.0
  %10488 = vmatpush1.msra.mxu0 0.0
  %10489 = vmatprep.subr.mxu0 0.0
  %10490 = vmatpush1.msra.mxu0 0.0
  %10491 = vmatprep.subr.mxu0 0.0
  %10492 = vmatpush1.msra.mxu0 0.0
  %10493 = vmatprep.mubr.f32.mxu0 0.0
  %v10494 = vand.u32 %v2103, 4294901760
  %10495 = vmatmul.mubr.f32.gmra.mrb[0].mxu0 %v10494
  %v10496 = vpop.f32.mrb[0].mxu0
  %v10497 = vadd.f32 %v10258, %v10496
  %v10498 = vpop.f32.mrb[0].mxu0
  %10499 = vmatprep.mubr.f32.mxu0 0.0
  %v10500 = vand.u32 %v2117, 4294901760
  %10501 = vmatmul.mubr.f32.gmra.mrb[0].mxu0 %v10500
  %v10502 = vpop.f32.mrb[0].mxu0
  %v10503 = vadd.f32 %v10266, %v10502
  %v10504 = vpop.f32.mrb[0].mxu0
  %10505 = vmatprep.mubr.f32.mxu0 0.0
  %v10506 = vand.u32 %v2131, 4294901760
  %10507 = vmatmul.mubr.f32.gmra.mrb[0].mxu0 %v10506
  %v10508 = vpop.f32.mrb[0].mxu0
  %v10509 = vadd.f32 %v10274, %v10508
  %v10510 = vpop.f32.mrb[0].mxu0
  %10511 = vmatprep.mubr.f32.mxu0 0.0
  %v10512 = vand.u32 %v2145, 4294901760
  %10513 = vmatmul.mubr.f32.gmra.mrb[0].mxu0 %v10512
  %v10514 = vpop.f32.mrb[0].mxu0
  %v10515 = vadd.f32 %v10282, %v10514
  %v10516 = vpop.f32.mrb[0].mxu0
  %10517 = vmatprep.mubr.f32.mxu0 0.0
  %v10518 = vand.u32 %v2159, 4294901760
  %10519 = vmatmul.mubr.f32.gmra.mrb[0].mxu0 %v10518
  %v10520 = vpop.f32.mrb[0].mxu0
  %v10521 = vadd.f32 %v10290, %v10520
  %v10522 = vpop.f32.mrb[0].mxu0
  %10523 = vmatprep.mubr.f32.mxu0 0.0
  %v10524 = vand.u32 %v2173, 4294901760
  %10525 = vmatmul.mubr.f32.gmra.mrb[0].mxu0 %v10524
  %v10526 = vpop.f32.mrb[0].mxu0
  %v10527 = vadd.f32 %v10298, %v10526
  %v10528 = vpop.f32.mrb[0].mxu0
  %10529 = vmatprep.mubr.f32.mxu0 0.0
  %v10530 = vand.u32 %v2395, 4294901760
  %10531 = vmatmul.mubr.f32.gmra.mrb[0].mxu0 %v10530
  %v10532 = vpop.f32.mrb[0].mxu0
  %v10533 = vadd.f32 %v10306, %v10532
  %v10534 = vpop.f32.mrb[0].mxu0
  %10535 = vmatprep.mubr.f32.mxu0 0.0
  %v10536 = vand.u32 %v2505, 4294901760
  %10537 = vmatmul.mubr.f32.gmra.mrb[0].mxu0 %v10536
  %v10538 = vpop.f32.mrb[0].mxu0
  %v10539 = vadd.f32 %v10314, %v10538
  %v10540 = vpop.f32.mrb[0].mxu0
  %10541 = vmatprep.mubr.f32.mxu0 0.0
  %v10542 = vand.u32 %v2215, 4294901760
  %10543 = vmatmul.mubr.f32.gmra.mrb[0].mxu0 %v10542
  %v10544 = vpop.f32.mrb[0].mxu0
  %v10545 = vadd.f32 %v10322, %v10544
  %v10546 = vpop.f32.mrb[0].mxu0
  %10547 = vmatprep.mubr.f32.mxu0 0.0
  %v10548 = vand.u32 %v2229, 4294901760
  %10549 = vmatmul.mubr.f32.gmra.mrb[0].mxu0 %v10548
  %v10550 = vpop.f32.mrb[0].mxu0
  %v10551 = vadd.f32 %v10330, %v10550
  %v10552 = vpop.f32.mrb[0].mxu0
  %10553 = vmatprep.mubr.f32.mxu0 0.0
  %v10554 = vand.u32 %v2243, 4294901760
  %10555 = vmatmul.mubr.f32.gmra.mrb[0].mxu0 %v10554
  %v10556 = vpop.f32.mrb[0].mxu0
  %v10557 = vadd.f32 %v10338, %v10556
  %v10558 = vpop.f32.mrb[0].mxu0
  %10559 = vmatprep.mubr.f32.mxu0 0.0
  %v10560 = vand.u32 %v2257, 4294901760
  %10561 = vmatmul.mubr.f32.gmra.mrb[0].mxu0 %v10560
  %v10562 = vpop.f32.mrb[0].mxu0
  %v10563 = vadd.f32 %v10346, %v10562
  %v10564 = vpop.f32.mrb[0].mxu0
  %10565 = vmatprep.mubr.f32.mxu0 0.0
  %v10566 = vand.u32 %v2271, 4294901760
  %10567 = vmatmul.mubr.f32.gmra.mrb[0].mxu0 %v10566
  %v10568 = vpop.f32.mrb[0].mxu0
  %v10569 = vadd.f32 %v10354, %v10568
  %v10570 = vpop.f32.mrb[0].mxu0
  %10571 = vmatprep.mubr.f32.mxu0 0.0
  %v10572 = vand.u32 %v2285, 4294901760
  %10573 = vmatmul.mubr.f32.gmra.mrb[0].mxu0 %v10572
  %v10574 = vpop.f32.mrb[0].mxu0
  %v10575 = vadd.f32 %v10362, %v10574
  %v10576 = vpop.f32.mrb[0].mxu0
  %10577 = vmatprep.mubr.f32.mxu0 0.0
  %v10578 = vand.u32 %v2409, 4294901760
  %10579 = vmatmul.mubr.f32.gmra.mrb[0].mxu0 %v10578
  %v10580 = vpop.f32.mrb[0].mxu0
  %v10581 = vadd.f32 %v10370, %v10580
  %v10582 = vpop.f32.mrb[0].mxu0
  %10583 = vmatprep.mubr.f32.mxu0 0.0
  %v10584 = vand.u32 %v2519, 4294901760
  %10585 = vmatmul.mubr.f32.gmra.mrb[0].mxu0 %v10584
  %v10586 = vpop.f32.mrb[0].mxu0
  %v10587 = vadd.f32 %v10378, %v10586
  %v10588 = vpop.f32.mrb[0].mxu0
  %10589 = vdwg.mxu0
  %10590 = vmatprep.subr.mxu0 0.0
  %v10591 = vand.u32 %v2650, 4294901760
  %10592 = vmatpush1.msra.mxu0 %v10591
  %10593 = vmatprep.subr.mxu0 0.0
  %v10594 = vand.u32 %v2651, 4294901760
  %10595 = vmatpush1.msra.mxu0 %v10594
  %10596 = vmatprep.subr.mxu0 0.0
  %v10597 = vand.u32 %v2652, 4294901760
  %10598 = vmatpush1.msra.mxu0 %v10597
  %10599 = vmatprep.subr.mxu0 0.0
  %v10600 = vand.u32 %v2653, 4294901760
  %10601 = vmatpush1.msra.mxu0 %v10600
  %10602 = vmatprep.subr.mxu0 0.0
  %v10603 = vand.u32 %v2654, 4294901760
  %10604 = vmatpush1.msra.mxu0 %v10603
  %10605 = vmatprep.subr.mxu0 0.0
  %v10606 = vand.u32 %v2655, 4294901760
  %10607 = vmatpush1.msra.mxu0 %v10606
  %10608 = vmatprep.subr.mxu0 0.0
  %v10609 = vand.u32 %v2656, 4294901760
  %10610 = vmatpush1.msra.mxu0 %v10609
  %10611 = vmatprep.subr.mxu0 0.0
  %v10612 = vand.u32 %v2657, 4294901760
  %10613 = vmatpush1.msra.mxu0 %v10612
  %10614 = vmatprep.subr.mxu0 0.0
  %v10615 = vand.u32 %v2658, 4294901760
  %10616 = vmatpush1.msra.mxu0 %v10615
  %10617 = vmatprep.subr.mxu0 0.0
  %v10618 = vand.u32 %v2659, 4294901760
  %10619 = vmatpush1.msra.mxu0 %v10618
  %10620 = vmatprep.subr.mxu0 0.0
  %v10621 = vand.u32 %v2660, 4294901760
  %10622 = vmatpush1.msra.mxu0 %v10621
  %10623 = vmatprep.subr.mxu0 0.0
  %v10624 = vand.u32 %v2661, 4294901760
  %10625 = vmatpush1.msra.mxu0 %v10624
  %10626 = vmatprep.subr.mxu0 0.0
  %v10627 = vand.u32 %v2662, 4294901760
  %10628 = vmatpush1.msra.mxu0 %v10627
  %10629 = vmatprep.subr.mxu0 0.0
  %v10630 = vand.u32 %v2663, 4294901760
  %10631 = vmatpush1.msra.mxu0 %v10630
  %10632 = vmatprep.subr.mxu0 0.0
  %v10633 = vand.u32 %v2664, 4294901760
  %10634 = vmatpush1.msra.mxu0 %v10633
  %10635 = vmatprep.subr.mxu0 0.0
  %v10636 = vand.u32 %v2665, 4294901760
  %10637 = vmatpush1.msra.mxu0 %v10636
  %10638 = vmatprep.subr.mxu0 0.0
  %10639 = vmatpush1.msra.mxu0 0.0
  %10640 = vmatprep.subr.mxu0 0.0
  %10641 = vmatpush1.msra.mxu0 0.0
  %10642 = vmatprep.subr.mxu0 0.0
  %10643 = vmatpush1.msra.mxu0 0.0
  %10644 = vmatprep.subr.mxu0 0.0
  %10645 = vmatpush1.msra.mxu0 0.0
  %10646 = vmatprep.subr.mxu0 0.0
  %10647 = vmatpush1.msra.mxu0 0.0
  %10648 = vmatprep.subr.mxu0 0.0
  %10649 = vmatpush1.msra.mxu0 0.0
  %10650 = vmatprep.subr.mxu0 0.0
  %10651 = vmatpush1.msra.mxu0 0.0
  %10652 = vmatprep.subr.mxu0 0.0
  %10653 = vmatpush1.msra.mxu0 0.0
  %10654 = vmatprep.subr.mxu0 0.0
  %10655 = vmatpush1.msra.mxu0 0.0
  %10656 = vmatprep.subr.mxu0 0.0
  %10657 = vmatpush1.msra.mxu0 0.0
  %10658 = vmatprep.subr.mxu0 0.0
  %10659 = vmatpush1.msra.mxu0 0.0
  %10660 = vmatprep.subr.mxu0 0.0
  %10661 = vmatpush1.msra.mxu0 0.0
  %10662 = vmatprep.subr.mxu0 0.0
  %10663 = vmatpush1.msra.mxu0 0.0
  %10664 = vmatprep.subr.mxu0 0.0
  %10665 = vmatpush1.msra.mxu0 0.0
  %10666 = vmatprep.subr.mxu0 0.0
  %10667 = vmatpush1.msra.mxu0 0.0
  %10668 = vmatprep.subr.mxu0 0.0
  %10669 = vmatpush1.msra.mxu0 0.0
  %10670 = vmatprep.mubr.f32.mxu0 0.0
  %v10671 = vand.u32 %v2103, 4294901760
  %10672 = vmatmul.mubr.f32.gmra.mrb[0].mxu0 %v10671
  %v10673 = vpop.f32.mrb[0].mxu0
  %v10674 = vadd.f32 %v10497, %v10673
  %v10675 = vpop.f32.mrb[0].mxu0
  %10676 = vmatprep.mubr.f32.mxu0 0.0
  %v10677 = vand.u32 %v2117, 4294901760
  %10678 = vmatmul.mubr.f32.gmra.mrb[0].mxu0 %v10677
  %v10679 = vpop.f32.mrb[0].mxu0
  %v10680 = vadd.f32 %v10503, %v10679
  %v10681 = vpop.f32.mrb[0].mxu0
  %10682 = vmatprep.mubr.f32.mxu0 0.0
  %v10683 = vand.u32 %v2131, 4294901760
  %10684 = vmatmul.mubr.f32.gmra.mrb[0].mxu0 %v10683
  %v10685 = vpop.f32.mrb[0].mxu0
  %v10686 = vadd.f32 %v10509, %v10685
  %v10687 = vpop.f32.mrb[0].mxu0
  %10688 = vmatprep.mubr.f32.mxu0 0.0
  %v10689 = vand.u32 %v2145, 4294901760
  %10690 = vmatmul.mubr.f32.gmra.mrb[0].mxu0 %v10689
  %v10691 = vpop.f32.mrb[0].mxu0
  %v10692 = vadd.f32 %v10515, %v10691
  %v10693 = vpop.f32.mrb[0].mxu0
  %10694 = vmatprep.mubr.f32.mxu0 0.0
  %v10695 = vand.u32 %v2159, 4294901760
  %10696 = vmatmul.mubr.f32.gmra.mrb[0].mxu0 %v10695
  %v10697 = vpop.f32.mrb[0].mxu0
  %v10698 = vadd.f32 %v10521, %v10697
  %v10699 = vpop.f32.mrb[0].mxu0
  %10700 = vmatprep.mubr.f32.mxu0 0.0
  %v10701 = vand.u32 %v2173, 4294901760
  %10702 = vmatmul.mubr.f32.gmra.mrb[0].mxu0 %v10701
  %v10703 = vpop.f32.mrb[0].mxu0
  %v10704 = vadd.f32 %v10527, %v10703
  %v10705 = vpop.f32.mrb[0].mxu0
  %10706 = vmatprep.mubr.f32.mxu0 0.0
  %v10707 = vand.u32 %v2395, 4294901760
  %10708 = vmatmul.mubr.f32.gmra.mrb[0].mxu0 %v10707
  %v10709 = vpop.f32.mrb[0].mxu0
  %v10710 = vadd.f32 %v10533, %v10709
  %v10711 = vpop.f32.mrb[0].mxu0
  %10712 = vmatprep.mubr.f32.mxu0 0.0
  %v10713 = vand.u32 %v2505, 4294901760
  %10714 = vmatmul.mubr.f32.gmra.mrb[0].mxu0 %v10713
  %v10715 = vpop.f32.mrb[0].mxu0
  %v10716 = vadd.f32 %v10539, %v10715
  %v10717 = vpop.f32.mrb[0].mxu0
  %10718 = vmatprep.mubr.f32.mxu0 0.0
  %v10719 = vand.u32 %v2215, 4294901760
  %10720 = vmatmul.mubr.f32.gmra.mrb[0].mxu0 %v10719
  %v10721 = vpop.f32.mrb[0].mxu0
  %v10722 = vadd.f32 %v10545, %v10721
  %v10723 = vpop.f32.mrb[0].mxu0
  %10724 = vmatprep.mubr.f32.mxu0 0.0
  %v10725 = vand.u32 %v2229, 4294901760
  %10726 = vmatmul.mubr.f32.gmra.mrb[0].mxu0 %v10725
  %v10727 = vpop.f32.mrb[0].mxu0
  %v10728 = vadd.f32 %v10551, %v10727
  %v10729 = vpop.f32.mrb[0].mxu0
  %10730 = vmatprep.mubr.f32.mxu0 0.0
  %v10731 = vand.u32 %v2243, 4294901760
  %10732 = vmatmul.mubr.f32.gmra.mrb[0].mxu0 %v10731
  %v10733 = vpop.f32.mrb[0].mxu0
  %v10734 = vadd.f32 %v10557, %v10733
  %v10735 = vpop.f32.mrb[0].mxu0
  %10736 = vmatprep.mubr.f32.mxu0 0.0
  %v10737 = vand.u32 %v2257, 4294901760
  %10738 = vmatmul.mubr.f32.gmra.mrb[0].mxu0 %v10737
  %v10739 = vpop.f32.mrb[0].mxu0
  %v10740 = vadd.f32 %v10563, %v10739
  %v10741 = vpop.f32.mrb[0].mxu0
  %10742 = vmatprep.mubr.f32.mxu0 0.0
  %v10743 = vand.u32 %v2271, 4294901760
  %10744 = vmatmul.mubr.f32.gmra.mrb[0].mxu0 %v10743
  %v10745 = vpop.f32.mrb[0].mxu0
  %v10746 = vadd.f32 %v10569, %v10745
  %v10747 = vpop.f32.mrb[0].mxu0
  %10748 = vmatprep.mubr.f32.mxu0 0.0
  %v10749 = vand.u32 %v2285, 4294901760
  %10750 = vmatmul.mubr.f32.gmra.mrb[0].mxu0 %v10749
  %v10751 = vpop.f32.mrb[0].mxu0
  %v10752 = vadd.f32 %v10575, %v10751
  %v10753 = vpop.f32.mrb[0].mxu0
  %10754 = vmatprep.mubr.f32.mxu0 0.0
  %v10755 = vand.u32 %v2409, 4294901760
  %10756 = vmatmul.mubr.f32.gmra.mrb[0].mxu0 %v10755
  %v10757 = vpop.f32.mrb[0].mxu0
  %v10758 = vadd.f32 %v10581, %v10757
  %v10759 = vpop.f32.mrb[0].mxu0
  %10760 = vmatprep.mubr.f32.mxu0 0.0
  %v10761 = vand.u32 %v2519, 4294901760
  %10762 = vmatmul.mubr.f32.gmra.mrb[0].mxu0 %v10761
  %v10763 = vpop.f32.mrb[0].mxu0
  %v10764 = vadd.f32 %v10587, %v10763
  %v10765 = vpop.f32.mrb[0].mxu0
  %10766 = vdwg.mxu0
  %v10767 = vmax.f32 %v10674, 0.0
  %v10768 = vmax.f32 %v10680, 0.0
  %v10769 = vmax.f32 %v10686, 0.0
  %v10770 = vmax.f32 %v10692, 0.0
  %v10771 = vmax.f32 %v10698, 0.0
  %v10772 = vmax.f32 %v10704, 0.0
  %v10773 = vmax.f32 %v10710, 0.0
  %v10774 = vmax.f32 %v10716, 0.0
  %v10775 = vmax.f32 %v10722, 0.0
  %v10776 = vmax.f32 %v10728, 0.0
  %v10777 = vmax.f32 %v10734, 0.0
  %v10778 = vmax.f32 %v10740, 0.0
  %v10779 = vmax.f32 %v10746, 0.0
  %v10780 = vmax.f32 %v10752, 0.0
  %v10781 = vmax.f32 %v10758, 0.0
  %v10782 = vmax.f32 %v10764, 0.0
  %10783 = vst [vmem:[%s3] sm:$0xff] %v10767
  %10784 = vst [vmem:[%s3 + $0x8] sm:$0xff] %v10768
  %10785 = vst [vmem:[%s3 + $0x10] sm:$0xff] %v10769
  %10786 = vst [vmem:[%s3 + $0x18] sm:$0xff] %v10770
  %10787 = vst [vmem:[%s3 + $0x20] sm:$0xff] %v10771
  %10788 = vst [vmem:[%s3 + $0x28] sm:$0xff] %v10772
  %10789 = vst [vmem:[%s3 + $0x30] sm:$0xff] %v10773
  %10790 = vst [vmem:[%s3 + $0x38] sm:$0xff] %v10774
  %10791 = vst [vmem:[%s3 + $0x40] sm:$0xff] %v10775
  %10792 = vst [vmem:[%s3 + $0x48] sm:$0xff] %v10776
  %10793 = vst [vmem:[%s3 + $0x50] sm:$0xff] %v10777
  %10794 = vst [vmem:[%s3 + $0x58] sm:$0xff] %v10778
  %10795 = vst [vmem:[%s3 + $0x60] sm:$0xff] %v10779
  %10796 = vst [vmem:[%s3 + $0x68] sm:$0xff] %v10780
  %10797 = vst [vmem:[%s3 + $0x70] sm:$0xff] %v10781
  %10798 = vst [vmem:[%s3 + $0x78] sm:$0xff] %v10782
  // Predicated region
  $region14: #{conv_down.1} parent=0 // pred_check
    _
  $region15: #{conv_down.1} parent=0 // pred_check_branch
    %10800 = sbr.rel (0) target = $region17
  $region16: #{conv_down.1} parent=0 // pred_region
    _
  $region17: #{conv_down.1} parent=0 // pred_fallthru
    _
  // Predicated region
  $region18: #{conv_down.1} parent=0 // pred_check
    _
  $region19: #{conv_down.1} parent=0 // pred_check_branch
    %10802 = sbr.rel (0) target = $region21
  $region20: #{conv_down.1} parent=0 // pred_region
    _
  $region21: #{conv_down.1} parent=0 // pred_fallthru
    _

</llo_original>
